<compile_context>
chip_gen: v6e
topology: v6e:2x2x1
jax: 0.10.0
libtpu: 0.0.40
codegen_flags: <defaults>
</compile_context>

<pallas_src>
import jax
import jax.numpy as jnp
from jax.experimental import pallas as pl
from jax.experimental.pallas import tpu as pltpu

_BN_EPS = 1e-5


# --------------------------- generation-aware knobs -------------------------- #

def _vmem_limit_bytes():
    """~75% of per-core VMEM, capped at 100 MiB (v5e/v6e: ~96 MiB, v7x: ~48 MiB)."""
    try:
        cap = int(pltpu.get_tpu_info().vmem_capacity_bytes)
    except Exception:
        cap = 64 * 1024 * 1024          # conservative default (v7x per-core VMEM)
    return min(cap * 3 // 4, 100 * 1024 * 1024)


_VMEM_LIMIT = _vmem_limit_bytes()

# conv kernels: batch axis parallel (megacore), row-tile axis arbitrary because the
# padded-image VMEM scratch and the per-batch stats accumulator are carried across it.
_CONV_CPARAMS = pltpu.CompilerParams(
    dimension_semantics=("parallel", "arbitrary"),
    vmem_limit_bytes=_VMEM_LIMIT,
)
_ELEM_CPARAMS = pltpu.CompilerParams(
    dimension_semantics=("parallel", "parallel"),
    vmem_limit_bytes=_VMEM_LIMIT,
)


def _pick_row_tile(h, w, k_depth, c_out, budget_bytes=2 * 1024 * 1024):
    """Largest divisor of h whose per-tile im2col patch + accumulator fits the budget."""
    best = 1
    for rt in range(1, h + 1):
        if h % rt:
            continue
        patch = rt * w * k_depth * 2          # bf16 im2col patch scratch
        acc = rt * w * c_out * 4              # f32 accumulator / output block
        if 2 * (patch + acc) <= budget_bytes:
            best = rt
    return best


# ----------------------------- Pallas kernels ------------------------------ #

def _make_conv1_kernel(h1, w1, h2, w2, cin, cout, pad_t, pad_l):
    """Fused: ConvTranspose2d(k=2,s=2) + F.pad + concat([x2, y]) + 3x3 conv + BN stats.

    refs: x1 (1,H1,W1,Cin) f32 resident, x2 (1,H2,W2,Cout) f32 resident,
          wup (Cin,4*Cout) bf16, upb (1,4*Cout) f32, w1p (9*2*Cout,Cout) bf16,
          out (1,rt,W2,Cout) f32, stats (1,2,Cout) f32 [per-batch accumulator],
          cat (H2+2,W2+2,2*Cout) bf16 scratch, patch (rt*W2,9*2*Cout) bf16 scratch.
    """
    cc = 2 * cout

    def kernel(x1_ref, x2_ref, wup_ref, upb_ref, w1p_ref,
               out_ref, stats_ref, cat_ref, patch_ref):
        rt = out_ref.shape[1]
        r = pl.program_id(1)

        # -- once per batch element: build padded, concatenated image in VMEM (bf16) --
        @pl.when(r == 0)
        def _():
            cat_ref[...] = jnp.zeros(cat_ref.shape, cat_ref.dtype)
            # skip connection x2 -> channels [0, Cout)
            cat_ref[1:h2 + 1, 1:w2 + 1, 0:cout] = x2_ref[0, :, :, :].astype(jnp.bfloat16)
            # ConvTranspose2d: ONE (H1*W1, Cin) x (Cin, 4*Cout) matmul, bias added once
            xl = x1_ref[0, :, :, :].reshape(h1 * w1, cin).astype(jnp.bfloat16)
            res = jnp.dot(xl, wup_ref[...], preferred_element_type=jnp.float32)
            res = res + upb_ref[...]                               # (H1*W1, 4*Cout)
            pieces = [res[:, k * cout:(k + 1) * cout].reshape(h1, w1, cout)
                      for k in range(4)]                           # k = dy*2 + dx
            top = jnp.stack([pieces[0], pieces[1]], axis=2).reshape(h1, 2 * w1, cout)
            bot = jnp.stack([pieces[2], pieces[3]], axis=2).reshape(h1, 2 * w1, cout)
            y = jnp.stack([top, bot], axis=1).reshape(2 * h1, 2 * w1, cout)
            # F.pad offsets + halo pad folded into the placement inside the scratch
            cat_ref[1 + pad_t:1 + pad_t + 2 * h1,
                    1 + pad_l:1 + pad_l + 2 * w1,
                    cout:cc] = y.astype(jnp.bfloat16)
            stats_ref[...] = jnp.zeros(stats_ref.shape, stats_ref.dtype)

        # -- per row tile: im2col patch (rt*W2, 9*2C) then ONE matmul --
        row0 = pl.multiple_of(r * rt, rt)
        for k in range(9):
            dy, dx = k // 3, k % 3
            p = cat_ref[pl.ds(row0 + dy, rt), dx:dx + w2, :]       # (rt, W2, 2C) bf16
            patch_ref[:, k * cc:(k + 1) * cc] = p.reshape(rt * w2, cc)
        acc = jnp.dot(patch_ref[...], w1p_ref[...],
                      preferred_element_type=jnp.float32)          # (rt*W2, Cout)

        out_ref[0, :, :, :] = acc.reshape(rt, w2, cout).astype(out_ref.dtype)
        s1 = jnp.sum(acc, axis=0, keepdims=True)
        s2 = jnp.sum(acc * acc, axis=0, keepdims=True)
        stats_ref[0, :, :] = stats_ref[0, :, :] + jnp.concatenate([s1, s2], axis=0)

    return kernel


def _make_conv2_kernel(h2, w2, cout):
    """Fused: BN1+ReLU + halo pad (into VMEM) + 3x3 conv + BN2 stats.

    refs: hraw (1,H2,W2,Cout) f32 resident, sc/sh (1,Cout) f32, w2p (9*Cout,Cout) bf16,
          out (1,rt,W2,Cout) f32, stats (1,2,Cout) f32 [per-batch accumulator],
          img (H2+2,W2+2,Cout) bf16 scratch, patch (rt*W2,9*Cout) bf16 scratch.
    """
    def kernel(hraw_ref, sc_ref, sh_ref, w2p_ref,
               out_ref, stats_ref, img_ref, patch_ref):
        rt = out_ref.shape[1]
        r = pl.program_id(1)

        # -- once per batch element: BN1 + ReLU applied while filling the padded image --
        @pl.when(r == 0)
        def _():
            img_ref[...] = jnp.zeros(img_ref.shape, img_ref.dtype)
            h = hraw_ref[0, :, :, :] * sc_ref[...] + sh_ref[...]
            img_ref[1:h2 + 1, 1:w2 + 1, :] = jnp.maximum(h, 0.0).astype(jnp.bfloat16)
            stats_ref[...] = jnp.zeros(stats_ref.shape, stats_ref.dtype)

        # -- per row tile: im2col patch (rt*W2, 9*C) then ONE matmul --
        row0 = pl.multiple_of(r * rt, rt)
        for k in range(9):
            dy, dx = k // 3, k % 3
            p = img_ref[pl.ds(row0 + dy, rt), dx:dx + w2, :]       # (rt, W2, C) bf16
            patch_ref[:, k * cout:(k + 1) * cout] = p.reshape(rt * w2, cout)
        acc = jnp.dot(patch_ref[...], w2p_ref[...],
                      preferred_element_type=jnp.float32)          # (rt*W2, Cout)

        out_ref[0, :, :, :] = acc.reshape(rt, w2, cout).astype(out_ref.dtype)
        s1 = jnp.sum(acc, axis=0, keepdims=True)
        s2 = jnp.sum(acc * acc, axis=0, keepdims=True)
        stats_ref[0, :, :] = stats_ref[0, :, :] + jnp.concatenate([s1, s2], axis=0)

    return kernel


def _bn_relu_kernel(x_ref, scale_ref, shift_ref, o_ref):
    """y = relu(x * scale + shift) on a row tile (final BN2 + ReLU)."""
    y = x_ref[0, :, :, :] * scale_ref[...] + shift_ref[...]
    o_ref[0, :, :, :] = jnp.maximum(y, 0.0).astype(o_ref.dtype)


# ------------------------------ wrappers ----------------------------------- #

def _conv1_fused(x1_nhwc, x2_nhwc, wup, upb4, w1p, pad_t, pad_l, rt):
    n, h1, w1, cin = x1_nhwc.shape
    _, h2, w2, cout = x2_nhwc.shape
    cc = 2 * cout
    nrt = h2 // rt
    flops = 2 * n * h2 * w2 * 9 * cc * cout + 2 * n * h1 * w1 * cin * 4 * cout
    bytes_acc = int((x1_nhwc.size + x2_nhwc.size + n * h2 * w2 * cout + n * 2 * cout) * 4)
    return pl.pallas_call(
        _make_conv1_kernel(h1, w1, h2, w2, cin, cout, pad_t, pad_l),
        out_shape=(jax.ShapeDtypeStruct((n, h2, w2, cout), jnp.float32),
                   jax.ShapeDtypeStruct((n, 2, cout), jnp.float32)),
        grid_spec=pltpu.PrefetchScalarGridSpec(
            num_scalar_prefetch=0,
            grid=(n, nrt),
            in_specs=[
                pl.BlockSpec((1, h1, w1, cin), lambda i, r: (i, 0, 0, 0)),
                pl.BlockSpec((1, h2, w2, cout), lambda i, r: (i, 0, 0, 0)),
                pl.BlockSpec((cin, 4 * cout), lambda i, r: (0, 0)),
                pl.BlockSpec((1, 4 * cout), lambda i, r: (0, 0)),
                pl.BlockSpec((9 * cc, cout), lambda i, r: (0, 0)),
            ],
            out_specs=(
                pl.BlockSpec((1, rt, w2, cout), lambda i, r: (i, r, 0, 0)),
                pl.BlockSpec((1, 2, cout), lambda i, r: (i, 0, 0)),   # per-batch accumulator
            ),
            scratch_shapes=[
                pltpu.VMEM((h2 + 2, w2 + 2, cc), jnp.bfloat16),       # padded concat image
                pltpu.VMEM((rt * w2, 9 * cc), jnp.bfloat16),          # im2col patch
            ],
        ),
        compiler_params=_CONV_CPARAMS,
        cost_estimate=pl.CostEstimate(flops=int(flops), transcendentals=0,
                                      bytes_accessed=bytes_acc),
    )(x1_nhwc, x2_nhwc, wup, upb4, w1p)


def _conv2_fused(hraw, sc, sh, w2p, rt):
    n, h2, w2, cout = hraw.shape
    nrt = h2 // rt
    flops = 2 * n * h2 * w2 * 9 * cout * cout
    bytes_acc = int(2 * hraw.size * 4)
    return pl.pallas_call(
        _make_conv2_kernel(h2, w2, cout),
        out_shape=(jax.ShapeDtypeStruct((n, h2, w2, cout), jnp.float32),
                   jax.ShapeDtypeStruct((n, 2, cout), jnp.float32)),
        grid_spec=pltpu.PrefetchScalarGridSpec(
            num_scalar_prefetch=0,
            grid=(n, nrt),
            in_specs=[
                pl.BlockSpec((1, h2, w2, cout), lambda i, r: (i, 0, 0, 0)),
                pl.BlockSpec((1, cout), lambda i, r: (0, 0)),
                pl.BlockSpec((1, cout), lambda i, r: (0, 0)),
                pl.BlockSpec((9 * cout, cout), lambda i, r: (0, 0)),
            ],
            out_specs=(
                pl.BlockSpec((1, rt, w2, cout), lambda i, r: (i, r, 0, 0)),
                pl.BlockSpec((1, 2, cout), lambda i, r: (i, 0, 0)),
            ),
            scratch_shapes=[
                pltpu.VMEM((h2 + 2, w2 + 2, cout), jnp.bfloat16),     # padded post-BN1 image
                pltpu.VMEM((rt * w2, 9 * cout), jnp.bfloat16),        # im2col patch
            ],
        ),
        compiler_params=_CONV_CPARAMS,
        cost_estimate=pl.CostEstimate(flops=int(flops), transcendentals=0,
                                      bytes_accessed=bytes_acc),
    )(hraw, sc, sh, w2p)


def _bn_relu(x, scale, shift, rt):
    n, h, w, c = x.shape
    return pl.pallas_call(
        _bn_relu_kernel,
        out_shape=jax.ShapeDtypeStruct((n, h, w, c), jnp.float32),
        grid_spec=pltpu.PrefetchScalarGridSpec(
            num_scalar_prefetch=0,
            grid=(n, h // rt),
            in_specs=[
                pl.BlockSpec((1, rt, w, c), lambda i, r: (i, r, 0, 0)),
                pl.BlockSpec((1, c), lambda i, r: (0, 0)),
                pl.BlockSpec((1, c), lambda i, r: (0, 0)),
            ],
            out_specs=pl.BlockSpec((1, rt, w, c), lambda i, r: (i, r, 0, 0)),
        ),
        compiler_params=_ELEM_CPARAMS,
    )(x, scale, shift)


def _bn_scale_shift(stats, count, gamma, beta):
    """Reduce per-batch [sum, sumsq] accumulators into folded per-channel scale/shift."""
    # TODO(synk): E[x^2]-E[x]^2 in f32 can cancel at production N*H*W; use a shifted /
    #             two-pass accumulation there.
    tot = jnp.sum(stats, axis=0)                            # (2, C)
    mean = tot[0] / count
    var = jnp.maximum(tot[1] / count - mean * mean, 0.0)    # biased var (train-mode BN)
    inv = jax.lax.rsqrt(var + _BN_EPS)
    scale = gamma * inv
    shift = beta - mean * scale
    return (scale.reshape(1, -1).astype(jnp.float32),
            shift.reshape(1, -1).astype(jnp.float32))


def up_forward(x1, x2, params):
    """Up.forward.  x1: (N, Cin, H1, W1), x2: (N, Cout, H2, W2)  [NCHW, like PyTorch]."""
    n, cin, h1, w1 = x1.shape
    cout = params["up_b"].shape[0]
    h2, w2 = x2.shape[2], x2.shape[3]
    assert h2 >= 2 * h1 and w2 >= 2 * w1   # TODO(synk): F.pad cropping (diff < 0) unsupported

    x1_nhwc = jnp.transpose(x1, (0, 2, 3, 1))
    x2_nhwc = jnp.transpose(x2, (0, 2, 3, 1))

    # ---- weight repacking (tiny, one-time) -> bf16 for the MXU ----
    # ConvTranspose2d weight (Cin, Cout, 2, 2) -> (Cin, 4*Cout) with columns k=dy*2+dx
    wup = jnp.transpose(params["up_w"], (0, 2, 3, 1)).reshape(cin, 4 * cout).astype(jnp.bfloat16)
    upb4 = jnp.tile(params["up_b"], 4).reshape(1, 4 * cout).astype(jnp.float32)
    # Conv2d weight (Cout, Ci, 3, 3) -> (9*Ci, Cout), rows ordered (dy*3+dx, ci) to match
    # the im2col patch; conv1's input-channel order [x2, y] matches torch.cat([x2, y]).
    w1p = jnp.transpose(params["c1_w"], (2, 3, 1, 0)).reshape(9 * 2 * cout, cout).astype(jnp.bfloat16)
    w2p = jnp.transpose(params["c2_w"], (2, 3, 1, 0)).reshape(9 * cout, cout).astype(jnp.bfloat16)

    pad_t = (h2 - 2 * h1) // 2           # F.pad top / left offsets (folded in-kernel)
    pad_l = (w2 - 2 * w1) // 2

    rt = _pick_row_tile(h2, w2, 9 * 2 * cout, cout)
    m = n * h2 * w2

    # ---- conv1 fused (upconv + pad + concat + conv + stats); conv biases cancel in BN ----
    hraw, st1 = _conv1_fused(x1_nhwc, x2_nhwc, wup, upb4, w1p, pad_t, pad_l, rt)
    sc1, sh1 = _bn_scale_shift(st1, m, params["bn1_g"], params["bn1_b"])

    # ---- conv2 fused (BN1 + ReLU + pad applied in-kernel) ----
    h2raw, st2 = _conv2_fused(hraw, sc1, sh1, w2p, rt)
    sc2, sh2 = _bn_scale_shift(st2, m, params["bn2_g"], params["bn2_b"])

    # ---- final BN2 + ReLU (needs global stats, hence a separate tiled pass) ----
    out = _bn_relu(h2raw, sc2, sh2, rt)

    # TODO(synk): fold this NCHW transpose into the last kernel once channel counts are
    #             lane-dense (C >= 128); at C=4 the in-kernel minor-dim transpose is a
    #             relayout risk for no bandwidth win.
    return jnp.transpose(out, (0, 3, 1, 2))


# ------------------------------ params init -------------------------------- #

def init_params(key, in_channels, out_channels):
    ks = jax.random.split(key, 8)
    f32 = jnp.float32
    return {
        # ConvTranspose2d(in, out, k=2, s=2): weight (Cin, Cout, 2, 2), bias (Cout,)
        "up_w": 0.1 * jax.random.normal(ks[0], (in_channels, out_channels, 2, 2), f32),
        "up_b": 0.1 * jax.random.normal(ks[1], (out_channels,), f32),
        # Conv2d(2*out, out, 3, padding=1)
        "c1_w": 0.1 * jax.random.normal(ks[2], (out_channels, 2 * out_channels, 3, 3), f32),
        "c1_b": 0.1 * jax.random.normal(ks[3], (out_channels,), f32),   # cancels in train-mode BN
        "bn1_g": 1.0 + 0.1 * jax.random.normal(ks[4], (out_channels,), f32),
        "bn1_b": 0.1 * jax.random.normal(ks[5], (out_channels,), f32),
        # Conv2d(out, out, 3, padding=1)
        "c2_w": 0.1 * jax.random.normal(ks[6], (out_channels, out_channels, 3, 3), f32),
        "c2_b": 0.1 * jax.random.normal(ks[7], (out_channels,), f32),   # cancels in train-mode BN
        "bn2_g": jnp.ones((out_channels,), f32),
        "bn2_b": jnp.zeros((out_channels,), f32),
    }


# ---------------------------------- main ------------------------------------ #

if __name__ == "__main__":
    in_channels, out_channels = 8, 4
    N = 2
    key = jax.random.PRNGKey(0)
    k_x1, k_x2, k_p = jax.random.split(key, 3)

    # x1: low-res feature map (N, in_channels, 8, 8); x2: skip connection (N, out_channels, 16, 16)
    x1 = jax.random.normal(k_x1, (N, in_channels, 8, 8), jnp.float32)
    x2 = jax.random.normal(k_x2, (N, out_channels, 16, 16), jnp.float32)
    params = init_params(k_p, in_channels, out_channels)

    fwd = jax.jit(up_forward)
    out = jax.block_until_ready(fwd(x1, x2, params))
    assert out.shape == (N, out_channels, 16, 16), out.shape
    assert bool(jnp.all(jnp.isfinite(out)))
    print("KERNEL_OK")
</pallas_src>

<mosaic_0001>
module attributes {stable_mosaic.version = 11 : i64} {
  func.func @_bn_relu_kernel(%arg0: i32, %arg1: i32, %arg2: memref<1x16x16x4xf32, #tpu.memory_space<vmem>>, %arg3: memref<1x4xf32, #tpu.memory_space<vmem>>, %arg4: memref<1x4xf32, #tpu.memory_space<vmem>>, %arg5: memref<1x16x16x4xf32, #tpu.memory_space<vmem>>) attributes {dimension_semantics = [#tpu.dimension_semantics<parallel>, #tpu.dimension_semantics<parallel>], iteration_bounds = array<i64: 2, 1>, scalar_prefetch = 0 : i64, scratch_operands = 0 : i64, tpu.core_type = #tpu.core_type<tc>, window_params = [{transform_indices = @transform_0, window_bounds = array<i64: 1, 16, 16, 4>}, {pipeline_mode = #tpu.pipeline_mode<synchronous>, transform_indices = @transform_1, window_bounds = array<i64: 1, 4>}, {pipeline_mode = #tpu.pipeline_mode<synchronous>, transform_indices = @transform_2, window_bounds = array<i64: 1, 4>}, {transform_indices = @transform_3, window_bounds = array<i64: 1, 16, 16, 4>}]} {
    %c0 = arith.constant 0 : index
    %c0_0 = arith.constant 0 : index
    %c0_1 = arith.constant 0 : index
    %c0_2 = arith.constant 0 : index
    %0 = vector.load %arg2[%c0, %c0_0, %c0_1, %c0_2] : memref<1x16x16x4xf32, #tpu.memory_space<vmem>>, vector<1x16x16x4xf32>
    %1 = vector.shape_cast %0 : vector<1x16x16x4xf32> to vector<16x16x4xf32>
    %c0_3 = arith.constant 0 : index
    %c0_4 = arith.constant 0 : index
    %2 = vector.load %arg3[%c0_3, %c0_4] : memref<1x4xf32, #tpu.memory_space<vmem>>, vector<1x4xf32>
    %3 = vector.shape_cast %2 : vector<1x4xf32> to vector<1x1x4xf32>
    %4 = vector.broadcast %3 : vector<1x1x4xf32> to vector<16x16x4xf32>
    %5 = arith.mulf %1, %4 : vector<16x16x4xf32>
    %c0_5 = arith.constant 0 : index
    %c0_6 = arith.constant 0 : index
    %6 = vector.load %arg4[%c0_5, %c0_6] : memref<1x4xf32, #tpu.memory_space<vmem>>, vector<1x4xf32>
    %7 = vector.shape_cast %6 : vector<1x4xf32> to vector<1x1x4xf32>
    %8 = vector.broadcast %7 : vector<1x1x4xf32> to vector<16x16x4xf32>
    %9 = arith.addf %5, %8 : vector<16x16x4xf32>
    %cst = arith.constant 0.000000e+00 : f32
    %10 = vector.broadcast %cst : f32 to vector<16x16x4xf32>
    %11 = arith.maximumf %9, %10 : vector<16x16x4xf32>
    %c0_7 = arith.constant 0 : index
    %c0_8 = arith.constant 0 : index
    %c0_9 = arith.constant 0 : index
    %c0_10 = arith.constant 0 : index
    %12 = vector.load %arg5[%c0_7, %c0_8, %c0_9, %c0_10] : memref<1x16x16x4xf32, #tpu.memory_space<vmem>>, vector<1x16x16x4xf32>
    %13 = vector.shape_cast %12 : vector<1x16x16x4xf32> to vector<16x16x4xf32>
    %14 = vector.shape_cast %11 : vector<16x16x4xf32> to vector<1x16x16x4xf32>
    tpu.vector_store %arg5[%c0_7, %c0_8, %c0_9, %c0_10], %14 {strides = array<i32>} : memref<1x16x16x4xf32, #tpu.memory_space<vmem>>, vector<1x16x16x4xf32>,
    return
  }
  func.func @transform_0(%arg0: i32, %arg1: i32) -> (i32, i32, i32, i32) {
    %c0_i32 = arith.constant 0 : i32
    %c0_i32_0 = arith.constant 0 : i32
    %c0_i32_1 = arith.constant 0 : i32
    return %arg0, %arg1, %c0_i32, %c0_i32_0 : i32, i32, i32, i32
  }
  func.func @transform_1(%arg0: i32, %arg1: i32) -> (i32, i32) {
    %c0_i32 = arith.constant 0 : i32
    %c0_i32_0 = arith.constant 0 : i32
    %c0_i32_1 = arith.constant 0 : i32
    return %c0_i32, %c0_i32_0 : i32, i32
  }
  func.func @transform_2(%arg0: i32, %arg1: i32) -> (i32, i32) {
    %c0_i32 = arith.constant 0 : i32
    %c0_i32_0 = arith.constant 0 : i32
    %c0_i32_1 = arith.constant 0 : i32
    return %c0_i32, %c0_i32_0 : i32, i32
  }
  func.func @transform_3(%arg0: i32, %arg1: i32) -> (i32, i32, i32, i32) {
    %c0_i32 = arith.constant 0 : i32
    %c0_i32_0 = arith.constant 0 : i32
    %c0_i32_1 = arith.constant 0 : i32
    return %arg0, %arg1, %c0_i32, %c0_i32_0 : i32, i32, i32, i32
  }
}

module attributes {stable_mosaic.version = 11 : i64} {
  func.func @kernel(%arg0: i32, %arg1: i32, %arg2: memref<1x8x8x8xf32, #tpu.memory_space<vmem>>, %arg3: memref<1x16x16x4xf32, #tpu.memory_space<vmem>>, %arg4: memref<8x16xbf16, #tpu.memory_space<vmem>>, %arg5: memref<1x16xf32, #tpu.memory_space<vmem>>, %arg6: memref<72x4xbf16, #tpu.memory_space<vmem>>, %arg7: memref<1x16x16x4xf32, #tpu.memory_space<vmem>>, %arg8: memref<1x2x4xf32, #tpu.memory_space<vmem>>, %arg9: memref<18x18x8xbf16, #tpu.memory_space<vmem>>, %arg10: memref<256x72xbf16, #tpu.memory_space<vmem>>) attributes {dimension_semantics = [#tpu.dimension_semantics<parallel>, #tpu.dimension_semantics<arbitrary>], iteration_bounds = array<i64: 2, 1>, scalar_prefetch = 0 : i64, scratch_operands = 2 : i64, tpu.core_type = #tpu.core_type<tc>, window_params = [{transform_indices = @transform_0, window_bounds = array<i64: 1, 8, 8, 8>}, {transform_indices = @transform_1, window_bounds = array<i64: 1, 16, 16, 4>}, {pipeline_mode = #tpu.pipeline_mode<synchronous>, transform_indices = @transform_2, window_bounds = array<i64: 8, 16>}, {pipeline_mode = #tpu.pipeline_mode<synchronous>, transform_indices = @transform_3, window_bounds = array<i64: 1, 16>}, {pipeline_mode = #tpu.pipeline_mode<synchronous>, transform_indices = @transform_4, window_bounds = array<i64: 72, 4>}, {transform_indices = @transform_5, window_bounds = array<i64: 1, 16, 16, 4>}, {transform_indices = @transform_6, window_bounds = array<i64: 1, 2, 4>}]} {
    %c0_i32 = arith.constant 0 : i32
    %0 = arith.cmpi eq, %arg1, %c0_i32 : i32
    %1 = arith.extui %0 : i1 to i32
    %c0_i32_0 = arith.constant 0 : i32
    %2 = arith.cmpi ne, %1, %c0_i32_0 : i32
    scf.if %2 {
      %cst_49 = arith.constant 0.000000e+00 : bf16
      %69 = vector.broadcast %cst_49 : bf16 to vector<18x18x8xbf16>
      %c0_50 = arith.constant 0 : index
      %c0_51 = arith.constant 0 : index
      %c0_52 = arith.constant 0 : index
      %70 = vector.load %arg9[%c0_50, %c0_51, %c0_52] : memref<18x18x8xbf16, #tpu.memory_space<vmem>>, vector<18x18x8xbf16>
      tpu.vector_store %arg9[%c0_50, %c0_51, %c0_52], %69 {strides = array<i32>} : memref<18x18x8xbf16, #tpu.memory_space<vmem>>, vector<18x18x8xbf16>,
      %c0_53 = arith.constant 0 : index
      %c0_54 = arith.constant 0 : index
      %c0_55 = arith.constant 0 : index
      %c0_56 = arith.constant 0 : index
      %71 = vector.load %arg3[%c0_53, %c0_54, %c0_55, %c0_56] : memref<1x16x16x4xf32, #tpu.memory_space<vmem>>, vector<1x16x16x4xf32>
      %72 = vector.shape_cast %71 : vector<1x16x16x4xf32> to vector<16x16x4xf32>
      %73 = arith.truncf %72 : vector<16x16x4xf32> to vector<16x16x4xbf16>
      %c1_57 = arith.constant 1 : index
      %c1_58 = arith.constant 1 : index
      %c0_59 = arith.constant 0 : index
      %74 = vector.load %arg9[%c1_57, %c1_58, %c0_59] : memref<18x18x8xbf16, #tpu.memory_space<vmem>>, vector<16x16x4xbf16>
      tpu.vector_store %arg9[%c1_57, %c1_58, %c0_59], %73 {strides = array<i32>} : memref<18x18x8xbf16, #tpu.memory_space<vmem>>, vector<16x16x4xbf16>,
      %c0_60 = arith.constant 0 : index
      %c0_61 = arith.constant 0 : index
      %c0_62 = arith.constant 0 : index
      %c0_63 = arith.constant 0 : index
      %75 = vector.load %arg2[%c0_60, %c0_61, %c0_62, %c0_63] : memref<1x8x8x8xf32, #tpu.memory_space<vmem>>, vector<1x8x8x8xf32>
      %76 = vector.shape_cast %75 : vector<1x8x8x8xf32> to vector<8x8x8xf32>
      %77 = vector.shape_cast %76 : vector<8x8x8xf32> to vector<64x8xf32>
      %78 = arith.truncf %77 : vector<64x8xf32> to vector<64x8xbf16>
      %c0_64 = arith.constant 0 : index
      %c0_65 = arith.constant 0 : index
      %79 = vector.load %arg4[%c0_64, %c0_65] : memref<8x16xbf16, #tpu.memory_space<vmem>>, vector<8x16xbf16>
      %cst_66 = arith.constant dense<0.000000e+00> : vector<64x16xf32>
      %80 = tpu.matmul %78, %79, %cst_66 {dimension_numbers = #tpu.dot_dimension_numbers<[1], [0], [0], [1], [0, 0, 1, 1], [], []>} : vector<64x8xbf16>, vector<8x16xbf16>, vector<64x16xf32> -> vector<64x16xf32>
      %c0_67 = arith.constant 0 : index
      %c0_68 = arith.constant 0 : index
      %81 = vector.load %arg5[%c0_67, %c0_68] : memref<1x16xf32, #tpu.memory_space<vmem>>, vector<1x16xf32>
      %82 = vector.broadcast %81 : vector<1x16xf32> to vector<64x16xf32>
      %83 = arith.addf %80, %82 : vector<64x16xf32>
      %84 = vector.extract_strided_slice %83 {offsets = [0, 0], sizes = [64, 4], strides = [1, 1]} : vector<64x16xf32> to vector<64x4xf32>
      %85 = vector.shape_cast %84 : vector<64x4xf32> to vector<8x8x4xf32>
      %86 = vector.extract_strided_slice %83 {offsets = [0, 4], sizes = [64, 4], strides = [1, 1]} : vector<64x16xf32> to vector<64x4xf32>
      %87 = vector.shape_cast %86 : vector<64x4xf32> to vector<8x8x4xf32>
      %88 = vector.extract_strided_slice %83 {offsets = [0, 8], sizes = [64, 4], strides = [1, 1]} : vector<64x16xf32> to vector<64x4xf32>
      %89 = vector.shape_cast %88 : vector<64x4xf32> to vector<8x8x4xf32>
      %90 = vector.extract_strided_slice %83 {offsets = [0, 12], sizes = [64, 4], strides = [1, 1]} : vector<64x16xf32> to vector<64x4xf32>
      %91 = vector.shape_cast %90 : vector<64x4xf32> to vector<8x8x4xf32>
      %92 = vector.shape_cast %85 : vector<8x8x4xf32> to vector<8x8x1x4xf32>
      %93 = vector.shape_cast %87 : vector<8x8x4xf32> to vector<8x8x1x4xf32>
      %94 = tpu.concatenate %92, %93 in 2 : vector<8x8x1x4xf32>, vector<8x8x1x4xf32> -> vector<8x8x2x4xf32>
      %95 = vector.shape_cast %94 : vector<8x8x2x4xf32> to vector<8x16x4xf32>
      %96 = vector.shape_cast %89 : vector<8x8x4xf32> to vector<8x8x1x4xf32>
      %97 = vector.shape_cast %91 : vector<8x8x4xf32> to vector<8x8x1x4xf32>
      %98 = tpu.concatenate %96, %97 in 2 : vector<8x8x1x4xf32>, vector<8x8x1x4xf32> -> vector<8x8x2x4xf32>
      %99 = vector.shape_cast %98 : vector<8x8x2x4xf32> to vector<8x16x4xf32>
      %100 = vector.shape_cast %95 : vector<8x16x4xf32> to vector<8x1x16x4xf32>
      %101 = vector.shape_cast %99 : vector<8x16x4xf32> to vector<8x1x16x4xf32>
      %102 = tpu.concatenate %100, %101 in 1 : vector<8x1x16x4xf32>, vector<8x1x16x4xf32> -> vector<8x2x16x4xf32>
      %103 = vector.shape_cast %102 : vector<8x2x16x4xf32> to vector<16x16x4xf32>
      %104 = arith.truncf %103 : vector<16x16x4xf32> to vector<16x16x4xbf16>
      %c1_69 = arith.constant 1 : index
      %c1_70 = arith.constant 1 : index
      %c4 = arith.constant 4 : index
      %105 = vector.load %arg9[%c1_69, %c1_70, %c4] : memref<18x18x8xbf16, #tpu.memory_space<vmem>>, vector<16x16x4xbf16>
      tpu.vector_store %arg9[%c1_69, %c1_70, %c4], %104 {strides = array<i32>} : memref<18x18x8xbf16, #tpu.memory_space<vmem>>, vector<16x16x4xbf16>,
      %cst_71 = arith.constant 0.000000e+00 : f32
      %106 = vector.broadcast %cst_71 : f32 to vector<1x2x4xf32>
      %c0_72 = arith.constant 0 : index
      %c0_73 = arith.constant 0 : index
      %c0_74 = arith.constant 0 : index
      %107 = vector.load %arg8[%c0_72, %c0_73, %c0_74] : memref<1x2x4xf32, #tpu.memory_space<vmem>>, vector<1x2x4xf32>
      tpu.vector_store %arg8[%c0_72, %c0_73, %c0_74], %106 {strides = array<i32>} : memref<1x2x4xf32, #tpu.memory_space<vmem>>, vector<1x2x4xf32>,
    } else {
    }
    %c16_i32 = arith.constant 16 : i32
    %3 = arith.muli %arg1, %c16_i32 : i32
    %4 = tpu.assume_multiple %3, 16 : i32
    %c0_i32_1 = arith.constant 0 : i32
    %5 = arith.addi %4, %c0_i32_1 : i32
    %6 = arith.index_cast %5 : i32 to index
    %c0 = arith.constant 0 : index
    %c0_2 = arith.constant 0 : index
    %7 = vector.load %arg9[%6, %c0, %c0_2] : memref<18x18x8xbf16, #tpu.memory_space<vmem>>, vector<16x16x8xbf16>
    %8 = vector.shape_cast %7 : vector<16x16x8xbf16> to vector<256x8xbf16>
    %c0_3 = arith.constant 0 : index
    %c0_4 = arith.constant 0 : index
    %9 = vector.load %arg10[%c0_3, %c0_4] : memref<256x72xbf16, #tpu.memory_space<vmem>>, vector<256x8xbf16>
    tpu.vector_store %arg10[%c0_3, %c0_4], %8 {strides = array<i32>} : memref<256x72xbf16, #tpu.memory_space<vmem>>, vector<256x8xbf16>,
    %c0_i32_5 = arith.constant 0 : i32
    %10 = arith.addi %4, %c0_i32_5 : i32
    %11 = arith.index_cast %10 : i32 to index
    %c1 = arith.constant 1 : index
    %c0_6 = arith.constant 0 : index
    %12 = vector.load %arg9[%11, %c1, %c0_6] : memref<18x18x8xbf16, #tpu.memory_space<vmem>>, vector<16x16x8xbf16>
    %13 = vector.shape_cast %12 : vector<16x16x8xbf16> to vector<256x8xbf16>
    %c0_7 = arith.constant 0 : index
    %c8 = arith.constant 8 : index
    %14 = vector.load %arg10[%c0_7, %c8] : memref<256x72xbf16, #tpu.memory_space<vmem>>, vector<256x8xbf16>
    tpu.vector_store %arg10[%c0_7, %c8], %13 {strides = array<i32>} : memref<256x72xbf16, #tpu.memory_space<vmem>>, vector<256x8xbf16>,
    %c0_i32_8 = arith.constant 0 : i32
    %15 = arith.addi %4, %c0_i32_8 : i32
    %16 = arith.index_cast %15 : i32 to index
    %c2 = arith.constant 2 : index
    %c0_9 = arith.constant 0 : index
    %17 = vector.load %arg9[%16, %c2, %c0_9] : memref<18x18x8xbf16, #tpu.memory_space<vmem>>, vector<16x16x8xbf16>
    %18 = vector.shape_cast %17 : vector<16x16x8xbf16> to vector<256x8xbf16>
    %c0_10 = arith.constant 0 : index
    %c16 = arith.constant 16 : index
    %19 = vector.load %arg10[%c0_10, %c16] : memref<256x72xbf16, #tpu.memory_space<vmem>>, vector<256x8xbf16>
    tpu.vector_store %arg10[%c0_10, %c16], %18 {strides = array<i32>} : memref<256x72xbf16, #tpu.memory_space<vmem>>, vector<256x8xbf16>,
    %c1_i32 = arith.constant 1 : i32
    %20 = arith.addi %4, %c1_i32 : i32
    %21 = arith.index_cast %20 : i32 to index
    %c0_11 = arith.constant 0 : index
    %c0_12 = arith.constant 0 : index
    %22 = vector.load %arg9[%21, %c0_11, %c0_12] : memref<18x18x8xbf16, #tpu.memory_space<vmem>>, vector<16x16x8xbf16>
    %23 = vector.shape_cast %22 : vector<16x16x8xbf16> to vector<256x8xbf16>
    %c0_13 = arith.constant 0 : index
    %c24 = arith.constant 24 : index
    %24 = vector.load %arg10[%c0_13, %c24] : memref<256x72xbf16, #tpu.memory_space<vmem>>, vector<256x8xbf16>
    tpu.vector_store %arg10[%c0_13, %c24], %23 {strides = array<i32>} : memref<256x72xbf16, #tpu.memory_space<vmem>>, vector<256x8xbf16>,
    %c1_i32_14 = arith.constant 1 : i32
    %25 = arith.addi %4, %c1_i32_14 : i32
    %26 = arith.index_cast %25 : i32 to index
    %c1_15 = arith.constant 1 : index
    %c0_16 = arith.constant 0 : index
    %27 = vector.load %arg9[%26, %c1_15, %c0_16] : memref<18x18x8xbf16, #tpu.memory_space<vmem>>, vector<16x16x8xbf16>
    %28 = vector.shape_cast %27 : vector<16x16x8xbf16> to vector<256x8xbf16>
    %c0_17 = arith.constant 0 : index
    %c32 = arith.constant 32 : index
    %29 = vector.load %arg10[%c0_17, %c32] : memref<256x72xbf16, #tpu.memory_space<vmem>>, vector<256x8xbf16>
    tpu.vector_store %arg10[%c0_17, %c32], %28 {strides = array<i32>} : memref<256x72xbf16, #tpu.memory_space<vmem>>, vector<256x8xbf16>,
    %c1_i32_18 = arith.constant 1 : i32
    %30 = arith.addi %4, %c1_i32_18 : i32
    %31 = arith.index_cast %30 : i32 to index
    %c2_19 = arith.constant 2 : index
    %c0_20 = arith.constant 0 : index
    %32 = vector.load %arg9[%31, %c2_19, %c0_20] : memref<18x18x8xbf16, #tpu.memory_space<vmem>>, vector<16x16x8xbf16>
    %33 = vector.shape_cast %32 : vector<16x16x8xbf16> to vector<256x8xbf16>
    %c0_21 = arith.constant 0 : index
    %c40 = arith.constant 40 : index
    %34 = vector.load %arg10[%c0_21, %c40] : memref<256x72xbf16, #tpu.memory_space<vmem>>, vector<256x8xbf16>
    tpu.vector_store %arg10[%c0_21, %c40], %33 {strides = array<i32>} : memref<256x72xbf16, #tpu.memory_space<vmem>>, vector<256x8xbf16>,
    %c2_i32 = arith.constant 2 : i32
    %35 = arith.addi %4, %c2_i32 : i32
    %36 = arith.index_cast %35 : i32 to index
    %c0_22 = arith.constant 0 : index
    %c0_23 = arith.constant 0 : index
    %37 = vector.load %arg9[%36, %c0_22, %c0_23] : memref<18x18x8xbf16, #tpu.memory_space<vmem>>, vector<16x16x8xbf16>
    %38 = vector.shape_cast %37 : vector<16x16x8xbf16> to vector<256x8xbf16>
    %c0_24 = arith.constant 0 : index
    %c48 = arith.constant 48 : index
    %39 = vector.load %arg10[%c0_24, %c48] : memref<256x72xbf16, #tpu.memory_space<vmem>>, vector<256x8xbf16>
    tpu.vector_store %arg10[%c0_24, %c48], %38 {strides = array<i32>} : memref<256x72xbf16, #tpu.memory_space<vmem>>, vector<256x8xbf16>,
    %c2_i32_25 = arith.constant 2 : i32
    %40 = arith.addi %4, %c2_i32_25 : i32
    %41 = arith.index_cast %40 : i32 to index
    %c1_26 = arith.constant 1 : index
    %c0_27 = arith.constant 0 : index
    %42 = vector.load %arg9[%41, %c1_26, %c0_27] : memref<18x18x8xbf16, #tpu.memory_space<vmem>>, vector<16x16x8xbf16>
    %43 = vector.shape_cast %42 : vector<16x16x8xbf16> to vector<256x8xbf16>
    %c0_28 = arith.constant 0 : index
    %c56 = arith.constant 56 : index
    %44 = vector.load %arg10[%c0_28, %c56] : memref<256x72xbf16, #tpu.memory_space<vmem>>, vector<256x8xbf16>
    tpu.vector_store %arg10[%c0_28, %c56], %43 {strides = array<i32>} : memref<256x72xbf16, #tpu.memory_space<vmem>>, vector<256x8xbf16>,
    %c2_i32_29 = arith.constant 2 : i32
    %45 = arith.addi %4, %c2_i32_29 : i32
    %46 = arith.index_cast %45 : i32 to index
    %c2_30 = arith.constant 2 : index
    %c0_31 = arith.constant 0 : index
    %47 = vector.load %arg9[%46, %c2_30, %c0_31] : memref<18x18x8xbf16, #tpu.memory_space<vmem>>, vector<16x16x8xbf16>
    %48 = vector.shape_cast %47 : vector<16x16x8xbf16> to vector<256x8xbf16>
    %c0_32 = arith.constant 0 : index
    %c64 = arith.constant 64 : index
    %49 = vector.load %arg10[%c0_32, %c64] : memref<256x72xbf16, #tpu.memory_space<vmem>>, vector<256x8xbf16>
    tpu.vector_store %arg10[%c0_32, %c64], %48 {strides = array<i32>} : memref<256x72xbf16, #tpu.memory_space<vmem>>, vector<256x8xbf16>,
    %c0_33 = arith.constant 0 : index
    %c0_34 = arith.constant 0 : index
    %50 = vector.load %arg10[%c0_33, %c0_34] : memref<256x72xbf16, #tpu.memory_space<vmem>>, vector<256x72xbf16>
    %c0_35 = arith.constant 0 : index
    %c0_36 = arith.constant 0 : index
    %51 = vector.load %arg6[%c0_35, %c0_36] : memref<72x4xbf16, #tpu.memory_space<vmem>>, vector<72x4xbf16>
    %cst = arith.constant dense<0.000000e+00> : vector<256x4xf32>
    %52 = tpu.matmul %50, %51, %cst {dimension_numbers = #tpu.dot_dimension_numbers<[1], [0], [0], [1], [0, 0, 1, 1], [], []>} : vector<256x72xbf16>, vector<72x4xbf16>, vector<256x4xf32> -> vector<256x4xf32>
    %53 = vector.shape_cast %52 : vector<256x4xf32> to vector<16x16x4xf32>
    %c0_37 = arith.constant 0 : index
    %c0_38 = arith.constant 0 : index
    %c0_39 = arith.constant 0 : index
    %c0_40 = arith.constant 0 : index
    %54 = vector.load %arg7[%c0_37, %c0_38, %c0_39, %c0_40] : memref<1x16x16x4xf32, #tpu.memory_space<vmem>>, vector<1x16x16x4xf32>
    %55 = vector.shape_cast %54 : vector<1x16x16x4xf32> to vector<16x16x4xf32>
    %56 = vector.shape_cast %53 : vector<16x16x4xf32> to vector<1x16x16x4xf32>
    tpu.vector_store %arg7[%c0_37, %c0_38, %c0_39, %c0_40], %56 {strides = array<i32>} : memref<1x16x16x4xf32, #tpu.memory_space<vmem>>, vector<1x16x16x4xf32>,
    %cst_41 = arith.constant dense<0.000000e+00> : vector<4xf32>
    %57 = vector.multi_reduction <add>, %52, %cst_41 [0] : vector<256x4xf32> to vector<4xf32>
    %58 = vector.shape_cast %57 : vector<4xf32> to vector<1x4xf32>
    %59 = arith.mulf %52, %52 : vector<256x4xf32>
    %cst_42 = arith.constant dense<0.000000e+00> : vector<4xf32>
    %60 = vector.multi_reduction <add>, %59, %cst_42 [0] : vector<256x4xf32> to vector<4xf32>
    %61 = vector.shape_cast %60 : vector<4xf32> to vector<1x4xf32>
    %c0_43 = arith.constant 0 : index
    %c0_44 = arith.constant 0 : index
    %c0_45 = arith.constant 0 : index
    %62 = vector.load %arg8[%c0_43, %c0_44, %c0_45] : memref<1x2x4xf32, #tpu.memory_space<vmem>>, vector<1x2x4xf32>
    %63 = vector.shape_cast %62 : vector<1x2x4xf32> to vector<2x4xf32>
    %64 = tpu.concatenate %58, %61 in 0 : vector<1x4xf32>, vector<1x4xf32> -> vector<2x4xf32>
    %65 = arith.addf %63, %64 : vector<2x4xf32>
    %c0_46 = arith.constant 0 : index
    %c0_47 = arith.constant 0 : index
    %c0_48 = arith.constant 0 : index
    %66 = vector.load %arg8[%c0_46, %c0_47, %c0_48] : memref<1x2x4xf32, #tpu.memory_space<vmem>>, vector<1x2x4xf32>
    %67 = vector.shape_cast %66 : vector<1x2x4xf32> to vector<2x4xf32>
    %68 = vector.shape_cast %65 : vector<2x4xf32> to vector<1x2x4xf32>
    tpu.vector_store %arg8[%c0_46, %c0_47, %c0_48], %68 {strides = array<i32>} : memref<1x2x4xf32, #tpu.memory_space<vmem>>, vector<1x2x4xf32>,
    return
  }
  func.func @transform_0(%arg0: i32, %arg1: i32) -> (i32, i32, i32, i32) {
    %c0_i32 = arith.constant 0 : i32
    %c0_i32_0 = arith.constant 0 : i32
    %c0_i32_1 = arith.constant 0 : i32
    %c0_i32_2 = arith.constant 0 : i32
    return %arg0, %c0_i32, %c0_i32_0, %c0_i32_1 : i32, i32, i32, i32
  }
  func.func @transform_1(%arg0: i32, %arg1: i32) -> (i32, i32, i32, i32) {
    %c0_i32 = arith.constant 0 : i32
    %c0_i32_0 = arith.constant 0 : i32
    %c0_i32_1 = arith.constant 0 : i32
    %c0_i32_2 = arith.constant 0 : i32
    return %arg0, %c0_i32, %c0_i32_0, %c0_i32_1 : i32, i32, i32, i32
  }
  func.func @transform_2(%arg0: i32, %arg1: i32) -> (i32, i32) {
    %c0_i32 = arith.constant 0 : i32
    %c0_i32_0 = arith.constant 0 : i32
    %c0_i32_1 = arith.constant 0 : i32
    return %c0_i32, %c0_i32_0 : i32, i32
  }
  func.func @transform_3(%arg0: i32, %arg1: i32) -> (i32, i32) {
    %c0_i32 = arith.constant 0 : i32
    %c0_i32_0 = arith.constant 0 : i32
    %c0_i32_1 = arith.constant 0 : i32
    return %c0_i32, %c0_i32_0 : i32, i32
  }
  func.func @transform_4(%arg0: i32, %arg1: i32) -> (i32, i32) {
    %c0_i32 = arith.constant 0 : i32
    %c0_i32_0 = arith.constant 0 : i32
    %c0_i32_1 = arith.constant 0 : i32
    return %c0_i32, %c0_i32_0 : i32, i32
  }
  func.func @transform_5(%arg0: i32, %arg1: i32) -> (i32, i32, i32, i32) {
    %c0_i32 = arith.constant 0 : i32
    %c0_i32_0 = arith.constant 0 : i32
    %c0_i32_1 = arith.constant 0 : i32
    return %arg0, %arg1, %c0_i32, %c0_i32_0 : i32, i32, i32, i32
  }
  func.func @transform_6(%arg0: i32, %arg1: i32) -> (i32, i32, i32) {
    %c0_i32 = arith.constant 0 : i32
    %c0_i32_0 = arith.constant 0 : i32
    %c0_i32_1 = arith.constant 0 : i32
    return %arg0, %c0_i32, %c0_i32_0 : i32, i32, i32
  }
}

module attributes {stable_mosaic.version = 11 : i64} {
  func.func @kernel(%arg0: i32, %arg1: i32, %arg2: memref<1x16x16x4xf32, #tpu.memory_space<vmem>>, %arg3: memref<1x4xf32, #tpu.memory_space<vmem>>, %arg4: memref<1x4xf32, #tpu.memory_space<vmem>>, %arg5: memref<36x4xbf16, #tpu.memory_space<vmem>>, %arg6: memref<1x16x16x4xf32, #tpu.memory_space<vmem>>, %arg7: memref<1x2x4xf32, #tpu.memory_space<vmem>>, %arg8: memref<18x18x4xbf16, #tpu.memory_space<vmem>>, %arg9: memref<256x36xbf16, #tpu.memory_space<vmem>>) attributes {dimension_semantics = [#tpu.dimension_semantics<parallel>, #tpu.dimension_semantics<arbitrary>], iteration_bounds = array<i64: 2, 1>, scalar_prefetch = 0 : i64, scratch_operands = 2 : i64, tpu.core_type = #tpu.core_type<tc>, window_params = [{transform_indices = @transform_0, window_bounds = array<i64: 1, 16, 16, 4>}, {pipeline_mode = #tpu.pipeline_mode<synchronous>, transform_indices = @transform_1, window_bounds = array<i64: 1, 4>}, {pipeline_mode = #tpu.pipeline_mode<synchronous>, transform_indices = @transform_2, window_bounds = array<i64: 1, 4>}, {pipeline_mode = #tpu.pipeline_mode<synchronous>, transform_indices = @transform_3, window_bounds = array<i64: 36, 4>}, {transform_indices = @transform_4, window_bounds = array<i64: 1, 16, 16, 4>}, {transform_indices = @transform_5, window_bounds = array<i64: 1, 2, 4>}]} {
    %c0_i32 = arith.constant 0 : i32
    %0 = arith.cmpi eq, %arg1, %c0_i32 : i32
    %1 = arith.extui %0 : i1 to i32
    %c0_i32_0 = arith.constant 0 : i32
    %2 = arith.cmpi ne, %1, %c0_i32_0 : i32
    scf.if %2 {
      %cst_49 = arith.constant 0.000000e+00 : bf16
      %69 = vector.broadcast %cst_49 : bf16 to vector<18x18x4xbf16>
      %c0_50 = arith.constant 0 : index
      %c0_51 = arith.constant 0 : index
      %c0_52 = arith.constant 0 : index
      %70 = vector.load %arg8[%c0_50, %c0_51, %c0_52] : memref<18x18x4xbf16, #tpu.memory_space<vmem>>, vector<18x18x4xbf16>
      tpu.vector_store %arg8[%c0_50, %c0_51, %c0_52], %69 {strides = array<i32>} : memref<18x18x4xbf16, #tpu.memory_space<vmem>>, vector<18x18x4xbf16>,
      %c0_53 = arith.constant 0 : index
      %c0_54 = arith.constant 0 : index
      %c0_55 = arith.constant 0 : index
      %c0_56 = arith.constant 0 : index
      %71 = vector.load %arg2[%c0_53, %c0_54, %c0_55, %c0_56] : memref<1x16x16x4xf32, #tpu.memory_space<vmem>>, vector<1x16x16x4xf32>
      %72 = vector.shape_cast %71 : vector<1x16x16x4xf32> to vector<16x16x4xf32>
      %c0_57 = arith.constant 0 : index
      %c0_58 = arith.constant 0 : index
      %73 = vector.load %arg3[%c0_57, %c0_58] : memref<1x4xf32, #tpu.memory_space<vmem>>, vector<1x4xf32>
      %74 = vector.shape_cast %73 : vector<1x4xf32> to vector<1x1x4xf32>
      %75 = vector.broadcast %74 : vector<1x1x4xf32> to vector<16x16x4xf32>
      %76 = arith.mulf %72, %75 : vector<16x16x4xf32>
      %c0_59 = arith.constant 0 : index
      %c0_60 = arith.constant 0 : index
      %77 = vector.load %arg4[%c0_59, %c0_60] : memref<1x4xf32, #tpu.memory_space<vmem>>, vector<1x4xf32>
      %78 = vector.shape_cast %77 : vector<1x4xf32> to vector<1x1x4xf32>
      %79 = vector.broadcast %78 : vector<1x1x4xf32> to vector<16x16x4xf32>
      %80 = arith.addf %76, %79 : vector<16x16x4xf32>
      %cst_61 = arith.constant 0.000000e+00 : f32
      %81 = vector.broadcast %cst_61 : f32 to vector<16x16x4xf32>
      %82 = arith.maximumf %80, %81 : vector<16x16x4xf32>
      %83 = arith.truncf %82 : vector<16x16x4xf32> to vector<16x16x4xbf16>
      %c1_62 = arith.constant 1 : index
      %c1_63 = arith.constant 1 : index
      %c0_64 = arith.constant 0 : index
      %84 = vector.load %arg8[%c1_62, %c1_63, %c0_64] : memref<18x18x4xbf16, #tpu.memory_space<vmem>>, vector<16x16x4xbf16>
      tpu.vector_store %arg8[%c1_62, %c1_63, %c0_64], %83 {strides = array<i32>} : memref<18x18x4xbf16, #tpu.memory_space<vmem>>, vector<16x16x4xbf16>,
      %cst_65 = arith.constant 0.000000e+00 : f32
      %85 = vector.broadcast %cst_65 : f32 to vector<1x2x4xf32>
      %c0_66 = arith.constant 0 : index
      %c0_67 = arith.constant 0 : index
      %c0_68 = arith.constant 0 : index
      %86 = vector.load %arg7[%c0_66, %c0_67, %c0_68] : memref<1x2x4xf32, #tpu.memory_space<vmem>>, vector<1x2x4xf32>
      tpu.vector_store %arg7[%c0_66, %c0_67, %c0_68], %85 {strides = array<i32>} : memref<1x2x4xf32, #tpu.memory_space<vmem>>, vector<1x2x4xf32>,
    } else {
    }
    %c16_i32 = arith.constant 16 : i32
    %3 = arith.muli %arg1, %c16_i32 : i32
    %4 = tpu.assume_multiple %3, 16 : i32
    %c0_i32_1 = arith.constant 0 : i32
    %5 = arith.addi %4, %c0_i32_1 : i32
    %6 = arith.index_cast %5 : i32 to index
    %c0 = arith.constant 0 : index
    %c0_2 = arith.constant 0 : index
    %7 = vector.load %arg8[%6, %c0, %c0_2] : memref<18x18x4xbf16, #tpu.memory_space<vmem>>, vector<16x16x4xbf16>
    %8 = vector.shape_cast %7 : vector<16x16x4xbf16> to vector<256x4xbf16>
    %c0_3 = arith.constant 0 : index
    %c0_4 = arith.constant 0 : index
    %9 = vector.load %arg9[%c0_3, %c0_4] : memref<256x36xbf16, #tpu.memory_space<vmem>>, vector<256x4xbf16>
    tpu.vector_store %arg9[%c0_3, %c0_4], %8 {strides = array<i32>} : memref<256x36xbf16, #tpu.memory_space<vmem>>, vector<256x4xbf16>,
    %c0_i32_5 = arith.constant 0 : i32
    %10 = arith.addi %4, %c0_i32_5 : i32
    %11 = arith.index_cast %10 : i32 to index
    %c1 = arith.constant 1 : index
    %c0_6 = arith.constant 0 : index
    %12 = vector.load %arg8[%11, %c1, %c0_6] : memref<18x18x4xbf16, #tpu.memory_space<vmem>>, vector<16x16x4xbf16>
    %13 = vector.shape_cast %12 : vector<16x16x4xbf16> to vector<256x4xbf16>
    %c0_7 = arith.constant 0 : index
    %c4 = arith.constant 4 : index
    %14 = vector.load %arg9[%c0_7, %c4] : memref<256x36xbf16, #tpu.memory_space<vmem>>, vector<256x4xbf16>
    tpu.vector_store %arg9[%c0_7, %c4], %13 {strides = array<i32>} : memref<256x36xbf16, #tpu.memory_space<vmem>>, vector<256x4xbf16>,
    %c0_i32_8 = arith.constant 0 : i32
    %15 = arith.addi %4, %c0_i32_8 : i32
    %16 = arith.index_cast %15 : i32 to index
    %c2 = arith.constant 2 : index
    %c0_9 = arith.constant 0 : index
    %17 = vector.load %arg8[%16, %c2, %c0_9] : memref<18x18x4xbf16, #tpu.memory_space<vmem>>, vector<16x16x4xbf16>
    %18 = vector.shape_cast %17 : vector<16x16x4xbf16> to vector<256x4xbf16>
    %c0_10 = arith.constant 0 : index
    %c8 = arith.constant 8 : index
    %19 = vector.load %arg9[%c0_10, %c8] : memref<256x36xbf16, #tpu.memory_space<vmem>>, vector<256x4xbf16>
    tpu.vector_store %arg9[%c0_10, %c8], %18 {strides = array<i32>} : memref<256x36xbf16, #tpu.memory_space<vmem>>, vector<256x4xbf16>,
    %c1_i32 = arith.constant 1 : i32
    %20 = arith.addi %4, %c1_i32 : i32
    %21 = arith.index_cast %20 : i32 to index
    %c0_11 = arith.constant 0 : index
    %c0_12 = arith.constant 0 : index
    %22 = vector.load %arg8[%21, %c0_11, %c0_12] : memref<18x18x4xbf16, #tpu.memory_space<vmem>>, vector<16x16x4xbf16>
    %23 = vector.shape_cast %22 : vector<16x16x4xbf16> to vector<256x4xbf16>
    %c0_13 = arith.constant 0 : index
    %c12 = arith.constant 12 : index
    %24 = vector.load %arg9[%c0_13, %c12] : memref<256x36xbf16, #tpu.memory_space<vmem>>, vector<256x4xbf16>
    tpu.vector_store %arg9[%c0_13, %c12], %23 {strides = array<i32>} : memref<256x36xbf16, #tpu.memory_space<vmem>>, vector<256x4xbf16>,
    %c1_i32_14 = arith.constant 1 : i32
    %25 = arith.addi %4, %c1_i32_14 : i32
    %26 = arith.index_cast %25 : i32 to index
    %c1_15 = arith.constant 1 : index
    %c0_16 = arith.constant 0 : index
    %27 = vector.load %arg8[%26, %c1_15, %c0_16] : memref<18x18x4xbf16, #tpu.memory_space<vmem>>, vector<16x16x4xbf16>
    %28 = vector.shape_cast %27 : vector<16x16x4xbf16> to vector<256x4xbf16>
    %c0_17 = arith.constant 0 : index
    %c16 = arith.constant 16 : index
    %29 = vector.load %arg9[%c0_17, %c16] : memref<256x36xbf16, #tpu.memory_space<vmem>>, vector<256x4xbf16>
    tpu.vector_store %arg9[%c0_17, %c16], %28 {strides = array<i32>} : memref<256x36xbf16, #tpu.memory_space<vmem>>, vector<256x4xbf16>,
    %c1_i32_18 = arith.constant 1 : i32
    %30 = arith.addi %4, %c1_i32_18 : i32
    %31 = arith.index_cast %30 : i32 to index
    %c2_19 = arith.constant 2 : index
    %c0_20 = arith.constant 0 : index
    %32 = vector.load %arg8[%31, %c2_19, %c0_20] : memref<18x18x4xbf16, #tpu.memory_space<vmem>>, vector<16x16x4xbf16>
    %33 = vector.shape_cast %32 : vector<16x16x4xbf16> to vector<256x4xbf16>
    %c0_21 = arith.constant 0 : index
    %c20 = arith.constant 20 : index
    %34 = vector.load %arg9[%c0_21, %c20] : memref<256x36xbf16, #tpu.memory_space<vmem>>, vector<256x4xbf16>
    tpu.vector_store %arg9[%c0_21, %c20], %33 {strides = array<i32>} : memref<256x36xbf16, #tpu.memory_space<vmem>>, vector<256x4xbf16>,
    %c2_i32 = arith.constant 2 : i32
    %35 = arith.addi %4, %c2_i32 : i32
    %36 = arith.index_cast %35 : i32 to index
    %c0_22 = arith.constant 0 : index
    %c0_23 = arith.constant 0 : index
    %37 = vector.load %arg8[%36, %c0_22, %c0_23] : memref<18x18x4xbf16, #tpu.memory_space<vmem>>, vector<16x16x4xbf16>
    %38 = vector.shape_cast %37 : vector<16x16x4xbf16> to vector<256x4xbf16>
    %c0_24 = arith.constant 0 : index
    %c24 = arith.constant 24 : index
    %39 = vector.load %arg9[%c0_24, %c24] : memref<256x36xbf16, #tpu.memory_space<vmem>>, vector<256x4xbf16>
    tpu.vector_store %arg9[%c0_24, %c24], %38 {strides = array<i32>} : memref<256x36xbf16, #tpu.memory_space<vmem>>, vector<256x4xbf16>,
    %c2_i32_25 = arith.constant 2 : i32
    %40 = arith.addi %4, %c2_i32_25 : i32
    %41 = arith.index_cast %40 : i32 to index
    %c1_26 = arith.constant 1 : index
    %c0_27 = arith.constant 0 : index
    %42 = vector.load %arg8[%41, %c1_26, %c0_27] : memref<18x18x4xbf16, #tpu.memory_space<vmem>>, vector<16x16x4xbf16>
    %43 = vector.shape_cast %42 : vector<16x16x4xbf16> to vector<256x4xbf16>
    %c0_28 = arith.constant 0 : index
    %c28 = arith.constant 28 : index
    %44 = vector.load %arg9[%c0_28, %c28] : memref<256x36xbf16, #tpu.memory_space<vmem>>, vector<256x4xbf16>
    tpu.vector_store %arg9[%c0_28, %c28], %43 {strides = array<i32>} : memref<256x36xbf16, #tpu.memory_space<vmem>>, vector<256x4xbf16>,
    %c2_i32_29 = arith.constant 2 : i32
    %45 = arith.addi %4, %c2_i32_29 : i32
    %46 = arith.index_cast %45 : i32 to index
    %c2_30 = arith.constant 2 : index
    %c0_31 = arith.constant 0 : index
    %47 = vector.load %arg8[%46, %c2_30, %c0_31] : memref<18x18x4xbf16, #tpu.memory_space<vmem>>, vector<16x16x4xbf16>
    %48 = vector.shape_cast %47 : vector<16x16x4xbf16> to vector<256x4xbf16>
    %c0_32 = arith.constant 0 : index
    %c32 = arith.constant 32 : index
    %49 = vector.load %arg9[%c0_32, %c32] : memref<256x36xbf16, #tpu.memory_space<vmem>>, vector<256x4xbf16>
    tpu.vector_store %arg9[%c0_32, %c32], %48 {strides = array<i32>} : memref<256x36xbf16, #tpu.memory_space<vmem>>, vector<256x4xbf16>,
    %c0_33 = arith.constant 0 : index
    %c0_34 = arith.constant 0 : index
    %50 = vector.load %arg9[%c0_33, %c0_34] : memref<256x36xbf16, #tpu.memory_space<vmem>>, vector<256x36xbf16>
    %c0_35 = arith.constant 0 : index
    %c0_36 = arith.constant 0 : index
    %51 = vector.load %arg5[%c0_35, %c0_36] : memref<36x4xbf16, #tpu.memory_space<vmem>>, vector<36x4xbf16>
    %cst = arith.constant dense<0.000000e+00> : vector<256x4xf32>
    %52 = tpu.matmul %50, %51, %cst {dimension_numbers = #tpu.dot_dimension_numbers<[1], [0], [0], [1], [0, 0, 1, 1], [], []>} : vector<256x36xbf16>, vector<36x4xbf16>, vector<256x4xf32> -> vector<256x4xf32>
    %53 = vector.shape_cast %52 : vector<256x4xf32> to vector<16x16x4xf32>
    %c0_37 = arith.constant 0 : index
    %c0_38 = arith.constant 0 : index
    %c0_39 = arith.constant 0 : index
    %c0_40 = arith.constant 0 : index
    %54 = vector.load %arg6[%c0_37, %c0_38, %c0_39, %c0_40] : memref<1x16x16x4xf32, #tpu.memory_space<vmem>>, vector<1x16x16x4xf32>
    %55 = vector.shape_cast %54 : vector<1x16x16x4xf32> to vector<16x16x4xf32>
    %56 = vector.shape_cast %53 : vector<16x16x4xf32> to vector<1x16x16x4xf32>
    tpu.vector_store %arg6[%c0_37, %c0_38, %c0_39, %c0_40], %56 {strides = array<i32>} : memref<1x16x16x4xf32, #tpu.memory_space<vmem>>, vector<1x16x16x4xf32>,
    %cst_41 = arith.constant dense<0.000000e+00> : vector<4xf32>
    %57 = vector.multi_reduction <add>, %52, %cst_41 [0] : vector<256x4xf32> to vector<4xf32>
    %58 = vector.shape_cast %57 : vector<4xf32> to vector<1x4xf32>
    %59 = arith.mulf %52, %52 : vector<256x4xf32>
    %cst_42 = arith.constant dense<0.000000e+00> : vector<4xf32>
    %60 = vector.multi_reduction <add>, %59, %cst_42 [0] : vector<256x4xf32> to vector<4xf32>
    %61 = vector.shape_cast %60 : vector<4xf32> to vector<1x4xf32>
    %c0_43 = arith.constant 0 : index
    %c0_44 = arith.constant 0 : index
    %c0_45 = arith.constant 0 : index
    %62 = vector.load %arg7[%c0_43, %c0_44, %c0_45] : memref<1x2x4xf32, #tpu.memory_space<vmem>>, vector<1x2x4xf32>
    %63 = vector.shape_cast %62 : vector<1x2x4xf32> to vector<2x4xf32>
    %64 = tpu.concatenate %58, %61 in 0 : vector<1x4xf32>, vector<1x4xf32> -> vector<2x4xf32>
    %65 = arith.addf %63, %64 : vector<2x4xf32>
    %c0_46 = arith.constant 0 : index
    %c0_47 = arith.constant 0 : index
    %c0_48 = arith.constant 0 : index
    %66 = vector.load %arg7[%c0_46, %c0_47, %c0_48] : memref<1x2x4xf32, #tpu.memory_space<vmem>>, vector<1x2x4xf32>
    %67 = vector.shape_cast %66 : vector<1x2x4xf32> to vector<2x4xf32>
    %68 = vector.shape_cast %65 : vector<2x4xf32> to vector<1x2x4xf32>
    tpu.vector_store %arg7[%c0_46, %c0_47, %c0_48], %68 {strides = array<i32>} : memref<1x2x4xf32, #tpu.memory_space<vmem>>, vector<1x2x4xf32>,
    return
  }
  func.func @transform_0(%arg0: i32, %arg1: i32) -> (i32, i32, i32, i32) {
    %c0_i32 = arith.constant 0 : i32
    %c0_i32_0 = arith.constant 0 : i32
    %c0_i32_1 = arith.constant 0 : i32
    %c0_i32_2 = arith.constant 0 : i32
    return %arg0, %c0_i32, %c0_i32_0, %c0_i32_1 : i32, i32, i32, i32
  }
  func.func @transform_1(%arg0: i32, %arg1: i32) -> (i32, i32) {
    %c0_i32 = arith.constant 0 : i32
    %c0_i32_0 = arith.constant 0 : i32
    %c0_i32_1 = arith.constant 0 : i32
    return %c0_i32, %c0_i32_0 : i32, i32
  }
  func.func @transform_2(%arg0: i32, %arg1: i32) -> (i32, i32) {
    %c0_i32 = arith.constant 0 : i32
    %c0_i32_0 = arith.constant 0 : i32
    %c0_i32_1 = arith.constant 0 : i32
    return %c0_i32, %c0_i32_0 : i32, i32
  }
  func.func @transform_3(%arg0: i32, %arg1: i32) -> (i32, i32) {
    %c0_i32 = arith.constant 0 : i32
    %c0_i32_0 = arith.constant 0 : i32
    %c0_i32_1 = arith.constant 0 : i32
    return %c0_i32, %c0_i32_0 : i32, i32
  }
  func.func @transform_4(%arg0: i32, %arg1: i32) -> (i32, i32, i32, i32) {
    %c0_i32 = arith.constant 0 : i32
    %c0_i32_0 = arith.constant 0 : i32
    %c0_i32_1 = arith.constant 0 : i32
    return %arg0, %arg1, %c0_i32, %c0_i32_0 : i32, i32, i32, i32
  }
  func.func @transform_5(%arg0: i32, %arg1: i32) -> (i32, i32, i32) {
    %c0_i32 = arith.constant 0 : i32
    %c0_i32_0 = arith.constant 0 : i32
    %c0_i32_1 = arith.constant 0 : i32
    return %arg0, %c0_i32, %c0_i32_0 : i32, i32, i32
  }
}

</mosaic_0001>

<llo_original>
// kernel: tile.8
$region0: #{tile.8}
  #allocation0 [shape = 's32[1]{0}', space=sflag, size = 0x4, scoped, tag = 'scoped memory for tile.8']
  %s0 = inlined_call_operand.vmem [shape: f32[4], index: 0, kind: input, shape index: {}]
  %s1 = inlined_call_operand.vmem [shape: f32[4,4], index: 1, kind: output, shape index: {}]
  // Predicated region
  $region2: #{tile.8} parent=0 // pred_check
    _
  $region3: #{tile.8} parent=0 // pred_check_branch
    %3 = sbr.rel (0) target = $region5
  $region4: #{tile.8} parent=0 // pred_region
    _
  $region5: #{tile.8} parent=0 // pred_fallthru
    _
  %v4 = vld [vmem:[%s0] ss:$0 sm:$0xff]
  %5 = vst [vmem:[%s1] sm:$0xf] %v4

// kernel: tile.9
$region0: #{tile.9}
  %s0 = inlined_call_operand.vmem [shape: f32[4,4], index: 0, kind: input, shape index: {}]
  %s1 = inlined_call_operand.vmem [shape: f32[1,16], index: 1, kind: output, shape index: {}]
  $region1: #{tile.9} parent=0
    #allocation0 [shape = 'u8[4096]{0}', space=vmem, size = 0x1000, scoped, tag = 'scoped mem for output reshape']
    #allocation1 [shape = 'u8[4096]{0}', space=vmem, size = 0x1000, scoped, tag = 'scoped mem for input reshape']
    %s3 = sshll.u32 1, 4
    %s4 = ssub.s32 %s3, 1
    %v5 = vld [vmem:[%s0] sm:%s4]
    %6 = vst [vmem:[#allocation1] sm:%s4] %v5
    %v7 = vld [vmem:[#allocation1] sm:$0x1]
    %vm8 = vcmask 31744
    %9 = vst.msk [vmem:[#allocation0] sm:$0x1] %vm8, %v7
    %s10 = scalar_lea.vmem [#allocation1], 3
    %v11 = vld [vmem:[%s10] sm:$0x1]
    %12 = vrot.lane.b32.xlu0 %v11, 12
    %v13 = vpop.permute.xlu0 %12
    %vm14 = vcmask 130144
    %15 = vst.msk [vmem:[#allocation0] sm:$0x1] %vm14, %v13
    %s16 = scalar_lea.vmem [#allocation1], 2
    %v17 = vld [vmem:[%s16] sm:$0x1]
    %18 = vrot.lane.b32.xlu0 %v17, 8
    %v19 = vpop.permute.xlu0 %18
    %vm20 = vcmask 97344
    %21 = vst.msk [vmem:[#allocation0] sm:$0x1] %vm20, %v19
    %s22 = scalar_lea.vmem [#allocation1], 1
    %v23 = vld [vmem:[%s22] sm:$0x1]
    %24 = vrot.lane.b32.xlu0 %v23, 4
    %v25 = vpop.permute.xlu0 %24
    %vm26 = vcmask 64544
    %27 = vst.msk [vmem:[#allocation0] sm:$0x1] %vm26, %v25
    %s29 = sshll.u32 1, 1
    %s30 = ssub.s32 %s29, 1
    %v32 = vld [vmem:[#allocation0] sm:%s30]
    %s33 = sshll.u32 1, 1
    %s34 = ssub.s32 %s33, 1
    %35 = vst [vmem:[%s1] sm:%s34] %v32

// kernel: up_forward.5
$region0: #{up_forward.5}
  #allocation0 [shape = 'u32[]', space=smem, size = 0x4, offset = 0x4, fixed_abs, tag = 'smem constant byte address 0x4 - core index']
  #allocation1 [shape = 'u32[144,128]{1,0:T(1,128)}', space=vmem, size = 0x12000, scoped, tag = 'internal scratch']
  %s0 = inlined_call_operand.vmem [shape: f32[2,16,16,4], index: 0, kind: input, shape index: {}]
  %s1 = inlined_call_operand.vmem [shape: f32[1,4], index: 1, kind: input, shape index: {}]
  %s2 = inlined_call_operand.vmem [shape: f32[1,4], index: 2, kind: input, shape index: {}]
  %s3 = inlined_call_operand.vmem [shape: f32[2,16,16,4], index: 3, kind: output, shape index: {}]
  %s4 = sld [smem:[#allocation0]]
  $region45: #{up_forward.5} parent=0
    _
  %s6 = ssub.s32 1, %s4
  %s7 = scalar_select 0, %s6, %s4
  loop: start=0, step=1, limit=4
  $region2: #{up_forward.5} parent=0 // loop_pre_header
    _
  $region3: #{up_forward.5} parent=0 // loop_header
    %s9 = sphi 0, %s13
    %p10 = scmp.ge.s32.totalorder %s9, 4
    %s16 = sphi 0, %s28
    %s17 = sphi 0, %s24
    %s18 = sphi 0, %s16
    %s19 = sphi 0, %s17
    %s20 = sphi 0, %s18
    %s21 = sphi 0, %s19
    %s33 = sphi 0, %s35
    %s36 = sphi 0, %s33
    %s37 = sphi 0, %s36
    %s53 = sphi 0, %s37
    %s57 = sphi 0, %s57
    %s59 = sphi 0, %s57
    %s60 = sphi 0, %s59
    %s74 = sphi 0, %s60
    %s78 = sphi 0, %s78
    %s80 = sphi 0, %s78
    %s81 = sphi 0, %s80
    %s95 = sphi 0, %s81
    %s103 = sphi 0, %s105
    %s106 = sphi 0, %s103
    %s107 = sphi 0, %s106
    %s123 = sphi 0, %s107
  $region4: #{up_forward.5} parent=0 // loop_header_branch
    %12 = sbr.rel (%p10) target = $region8
  $region5: #{up_forward.5} parent=0 // loop_body
    %s14 = ssub.s32 %s9, 1
    %s15 = ssub.s32 %s9, 2
    %s22 = sadd.s32 1, %s17
    %p23 = scmp.ge.s32.totalorder %s22, 1
    %s24 = scalar_select %p23, 0, %s22
    %s25 = sadd.s32 1, %s16
    %s26 = scalar_select %p23, %s25, %s16
    %p27 = scmp.ge.s32.totalorder %s26, 2
    %s28 = scalar_select %p27, 0, %s26
    %s29 = ssub.s32 %s16, %s28
    %s30 = ssub.s32 %s17, %s24
    %s31 = sor.u32 %s29, %s30
    %p32 = scmp.eq.s32.totalorder %s31, 0
    %s34 = sadd.s32 %s33, 1
    %s35 = scalar_select %p32, %s33, %s34
    %p38 = pneg %p32
    %p39 = scmp.eq.s32.totalorder %s9, 1
    %p40 = por %p38, %p39
    %p41 = scmp.ne.s32.totalorder %s33, %s36
    %p42 = scmp.eq.s32.totalorder %s9, 0
    %p43 = por %p41, %p42
    %p44 = scmp.ne.s32.totalorder %s33, %s36
    %p45 = scmp.eq.s32.totalorder %s14, 1
    %p46 = por %p44, %p45
    %p47 = scmp.ne.s32.totalorder %s36, %s37
    %p48 = scmp.eq.s32.totalorder %s14, 0
    %p49 = por %p47, %p48
    %p50 = scmp.ne.s32.totalorder %s36, %s37
    %p51 = scmp.eq.s32.totalorder %s15, 1
    %p52 = por %p50, %p51
    %p54 = scmp.ne.s32.totalorder %s37, %s53
    %p55 = scmp.eq.s32.totalorder %s15, 0
    %p56 = por %p54, %p55
    %s58 = sadd.s32 %s57, 1
    %p61 = scmp.eq.s32.totalorder %s9, 1
    %p62 = scmp.ne.s32.totalorder %s57, %s59
    %p63 = scmp.eq.s32.totalorder %s9, 0
    %p64 = por %p62, %p63
    %p65 = scmp.ne.s32.totalorder %s57, %s59
    %p66 = scmp.eq.s32.totalorder %s14, 1
    %p67 = por %p65, %p66
    %p68 = scmp.ne.s32.totalorder %s59, %s60
    %p69 = scmp.eq.s32.totalorder %s14, 0
    %p70 = por %p68, %p69
    %p71 = scmp.ne.s32.totalorder %s59, %s60
    %p72 = scmp.eq.s32.totalorder %s15, 1
    %p73 = por %p71, %p72
    %p75 = scmp.ne.s32.totalorder %s60, %s74
    %p76 = scmp.eq.s32.totalorder %s15, 0
    %p77 = por %p75, %p76
    %s79 = sadd.s32 %s78, 1
    %p82 = scmp.eq.s32.totalorder %s9, 1
    %p83 = scmp.ne.s32.totalorder %s78, %s80
    %p84 = scmp.eq.s32.totalorder %s9, 0
    %p85 = por %p83, %p84
    %p86 = scmp.ne.s32.totalorder %s78, %s80
    %p87 = scmp.eq.s32.totalorder %s14, 1
    %p88 = por %p86, %p87
    %p89 = scmp.ne.s32.totalorder %s80, %s81
    %p90 = scmp.eq.s32.totalorder %s14, 0
    %p91 = por %p89, %p90
    %p92 = scmp.ne.s32.totalorder %s80, %s81
    %p93 = scmp.eq.s32.totalorder %s15, 1
    %p94 = por %p92, %p93
    %p96 = scmp.ne.s32.totalorder %s81, %s95
    %p97 = scmp.eq.s32.totalorder %s15, 0
    %p98 = por %p96, %p97
    %s99 = ssub.s32 %s16, %s28
    %s100 = ssub.s32 %s17, %s24
    %s101 = sor.u32 %s99, %s100
    %p102 = scmp.eq.s32.totalorder %s101, 0
    %s104 = sadd.s32 %s103, 1
    %s105 = scalar_select %p102, %s103, %s104
    %p108 = pneg %p102
    %p109 = scmp.eq.s32.totalorder %s9, 1
    %p110 = por %p108, %p109
    %p111 = scmp.ne.s32.totalorder %s103, %s106
    %p112 = scmp.eq.s32.totalorder %s9, 0
    %p113 = por %p111, %p112
    %p114 = scmp.ne.s32.totalorder %s103, %s106
    %p115 = scmp.eq.s32.totalorder %s14, 1
    %p116 = por %p114, %p115
    %p117 = scmp.ne.s32.totalorder %s106, %s107
    %p118 = scmp.eq.s32.totalorder %s14, 0
    %p119 = por %p117, %p118
    %p120 = scmp.ne.s32.totalorder %s106, %s107
    %p121 = scmp.eq.s32.totalorder %s15, 1
    %p122 = por %p120, %p121
    %p124 = scmp.ne.s32.totalorder %s107, %s123
    %p125 = scmp.eq.s32.totalorder %s15, 0
    %p126 = por %p124, %p125
    %p127 = scmp.le.s32.totalorder 1, %s9
    %p128 = scmp.lt.s32.totalorder %s9, 3
    %p129 = pnand %p127, %p128
    %p130 = pneg %p129
    // Predicated region
    $region9: #{up_forward.5} parent=5 // pred_check
      _
    $region10: #{up_forward.5} parent=5 // pred_check_branch
      %132 = sbr.rel (%p129) target = $region12
    $region11: #{up_forward.5} parent=5 // pred_region
      %s133 = ssub.s32 %s9, 1
      // Predicated region
      $region13: #{up_forward.5} parent=11 // pred_check
        %p134 = pneg %p70
      $region14: #{up_forward.5} parent=11 // pred_check_branch
        %136 = sbr.rel (%p134) target = $region16
      $region15: #{up_forward.5} parent=11 // pred_region
        _
      $region16: #{up_forward.5} parent=11 // pred_fallthru
        _
      // Predicated region
      $region17: #{up_forward.5} parent=11 // pred_check
        %p137 = pneg %p91
      $region18: #{up_forward.5} parent=11 // pred_check_branch
        %139 = sbr.rel (%p137) target = $region20
      $region19: #{up_forward.5} parent=11 // pred_region
        _
      $region20: #{up_forward.5} parent=11 // pred_fallthru
        _
    $region12: #{up_forward.5} parent=5 // pred_fallthru
      _
    %p140 = scmp.lt.s32.totalorder %s9, 2
    // Predicated region
    $region21: #{up_forward.5} parent=5 // pred_check
      %p141 = pneg %p140
    $region22: #{up_forward.5} parent=5 // pred_check_branch
      %143 = sbr.rel (%p141) target = $region24
    $region23: #{up_forward.5} parent=5 // pred_region
      // Predicated region
      $region25: #{up_forward.5} parent=23 // pred_check
        %p144 = pneg %p43
      $region26: #{up_forward.5} parent=23 // pred_check_branch
        %146 = sbr.rel (%p144) target = $region28
      $region27: #{up_forward.5} parent=23 // pred_region
        %s147 = smul.u32 16, %s17
        %p148 = scmp.lt.s32.totalorder %s16, 1
        %s149 = scalar_select %p148, %s16, 1
        %p150 = scmp.lt.s32.totalorder %s147, 15
        %s151 = scalar_select %p150, %s147, 15
        %s152 = smul.addr %s151, 2
        %s153 = smul.addr %s149, 32
        %s154 = sadd.s32 %s152, %s153
        %s155 = smul.addr %s154, 8
        %s156 = scalar_lea.vmem %s0, %s155
        %s157 = smul.u32 16, %s17
      $region28: #{up_forward.5} parent=23 // pred_fallthru
        _
    $region24: #{up_forward.5} parent=5 // pred_fallthru
      _
    %p158 = scmp.le.s32.totalorder 1, %s9
    %p159 = scmp.lt.s32.totalorder %s9, 3
    %p160 = pnand %p158, %p159
    %p161 = pneg %p160
    // Predicated region
    $region29: #{up_forward.5} parent=5 // pred_check
      _
    $region30: #{up_forward.5} parent=5 // pred_check_branch
      %163 = sbr.rel (%p160) target = $region32
    $region31: #{up_forward.5} parent=5 // pred_region
      %s164 = ssub.s32 %s9, 1
      %s165 = smul.u32 16, %s19
      %p166 = scmp.lt.s32.totalorder %s18, 1
      %s167 = scalar_select %p166, %s18, 1
      %p168 = scmp.lt.s32.totalorder %s165, 15
      %s169 = scalar_select %p168, %s165, 15
      %s170 = smul.addr %s169, 2
      %s171 = smul.addr %s167, 32
      %s172 = sadd.s32 %s170, %s171
      %s173 = smul.addr %s172, 8
      %s174 = scalar_lea.vmem %s0, %s173
      %p175 = pneg %p49
      %p176 = pneg %p46
      %p177 = pneg %p70
      %p178 = pneg %p67
      %p179 = pneg %p91
      %p180 = pneg %p88
      %p181 = pneg %p119
      %p182 = pneg %p116
      %s183 = smul.u32 16, %s19
      %p184 = scmp.lt.s32.totalorder %s18, 1
      %s185 = scalar_select %p184, %s18, 1
      %p186 = scmp.lt.s32.totalorder %s183, 15
      %s187 = scalar_select %p186, %s183, 15
      %s188 = smul.addr %s187, 2
      %s189 = smul.addr %s185, 32
      %s190 = sadd.s32 %s188, %s189
      %s191 = smul.addr %s190, 8
      %s192 = scalar_lea.vmem %s3, %s191
      %s193 = smul.u32 16, %s19
      %p194 = scmp.lt.s32.totalorder %s18, 1
      %s195 = scalar_select %p194, %s18, 1
      %p196 = scmp.lt.s32.totalorder %s193, 15
      %s197 = scalar_select %p196, %s193, 15
      %s198 = smul.addr %s197, 2
      %s199 = smul.addr %s195, 32
      %s200 = sadd.s32 %s198, %s199
      %s201 = smul.addr %s200, 8
      %s202 = scalar_lea.vmem %s0, %s201
      %s203 = smul.u32 16, %s19
      %s204 = smul.u32 16, %s19
      %p205 = scmp.lt.s32.totalorder %s18, 1
      %s206 = scalar_select %p205, %s18, 1
      %p207 = scmp.lt.s32.totalorder %s204, 15
      %s208 = scalar_select %p207, %s204, 15
      %s209 = smul.addr %s208, 2
      %s210 = smul.addr %s206, 32
      %s211 = sadd.s32 %s209, %s210
      %s212 = smul.addr %s211, 8
      %s213 = scalar_lea.vmem %s3, %s212
      %s214 = smul.u32 16, %s19
      %v215 = vld [vmem:[%s202] sm:$0xff]
      %v216 = vld [vmem:[%s202 + $0x8] sm:$0xff]
      %v217 = vld [vmem:[%s202 + $0x10] sm:$0xff]
      %v218 = vld [vmem:[%s202 + $0x18] sm:$0xff]
      %v219 = vld [vmem:[%s202 + $0x20] sm:$0xff]
      %v220 = vld [vmem:[%s202 + $0x28] sm:$0xff]
      %v221 = vld [vmem:[%s202 + $0x30] sm:$0xff]
      %v222 = vld [vmem:[%s202 + $0x38] sm:$0xff]
      %v223 = vld [vmem:[%s202 + $0x40] sm:$0xff]
      %v224 = vld [vmem:[%s202 + $0x48] sm:$0xff]
      %v225 = vld [vmem:[%s202 + $0x50] sm:$0xff]
      %v226 = vld [vmem:[%s202 + $0x58] sm:$0xff]
      %v227 = vld [vmem:[%s202 + $0x60] sm:$0xff]
      %v228 = vld [vmem:[%s202 + $0x68] sm:$0xff]
      %v229 = vld [vmem:[%s202 + $0x70] sm:$0xff]
      %v230 = vld [vmem:[%s202 + $0x78] sm:$0xff]
      %v231 = vld [vmem:[%s202 + $0x80] sm:$0xff]
      %v232 = vld [vmem:[%s202 + $0x88] sm:$0xff]
      %v233 = vld [vmem:[%s202 + $0x90] sm:$0xff]
      %v234 = vld [vmem:[%s202 + $0x98] sm:$0xff]
      %v235 = vld [vmem:[%s202 + $0xa0] sm:$0xff]
      %v236 = vld [vmem:[%s202 + $0xa8] sm:$0xff]
      %v237 = vld [vmem:[%s202 + $0xb0] sm:$0xff]
      %v238 = vld [vmem:[%s202 + $0xb8] sm:$0xff]
      %v239 = vld [vmem:[%s202 + $0xc0] sm:$0xff]
      %v240 = vld [vmem:[%s202 + $0xc8] sm:$0xff]
      %v241 = vld [vmem:[%s202 + $0xd0] sm:$0xff]
      %v242 = vld [vmem:[%s202 + $0xd8] sm:$0xff]
      %v243 = vld [vmem:[%s202 + $0xe0] sm:$0xff]
      %v244 = vld [vmem:[%s202 + $0xe8] sm:$0xff]
      %v245 = vld [vmem:[%s202 + $0xf0] sm:$0xff]
      %v246 = vld [vmem:[%s202 + $0xf8] sm:$0xff]
      %v247 = vld [vmem:[%s1] sm:$0x1]
      %v249 = vlaneseq
      %v250 = vshrl.u32 %v249, 7
      %v251 = vsub.s32 0, %v250
      %v252 = vrot.slane %v247, %v251
      %v254 = vmul.f32 %v215, %v252
      %v255 = vmul.f32 %v216, %v252
      %v256 = vmul.f32 %v217, %v252
      %v257 = vmul.f32 %v218, %v252
      %v258 = vmul.f32 %v219, %v252
      %v259 = vmul.f32 %v220, %v252
      %v260 = vmul.f32 %v221, %v252
      %v261 = vmul.f32 %v222, %v252
      %v262 = vmul.f32 %v223, %v252
      %v263 = vmul.f32 %v224, %v252
      %v264 = vmul.f32 %v225, %v252
      %v265 = vmul.f32 %v226, %v252
      %v266 = vmul.f32 %v227, %v252
      %v267 = vmul.f32 %v228, %v252
      %v268 = vmul.f32 %v229, %v252
      %v269 = vmul.f32 %v230, %v252
      %v270 = vmul.f32 %v231, %v252
      %v271 = vmul.f32 %v232, %v252
      %v272 = vmul.f32 %v233, %v252
      %v273 = vmul.f32 %v234, %v252
      %v274 = vmul.f32 %v235, %v252
      %v275 = vmul.f32 %v236, %v252
      %v276 = vmul.f32 %v237, %v252
      %v277 = vmul.f32 %v238, %v252
      %v278 = vmul.f32 %v239, %v252
      %v279 = vmul.f32 %v240, %v252
      %v280 = vmul.f32 %v241, %v252
      %v281 = vmul.f32 %v242, %v252
      %v282 = vmul.f32 %v243, %v252
      %v283 = vmul.f32 %v244, %v252
      %v284 = vmul.f32 %v245, %v252
      %v285 = vmul.f32 %v246, %v252
      %v286 = vld [vmem:[%s2] sm:$0x1]
      %v288 = vlaneseq
      %v289 = vshrl.u32 %v288, 7
      %v290 = vsub.s32 0, %v289
      %v291 = vrot.slane %v286, %v290
      %v293 = vadd.f32 %v254, %v291
      %v294 = vadd.f32 %v255, %v291
      %v295 = vadd.f32 %v256, %v291
      %v296 = vadd.f32 %v257, %v291
      %v297 = vadd.f32 %v258, %v291
      %v298 = vadd.f32 %v259, %v291
      %v299 = vadd.f32 %v260, %v291
      %v300 = vadd.f32 %v261, %v291
      %v301 = vadd.f32 %v262, %v291
      %v302 = vadd.f32 %v263, %v291
      %v303 = vadd.f32 %v264, %v291
      %v304 = vadd.f32 %v265, %v291
      %v305 = vadd.f32 %v266, %v291
      %v306 = vadd.f32 %v267, %v291
      %v307 = vadd.f32 %v268, %v291
      %v308 = vadd.f32 %v269, %v291
      %v309 = vadd.f32 %v270, %v291
      %v310 = vadd.f32 %v271, %v291
      %v311 = vadd.f32 %v272, %v291
      %v312 = vadd.f32 %v273, %v291
      %v313 = vadd.f32 %v274, %v291
      %v314 = vadd.f32 %v275, %v291
      %v315 = vadd.f32 %v276, %v291
      %v316 = vadd.f32 %v277, %v291
      %v317 = vadd.f32 %v278, %v291
      %v318 = vadd.f32 %v279, %v291
      %v319 = vadd.f32 %v280, %v291
      %v320 = vadd.f32 %v281, %v291
      %v321 = vadd.f32 %v282, %v291
      %v322 = vadd.f32 %v283, %v291
      %v323 = vadd.f32 %v284, %v291
      %v324 = vadd.f32 %v285, %v291
      %v325 = vmax.f32 %v293, 0.0
      %v326 = vmax.f32 %v294, 0.0
      %v327 = vmax.f32 %v295, 0.0
      %v328 = vmax.f32 %v296, 0.0
      %v329 = vmax.f32 %v297, 0.0
      %v330 = vmax.f32 %v298, 0.0
      %v331 = vmax.f32 %v299, 0.0
      %v332 = vmax.f32 %v300, 0.0
      %v333 = vmax.f32 %v301, 0.0
      %v334 = vmax.f32 %v302, 0.0
      %v335 = vmax.f32 %v303, 0.0
      %v336 = vmax.f32 %v304, 0.0
      %v337 = vmax.f32 %v305, 0.0
      %v338 = vmax.f32 %v306, 0.0
      %v339 = vmax.f32 %v307, 0.0
      %v340 = vmax.f32 %v308, 0.0
      %v341 = vmax.f32 %v309, 0.0
      %v342 = vmax.f32 %v310, 0.0
      %v343 = vmax.f32 %v311, 0.0
      %v344 = vmax.f32 %v312, 0.0
      %v345 = vmax.f32 %v313, 0.0
      %v346 = vmax.f32 %v314, 0.0
      %v347 = vmax.f32 %v315, 0.0
      %v348 = vmax.f32 %v316, 0.0
      %v349 = vmax.f32 %v317, 0.0
      %v350 = vmax.f32 %v318, 0.0
      %v351 = vmax.f32 %v319, 0.0
      %v352 = vmax.f32 %v320, 0.0
      %v353 = vmax.f32 %v321, 0.0
      %v354 = vmax.f32 %v322, 0.0
      %v355 = vmax.f32 %v323, 0.0
      %v356 = vmax.f32 %v324, 0.0
      %vm357 = vcmask 31744
      %358 = vst.msk [vmem:[%s213] sm:$0xff] %vm357, %v325
      %359 = vst.msk [vmem:[%s213 + $0x8] sm:$0xff] %vm357, %v326
      %360 = vst.msk [vmem:[%s213 + $0x10] sm:$0xff] %vm357, %v327
      %361 = vst.msk [vmem:[%s213 + $0x18] sm:$0xff] %vm357, %v328
      %362 = vst.msk [vmem:[%s213 + $0x20] sm:$0xff] %vm357, %v329
      %363 = vst.msk [vmem:[%s213 + $0x28] sm:$0xff] %vm357, %v330
      %364 = vst.msk [vmem:[%s213 + $0x30] sm:$0xff] %vm357, %v331
      %365 = vst.msk [vmem:[%s213 + $0x38] sm:$0xff] %vm357, %v332
      %366 = vst.msk [vmem:[%s213 + $0x40] sm:$0xff] %vm357, %v333
      %367 = vst.msk [vmem:[%s213 + $0x48] sm:$0xff] %vm357, %v334
      %368 = vst.msk [vmem:[%s213 + $0x50] sm:$0xff] %vm357, %v335
      %369 = vst.msk [vmem:[%s213 + $0x58] sm:$0xff] %vm357, %v336
      %370 = vst.msk [vmem:[%s213 + $0x60] sm:$0xff] %vm357, %v337
      %371 = vst.msk [vmem:[%s213 + $0x68] sm:$0xff] %vm357, %v338
      %372 = vst.msk [vmem:[%s213 + $0x70] sm:$0xff] %vm357, %v339
      %373 = vst.msk [vmem:[%s213 + $0x78] sm:$0xff] %vm357, %v340
      %374 = vst.msk [vmem:[%s213 + $0x80] sm:$0xff] %vm357, %v341
      %375 = vst.msk [vmem:[%s213 + $0x88] sm:$0xff] %vm357, %v342
      %376 = vst.msk [vmem:[%s213 + $0x90] sm:$0xff] %vm357, %v343
      %377 = vst.msk [vmem:[%s213 + $0x98] sm:$0xff] %vm357, %v344
      %378 = vst.msk [vmem:[%s213 + $0xa0] sm:$0xff] %vm357, %v345
      %379 = vst.msk [vmem:[%s213 + $0xa8] sm:$0xff] %vm357, %v346
      %380 = vst.msk [vmem:[%s213 + $0xb0] sm:$0xff] %vm357, %v347
      %381 = vst.msk [vmem:[%s213 + $0xb8] sm:$0xff] %vm357, %v348
      %382 = vst.msk [vmem:[%s213 + $0xc0] sm:$0xff] %vm357, %v349
      %383 = vst.msk [vmem:[%s213 + $0xc8] sm:$0xff] %vm357, %v350
      %384 = vst.msk [vmem:[%s213 + $0xd0] sm:$0xff] %vm357, %v351
      %385 = vst.msk [vmem:[%s213 + $0xd8] sm:$0xff] %vm357, %v352
      %386 = vst.msk [vmem:[%s213 + $0xe0] sm:$0xff] %vm357, %v353
      %387 = vst.msk [vmem:[%s213 + $0xe8] sm:$0xff] %vm357, %v354
      %388 = vst.msk [vmem:[%s213 + $0xf0] sm:$0xff] %vm357, %v355
      %389 = vst.msk [vmem:[%s213 + $0xf8] sm:$0xff] %vm357, %v356
      %s390 = smul.u32 16, %s19
      %p391 = scmp.lt.s32.totalorder %s18, 1
      %s392 = scalar_select %p391, %s18, 1
      %p393 = scmp.lt.s32.totalorder %s390, 15
      %s394 = scalar_select %p393, %s390, 15
      %s395 = smul.addr %s394, 2
      %s396 = smul.addr %s392, 32
      %s397 = sadd.s32 %s395, %s396
      %s398 = smul.addr %s397, 8
      %s399 = scalar_lea.vmem %s3, %s398
      // Predicated region
      $region33: #{up_forward.5} parent=31 // pred_check
        %p400 = pneg %p116
      $region34: #{up_forward.5} parent=31 // pred_check_branch
        %402 = sbr.rel (%p400) target = $region36
      $region35: #{up_forward.5} parent=31 // pred_region
        %s403 = smul.u32 16, %s19
      $region36: #{up_forward.5} parent=31 // pred_fallthru
        _
    $region32: #{up_forward.5} parent=5 // pred_fallthru
      _
    %p404 = scmp.le.s32.totalorder 2, %s9
    // Predicated region
    $region37: #{up_forward.5} parent=5 // pred_check
      %p405 = pneg %p404
    $region38: #{up_forward.5} parent=5 // pred_check_branch
      %407 = sbr.rel (%p405) target = $region40
    $region39: #{up_forward.5} parent=5 // pred_region
      %s408 = ssub.s32 %s9, 2
      // Predicated region
      $region41: #{up_forward.5} parent=39 // pred_check
        %p409 = pneg %p122
      $region42: #{up_forward.5} parent=39 // pred_check_branch
        %411 = sbr.rel (%p409) target = $region44
      $region43: #{up_forward.5} parent=39 // pred_region
        %s412 = smul.u32 16, %s21
        %p413 = scmp.lt.s32.totalorder %s20, 1
        %s414 = scalar_select %p413, %s20, 1
        %p415 = scmp.lt.s32.totalorder %s412, 15
        %s416 = scalar_select %p415, %s412, 15
        %s417 = smul.addr %s416, 2
        %s418 = smul.addr %s414, 32
        %s419 = sadd.s32 %s417, %s418
        %s420 = smul.addr %s419, 8
        %s421 = scalar_lea.vmem %s3, %s420
      $region44: #{up_forward.5} parent=39 // pred_fallthru
        _
    $region40: #{up_forward.5} parent=5 // pred_fallthru
      _
  $region6: #{up_forward.5} parent=0 // loop_footer
    %s13 = sadd.s32 1, %s9
  $region7: #{up_forward.5} parent=0 // loop_footer_branch
    %8 = sbr.rel target = $region3
  $region8: #{up_forward.5} parent=0 // loop_exit
    _

// kernel: up_forward.4
$region0: #{up_forward.4}
  #allocation0 [shape = 'u32[]', space=smem, size = 0x4, offset = 0x4, fixed_abs, tag = 'smem constant byte address 0x4 - core index']
  #allocation1 [shape = 'u32[144,128]{1,0:T(1,128)}', space=vmem, size = 0x12000, scoped, tag = 'internal scratch']
  #allocation2 [shape = 'bf16[18,18,4]{2,1,0:T(8,128)(2,1)}', space=vmem, size = 0x1b000, scoped, tag = 'scratch operand']
  #allocation3 [shape = 'bf16[256,36]{1,0:T(8,128)(2,1)}', space=vmem, size = 0x10000, scoped, tag = 'scratch operand']
  %s0 = inlined_call_operand.vmem [shape: f32[2,16,16,4], index: 0, kind: input, shape index: {}]
  %s1 = inlined_call_operand.vmem [shape: f32[1,4], index: 1, kind: input, shape index: {}]
  %s2 = inlined_call_operand.vmem [shape: f32[1,4], index: 2, kind: input, shape index: {}]
  %s3 = inlined_call_operand.vmem [shape: bf16[36,4], index: 3, kind: input, shape index: {}]
  %s4 = inlined_call_operand.vmem [shape: f32[2,16,16,4], index: 4, kind: output, shape index: {0}]
  %s5 = inlined_call_operand.vmem [shape: f32[2,2,4], index: 5, kind: output, shape index: {1}]
  %6 = xla_tuple %s4, %s5
  %s7 = sld [smem:[#allocation0]]
  $region61: #{up_forward.4} parent=0
    _
  %s9 = ssub.s32 1, %s7
  %s10 = scalar_select 0, %s9, %s7
  loop: start=0, step=1, limit=4
  $region2: #{up_forward.4} parent=0 // loop_pre_header
    _
  $region3: #{up_forward.4} parent=0 // loop_header
    %s12 = sphi 0, %s16
    %p13 = scmp.ge.s32.totalorder %s12, 4
    %s19 = sphi 0, %s31
    %s20 = sphi 0, %s27
    %s21 = sphi 0, %s19
    %s22 = sphi 0, %s20
    %s23 = sphi 0, %s21
    %s24 = sphi 0, %s22
    %s34 = sphi 0, %s36
    %s37 = sphi 0, %s34
    %s38 = sphi 0, %s37
    %s54 = sphi 0, %s38
    %s58 = sphi 0, %s58
    %s60 = sphi 0, %s58
    %s61 = sphi 0, %s60
    %s75 = sphi 0, %s61
    %s79 = sphi 0, %s79
    %s81 = sphi 0, %s79
    %s82 = sphi 0, %s81
    %s96 = sphi 0, %s82
    %s100 = sphi 0, %s100
    %s102 = sphi 0, %s100
    %s103 = sphi 0, %s102
    %s117 = sphi 0, %s103
    %s125 = sphi 0, %s127
    %s128 = sphi 0, %s125
    %s129 = sphi 0, %s128
    %s145 = sphi 0, %s129
    %s151 = sphi 0, %s153
    %s154 = sphi 0, %s151
    %s155 = sphi 0, %s154
    %s171 = sphi 0, %s155
  $region4: #{up_forward.4} parent=0 // loop_header_branch
    %15 = sbr.rel (%p13) target = $region8
  $region5: #{up_forward.4} parent=0 // loop_body
    %s17 = ssub.s32 %s12, 1
    %s18 = ssub.s32 %s12, 2
    %s25 = sadd.s32 1, %s20
    %p26 = scmp.ge.s32.totalorder %s25, 1
    %s27 = scalar_select %p26, 0, %s25
    %s28 = sadd.s32 1, %s19
    %s29 = scalar_select %p26, %s28, %s19
    %p30 = scmp.ge.s32.totalorder %s29, 2
    %s31 = scalar_select %p30, 0, %s29
    %s32 = ssub.s32 %s19, %s31
    %p33 = scmp.eq.s32.totalorder %s32, 0
    %s35 = sadd.s32 %s34, 1
    %s36 = scalar_select %p33, %s34, %s35
    %p39 = pneg %p33
    %p40 = scmp.eq.s32.totalorder %s12, 1
    %p41 = por %p39, %p40
    %p42 = scmp.ne.s32.totalorder %s34, %s37
    %p43 = scmp.eq.s32.totalorder %s12, 0
    %p44 = por %p42, %p43
    %p45 = scmp.ne.s32.totalorder %s34, %s37
    %p46 = scmp.eq.s32.totalorder %s17, 1
    %p47 = por %p45, %p46
    %p48 = scmp.ne.s32.totalorder %s37, %s38
    %p49 = scmp.eq.s32.totalorder %s17, 0
    %p50 = por %p48, %p49
    %p51 = scmp.ne.s32.totalorder %s37, %s38
    %p52 = scmp.eq.s32.totalorder %s18, 1
    %p53 = por %p51, %p52
    %p55 = scmp.ne.s32.totalorder %s38, %s54
    %p56 = scmp.eq.s32.totalorder %s18, 0
    %p57 = por %p55, %p56
    %s59 = sadd.s32 %s58, 1
    %p62 = scmp.eq.s32.totalorder %s12, 1
    %p63 = scmp.ne.s32.totalorder %s58, %s60
    %p64 = scmp.eq.s32.totalorder %s12, 0
    %p65 = por %p63, %p64
    %p66 = scmp.ne.s32.totalorder %s58, %s60
    %p67 = scmp.eq.s32.totalorder %s17, 1
    %p68 = por %p66, %p67
    %p69 = scmp.ne.s32.totalorder %s60, %s61
    %p70 = scmp.eq.s32.totalorder %s17, 0
    %p71 = por %p69, %p70
    %p72 = scmp.ne.s32.totalorder %s60, %s61
    %p73 = scmp.eq.s32.totalorder %s18, 1
    %p74 = por %p72, %p73
    %p76 = scmp.ne.s32.totalorder %s61, %s75
    %p77 = scmp.eq.s32.totalorder %s18, 0
    %p78 = por %p76, %p77
    %s80 = sadd.s32 %s79, 1
    %p83 = scmp.eq.s32.totalorder %s12, 1
    %p84 = scmp.ne.s32.totalorder %s79, %s81
    %p85 = scmp.eq.s32.totalorder %s12, 0
    %p86 = por %p84, %p85
    %p87 = scmp.ne.s32.totalorder %s79, %s81
    %p88 = scmp.eq.s32.totalorder %s17, 1
    %p89 = por %p87, %p88
    %p90 = scmp.ne.s32.totalorder %s81, %s82
    %p91 = scmp.eq.s32.totalorder %s17, 0
    %p92 = por %p90, %p91
    %p93 = scmp.ne.s32.totalorder %s81, %s82
    %p94 = scmp.eq.s32.totalorder %s18, 1
    %p95 = por %p93, %p94
    %p97 = scmp.ne.s32.totalorder %s82, %s96
    %p98 = scmp.eq.s32.totalorder %s18, 0
    %p99 = por %p97, %p98
    %s101 = sadd.s32 %s100, 1
    %p104 = scmp.eq.s32.totalorder %s12, 1
    %p105 = scmp.ne.s32.totalorder %s100, %s102
    %p106 = scmp.eq.s32.totalorder %s12, 0
    %p107 = por %p105, %p106
    %p108 = scmp.ne.s32.totalorder %s100, %s102
    %p109 = scmp.eq.s32.totalorder %s17, 1
    %p110 = por %p108, %p109
    %p111 = scmp.ne.s32.totalorder %s102, %s103
    %p112 = scmp.eq.s32.totalorder %s17, 0
    %p113 = por %p111, %p112
    %p114 = scmp.ne.s32.totalorder %s102, %s103
    %p115 = scmp.eq.s32.totalorder %s18, 1
    %p116 = por %p114, %p115
    %p118 = scmp.ne.s32.totalorder %s103, %s117
    %p119 = scmp.eq.s32.totalorder %s18, 0
    %p120 = por %p118, %p119
    %s121 = ssub.s32 %s19, %s31
    %s122 = ssub.s32 %s20, %s27
    %s123 = sor.u32 %s121, %s122
    %p124 = scmp.eq.s32.totalorder %s123, 0
    %s126 = sadd.s32 %s125, 1
    %s127 = scalar_select %p124, %s125, %s126
    %p130 = pneg %p124
    %p131 = scmp.eq.s32.totalorder %s12, 1
    %p132 = por %p130, %p131
    %p133 = scmp.ne.s32.totalorder %s125, %s128
    %p134 = scmp.eq.s32.totalorder %s12, 0
    %p135 = por %p133, %p134
    %p136 = scmp.ne.s32.totalorder %s125, %s128
    %p137 = scmp.eq.s32.totalorder %s17, 1
    %p138 = por %p136, %p137
    %p139 = scmp.ne.s32.totalorder %s128, %s129
    %p140 = scmp.eq.s32.totalorder %s17, 0
    %p141 = por %p139, %p140
    %p142 = scmp.ne.s32.totalorder %s128, %s129
    %p143 = scmp.eq.s32.totalorder %s18, 1
    %p144 = por %p142, %p143
    %p146 = scmp.ne.s32.totalorder %s129, %s145
    %p147 = scmp.eq.s32.totalorder %s18, 0
    %p148 = por %p146, %p147
    %s149 = ssub.s32 %s19, %s31
    %p150 = scmp.eq.s32.totalorder %s149, 0
    %s152 = sadd.s32 %s151, 1
    %s153 = scalar_select %p150, %s151, %s152
    %p156 = pneg %p150
    %p157 = scmp.eq.s32.totalorder %s12, 1
    %p158 = por %p156, %p157
    %p159 = scmp.ne.s32.totalorder %s151, %s154
    %p160 = scmp.eq.s32.totalorder %s12, 0
    %p161 = por %p159, %p160
    %p162 = scmp.ne.s32.totalorder %s151, %s154
    %p163 = scmp.eq.s32.totalorder %s17, 1
    %p164 = por %p162, %p163
    %p165 = scmp.ne.s32.totalorder %s154, %s155
    %p166 = scmp.eq.s32.totalorder %s17, 0
    %p167 = por %p165, %p166
    %p168 = scmp.ne.s32.totalorder %s154, %s155
    %p169 = scmp.eq.s32.totalorder %s18, 1
    %p170 = por %p168, %p169
    %p172 = scmp.ne.s32.totalorder %s155, %s171
    %p173 = scmp.eq.s32.totalorder %s18, 0
    %p174 = por %p172, %p173
    %p175 = scmp.le.s32.totalorder 1, %s12
    %p176 = scmp.lt.s32.totalorder %s12, 3
    %p177 = pnand %p175, %p176
    %p178 = pneg %p177
    // Predicated region
    $region9: #{up_forward.4} parent=5 // pred_check
      _
    $region10: #{up_forward.4} parent=5 // pred_check_branch
      %180 = sbr.rel (%p177) target = $region12
    $region11: #{up_forward.4} parent=5 // pred_region
      %s181 = ssub.s32 %s12, 1
      // Predicated region
      $region13: #{up_forward.4} parent=11 // pred_check
        %p182 = pneg %p71
      $region14: #{up_forward.4} parent=11 // pred_check_branch
        %184 = sbr.rel (%p182) target = $region16
      $region15: #{up_forward.4} parent=11 // pred_region
        _
      $region16: #{up_forward.4} parent=11 // pred_fallthru
        _
      // Predicated region
      $region17: #{up_forward.4} parent=11 // pred_check
        %p185 = pneg %p92
      $region18: #{up_forward.4} parent=11 // pred_check_branch
        %187 = sbr.rel (%p185) target = $region20
      $region19: #{up_forward.4} parent=11 // pred_region
        _
      $region20: #{up_forward.4} parent=11 // pred_fallthru
        _
      // Predicated region
      $region21: #{up_forward.4} parent=11 // pred_check
        %p188 = pneg %p113
      $region22: #{up_forward.4} parent=11 // pred_check_branch
        %190 = sbr.rel (%p188) target = $region24
      $region23: #{up_forward.4} parent=11 // pred_region
        _
      $region24: #{up_forward.4} parent=11 // pred_fallthru
        _
    $region12: #{up_forward.4} parent=5 // pred_fallthru
      _
    %p191 = scmp.lt.s32.totalorder %s12, 2
    // Predicated region
    $region25: #{up_forward.4} parent=5 // pred_check
      %p192 = pneg %p191
    $region26: #{up_forward.4} parent=5 // pred_check_branch
      %194 = sbr.rel (%p192) target = $region28
    $region27: #{up_forward.4} parent=5 // pred_region
      // Predicated region
      $region29: #{up_forward.4} parent=27 // pred_check
        %p195 = pneg %p44
      $region30: #{up_forward.4} parent=27 // pred_check_branch
        %197 = sbr.rel (%p195) target = $region32
      $region31: #{up_forward.4} parent=27 // pred_region
        %p198 = scmp.lt.s32.totalorder %s19, 1
        %s199 = scalar_select %p198, %s19, 1
        %s200 = smul.addr %s199, 32
        %s201 = smul.addr %s200, 8
        %s202 = scalar_lea.vmem %s0, %s201
      $region32: #{up_forward.4} parent=27 // pred_fallthru
        _
    $region28: #{up_forward.4} parent=5 // pred_fallthru
      _
    %p203 = scmp.le.s32.totalorder 1, %s12
    %p204 = scmp.lt.s32.totalorder %s12, 3
    %p205 = pnand %p203, %p204
    %p206 = pneg %p205
    // Predicated region
    $region33: #{up_forward.4} parent=5 // pred_check
      _
    $region34: #{up_forward.4} parent=5 // pred_check_branch
      %208 = sbr.rel (%p205) target = $region36
    $region35: #{up_forward.4} parent=5 // pred_region
      %s209 = ssub.s32 %s12, 1
      %p210 = scmp.lt.s32.totalorder %s21, 1
      %s211 = scalar_select %p210, %s21, 1
      %s212 = smul.addr %s211, 32
      %s213 = smul.addr %s212, 8
      %s214 = scalar_lea.vmem %s0, %s213
      %p215 = pneg %p50
      %p216 = pneg %p47
      %p217 = pneg %p71
      %p218 = pneg %p68
      %p219 = pneg %p92
      %p220 = pneg %p89
      %p221 = pneg %p113
      %p222 = pneg %p110
      %p223 = pneg %p141
      %p224 = pneg %p138
      %s225 = smul.u32 16, %s22
      %p226 = scmp.lt.s32.totalorder %s21, 1
      %s227 = scalar_select %p226, %s21, 1
      %p228 = scmp.lt.s32.totalorder %s225, 15
      %s229 = scalar_select %p228, %s225, 15
      %s230 = smul.addr %s229, 2
      %s231 = smul.addr %s227, 32
      %s232 = sadd.s32 %s230, %s231
      %s233 = smul.addr %s232, 8
      %s234 = scalar_lea.vmem %s4, %s233
      %p235 = pneg %p167
      %p236 = pneg %p164
      %p237 = scmp.lt.s32.totalorder %s21, 1
      %s238 = scalar_select %p237, %s21, 1
      %s239 = smul.addr %s238, 2
      %s240 = scalar_lea.vmem %s5, %s239
      %p241 = scmp.lt.s32.totalorder %s21, 1
      %s242 = scalar_select %p241, %s21, 1
      %s243 = smul.addr %s242, 32
      %s244 = smul.addr %s243, 8
      %s245 = scalar_lea.vmem %s0, %s244
      %s246 = smul.u32 16, %s22
      %p247 = scmp.lt.s32.totalorder %s21, 1
      %s248 = scalar_select %p247, %s21, 1
      %p249 = scmp.lt.s32.totalorder %s246, 15
      %s250 = scalar_select %p249, %s246, 15
      %s251 = smul.addr %s250, 2
      %s252 = smul.addr %s248, 32
      %s253 = sadd.s32 %s251, %s252
      %s254 = smul.addr %s253, 8
      %s255 = scalar_lea.vmem %s4, %s254
      %s256 = smul.u32 16, %s22
      %p257 = scmp.lt.s32.totalorder %s21, 1
      %s258 = scalar_select %p257, %s21, 1
      %s259 = smul.addr %s258, 2
      %s260 = scalar_lea.vmem %s5, %s259
      %p262 = scmp.eq.s32.totalorder %s22, 0
      // Predicated region
      $region37: #{up_forward.4} parent=35 // pred_check
        %p263 = pneg %p262
      $region38: #{up_forward.4} parent=35 // pred_check_branch
        %265 = sbr.rel (%p263) target = $region40
      $region39: #{up_forward.4} parent=35 // pred_region
        %vm266 = vcmask 27648
        %267 = vst.msk [vmem:[#allocation2] sm:$0xf] %vm266, 0
        %268 = vst.msk [vmem:[#allocation2 + $0x4] sm:$0xf] %vm266, 0
        %vm269 = vcmask 24576
        %270 = vst.msk [vmem:[#allocation2 + $0x8] sm:$0x1] %vm269, 0
        %271 = vst.msk [vmem:[#allocation2 + $0xc] sm:$0xf] %vm266, 0
        %272 = vst.msk [vmem:[#allocation2 + $0x10] sm:$0xf] %vm266, 0
        %273 = vst.msk [vmem:[#allocation2 + $0x14] sm:$0x1] %vm269, 0
        %274 = vst.msk [vmem:[#allocation2 + $0x18] sm:$0xf] %vm266, 0
        %275 = vst.msk [vmem:[#allocation2 + $0x1c] sm:$0xf] %vm266, 0
        %276 = vst.msk [vmem:[#allocation2 + $0x20] sm:$0x1] %vm269, 0
        %277 = vst.msk [vmem:[#allocation2 + $0x24] sm:$0xf] %vm266, 0
        %278 = vst.msk [vmem:[#allocation2 + $0x28] sm:$0xf] %vm266, 0
        %279 = vst.msk [vmem:[#allocation2 + $0x2c] sm:$0x1] %vm269, 0
        %280 = vst.msk [vmem:[#allocation2 + $0x30] sm:$0xf] %vm266, 0
        %281 = vst.msk [vmem:[#allocation2 + $0x34] sm:$0xf] %vm266, 0
        %282 = vst.msk [vmem:[#allocation2 + $0x38] sm:$0x1] %vm269, 0
        %283 = vst.msk [vmem:[#allocation2 + $0x3c] sm:$0xf] %vm266, 0
        %284 = vst.msk [vmem:[#allocation2 + $0x40] sm:$0xf] %vm266, 0
        %285 = vst.msk [vmem:[#allocation2 + $0x44] sm:$0x1] %vm269, 0
        %286 = vst.msk [vmem:[#allocation2 + $0x48] sm:$0xf] %vm266, 0
        %287 = vst.msk [vmem:[#allocation2 + $0x4c] sm:$0xf] %vm266, 0
        %288 = vst.msk [vmem:[#allocation2 + $0x50] sm:$0x1] %vm269, 0
        %289 = vst.msk [vmem:[#allocation2 + $0x54] sm:$0xf] %vm266, 0
        %290 = vst.msk [vmem:[#allocation2 + $0x58] sm:$0xf] %vm266, 0
        %291 = vst.msk [vmem:[#allocation2 + $0x5c] sm:$0x1] %vm269, 0
        %292 = vst.msk [vmem:[#allocation2 + $0x60] sm:$0xf] %vm266, 0
        %293 = vst.msk [vmem:[#allocation2 + $0x64] sm:$0xf] %vm266, 0
        %294 = vst.msk [vmem:[#allocation2 + $0x68] sm:$0x1] %vm269, 0
        %295 = vst.msk [vmem:[#allocation2 + $0x6c] sm:$0xf] %vm266, 0
        %296 = vst.msk [vmem:[#allocation2 + $0x70] sm:$0xf] %vm266, 0
        %297 = vst.msk [vmem:[#allocation2 + $0x74] sm:$0x1] %vm269, 0
        %298 = vst.msk [vmem:[#allocation2 + $0x78] sm:$0xf] %vm266, 0
        %299 = vst.msk [vmem:[#allocation2 + $0x7c] sm:$0xf] %vm266, 0
        %300 = vst.msk [vmem:[#allocation2 + $0x80] sm:$0x1] %vm269, 0
        %301 = vst.msk [vmem:[#allocation2 + $0x84] sm:$0xf] %vm266, 0
        %302 = vst.msk [vmem:[#allocation2 + $0x88] sm:$0xf] %vm266, 0
        %303 = vst.msk [vmem:[#allocation2 + $0x8c] sm:$0x1] %vm269, 0
        %304 = vst.msk [vmem:[#allocation2 + $0x90] sm:$0xf] %vm266, 0
        %305 = vst.msk [vmem:[#allocation2 + $0x94] sm:$0xf] %vm266, 0
        %306 = vst.msk [vmem:[#allocation2 + $0x98] sm:$0x1] %vm269, 0
        %307 = vst.msk [vmem:[#allocation2 + $0x9c] sm:$0xf] %vm266, 0
        %308 = vst.msk [vmem:[#allocation2 + $0xa0] sm:$0xf] %vm266, 0
        %309 = vst.msk [vmem:[#allocation2 + $0xa4] sm:$0x1] %vm269, 0
        %310 = vst.msk [vmem:[#allocation2 + $0xa8] sm:$0xf] %vm266, 0
        %311 = vst.msk [vmem:[#allocation2 + $0xac] sm:$0xf] %vm266, 0
        %312 = vst.msk [vmem:[#allocation2 + $0xb0] sm:$0x1] %vm269, 0
        %313 = vst.msk [vmem:[#allocation2 + $0xb4] sm:$0xf] %vm266, 0
        %314 = vst.msk [vmem:[#allocation2 + $0xb8] sm:$0xf] %vm266, 0
        %315 = vst.msk [vmem:[#allocation2 + $0xbc] sm:$0x1] %vm269, 0
        %316 = vst.msk [vmem:[#allocation2 + $0xc0] sm:$0xf] %vm266, 0
        %317 = vst.msk [vmem:[#allocation2 + $0xc4] sm:$0xf] %vm266, 0
        %318 = vst.msk [vmem:[#allocation2 + $0xc8] sm:$0x1] %vm269, 0
        %319 = vst.msk [vmem:[#allocation2 + $0xcc] sm:$0xf] %vm266, 0
        %320 = vst.msk [vmem:[#allocation2 + $0xd0] sm:$0xf] %vm266, 0
        %321 = vst.msk [vmem:[#allocation2 + $0xd4] sm:$0x1] %vm269, 0
        %v322 = vld [vmem:[%s245] sm:$0xff]
        %v323 = vld [vmem:[%s245 + $0x8] sm:$0xff]
        %v324 = vld [vmem:[%s245 + $0x10] sm:$0xff]
        %v325 = vld [vmem:[%s245 + $0x18] sm:$0xff]
        %v326 = vld [vmem:[%s245 + $0x20] sm:$0xff]
        %v327 = vld [vmem:[%s245 + $0x28] sm:$0xff]
        %v328 = vld [vmem:[%s245 + $0x30] sm:$0xff]
        %v329 = vld [vmem:[%s245 + $0x38] sm:$0xff]
        %v330 = vld [vmem:[%s245 + $0x40] sm:$0xff]
        %v331 = vld [vmem:[%s245 + $0x48] sm:$0xff]
        %v332 = vld [vmem:[%s245 + $0x50] sm:$0xff]
        %v333 = vld [vmem:[%s245 + $0x58] sm:$0xff]
        %v334 = vld [vmem:[%s245 + $0x60] sm:$0xff]
        %v335 = vld [vmem:[%s245 + $0x68] sm:$0xff]
        %v336 = vld [vmem:[%s245 + $0x70] sm:$0xff]
        %v337 = vld [vmem:[%s245 + $0x78] sm:$0xff]
        %v338 = vld [vmem:[%s245 + $0x80] sm:$0xff]
        %v339 = vld [vmem:[%s245 + $0x88] sm:$0xff]
        %v340 = vld [vmem:[%s245 + $0x90] sm:$0xff]
        %v341 = vld [vmem:[%s245 + $0x98] sm:$0xff]
        %v342 = vld [vmem:[%s245 + $0xa0] sm:$0xff]
        %v343 = vld [vmem:[%s245 + $0xa8] sm:$0xff]
        %v344 = vld [vmem:[%s245 + $0xb0] sm:$0xff]
        %v345 = vld [vmem:[%s245 + $0xb8] sm:$0xff]
        %v346 = vld [vmem:[%s245 + $0xc0] sm:$0xff]
        %v347 = vld [vmem:[%s245 + $0xc8] sm:$0xff]
        %v348 = vld [vmem:[%s245 + $0xd0] sm:$0xff]
        %v349 = vld [vmem:[%s245 + $0xd8] sm:$0xff]
        %v350 = vld [vmem:[%s245 + $0xe0] sm:$0xff]
        %v351 = vld [vmem:[%s245 + $0xe8] sm:$0xff]
        %v352 = vld [vmem:[%s245 + $0xf0] sm:$0xff]
        %v353 = vld [vmem:[%s245 + $0xf8] sm:$0xff]
        %v354 = vld [vmem:[%s1] sm:$0x1]
        %v356 = vlaneseq
        %v357 = vshrl.u32 %v356, 7
        %v358 = vsub.s32 0, %v357
        %v359 = vrot.slane %v354, %v358
        %v361 = vmul.f32 %v322, %v359
        %v362 = vmul.f32 %v323, %v359
        %v363 = vmul.f32 %v324, %v359
        %v364 = vmul.f32 %v325, %v359
        %v365 = vmul.f32 %v326, %v359
        %v366 = vmul.f32 %v327, %v359
        %v367 = vmul.f32 %v328, %v359
        %v368 = vmul.f32 %v329, %v359
        %v369 = vmul.f32 %v330, %v359
        %v370 = vmul.f32 %v331, %v359
        %v371 = vmul.f32 %v332, %v359
        %v372 = vmul.f32 %v333, %v359
        %v373 = vmul.f32 %v334, %v359
        %v374 = vmul.f32 %v335, %v359
        %v375 = vmul.f32 %v336, %v359
        %v376 = vmul.f32 %v337, %v359
        %v377 = vmul.f32 %v338, %v359
        %v378 = vmul.f32 %v339, %v359
        %v379 = vmul.f32 %v340, %v359
        %v380 = vmul.f32 %v341, %v359
        %v381 = vmul.f32 %v342, %v359
        %v382 = vmul.f32 %v343, %v359
        %v383 = vmul.f32 %v344, %v359
        %v384 = vmul.f32 %v345, %v359
        %v385 = vmul.f32 %v346, %v359
        %v386 = vmul.f32 %v347, %v359
        %v387 = vmul.f32 %v348, %v359
        %v388 = vmul.f32 %v349, %v359
        %v389 = vmul.f32 %v350, %v359
        %v390 = vmul.f32 %v351, %v359
        %v391 = vmul.f32 %v352, %v359
        %v392 = vmul.f32 %v353, %v359
        %v393 = vld [vmem:[%s2] sm:$0x1]
        %v395 = vlaneseq
        %v396 = vshrl.u32 %v395, 7
        %v397 = vsub.s32 0, %v396
        %v398 = vrot.slane %v393, %v397
        %v400 = vadd.f32 %v361, %v398
        %v401 = vadd.f32 %v362, %v398
        %v402 = vadd.f32 %v363, %v398
        %v403 = vadd.f32 %v364, %v398
        %v404 = vadd.f32 %v365, %v398
        %v405 = vadd.f32 %v366, %v398
        %v406 = vadd.f32 %v367, %v398
        %v407 = vadd.f32 %v368, %v398
        %v408 = vadd.f32 %v369, %v398
        %v409 = vadd.f32 %v370, %v398
        %v410 = vadd.f32 %v371, %v398
        %v411 = vadd.f32 %v372, %v398
        %v412 = vadd.f32 %v373, %v398
        %v413 = vadd.f32 %v374, %v398
        %v414 = vadd.f32 %v375, %v398
        %v415 = vadd.f32 %v376, %v398
        %v416 = vadd.f32 %v377, %v398
        %v417 = vadd.f32 %v378, %v398
        %v418 = vadd.f32 %v379, %v398
        %v419 = vadd.f32 %v380, %v398
        %v420 = vadd.f32 %v381, %v398
        %v421 = vadd.f32 %v382, %v398
        %v422 = vadd.f32 %v383, %v398
        %v423 = vadd.f32 %v384, %v398
        %v424 = vadd.f32 %v385, %v398
        %v425 = vadd.f32 %v386, %v398
        %v426 = vadd.f32 %v387, %v398
        %v427 = vadd.f32 %v388, %v398
        %v428 = vadd.f32 %v389, %v398
        %v429 = vadd.f32 %v390, %v398
        %v430 = vadd.f32 %v391, %v398
        %v431 = vadd.f32 %v392, %v398
        %v432 = vmax.f32 %v400, 0.0
        %v433 = vmax.f32 %v401, 0.0
        %v434 = vmax.f32 %v402, 0.0
        %v435 = vmax.f32 %v403, 0.0
        %v436 = vmax.f32 %v404, 0.0
        %v437 = vmax.f32 %v405, 0.0
        %v438 = vmax.f32 %v406, 0.0
        %v439 = vmax.f32 %v407, 0.0
        %v440 = vmax.f32 %v408, 0.0
        %v441 = vmax.f32 %v409, 0.0
        %v442 = vmax.f32 %v410, 0.0
        %v443 = vmax.f32 %v411, 0.0
        %v444 = vmax.f32 %v412, 0.0
        %v445 = vmax.f32 %v413, 0.0
        %v446 = vmax.f32 %v414, 0.0
        %v447 = vmax.f32 %v415, 0.0
        %v448 = vmax.f32 %v416, 0.0
        %v449 = vmax.f32 %v417, 0.0
        %v450 = vmax.f32 %v418, 0.0
        %v451 = vmax.f32 %v419, 0.0
        %v452 = vmax.f32 %v420, 0.0
        %v453 = vmax.f32 %v421, 0.0
        %v454 = vmax.f32 %v422, 0.0
        %v455 = vmax.f32 %v423, 0.0
        %v456 = vmax.f32 %v424, 0.0
        %v457 = vmax.f32 %v425, 0.0
        %v458 = vmax.f32 %v426, 0.0
        %v459 = vmax.f32 %v427, 0.0
        %v460 = vmax.f32 %v428, 0.0
        %v461 = vmax.f32 %v429, 0.0
        %v462 = vmax.f32 %v430, 0.0
        %v463 = vmax.f32 %v431, 0.0
        %v464 = vpack.c.bf16 %v433, %v432
        %v465 = vpack.c.bf16 %v435, %v434
        %v466 = vpack.c.bf16 %v437, %v436
        %v467 = vpack.c.bf16 %v439, %v438
        %v468 = vpack.c.bf16 %v441, %v440
        %v469 = vpack.c.bf16 %v443, %v442
        %v470 = vpack.c.bf16 %v445, %v444
        %v471 = vpack.c.bf16 %v447, %v446
        %v472 = vpack.c.bf16 %v449, %v448
        %v473 = vpack.c.bf16 %v451, %v450
        %v474 = vpack.c.bf16 %v453, %v452
        %v475 = vpack.c.bf16 %v455, %v454
        %v476 = vpack.c.bf16 %v457, %v456
        %v477 = vpack.c.bf16 %v459, %v458
        %v478 = vpack.c.bf16 %v461, %v460
        %v479 = vpack.c.bf16 %v463, %v462
        %v496 = vunpack.c.l.b16 %v464
        %v497 = vunpack.c.h.b16 %v464
        %v498 = vunpack.c.l.b16 %v465
        %v499 = vunpack.c.h.b16 %v465
        %v500 = vunpack.c.l.b16 %v466
        %v501 = vunpack.c.h.b16 %v466
        %v502 = vunpack.c.l.b16 %v467
        %v503 = vunpack.c.h.b16 %v467
        %v504 = vunpack.c.l.b16 %v468
        %v505 = vunpack.c.h.b16 %v468
        %v506 = vunpack.c.l.b16 %v469
        %v507 = vunpack.c.h.b16 %v469
        %v508 = vunpack.c.l.b16 %v470
        %v509 = vunpack.c.h.b16 %v470
        %v510 = vunpack.c.l.b16 %v471
        %v511 = vunpack.c.h.b16 %v471
        %v512 = vunpack.c.l.b16 %v472
        %v513 = vunpack.c.h.b16 %v472
        %v514 = vunpack.c.l.b16 %v473
        %v515 = vunpack.c.h.b16 %v473
        %v516 = vunpack.c.l.b16 %v474
        %v517 = vunpack.c.h.b16 %v474
        %v518 = vunpack.c.l.b16 %v475
        %v519 = vunpack.c.h.b16 %v475
        %v520 = vunpack.c.l.b16 %v476
        %v521 = vunpack.c.h.b16 %v476
        %v522 = vunpack.c.l.b16 %v477
        %v523 = vunpack.c.h.b16 %v477
        %v524 = vunpack.c.l.b16 %v478
        %v525 = vunpack.c.h.b16 %v478
        %v526 = vunpack.c.l.b16 %v479
        %v527 = vunpack.c.h.b16 %v479
        %v528 = vpack.c.b16 %v496, %v496
        %v529 = vpack.c.b16 %v497, %v497
        %v530 = vpack.c.b16 %v498, %v498
        %v531 = vpack.c.b16 %v499, %v499
        %v532 = vpack.c.b16 %v500, %v500
        %v533 = vpack.c.b16 %v501, %v501
        %v534 = vpack.c.b16 %v502, %v502
        %v535 = vpack.c.b16 %v503, %v503
        %v536 = vpack.c.b16 %v504, %v504
        %v537 = vpack.c.b16 %v505, %v505
        %v538 = vpack.c.b16 %v506, %v506
        %v539 = vpack.c.b16 %v507, %v507
        %v540 = vpack.c.b16 %v508, %v508
        %v541 = vpack.c.b16 %v509, %v509
        %v542 = vpack.c.b16 %v510, %v510
        %v543 = vpack.c.b16 %v511, %v511
        %v544 = vpack.c.b16 %v512, %v512
        %v545 = vpack.c.b16 %v513, %v513
        %v546 = vpack.c.b16 %v514, %v514
        %v547 = vpack.c.b16 %v515, %v515
        %v548 = vpack.c.b16 %v516, %v516
        %v549 = vpack.c.b16 %v517, %v517
        %v550 = vpack.c.b16 %v518, %v518
        %v551 = vpack.c.b16 %v519, %v519
        %v552 = vpack.c.b16 %v520, %v520
        %v553 = vpack.c.b16 %v521, %v521
        %v554 = vpack.c.b16 %v522, %v522
        %v555 = vpack.c.b16 %v523, %v523
        %v556 = vpack.c.b16 %v524, %v524
        %v557 = vpack.c.b16 %v525, %v525
        %v558 = vpack.c.b16 %v526, %v526
        %v559 = vpack.c.b16 %v527, %v527
        %vm560 = vsmask.f32 256
        %vm561 = vsmask.f32 4368
        %vm562 = vmor %vm560, %vm561
        %v564 = vshrl.u32 %v528, 16
        %v566 = vrot.slane %v564, 7
        %v567 = vshll.u32 %v528, 16
        %v569 = vor.u32 %v566, %v567
        %v570 = vrot.slane %v566, 4
        %v572 = vshrl.u32 %v529, 16
        %v574 = vrot.slane %v572, 7
        %v575 = vshll.u32 %v529, 16
        %v577 = vor.u32 %v574, %v575
        %v578 = vsel %vm562, %v570, %v577
        %v579 = vrot.slane %v574, 4
        %v581 = vshrl.u32 %v530, 16
        %v583 = vrot.slane %v581, 7
        %v584 = vshll.u32 %v530, 16
        %v586 = vor.u32 %v583, %v584
        %v587 = vrot.slane %v583, 4
        %v589 = vshrl.u32 %v531, 16
        %v591 = vrot.slane %v589, 7
        %v592 = vshll.u32 %v531, 16
        %v594 = vor.u32 %v591, %v592
        %v595 = vsel %vm562, %v587, %v594
        %v596 = vrot.slane %v591, 4
        %v598 = vshrl.u32 %v532, 16
        %v600 = vrot.slane %v598, 7
        %v601 = vshll.u32 %v532, 16
        %v603 = vor.u32 %v600, %v601
        %v604 = vrot.slane %v600, 4
        %v606 = vshrl.u32 %v533, 16
        %v608 = vrot.slane %v606, 7
        %v609 = vshll.u32 %v533, 16
        %v611 = vor.u32 %v608, %v609
        %v612 = vsel %vm562, %v604, %v611
        %v613 = vrot.slane %v608, 4
        %v615 = vshrl.u32 %v534, 16
        %v617 = vrot.slane %v615, 7
        %v618 = vshll.u32 %v534, 16
        %v620 = vor.u32 %v617, %v618
        %v621 = vrot.slane %v617, 4
        %v623 = vshrl.u32 %v535, 16
        %v625 = vrot.slane %v623, 7
        %v626 = vshll.u32 %v535, 16
        %v628 = vor.u32 %v625, %v626
        %v629 = vsel %vm562, %v621, %v628
        %v630 = vrot.slane %v625, 4
        %v632 = vshrl.u32 %v536, 16
        %v634 = vrot.slane %v632, 7
        %v635 = vshll.u32 %v536, 16
        %v637 = vor.u32 %v634, %v635
        %v638 = vrot.slane %v634, 4
        %v640 = vshrl.u32 %v537, 16
        %v642 = vrot.slane %v640, 7
        %v643 = vshll.u32 %v537, 16
        %v645 = vor.u32 %v642, %v643
        %v646 = vsel %vm562, %v638, %v645
        %v647 = vrot.slane %v642, 4
        %v649 = vshrl.u32 %v538, 16
        %v651 = vrot.slane %v649, 7
        %v652 = vshll.u32 %v538, 16
        %v654 = vor.u32 %v651, %v652
        %v655 = vrot.slane %v651, 4
        %v657 = vshrl.u32 %v539, 16
        %v659 = vrot.slane %v657, 7
        %v660 = vshll.u32 %v539, 16
        %v662 = vor.u32 %v659, %v660
        %v663 = vsel %vm562, %v655, %v662
        %v664 = vrot.slane %v659, 4
        %v666 = vshrl.u32 %v540, 16
        %v668 = vrot.slane %v666, 7
        %v669 = vshll.u32 %v540, 16
        %v671 = vor.u32 %v668, %v669
        %v672 = vrot.slane %v668, 4
        %v674 = vshrl.u32 %v541, 16
        %v676 = vrot.slane %v674, 7
        %v677 = vshll.u32 %v541, 16
        %v679 = vor.u32 %v676, %v677
        %v680 = vsel %vm562, %v672, %v679
        %v681 = vrot.slane %v676, 4
        %v683 = vshrl.u32 %v542, 16
        %v685 = vrot.slane %v683, 7
        %v686 = vshll.u32 %v542, 16
        %v688 = vor.u32 %v685, %v686
        %v689 = vrot.slane %v685, 4
        %v691 = vshrl.u32 %v543, 16
        %v693 = vrot.slane %v691, 7
        %v694 = vshll.u32 %v543, 16
        %v696 = vor.u32 %v693, %v694
        %v697 = vsel %vm562, %v689, %v696
        %v698 = vrot.slane %v693, 4
        %v700 = vshrl.u32 %v544, 16
        %v702 = vrot.slane %v700, 7
        %v703 = vshll.u32 %v544, 16
        %v705 = vor.u32 %v702, %v703
        %v706 = vrot.slane %v702, 4
        %v708 = vshrl.u32 %v545, 16
        %v710 = vrot.slane %v708, 7
        %v711 = vshll.u32 %v545, 16
        %v713 = vor.u32 %v710, %v711
        %v714 = vsel %vm562, %v706, %v713
        %v715 = vrot.slane %v710, 4
        %v717 = vshrl.u32 %v546, 16
        %v719 = vrot.slane %v717, 7
        %v720 = vshll.u32 %v546, 16
        %v722 = vor.u32 %v719, %v720
        %v723 = vrot.slane %v719, 4
        %v725 = vshrl.u32 %v547, 16
        %v727 = vrot.slane %v725, 7
        %v728 = vshll.u32 %v547, 16
        %v730 = vor.u32 %v727, %v728
        %v731 = vsel %vm562, %v723, %v730
        %v732 = vrot.slane %v727, 4
        %v734 = vshrl.u32 %v548, 16
        %v736 = vrot.slane %v734, 7
        %v737 = vshll.u32 %v548, 16
        %v739 = vor.u32 %v736, %v737
        %v740 = vrot.slane %v736, 4
        %v742 = vshrl.u32 %v549, 16
        %v744 = vrot.slane %v742, 7
        %v745 = vshll.u32 %v549, 16
        %v747 = vor.u32 %v744, %v745
        %v748 = vsel %vm562, %v740, %v747
        %v749 = vrot.slane %v744, 4
        %v751 = vshrl.u32 %v550, 16
        %v753 = vrot.slane %v751, 7
        %v754 = vshll.u32 %v550, 16
        %v756 = vor.u32 %v753, %v754
        %v757 = vrot.slane %v753, 4
        %v759 = vshrl.u32 %v551, 16
        %v761 = vrot.slane %v759, 7
        %v762 = vshll.u32 %v551, 16
        %v764 = vor.u32 %v761, %v762
        %v765 = vsel %vm562, %v757, %v764
        %v766 = vrot.slane %v761, 4
        %v768 = vshrl.u32 %v552, 16
        %v770 = vrot.slane %v768, 7
        %v771 = vshll.u32 %v552, 16
        %v773 = vor.u32 %v770, %v771
        %v774 = vrot.slane %v770, 4
        %v776 = vshrl.u32 %v553, 16
        %v778 = vrot.slane %v776, 7
        %v779 = vshll.u32 %v553, 16
        %v781 = vor.u32 %v778, %v779
        %v782 = vsel %vm562, %v774, %v781
        %v783 = vrot.slane %v778, 4
        %v785 = vshrl.u32 %v554, 16
        %v787 = vrot.slane %v785, 7
        %v788 = vshll.u32 %v554, 16
        %v790 = vor.u32 %v787, %v788
        %v791 = vrot.slane %v787, 4
        %v793 = vshrl.u32 %v555, 16
        %v795 = vrot.slane %v793, 7
        %v796 = vshll.u32 %v555, 16
        %v798 = vor.u32 %v795, %v796
        %v799 = vsel %vm562, %v791, %v798
        %v800 = vrot.slane %v795, 4
        %v802 = vshrl.u32 %v556, 16
        %v804 = vrot.slane %v802, 7
        %v805 = vshll.u32 %v556, 16
        %v807 = vor.u32 %v804, %v805
        %v808 = vrot.slane %v804, 4
        %v810 = vshrl.u32 %v557, 16
        %v812 = vrot.slane %v810, 7
        %v813 = vshll.u32 %v557, 16
        %v815 = vor.u32 %v812, %v813
        %v816 = vsel %vm562, %v808, %v815
        %v817 = vrot.slane %v812, 4
        %v819 = vshrl.u32 %v558, 16
        %v821 = vrot.slane %v819, 7
        %v822 = vshll.u32 %v558, 16
        %v824 = vor.u32 %v821, %v822
        %v825 = vrot.slane %v821, 4
        %v827 = vshrl.u32 %v559, 16
        %v829 = vrot.slane %v827, 7
        %v830 = vshll.u32 %v559, 16
        %v832 = vor.u32 %v829, %v830
        %v833 = vsel %vm562, %v825, %v832
        %v834 = vrot.slane %v829, 4
        %s883 = scalar_lea.vmem [#allocation2], 12
        %vm884 = vcmask 27648
        %vm885 = vsmask.f32 7938
        %vm886 = vmand %vm884, %vm885
        %v887 = vld [vmem:[%s883] sm:$0xf]
        %v888 = vsel %vm886, %v569, %v887
        %889 = vst [vmem:[%s883] sm:$0xf] %v888
        %890 = vst.msk [vmem:[%s883 + $0x4] sm:$0xf] %vm266, %v578
        %vm891 = vcmask 24576
        %vm892 = vmand %vm891, %vm560
        %v893 = vld [vmem:[%s883 + $0x8] sm:$0x1]
        %v894 = vsel %vm892, %v579, %v893
        %895 = vst [vmem:[%s883 + $0x8] sm:$0x1] %v894
        %v896 = vld [vmem:[%s883 + $0xc] sm:$0xf]
        %v897 = vsel %vm886, %v586, %v896
        %898 = vst [vmem:[%s883 + $0xc] sm:$0xf] %v897
        %899 = vst.msk [vmem:[%s883 + $0x10] sm:$0xf] %vm266, %v595
        %v900 = vld [vmem:[%s883 + $0x14] sm:$0x1]
        %v901 = vsel %vm892, %v596, %v900
        %902 = vst [vmem:[%s883 + $0x14] sm:$0x1] %v901
        %v903 = vld [vmem:[%s883 + $0x18] sm:$0xf]
        %v904 = vsel %vm886, %v603, %v903
        %905 = vst [vmem:[%s883 + $0x18] sm:$0xf] %v904
        %906 = vst.msk [vmem:[%s883 + $0x1c] sm:$0xf] %vm266, %v612
        %v907 = vld [vmem:[%s883 + $0x20] sm:$0x1]
        %v908 = vsel %vm892, %v613, %v907
        %909 = vst [vmem:[%s883 + $0x20] sm:$0x1] %v908
        %v910 = vld [vmem:[%s883 + $0x24] sm:$0xf]
        %v911 = vsel %vm886, %v620, %v910
        %912 = vst [vmem:[%s883 + $0x24] sm:$0xf] %v911
        %913 = vst.msk [vmem:[%s883 + $0x28] sm:$0xf] %vm266, %v629
        %v914 = vld [vmem:[%s883 + $0x2c] sm:$0x1]
        %v915 = vsel %vm892, %v630, %v914
        %916 = vst [vmem:[%s883 + $0x2c] sm:$0x1] %v915
        %v917 = vld [vmem:[%s883 + $0x30] sm:$0xf]
        %v918 = vsel %vm886, %v637, %v917
        %919 = vst [vmem:[%s883 + $0x30] sm:$0xf] %v918
        %920 = vst.msk [vmem:[%s883 + $0x34] sm:$0xf] %vm266, %v646
        %v921 = vld [vmem:[%s883 + $0x38] sm:$0x1]
        %v922 = vsel %vm892, %v647, %v921
        %923 = vst [vmem:[%s883 + $0x38] sm:$0x1] %v922
        %v924 = vld [vmem:[%s883 + $0x3c] sm:$0xf]
        %v925 = vsel %vm886, %v654, %v924
        %926 = vst [vmem:[%s883 + $0x3c] sm:$0xf] %v925
        %927 = vst.msk [vmem:[%s883 + $0x40] sm:$0xf] %vm266, %v663
        %v928 = vld [vmem:[%s883 + $0x44] sm:$0x1]
        %v929 = vsel %vm892, %v664, %v928
        %930 = vst [vmem:[%s883 + $0x44] sm:$0x1] %v929
        %v931 = vld [vmem:[%s883 + $0x48] sm:$0xf]
        %v932 = vsel %vm886, %v671, %v931
        %933 = vst [vmem:[%s883 + $0x48] sm:$0xf] %v932
        %934 = vst.msk [vmem:[%s883 + $0x4c] sm:$0xf] %vm266, %v680
        %v935 = vld [vmem:[%s883 + $0x50] sm:$0x1]
        %v936 = vsel %vm892, %v681, %v935
        %937 = vst [vmem:[%s883 + $0x50] sm:$0x1] %v936
        %v938 = vld [vmem:[%s883 + $0x54] sm:$0xf]
        %v939 = vsel %vm886, %v688, %v938
        %940 = vst [vmem:[%s883 + $0x54] sm:$0xf] %v939
        %941 = vst.msk [vmem:[%s883 + $0x58] sm:$0xf] %vm266, %v697
        %v942 = vld [vmem:[%s883 + $0x5c] sm:$0x1]
        %v943 = vsel %vm892, %v698, %v942
        %944 = vst [vmem:[%s883 + $0x5c] sm:$0x1] %v943
        %v945 = vld [vmem:[%s883 + $0x60] sm:$0xf]
        %v946 = vsel %vm886, %v705, %v945
        %947 = vst [vmem:[%s883 + $0x60] sm:$0xf] %v946
        %948 = vst.msk [vmem:[%s883 + $0x64] sm:$0xf] %vm266, %v714
        %v949 = vld [vmem:[%s883 + $0x68] sm:$0x1]
        %v950 = vsel %vm892, %v715, %v949
        %951 = vst [vmem:[%s883 + $0x68] sm:$0x1] %v950
        %v952 = vld [vmem:[%s883 + $0x6c] sm:$0xf]
        %v953 = vsel %vm886, %v722, %v952
        %954 = vst [vmem:[%s883 + $0x6c] sm:$0xf] %v953
        %955 = vst.msk [vmem:[%s883 + $0x70] sm:$0xf] %vm266, %v731
        %v956 = vld [vmem:[%s883 + $0x74] sm:$0x1]
        %v957 = vsel %vm892, %v732, %v956
        %958 = vst [vmem:[%s883 + $0x74] sm:$0x1] %v957
        %v959 = vld [vmem:[%s883 + $0x78] sm:$0xf]
        %v960 = vsel %vm886, %v739, %v959
        %961 = vst [vmem:[%s883 + $0x78] sm:$0xf] %v960
        %962 = vst.msk [vmem:[%s883 + $0x7c] sm:$0xf] %vm266, %v748
        %v963 = vld [vmem:[%s883 + $0x80] sm:$0x1]
        %v964 = vsel %vm892, %v749, %v963
        %965 = vst [vmem:[%s883 + $0x80] sm:$0x1] %v964
        %v966 = vld [vmem:[%s883 + $0x84] sm:$0xf]
        %v967 = vsel %vm886, %v756, %v966
        %968 = vst [vmem:[%s883 + $0x84] sm:$0xf] %v967
        %969 = vst.msk [vmem:[%s883 + $0x88] sm:$0xf] %vm266, %v765
        %v970 = vld [vmem:[%s883 + $0x8c] sm:$0x1]
        %v971 = vsel %vm892, %v766, %v970
        %972 = vst [vmem:[%s883 + $0x8c] sm:$0x1] %v971
        %v973 = vld [vmem:[%s883 + $0x90] sm:$0xf]
        %v974 = vsel %vm886, %v773, %v973
        %975 = vst [vmem:[%s883 + $0x90] sm:$0xf] %v974
        %976 = vst.msk [vmem:[%s883 + $0x94] sm:$0xf] %vm266, %v782
        %v977 = vld [vmem:[%s883 + $0x98] sm:$0x1]
        %v978 = vsel %vm892, %v783, %v977
        %979 = vst [vmem:[%s883 + $0x98] sm:$0x1] %v978
        %v980 = vld [vmem:[%s883 + $0x9c] sm:$0xf]
        %v981 = vsel %vm886, %v790, %v980
        %982 = vst [vmem:[%s883 + $0x9c] sm:$0xf] %v981
        %983 = vst.msk [vmem:[%s883 + $0xa0] sm:$0xf] %vm266, %v799
        %v984 = vld [vmem:[%s883 + $0xa4] sm:$0x1]
        %v985 = vsel %vm892, %v800, %v984
        %986 = vst [vmem:[%s883 + $0xa4] sm:$0x1] %v985
        %v987 = vld [vmem:[%s883 + $0xa8] sm:$0xf]
        %v988 = vsel %vm886, %v807, %v987
        %989 = vst [vmem:[%s883 + $0xa8] sm:$0xf] %v988
        %990 = vst.msk [vmem:[%s883 + $0xac] sm:$0xf] %vm266, %v816
        %v991 = vld [vmem:[%s883 + $0xb0] sm:$0x1]
        %v992 = vsel %vm892, %v817, %v991
        %993 = vst [vmem:[%s883 + $0xb0] sm:$0x1] %v992
        %v994 = vld [vmem:[%s883 + $0xb4] sm:$0xf]
        %v995 = vsel %vm886, %v824, %v994
        %996 = vst [vmem:[%s883 + $0xb4] sm:$0xf] %v995
        %997 = vst.msk [vmem:[%s883 + $0xb8] sm:$0xf] %vm266, %v833
        %v998 = vld [vmem:[%s883 + $0xbc] sm:$0x1]
        %v999 = vsel %vm892, %v834, %v998
        %1000 = vst [vmem:[%s883 + $0xbc] sm:$0x1] %v999
        %vm1001 = vcmask 25600
        %1002 = vst.msk [vmem:[%s260] sm:$0x3] %vm1001, 0.0
      $region40: #{up_forward.4} parent=35 // pred_fallthru
        _
      %s1003 = smul.u32 %s22, 16
      %s1004 = smul.u32 %s1003, 3
      %s1005 = smul.addr %s1004, 4
      %s1006 = scalar_lea.vmem [#allocation2], %s1005
      %v1007 = vld [vmem:[%s1006] sm:$0xf]
      %v1008 = vld [vmem:[%s1006 + $0x4] sm:$0xf]
      %v1009 = vld [vmem:[%s1006 + $0xc] sm:$0xf]
      %v1010 = vld [vmem:[%s1006 + $0x10] sm:$0xf]
      %v1011 = vld [vmem:[%s1006 + $0x18] sm:$0xf]
      %v1012 = vld [vmem:[%s1006 + $0x1c] sm:$0xf]
      %v1013 = vld [vmem:[%s1006 + $0x24] sm:$0xf]
      %v1014 = vld [vmem:[%s1006 + $0x28] sm:$0xf]
      %v1015 = vld [vmem:[%s1006 + $0x30] sm:$0xf]
      %v1016 = vld [vmem:[%s1006 + $0x34] sm:$0xf]
      %v1017 = vld [vmem:[%s1006 + $0x3c] sm:$0xf]
      %v1018 = vld [vmem:[%s1006 + $0x40] sm:$0xf]
      %v1019 = vld [vmem:[%s1006 + $0x48] sm:$0xf]
      %v1020 = vld [vmem:[%s1006 + $0x4c] sm:$0xf]
      %v1021 = vld [vmem:[%s1006 + $0x54] sm:$0xf]
      %v1022 = vld [vmem:[%s1006 + $0x58] sm:$0xf]
      %v1023 = vld [vmem:[%s1006 + $0x60] sm:$0xf]
      %v1024 = vld [vmem:[%s1006 + $0x64] sm:$0xf]
      %v1025 = vld [vmem:[%s1006 + $0x6c] sm:$0xf]
      %v1026 = vld [vmem:[%s1006 + $0x70] sm:$0xf]
      %v1027 = vld [vmem:[%s1006 + $0x78] sm:$0xf]
      %v1028 = vld [vmem:[%s1006 + $0x7c] sm:$0xf]
      %v1029 = vld [vmem:[%s1006 + $0x84] sm:$0xf]
      %v1030 = vld [vmem:[%s1006 + $0x88] sm:$0xf]
      %v1031 = vld [vmem:[%s1006 + $0x90] sm:$0xf]
      %v1032 = vld [vmem:[%s1006 + $0x94] sm:$0xf]
      %v1033 = vld [vmem:[%s1006 + $0x9c] sm:$0xf]
      %v1034 = vld [vmem:[%s1006 + $0xa0] sm:$0xf]
      %v1035 = vld [vmem:[%s1006 + $0xa8] sm:$0xf]
      %v1036 = vld [vmem:[%s1006 + $0xac] sm:$0xf]
      %v1037 = vld [vmem:[%s1006 + $0xb4] sm:$0xf]
      %v1038 = vld [vmem:[%s1006 + $0xb8] sm:$0xf]
      %vm1039 = vcmask 27648
      %1040 = vst.msk [vmem:[#allocation3] sm:$0xf] %vm1039, %v1007
      %1041 = vst.msk [vmem:[#allocation3 + $0x4] sm:$0xf] %vm1039, %v1008
      %1042 = vst.msk [vmem:[#allocation3 + $0x8] sm:$0xf] %vm1039, %v1009
      %1043 = vst.msk [vmem:[#allocation3 + $0xc] sm:$0xf] %vm1039, %v1010
      %1044 = vst.msk [vmem:[#allocation3 + $0x10] sm:$0xf] %vm1039, %v1011
      %1045 = vst.msk [vmem:[#allocation3 + $0x14] sm:$0xf] %vm1039, %v1012
      %1046 = vst.msk [vmem:[#allocation3 + $0x18] sm:$0xf] %vm1039, %v1013
      %1047 = vst.msk [vmem:[#allocation3 + $0x1c] sm:$0xf] %vm1039, %v1014
      %1048 = vst.msk [vmem:[#allocation3 + $0x20] sm:$0xf] %vm1039, %v1015
      %1049 = vst.msk [vmem:[#allocation3 + $0x24] sm:$0xf] %vm1039, %v1016
      %1050 = vst.msk [vmem:[#allocation3 + $0x28] sm:$0xf] %vm1039, %v1017
      %1051 = vst.msk [vmem:[#allocation3 + $0x2c] sm:$0xf] %vm1039, %v1018
      %1052 = vst.msk [vmem:[#allocation3 + $0x30] sm:$0xf] %vm1039, %v1019
      %1053 = vst.msk [vmem:[#allocation3 + $0x34] sm:$0xf] %vm1039, %v1020
      %1054 = vst.msk [vmem:[#allocation3 + $0x38] sm:$0xf] %vm1039, %v1021
      %1055 = vst.msk [vmem:[#allocation3 + $0x3c] sm:$0xf] %vm1039, %v1022
      %1056 = vst.msk [vmem:[#allocation3 + $0x40] sm:$0xf] %vm1039, %v1023
      %1057 = vst.msk [vmem:[#allocation3 + $0x44] sm:$0xf] %vm1039, %v1024
      %1058 = vst.msk [vmem:[#allocation3 + $0x48] sm:$0xf] %vm1039, %v1025
      %1059 = vst.msk [vmem:[#allocation3 + $0x4c] sm:$0xf] %vm1039, %v1026
      %1060 = vst.msk [vmem:[#allocation3 + $0x50] sm:$0xf] %vm1039, %v1027
      %1061 = vst.msk [vmem:[#allocation3 + $0x54] sm:$0xf] %vm1039, %v1028
      %1062 = vst.msk [vmem:[#allocation3 + $0x58] sm:$0xf] %vm1039, %v1029
      %1063 = vst.msk [vmem:[#allocation3 + $0x5c] sm:$0xf] %vm1039, %v1030
      %1064 = vst.msk [vmem:[#allocation3 + $0x60] sm:$0xf] %vm1039, %v1031
      %1065 = vst.msk [vmem:[#allocation3 + $0x64] sm:$0xf] %vm1039, %v1032
      %1066 = vst.msk [vmem:[#allocation3 + $0x68] sm:$0xf] %vm1039, %v1033
      %1067 = vst.msk [vmem:[#allocation3 + $0x6c] sm:$0xf] %vm1039, %v1034
      %1068 = vst.msk [vmem:[#allocation3 + $0x70] sm:$0xf] %vm1039, %v1035
      %1069 = vst.msk [vmem:[#allocation3 + $0x74] sm:$0xf] %vm1039, %v1036
      %1070 = vst.msk [vmem:[#allocation3 + $0x78] sm:$0xf] %vm1039, %v1037
      %1071 = vst.msk [vmem:[#allocation3 + $0x7c] sm:$0xf] %vm1039, %v1038
      %v1072 = vld [vmem:[%s1006] sm:$0xf]
      %v1073 = vld [vmem:[%s1006 + $0x4] sm:$0xf]
      %v1074 = vld [vmem:[%s1006 + $0x8] sm:$0x1]
      %v1075 = vld [vmem:[%s1006 + $0xc] sm:$0xf]
      %v1076 = vld [vmem:[%s1006 + $0x10] sm:$0xf]
      %v1077 = vld [vmem:[%s1006 + $0x14] sm:$0x1]
      %v1078 = vld [vmem:[%s1006 + $0x18] sm:$0xf]
      %v1079 = vld [vmem:[%s1006 + $0x1c] sm:$0xf]
      %v1080 = vld [vmem:[%s1006 + $0x20] sm:$0x1]
      %v1081 = vld [vmem:[%s1006 + $0x24] sm:$0xf]
      %v1082 = vld [vmem:[%s1006 + $0x28] sm:$0xf]
      %v1083 = vld [vmem:[%s1006 + $0x2c] sm:$0x1]
      %v1084 = vld [vmem:[%s1006 + $0x30] sm:$0xf]
      %v1085 = vld [vmem:[%s1006 + $0x34] sm:$0xf]
      %v1086 = vld [vmem:[%s1006 + $0x38] sm:$0x1]
      %v1087 = vld [vmem:[%s1006 + $0x3c] sm:$0xf]
      %v1088 = vld [vmem:[%s1006 + $0x40] sm:$0xf]
      %v1089 = vld [vmem:[%s1006 + $0x44] sm:$0x1]
      %v1090 = vld [vmem:[%s1006 + $0x48] sm:$0xf]
      %v1091 = vld [vmem:[%s1006 + $0x4c] sm:$0xf]
      %v1092 = vld [vmem:[%s1006 + $0x50] sm:$0x1]
      %v1093 = vld [vmem:[%s1006 + $0x54] sm:$0xf]
      %v1094 = vld [vmem:[%s1006 + $0x58] sm:$0xf]
      %v1095 = vld [vmem:[%s1006 + $0x5c] sm:$0x1]
      %v1096 = vld [vmem:[%s1006 + $0x60] sm:$0xf]
      %v1097 = vld [vmem:[%s1006 + $0x64] sm:$0xf]
      %v1098 = vld [vmem:[%s1006 + $0x68] sm:$0x1]
      %v1099 = vld [vmem:[%s1006 + $0x6c] sm:$0xf]
      %v1100 = vld [vmem:[%s1006 + $0x70] sm:$0xf]
      %v1101 = vld [vmem:[%s1006 + $0x74] sm:$0x1]
      %v1102 = vld [vmem:[%s1006 + $0x78] sm:$0xf]
      %v1103 = vld [vmem:[%s1006 + $0x7c] sm:$0xf]
      %v1104 = vld [vmem:[%s1006 + $0x80] sm:$0x1]
      %v1105 = vld [vmem:[%s1006 + $0x84] sm:$0xf]
      %v1106 = vld [vmem:[%s1006 + $0x88] sm:$0xf]
      %v1107 = vld [vmem:[%s1006 + $0x8c] sm:$0x1]
      %v1108 = vld [vmem:[%s1006 + $0x90] sm:$0xf]
      %v1109 = vld [vmem:[%s1006 + $0x94] sm:$0xf]
      %v1110 = vld [vmem:[%s1006 + $0x98] sm:$0x1]
      %v1111 = vld [vmem:[%s1006 + $0x9c] sm:$0xf]
      %v1112 = vld [vmem:[%s1006 + $0xa0] sm:$0xf]
      %v1113 = vld [vmem:[%s1006 + $0xa4] sm:$0x1]
      %v1114 = vld [vmem:[%s1006 + $0xa8] sm:$0xf]
      %v1115 = vld [vmem:[%s1006 + $0xac] sm:$0xf]
      %v1116 = vld [vmem:[%s1006 + $0xb0] sm:$0x1]
      %v1117 = vld [vmem:[%s1006 + $0xb4] sm:$0xf]
      %v1118 = vld [vmem:[%s1006 + $0xb8] sm:$0xf]
      %v1119 = vld [vmem:[%s1006 + $0xbc] sm:$0x1]
      %vm1120 = vsmask.f32 3328
      %vm1121 = vsmask.f32 7440
      %vm1122 = vmor %vm1120, %vm1121
      %v1124 = vshrl.u32 %v1072, 16
      %v1126 = vrot.slane %v1124, 4
      %v1127 = vshll.u32 %v1072, 16
      %v1129 = vrot.slane %v1127, 5
      %v1130 = vor.u32 %v1126, %v1129
      %v1131 = vrot.slane %v1130, 4
      %v1133 = vshll.u32 %v1073, 16
      %v1135 = vrot.slane %v1133, 5
      %v1136 = vsel %vm1122, %v1131, %v1135
      %v1137 = vshrl.u32 %v1073, 16
      %v1139 = vrot.slane %v1137, 4
      %v1140 = vor.u32 %v1139, %v1135
      %v1141 = vrot.slane %v1140, 4
      %v1143 = vshll.u32 %v1074, 16
      %v1145 = vrot.slane %v1143, 5
      %v1146 = vsel %vm1122, %v1141, %v1145
      %v1148 = vshrl.u32 %v1075, 16
      %v1150 = vrot.slane %v1148, 4
      %v1151 = vshll.u32 %v1075, 16
      %v1153 = vrot.slane %v1151, 5
      %v1154 = vor.u32 %v1150, %v1153
      %v1155 = vrot.slane %v1154, 4
      %v1157 = vshll.u32 %v1076, 16
      %v1159 = vrot.slane %v1157, 5
      %v1160 = vsel %vm1122, %v1155, %v1159
      %v1161 = vshrl.u32 %v1076, 16
      %v1163 = vrot.slane %v1161, 4
      %v1164 = vor.u32 %v1163, %v1159
      %v1165 = vrot.slane %v1164, 4
      %v1167 = vshll.u32 %v1077, 16
      %v1169 = vrot.slane %v1167, 5
      %v1170 = vsel %vm1122, %v1165, %v1169
      %v1172 = vshrl.u32 %v1078, 16
      %v1174 = vrot.slane %v1172, 4
      %v1175 = vshll.u32 %v1078, 16
      %v1177 = vrot.slane %v1175, 5
      %v1178 = vor.u32 %v1174, %v1177
      %v1179 = vrot.slane %v1178, 4
      %v1181 = vshll.u32 %v1079, 16
      %v1183 = vrot.slane %v1181, 5
      %v1184 = vsel %vm1122, %v1179, %v1183
      %v1185 = vshrl.u32 %v1079, 16
      %v1187 = vrot.slane %v1185, 4
      %v1188 = vor.u32 %v1187, %v1183
      %v1189 = vrot.slane %v1188, 4
      %v1191 = vshll.u32 %v1080, 16
      %v1193 = vrot.slane %v1191, 5
      %v1194 = vsel %vm1122, %v1189, %v1193
      %v1196 = vshrl.u32 %v1081, 16
      %v1198 = vrot.slane %v1196, 4
      %v1199 = vshll.u32 %v1081, 16
      %v1201 = vrot.slane %v1199, 5
      %v1202 = vor.u32 %v1198, %v1201
      %v1203 = vrot.slane %v1202, 4
      %v1205 = vshll.u32 %v1082, 16
      %v1207 = vrot.slane %v1205, 5
      %v1208 = vsel %vm1122, %v1203, %v1207
      %v1209 = vshrl.u32 %v1082, 16
      %v1211 = vrot.slane %v1209, 4
      %v1212 = vor.u32 %v1211, %v1207
      %v1213 = vrot.slane %v1212, 4
      %v1215 = vshll.u32 %v1083, 16
      %v1217 = vrot.slane %v1215, 5
      %v1218 = vsel %vm1122, %v1213, %v1217
      %v1220 = vshrl.u32 %v1084, 16
      %v1222 = vrot.slane %v1220, 4
      %v1223 = vshll.u32 %v1084, 16
      %v1225 = vrot.slane %v1223, 5
      %v1226 = vor.u32 %v1222, %v1225
      %v1227 = vrot.slane %v1226, 4
      %v1229 = vshll.u32 %v1085, 16
      %v1231 = vrot.slane %v1229, 5
      %v1232 = vsel %vm1122, %v1227, %v1231
      %v1233 = vshrl.u32 %v1085, 16
      %v1235 = vrot.slane %v1233, 4
      %v1236 = vor.u32 %v1235, %v1231
      %v1237 = vrot.slane %v1236, 4
      %v1239 = vshll.u32 %v1086, 16
      %v1241 = vrot.slane %v1239, 5
      %v1242 = vsel %vm1122, %v1237, %v1241
      %v1244 = vshrl.u32 %v1087, 16
      %v1246 = vrot.slane %v1244, 4
      %v1247 = vshll.u32 %v1087, 16
      %v1249 = vrot.slane %v1247, 5
      %v1250 = vor.u32 %v1246, %v1249
      %v1251 = vrot.slane %v1250, 4
      %v1253 = vshll.u32 %v1088, 16
      %v1255 = vrot.slane %v1253, 5
      %v1256 = vsel %vm1122, %v1251, %v1255
      %v1257 = vshrl.u32 %v1088, 16
      %v1259 = vrot.slane %v1257, 4
      %v1260 = vor.u32 %v1259, %v1255
      %v1261 = vrot.slane %v1260, 4
      %v1263 = vshll.u32 %v1089, 16
      %v1265 = vrot.slane %v1263, 5
      %v1266 = vsel %vm1122, %v1261, %v1265
      %v1268 = vshrl.u32 %v1090, 16
      %v1270 = vrot.slane %v1268, 4
      %v1271 = vshll.u32 %v1090, 16
      %v1273 = vrot.slane %v1271, 5
      %v1274 = vor.u32 %v1270, %v1273
      %v1275 = vrot.slane %v1274, 4
      %v1277 = vshll.u32 %v1091, 16
      %v1279 = vrot.slane %v1277, 5
      %v1280 = vsel %vm1122, %v1275, %v1279
      %v1281 = vshrl.u32 %v1091, 16
      %v1283 = vrot.slane %v1281, 4
      %v1284 = vor.u32 %v1283, %v1279
      %v1285 = vrot.slane %v1284, 4
      %v1287 = vshll.u32 %v1092, 16
      %v1289 = vrot.slane %v1287, 5
      %v1290 = vsel %vm1122, %v1285, %v1289
      %v1292 = vshrl.u32 %v1093, 16
      %v1294 = vrot.slane %v1292, 4
      %v1295 = vshll.u32 %v1093, 16
      %v1297 = vrot.slane %v1295, 5
      %v1298 = vor.u32 %v1294, %v1297
      %v1299 = vrot.slane %v1298, 4
      %v1301 = vshll.u32 %v1094, 16
      %v1303 = vrot.slane %v1301, 5
      %v1304 = vsel %vm1122, %v1299, %v1303
      %v1305 = vshrl.u32 %v1094, 16
      %v1307 = vrot.slane %v1305, 4
      %v1308 = vor.u32 %v1307, %v1303
      %v1309 = vrot.slane %v1308, 4
      %v1311 = vshll.u32 %v1095, 16
      %v1313 = vrot.slane %v1311, 5
      %v1314 = vsel %vm1122, %v1309, %v1313
      %v1316 = vshrl.u32 %v1096, 16
      %v1318 = vrot.slane %v1316, 4
      %v1319 = vshll.u32 %v1096, 16
      %v1321 = vrot.slane %v1319, 5
      %v1322 = vor.u32 %v1318, %v1321
      %v1323 = vrot.slane %v1322, 4
      %v1325 = vshll.u32 %v1097, 16
      %v1327 = vrot.slane %v1325, 5
      %v1328 = vsel %vm1122, %v1323, %v1327
      %v1329 = vshrl.u32 %v1097, 16
      %v1331 = vrot.slane %v1329, 4
      %v1332 = vor.u32 %v1331, %v1327
      %v1333 = vrot.slane %v1332, 4
      %v1335 = vshll.u32 %v1098, 16
      %v1337 = vrot.slane %v1335, 5
      %v1338 = vsel %vm1122, %v1333, %v1337
      %v1340 = vshrl.u32 %v1099, 16
      %v1342 = vrot.slane %v1340, 4
      %v1343 = vshll.u32 %v1099, 16
      %v1345 = vrot.slane %v1343, 5
      %v1346 = vor.u32 %v1342, %v1345
      %v1347 = vrot.slane %v1346, 4
      %v1349 = vshll.u32 %v1100, 16
      %v1351 = vrot.slane %v1349, 5
      %v1352 = vsel %vm1122, %v1347, %v1351
      %v1353 = vshrl.u32 %v1100, 16
      %v1355 = vrot.slane %v1353, 4
      %v1356 = vor.u32 %v1355, %v1351
      %v1357 = vrot.slane %v1356, 4
      %v1359 = vshll.u32 %v1101, 16
      %v1361 = vrot.slane %v1359, 5
      %v1362 = vsel %vm1122, %v1357, %v1361
      %v1364 = vshrl.u32 %v1102, 16
      %v1366 = vrot.slane %v1364, 4
      %v1367 = vshll.u32 %v1102, 16
      %v1369 = vrot.slane %v1367, 5
      %v1370 = vor.u32 %v1366, %v1369
      %v1371 = vrot.slane %v1370, 4
      %v1373 = vshll.u32 %v1103, 16
      %v1375 = vrot.slane %v1373, 5
      %v1376 = vsel %vm1122, %v1371, %v1375
      %v1377 = vshrl.u32 %v1103, 16
      %v1379 = vrot.slane %v1377, 4
      %v1380 = vor.u32 %v1379, %v1375
      %v1381 = vrot.slane %v1380, 4
      %v1383 = vshll.u32 %v1104, 16
      %v1385 = vrot.slane %v1383, 5
      %v1386 = vsel %vm1122, %v1381, %v1385
      %v1388 = vshrl.u32 %v1105, 16
      %v1390 = vrot.slane %v1388, 4
      %v1391 = vshll.u32 %v1105, 16
      %v1393 = vrot.slane %v1391, 5
      %v1394 = vor.u32 %v1390, %v1393
      %v1395 = vrot.slane %v1394, 4
      %v1397 = vshll.u32 %v1106, 16
      %v1399 = vrot.slane %v1397, 5
      %v1400 = vsel %vm1122, %v1395, %v1399
      %v1401 = vshrl.u32 %v1106, 16
      %v1403 = vrot.slane %v1401, 4
      %v1404 = vor.u32 %v1403, %v1399
      %v1405 = vrot.slane %v1404, 4
      %v1407 = vshll.u32 %v1107, 16
      %v1409 = vrot.slane %v1407, 5
      %v1410 = vsel %vm1122, %v1405, %v1409
      %v1412 = vshrl.u32 %v1108, 16
      %v1414 = vrot.slane %v1412, 4
      %v1415 = vshll.u32 %v1108, 16
      %v1417 = vrot.slane %v1415, 5
      %v1418 = vor.u32 %v1414, %v1417
      %v1419 = vrot.slane %v1418, 4
      %v1421 = vshll.u32 %v1109, 16
      %v1423 = vrot.slane %v1421, 5
      %v1424 = vsel %vm1122, %v1419, %v1423
      %v1425 = vshrl.u32 %v1109, 16
      %v1427 = vrot.slane %v1425, 4
      %v1428 = vor.u32 %v1427, %v1423
      %v1429 = vrot.slane %v1428, 4
      %v1431 = vshll.u32 %v1110, 16
      %v1433 = vrot.slane %v1431, 5
      %v1434 = vsel %vm1122, %v1429, %v1433
      %v1436 = vshrl.u32 %v1111, 16
      %v1438 = vrot.slane %v1436, 4
      %v1439 = vshll.u32 %v1111, 16
      %v1441 = vrot.slane %v1439, 5
      %v1442 = vor.u32 %v1438, %v1441
      %v1443 = vrot.slane %v1442, 4
      %v1445 = vshll.u32 %v1112, 16
      %v1447 = vrot.slane %v1445, 5
      %v1448 = vsel %vm1122, %v1443, %v1447
      %v1449 = vshrl.u32 %v1112, 16
      %v1451 = vrot.slane %v1449, 4
      %v1452 = vor.u32 %v1451, %v1447
      %v1453 = vrot.slane %v1452, 4
      %v1455 = vshll.u32 %v1113, 16
      %v1457 = vrot.slane %v1455, 5
      %v1458 = vsel %vm1122, %v1453, %v1457
      %v1460 = vshrl.u32 %v1114, 16
      %v1462 = vrot.slane %v1460, 4
      %v1463 = vshll.u32 %v1114, 16
      %v1465 = vrot.slane %v1463, 5
      %v1466 = vor.u32 %v1462, %v1465
      %v1467 = vrot.slane %v1466, 4
      %v1469 = vshll.u32 %v1115, 16
      %v1471 = vrot.slane %v1469, 5
      %v1472 = vsel %vm1122, %v1467, %v1471
      %v1473 = vshrl.u32 %v1115, 16
      %v1475 = vrot.slane %v1473, 4
      %v1476 = vor.u32 %v1475, %v1471
      %v1477 = vrot.slane %v1476, 4
      %v1479 = vshll.u32 %v1116, 16
      %v1481 = vrot.slane %v1479, 5
      %v1482 = vsel %vm1122, %v1477, %v1481
      %v1484 = vshrl.u32 %v1117, 16
      %v1486 = vrot.slane %v1484, 4
      %v1487 = vshll.u32 %v1117, 16
      %v1489 = vrot.slane %v1487, 5
      %v1490 = vor.u32 %v1486, %v1489
      %v1491 = vrot.slane %v1490, 4
      %v1493 = vshll.u32 %v1118, 16
      %v1495 = vrot.slane %v1493, 5
      %v1496 = vsel %vm1122, %v1491, %v1495
      %v1497 = vshrl.u32 %v1118, 16
      %v1499 = vrot.slane %v1497, 4
      %v1500 = vor.u32 %v1499, %v1495
      %v1501 = vrot.slane %v1500, 4
      %v1503 = vshll.u32 %v1119, 16
      %v1505 = vrot.slane %v1503, 5
      %v1506 = vsel %vm1122, %v1501, %v1505
      %1507 = vrot.lane.b32.xlu0 %v1136, 4
      %v1508 = vpop.permute.xlu0 %1507
      %1509 = vrot.lane.b32.xlu0 %v1146, 4
      %v1510 = vpop.permute.xlu0 %1509
      %1511 = vrot.lane.b32.xlu0 %v1160, 4
      %v1512 = vpop.permute.xlu0 %1511
      %1513 = vrot.lane.b32.xlu0 %v1170, 4
      %v1514 = vpop.permute.xlu0 %1513
      %1515 = vrot.lane.b32.xlu0 %v1184, 4
      %v1516 = vpop.permute.xlu0 %1515
      %1517 = vrot.lane.b32.xlu0 %v1194, 4
      %v1518 = vpop.permute.xlu0 %1517
      %1519 = vrot.lane.b32.xlu0 %v1208, 4
      %v1520 = vpop.permute.xlu0 %1519
      %1521 = vrot.lane.b32.xlu0 %v1218, 4
      %v1522 = vpop.permute.xlu0 %1521
      %1523 = vrot.lane.b32.xlu0 %v1232, 4
      %v1524 = vpop.permute.xlu0 %1523
      %1525 = vrot.lane.b32.xlu0 %v1242, 4
      %v1526 = vpop.permute.xlu0 %1525
      %1527 = vrot.lane.b32.xlu0 %v1256, 4
      %v1528 = vpop.permute.xlu0 %1527
      %1529 = vrot.lane.b32.xlu0 %v1266, 4
      %v1530 = vpop.permute.xlu0 %1529
      %1531 = vrot.lane.b32.xlu0 %v1280, 4
      %v1532 = vpop.permute.xlu0 %1531
      %1533 = vrot.lane.b32.xlu0 %v1290, 4
      %v1534 = vpop.permute.xlu0 %1533
      %1535 = vrot.lane.b32.xlu0 %v1304, 4
      %v1536 = vpop.permute.xlu0 %1535
      %1537 = vrot.lane.b32.xlu0 %v1314, 4
      %v1538 = vpop.permute.xlu0 %1537
      %1539 = vrot.lane.b32.xlu0 %v1328, 4
      %v1540 = vpop.permute.xlu0 %1539
      %1541 = vrot.lane.b32.xlu0 %v1338, 4
      %v1542 = vpop.permute.xlu0 %1541
      %1543 = vrot.lane.b32.xlu0 %v1352, 4
      %v1544 = vpop.permute.xlu0 %1543
      %1545 = vrot.lane.b32.xlu0 %v1362, 4
      %v1546 = vpop.permute.xlu0 %1545
      %1547 = vrot.lane.b32.xlu0 %v1376, 4
      %v1548 = vpop.permute.xlu0 %1547
      %1549 = vrot.lane.b32.xlu0 %v1386, 4
      %v1550 = vpop.permute.xlu0 %1549
      %1551 = vrot.lane.b32.xlu0 %v1400, 4
      %v1552 = vpop.permute.xlu0 %1551
      %1553 = vrot.lane.b32.xlu0 %v1410, 4
      %v1554 = vpop.permute.xlu0 %1553
      %1555 = vrot.lane.b32.xlu0 %v1424, 4
      %v1556 = vpop.permute.xlu0 %1555
      %1557 = vrot.lane.b32.xlu0 %v1434, 4
      %v1558 = vpop.permute.xlu0 %1557
      %1559 = vrot.lane.b32.xlu0 %v1448, 4
      %v1560 = vpop.permute.xlu0 %1559
      %1561 = vrot.lane.b32.xlu0 %v1458, 4
      %v1562 = vpop.permute.xlu0 %1561
      %1563 = vrot.lane.b32.xlu0 %v1472, 4
      %v1564 = vpop.permute.xlu0 %1563
      %1565 = vrot.lane.b32.xlu0 %v1482, 4
      %v1566 = vpop.permute.xlu0 %1565
      %1567 = vrot.lane.b32.xlu0 %v1496, 4
      %v1568 = vpop.permute.xlu0 %1567
      %1569 = vrot.lane.b32.xlu0 %v1506, 4
      %v1570 = vpop.permute.xlu0 %1569
      %vm1603 = vcmask 60448
      %1604 = vst.msk [vmem:[#allocation3] sm:$0xf] %vm1603, %v1508
      %1605 = vst.msk [vmem:[#allocation3 + $0x4] sm:$0xf] %vm1603, %v1510
      %1606 = vst.msk [vmem:[#allocation3 + $0x8] sm:$0xf] %vm1603, %v1512
      %1607 = vst.msk [vmem:[#allocation3 + $0xc] sm:$0xf] %vm1603, %v1514
      %1608 = vst.msk [vmem:[#allocation3 + $0x10] sm:$0xf] %vm1603, %v1516
      %1609 = vst.msk [vmem:[#allocation3 + $0x14] sm:$0xf] %vm1603, %v1518
      %1610 = vst.msk [vmem:[#allocation3 + $0x18] sm:$0xf] %vm1603, %v1520
      %1611 = vst.msk [vmem:[#allocation3 + $0x1c] sm:$0xf] %vm1603, %v1522
      %1612 = vst.msk [vmem:[#allocation3 + $0x20] sm:$0xf] %vm1603, %v1524
      %1613 = vst.msk [vmem:[#allocation3 + $0x24] sm:$0xf] %vm1603, %v1526
      %1614 = vst.msk [vmem:[#allocation3 + $0x28] sm:$0xf] %vm1603, %v1528
      %1615 = vst.msk [vmem:[#allocation3 + $0x2c] sm:$0xf] %vm1603, %v1530
      %1616 = vst.msk [vmem:[#allocation3 + $0x30] sm:$0xf] %vm1603, %v1532
      %1617 = vst.msk [vmem:[#allocation3 + $0x34] sm:$0xf] %vm1603, %v1534
      %1618 = vst.msk [vmem:[#allocation3 + $0x38] sm:$0xf] %vm1603, %v1536
      %1619 = vst.msk [vmem:[#allocation3 + $0x3c] sm:$0xf] %vm1603, %v1538
      %1620 = vst.msk [vmem:[#allocation3 + $0x40] sm:$0xf] %vm1603, %v1540
      %1621 = vst.msk [vmem:[#allocation3 + $0x44] sm:$0xf] %vm1603, %v1542
      %1622 = vst.msk [vmem:[#allocation3 + $0x48] sm:$0xf] %vm1603, %v1544
      %1623 = vst.msk [vmem:[#allocation3 + $0x4c] sm:$0xf] %vm1603, %v1546
      %1624 = vst.msk [vmem:[#allocation3 + $0x50] sm:$0xf] %vm1603, %v1548
      %1625 = vst.msk [vmem:[#allocation3 + $0x54] sm:$0xf] %vm1603, %v1550
      %1626 = vst.msk [vmem:[#allocation3 + $0x58] sm:$0xf] %vm1603, %v1552
      %1627 = vst.msk [vmem:[#allocation3 + $0x5c] sm:$0xf] %vm1603, %v1554
      %1628 = vst.msk [vmem:[#allocation3 + $0x60] sm:$0xf] %vm1603, %v1556
      %1629 = vst.msk [vmem:[#allocation3 + $0x64] sm:$0xf] %vm1603, %v1558
      %1630 = vst.msk [vmem:[#allocation3 + $0x68] sm:$0xf] %vm1603, %v1560
      %1631 = vst.msk [vmem:[#allocation3 + $0x6c] sm:$0xf] %vm1603, %v1562
      %1632 = vst.msk [vmem:[#allocation3 + $0x70] sm:$0xf] %vm1603, %v1564
      %1633 = vst.msk [vmem:[#allocation3 + $0x74] sm:$0xf] %vm1603, %v1566
      %1634 = vst.msk [vmem:[#allocation3 + $0x78] sm:$0xf] %vm1603, %v1568
      %1635 = vst.msk [vmem:[#allocation3 + $0x7c] sm:$0xf] %vm1603, %v1570
      %v1636 = vld [vmem:[%s1006] sm:$0xe]
      %v1637 = vld [vmem:[%s1006 + $0x4] sm:$0xf]
      %v1638 = vld [vmem:[%s1006 + $0x8] sm:$0x1]
      %v1639 = vld [vmem:[%s1006 + $0xc] sm:$0xe]
      %v1640 = vld [vmem:[%s1006 + $0x10] sm:$0xf]
      %v1641 = vld [vmem:[%s1006 + $0x14] sm:$0x1]
      %v1642 = vld [vmem:[%s1006 + $0x18] sm:$0xe]
      %v1643 = vld [vmem:[%s1006 + $0x1c] sm:$0xf]
      %v1644 = vld [vmem:[%s1006 + $0x20] sm:$0x1]
      %v1645 = vld [vmem:[%s1006 + $0x24] sm:$0xe]
      %v1646 = vld [vmem:[%s1006 + $0x28] sm:$0xf]
      %v1647 = vld [vmem:[%s1006 + $0x2c] sm:$0x1]
      %v1648 = vld [vmem:[%s1006 + $0x30] sm:$0xe]
      %v1649 = vld [vmem:[%s1006 + $0x34] sm:$0xf]
      %v1650 = vld [vmem:[%s1006 + $0x38] sm:$0x1]
      %v1651 = vld [vmem:[%s1006 + $0x3c] sm:$0xe]
      %v1652 = vld [vmem:[%s1006 + $0x40] sm:$0xf]
      %v1653 = vld [vmem:[%s1006 + $0x44] sm:$0x1]
      %v1654 = vld [vmem:[%s1006 + $0x48] sm:$0xe]
      %v1655 = vld [vmem:[%s1006 + $0x4c] sm:$0xf]
      %v1656 = vld [vmem:[%s1006 + $0x50] sm:$0x1]
      %v1657 = vld [vmem:[%s1006 + $0x54] sm:$0xe]
      %v1658 = vld [vmem:[%s1006 + $0x58] sm:$0xf]
      %v1659 = vld [vmem:[%s1006 + $0x5c] sm:$0x1]
      %v1660 = vld [vmem:[%s1006 + $0x60] sm:$0xe]
      %v1661 = vld [vmem:[%s1006 + $0x64] sm:$0xf]
      %v1662 = vld [vmem:[%s1006 + $0x68] sm:$0x1]
      %v1663 = vld [vmem:[%s1006 + $0x6c] sm:$0xe]
      %v1664 = vld [vmem:[%s1006 + $0x70] sm:$0xf]
      %v1665 = vld [vmem:[%s1006 + $0x74] sm:$0x1]
      %v1666 = vld [vmem:[%s1006 + $0x78] sm:$0xe]
      %v1667 = vld [vmem:[%s1006 + $0x7c] sm:$0xf]
      %v1668 = vld [vmem:[%s1006 + $0x80] sm:$0x1]
      %v1669 = vld [vmem:[%s1006 + $0x84] sm:$0xe]
      %v1670 = vld [vmem:[%s1006 + $0x88] sm:$0xf]
      %v1671 = vld [vmem:[%s1006 + $0x8c] sm:$0x1]
      %v1672 = vld [vmem:[%s1006 + $0x90] sm:$0xe]
      %v1673 = vld [vmem:[%s1006 + $0x94] sm:$0xf]
      %v1674 = vld [vmem:[%s1006 + $0x98] sm:$0x1]
      %v1675 = vld [vmem:[%s1006 + $0x9c] sm:$0xe]
      %v1676 = vld [vmem:[%s1006 + $0xa0] sm:$0xf]
      %v1677 = vld [vmem:[%s1006 + $0xa4] sm:$0x1]
      %v1678 = vld [vmem:[%s1006 + $0xa8] sm:$0xe]
      %v1679 = vld [vmem:[%s1006 + $0xac] sm:$0xf]
      %v1680 = vld [vmem:[%s1006 + $0xb0] sm:$0x1]
      %v1681 = vld [vmem:[%s1006 + $0xb4] sm:$0xe]
      %v1682 = vld [vmem:[%s1006 + $0xb8] sm:$0xf]
      %v1683 = vld [vmem:[%s1006 + $0xbc] sm:$0x1]
      %vm1732 = vcmask 1042432
      %vm1733 = vcmask 1046532
      %vm1734 = vmor %vm1732, %vm1733
      %v1735 = vrot.slane %v1636, 5
      %v1736 = vrot.slane %v1735, 4
      %v1737 = vrot.slane %v1637, 5
      %v1738 = vsel %vm1734, %v1736, %v1737
      %v1739 = vrot.slane %v1737, 4
      %v1740 = vrot.slane %v1638, 5
      %v1741 = vsel %vm1734, %v1739, %v1740
      %v1742 = vrot.slane %v1639, 5
      %v1743 = vrot.slane %v1742, 4
      %v1744 = vrot.slane %v1640, 5
      %v1745 = vsel %vm1734, %v1743, %v1744
      %v1746 = vrot.slane %v1744, 4
      %v1747 = vrot.slane %v1641, 5
      %v1748 = vsel %vm1734, %v1746, %v1747
      %v1749 = vrot.slane %v1642, 5
      %v1750 = vrot.slane %v1749, 4
      %v1751 = vrot.slane %v1643, 5
      %v1752 = vsel %vm1734, %v1750, %v1751
      %v1753 = vrot.slane %v1751, 4
      %v1754 = vrot.slane %v1644, 5
      %v1755 = vsel %vm1734, %v1753, %v1754
      %v1756 = vrot.slane %v1645, 5
      %v1757 = vrot.slane %v1756, 4
      %v1758 = vrot.slane %v1646, 5
      %v1759 = vsel %vm1734, %v1757, %v1758
      %v1760 = vrot.slane %v1758, 4
      %v1761 = vrot.slane %v1647, 5
      %v1762 = vsel %vm1734, %v1760, %v1761
      %v1763 = vrot.slane %v1648, 5
      %v1764 = vrot.slane %v1763, 4
      %v1765 = vrot.slane %v1649, 5
      %v1766 = vsel %vm1734, %v1764, %v1765
      %v1767 = vrot.slane %v1765, 4
      %v1768 = vrot.slane %v1650, 5
      %v1769 = vsel %vm1734, %v1767, %v1768
      %v1770 = vrot.slane %v1651, 5
      %v1771 = vrot.slane %v1770, 4
      %v1772 = vrot.slane %v1652, 5
      %v1773 = vsel %vm1734, %v1771, %v1772
      %v1774 = vrot.slane %v1772, 4
      %v1775 = vrot.slane %v1653, 5
      %v1776 = vsel %vm1734, %v1774, %v1775
      %v1777 = vrot.slane %v1654, 5
      %v1778 = vrot.slane %v1777, 4
      %v1779 = vrot.slane %v1655, 5
      %v1780 = vsel %vm1734, %v1778, %v1779
      %v1781 = vrot.slane %v1779, 4
      %v1782 = vrot.slane %v1656, 5
      %v1783 = vsel %vm1734, %v1781, %v1782
      %v1784 = vrot.slane %v1657, 5
      %v1785 = vrot.slane %v1784, 4
      %v1786 = vrot.slane %v1658, 5
      %v1787 = vsel %vm1734, %v1785, %v1786
      %v1788 = vrot.slane %v1786, 4
      %v1789 = vrot.slane %v1659, 5
      %v1790 = vsel %vm1734, %v1788, %v1789
      %v1791 = vrot.slane %v1660, 5
      %v1792 = vrot.slane %v1791, 4
      %v1793 = vrot.slane %v1661, 5
      %v1794 = vsel %vm1734, %v1792, %v1793
      %v1795 = vrot.slane %v1793, 4
      %v1796 = vrot.slane %v1662, 5
      %v1797 = vsel %vm1734, %v1795, %v1796
      %v1798 = vrot.slane %v1663, 5
      %v1799 = vrot.slane %v1798, 4
      %v1800 = vrot.slane %v1664, 5
      %v1801 = vsel %vm1734, %v1799, %v1800
      %v1802 = vrot.slane %v1800, 4
      %v1803 = vrot.slane %v1665, 5
      %v1804 = vsel %vm1734, %v1802, %v1803
      %v1805 = vrot.slane %v1666, 5
      %v1806 = vrot.slane %v1805, 4
      %v1807 = vrot.slane %v1667, 5
      %v1808 = vsel %vm1734, %v1806, %v1807
      %v1809 = vrot.slane %v1807, 4
      %v1810 = vrot.slane %v1668, 5
      %v1811 = vsel %vm1734, %v1809, %v1810
      %v1812 = vrot.slane %v1669, 5
      %v1813 = vrot.slane %v1812, 4
      %v1814 = vrot.slane %v1670, 5
      %v1815 = vsel %vm1734, %v1813, %v1814
      %v1816 = vrot.slane %v1814, 4
      %v1817 = vrot.slane %v1671, 5
      %v1818 = vsel %vm1734, %v1816, %v1817
      %v1819 = vrot.slane %v1672, 5
      %v1820 = vrot.slane %v1819, 4
      %v1821 = vrot.slane %v1673, 5
      %v1822 = vsel %vm1734, %v1820, %v1821
      %v1823 = vrot.slane %v1821, 4
      %v1824 = vrot.slane %v1674, 5
      %v1825 = vsel %vm1734, %v1823, %v1824
      %v1826 = vrot.slane %v1675, 5
      %v1827 = vrot.slane %v1826, 4
      %v1828 = vrot.slane %v1676, 5
      %v1829 = vsel %vm1734, %v1827, %v1828
      %v1830 = vrot.slane %v1828, 4
      %v1831 = vrot.slane %v1677, 5
      %v1832 = vsel %vm1734, %v1830, %v1831
      %v1833 = vrot.slane %v1678, 5
      %v1834 = vrot.slane %v1833, 4
      %v1835 = vrot.slane %v1679, 5
      %v1836 = vsel %vm1734, %v1834, %v1835
      %v1837 = vrot.slane %v1835, 4
      %v1838 = vrot.slane %v1680, 5
      %v1839 = vsel %vm1734, %v1837, %v1838
      %v1840 = vrot.slane %v1681, 5
      %v1841 = vrot.slane %v1840, 4
      %v1842 = vrot.slane %v1682, 5
      %v1843 = vsel %vm1734, %v1841, %v1842
      %v1844 = vrot.slane %v1842, 4
      %v1845 = vrot.slane %v1683, 5
      %v1846 = vsel %vm1734, %v1844, %v1845
      %1847 = vrot.lane.b32.xlu0 %v1738, 8
      %v1848 = vpop.permute.xlu0 %1847
      %1849 = vrot.lane.b32.xlu0 %v1741, 8
      %v1850 = vpop.permute.xlu0 %1849
      %1851 = vrot.lane.b32.xlu0 %v1745, 8
      %v1852 = vpop.permute.xlu0 %1851
      %1853 = vrot.lane.b32.xlu0 %v1748, 8
      %v1854 = vpop.permute.xlu0 %1853
      %1855 = vrot.lane.b32.xlu0 %v1752, 8
      %v1856 = vpop.permute.xlu0 %1855
      %1857 = vrot.lane.b32.xlu0 %v1755, 8
      %v1858 = vpop.permute.xlu0 %1857
      %1859 = vrot.lane.b32.xlu0 %v1759, 8
      %v1860 = vpop.permute.xlu0 %1859
      %1861 = vrot.lane.b32.xlu0 %v1762, 8
      %v1862 = vpop.permute.xlu0 %1861
      %1863 = vrot.lane.b32.xlu0 %v1766, 8
      %v1864 = vpop.permute.xlu0 %1863
      %1865 = vrot.lane.b32.xlu0 %v1769, 8
      %v1866 = vpop.permute.xlu0 %1865
      %1867 = vrot.lane.b32.xlu0 %v1773, 8
      %v1868 = vpop.permute.xlu0 %1867
      %1869 = vrot.lane.b32.xlu0 %v1776, 8
      %v1870 = vpop.permute.xlu0 %1869
      %1871 = vrot.lane.b32.xlu0 %v1780, 8
      %v1872 = vpop.permute.xlu0 %1871
      %1873 = vrot.lane.b32.xlu0 %v1783, 8
      %v1874 = vpop.permute.xlu0 %1873
      %1875 = vrot.lane.b32.xlu0 %v1787, 8
      %v1876 = vpop.permute.xlu0 %1875
      %1877 = vrot.lane.b32.xlu0 %v1790, 8
      %v1878 = vpop.permute.xlu0 %1877
      %1879 = vrot.lane.b32.xlu0 %v1794, 8
      %v1880 = vpop.permute.xlu0 %1879
      %1881 = vrot.lane.b32.xlu0 %v1797, 8
      %v1882 = vpop.permute.xlu0 %1881
      %1883 = vrot.lane.b32.xlu0 %v1801, 8
      %v1884 = vpop.permute.xlu0 %1883
      %1885 = vrot.lane.b32.xlu0 %v1804, 8
      %v1886 = vpop.permute.xlu0 %1885
      %1887 = vrot.lane.b32.xlu0 %v1808, 8
      %v1888 = vpop.permute.xlu0 %1887
      %1889 = vrot.lane.b32.xlu0 %v1811, 8
      %v1890 = vpop.permute.xlu0 %1889
      %1891 = vrot.lane.b32.xlu0 %v1815, 8
      %v1892 = vpop.permute.xlu0 %1891
      %1893 = vrot.lane.b32.xlu0 %v1818, 8
      %v1894 = vpop.permute.xlu0 %1893
      %1895 = vrot.lane.b32.xlu0 %v1822, 8
      %v1896 = vpop.permute.xlu0 %1895
      %1897 = vrot.lane.b32.xlu0 %v1825, 8
      %v1898 = vpop.permute.xlu0 %1897
      %1899 = vrot.lane.b32.xlu0 %v1829, 8
      %v1900 = vpop.permute.xlu0 %1899
      %1901 = vrot.lane.b32.xlu0 %v1832, 8
      %v1902 = vpop.permute.xlu0 %1901
      %1903 = vrot.lane.b32.xlu0 %v1836, 8
      %v1904 = vpop.permute.xlu0 %1903
      %1905 = vrot.lane.b32.xlu0 %v1839, 8
      %v1906 = vpop.permute.xlu0 %1905
      %1907 = vrot.lane.b32.xlu0 %v1843, 8
      %v1908 = vpop.permute.xlu0 %1907
      %1909 = vrot.lane.b32.xlu0 %v1846, 8
      %v1910 = vpop.permute.xlu0 %1909
      %vm1943 = vcmask 93248
      %1944 = vst.msk [vmem:[#allocation3] sm:$0xf] %vm1943, %v1848
      %1945 = vst.msk [vmem:[#allocation3 + $0x4] sm:$0xf] %vm1943, %v1850
      %1946 = vst.msk [vmem:[#allocation3 + $0x8] sm:$0xf] %vm1943, %v1852
      %1947 = vst.msk [vmem:[#allocation3 + $0xc] sm:$0xf] %vm1943, %v1854
      %1948 = vst.msk [vmem:[#allocation3 + $0x10] sm:$0xf] %vm1943, %v1856
      %1949 = vst.msk [vmem:[#allocation3 + $0x14] sm:$0xf] %vm1943, %v1858
      %1950 = vst.msk [vmem:[#allocation3 + $0x18] sm:$0xf] %vm1943, %v1860
      %1951 = vst.msk [vmem:[#allocation3 + $0x1c] sm:$0xf] %vm1943, %v1862
      %1952 = vst.msk [vmem:[#allocation3 + $0x20] sm:$0xf] %vm1943, %v1864
      %1953 = vst.msk [vmem:[#allocation3 + $0x24] sm:$0xf] %vm1943, %v1866
      %1954 = vst.msk [vmem:[#allocation3 + $0x28] sm:$0xf] %vm1943, %v1868
      %1955 = vst.msk [vmem:[#allocation3 + $0x2c] sm:$0xf] %vm1943, %v1870
      %1956 = vst.msk [vmem:[#allocation3 + $0x30] sm:$0xf] %vm1943, %v1872
      %1957 = vst.msk [vmem:[#allocation3 + $0x34] sm:$0xf] %vm1943, %v1874
      %1958 = vst.msk [vmem:[#allocation3 + $0x38] sm:$0xf] %vm1943, %v1876
      %1959 = vst.msk [vmem:[#allocation3 + $0x3c] sm:$0xf] %vm1943, %v1878
      %1960 = vst.msk [vmem:[#allocation3 + $0x40] sm:$0xf] %vm1943, %v1880
      %1961 = vst.msk [vmem:[#allocation3 + $0x44] sm:$0xf] %vm1943, %v1882
      %1962 = vst.msk [vmem:[#allocation3 + $0x48] sm:$0xf] %vm1943, %v1884
      %1963 = vst.msk [vmem:[#allocation3 + $0x4c] sm:$0xf] %vm1943, %v1886
      %1964 = vst.msk [vmem:[#allocation3 + $0x50] sm:$0xf] %vm1943, %v1888
      %1965 = vst.msk [vmem:[#allocation3 + $0x54] sm:$0xf] %vm1943, %v1890
      %1966 = vst.msk [vmem:[#allocation3 + $0x58] sm:$0xf] %vm1943, %v1892
      %1967 = vst.msk [vmem:[#allocation3 + $0x5c] sm:$0xf] %vm1943, %v1894
      %1968 = vst.msk [vmem:[#allocation3 + $0x60] sm:$0xf] %vm1943, %v1896
      %1969 = vst.msk [vmem:[#allocation3 + $0x64] sm:$0xf] %vm1943, %v1898
      %1970 = vst.msk [vmem:[#allocation3 + $0x68] sm:$0xf] %vm1943, %v1900
      %1971 = vst.msk [vmem:[#allocation3 + $0x6c] sm:$0xf] %vm1943, %v1902
      %1972 = vst.msk [vmem:[#allocation3 + $0x70] sm:$0xf] %vm1943, %v1904
      %1973 = vst.msk [vmem:[#allocation3 + $0x74] sm:$0xf] %vm1943, %v1906
      %1974 = vst.msk [vmem:[#allocation3 + $0x78] sm:$0xf] %vm1943, %v1908
      %1975 = vst.msk [vmem:[#allocation3 + $0x7c] sm:$0xf] %vm1943, %v1910
      %s1976 = sadd.s32 %s1003, 1
      %s1977 = smul.u32 %s1976, 3
      %s1978 = smul.addr %s1977, 4
      %s1979 = scalar_lea.vmem [#allocation2], %s1978
      %v1980 = vld [vmem:[%s1979] sm:$0xf]
      %v1981 = vld [vmem:[%s1979 + $0x4] sm:$0xf]
      %v1982 = vld [vmem:[%s1979 + $0xc] sm:$0xf]
      %v1983 = vld [vmem:[%s1979 + $0x10] sm:$0xf]
      %v1984 = vld [vmem:[%s1979 + $0x18] sm:$0xf]
      %v1985 = vld [vmem:[%s1979 + $0x1c] sm:$0xf]
      %v1986 = vld [vmem:[%s1979 + $0x24] sm:$0xf]
      %v1987 = vld [vmem:[%s1979 + $0x28] sm:$0xf]
      %v1988 = vld [vmem:[%s1979 + $0x30] sm:$0xf]
      %v1989 = vld [vmem:[%s1979 + $0x34] sm:$0xf]
      %v1990 = vld [vmem:[%s1979 + $0x3c] sm:$0xf]
      %v1991 = vld [vmem:[%s1979 + $0x40] sm:$0xf]
      %v1992 = vld [vmem:[%s1979 + $0x48] sm:$0xf]
      %v1993 = vld [vmem:[%s1979 + $0x4c] sm:$0xf]
      %v1994 = vld [vmem:[%s1979 + $0x54] sm:$0xf]
      %v1995 = vld [vmem:[%s1979 + $0x58] sm:$0xf]
      %v1996 = vld [vmem:[%s1979 + $0x60] sm:$0xf]
      %v1997 = vld [vmem:[%s1979 + $0x64] sm:$0xf]
      %v1998 = vld [vmem:[%s1979 + $0x6c] sm:$0xf]
      %v1999 = vld [vmem:[%s1979 + $0x70] sm:$0xf]
      %v2000 = vld [vmem:[%s1979 + $0x78] sm:$0xf]
      %v2001 = vld [vmem:[%s1979 + $0x7c] sm:$0xf]
      %v2002 = vld [vmem:[%s1979 + $0x84] sm:$0xf]
      %v2003 = vld [vmem:[%s1979 + $0x88] sm:$0xf]
      %v2004 = vld [vmem:[%s1979 + $0x90] sm:$0xf]
      %v2005 = vld [vmem:[%s1979 + $0x94] sm:$0xf]
      %v2006 = vld [vmem:[%s1979 + $0x9c] sm:$0xf]
      %v2007 = vld [vmem:[%s1979 + $0xa0] sm:$0xf]
      %v2008 = vld [vmem:[%s1979 + $0xa8] sm:$0xf]
      %v2009 = vld [vmem:[%s1979 + $0xac] sm:$0xf]
      %v2010 = vld [vmem:[%s1979 + $0xb4] sm:$0xf]
      %v2011 = vld [vmem:[%s1979 + $0xb8] sm:$0xf]
      %2044 = vrot.lane.b32.xlu0 %v1980, 12
      %v2045 = vpop.permute.xlu0 %2044
      %2046 = vrot.lane.b32.xlu0 %v1981, 12
      %v2047 = vpop.permute.xlu0 %2046
      %2048 = vrot.lane.b32.xlu0 %v1982, 12
      %v2049 = vpop.permute.xlu0 %2048
      %2050 = vrot.lane.b32.xlu0 %v1983, 12
      %v2051 = vpop.permute.xlu0 %2050
      %2052 = vrot.lane.b32.xlu0 %v1984, 12
      %v2053 = vpop.permute.xlu0 %2052
      %2054 = vrot.lane.b32.xlu0 %v1985, 12
      %v2055 = vpop.permute.xlu0 %2054
      %2056 = vrot.lane.b32.xlu0 %v1986, 12
      %v2057 = vpop.permute.xlu0 %2056
      %2058 = vrot.lane.b32.xlu0 %v1987, 12
      %v2059 = vpop.permute.xlu0 %2058
      %2060 = vrot.lane.b32.xlu0 %v1988, 12
      %v2061 = vpop.permute.xlu0 %2060
      %2062 = vrot.lane.b32.xlu0 %v1989, 12
      %v2063 = vpop.permute.xlu0 %2062
      %2064 = vrot.lane.b32.xlu0 %v1990, 12
      %v2065 = vpop.permute.xlu0 %2064
      %2066 = vrot.lane.b32.xlu0 %v1991, 12
      %v2067 = vpop.permute.xlu0 %2066
      %2068 = vrot.lane.b32.xlu0 %v1992, 12
      %v2069 = vpop.permute.xlu0 %2068
      %2070 = vrot.lane.b32.xlu0 %v1993, 12
      %v2071 = vpop.permute.xlu0 %2070
      %2072 = vrot.lane.b32.xlu0 %v1994, 12
      %v2073 = vpop.permute.xlu0 %2072
      %2074 = vrot.lane.b32.xlu0 %v1995, 12
      %v2075 = vpop.permute.xlu0 %2074
      %2076 = vrot.lane.b32.xlu0 %v1996, 12
      %v2077 = vpop.permute.xlu0 %2076
      %2078 = vrot.lane.b32.xlu0 %v1997, 12
      %v2079 = vpop.permute.xlu0 %2078
      %2080 = vrot.lane.b32.xlu0 %v1998, 12
      %v2081 = vpop.permute.xlu0 %2080
      %2082 = vrot.lane.b32.xlu0 %v1999, 12
      %v2083 = vpop.permute.xlu0 %2082
      %2084 = vrot.lane.b32.xlu0 %v2000, 12
      %v2085 = vpop.permute.xlu0 %2084
      %2086 = vrot.lane.b32.xlu0 %v2001, 12
      %v2087 = vpop.permute.xlu0 %2086
      %2088 = vrot.lane.b32.xlu0 %v2002, 12
      %v2089 = vpop.permute.xlu0 %2088
      %2090 = vrot.lane.b32.xlu0 %v2003, 12
      %v2091 = vpop.permute.xlu0 %2090
      %2092 = vrot.lane.b32.xlu0 %v2004, 12
      %v2093 = vpop.permute.xlu0 %2092
      %2094 = vrot.lane.b32.xlu0 %v2005, 12
      %v2095 = vpop.permute.xlu0 %2094
      %2096 = vrot.lane.b32.xlu0 %v2006, 12
      %v2097 = vpop.permute.xlu0 %2096
      %2098 = vrot.lane.b32.xlu0 %v2007, 12
      %v2099 = vpop.permute.xlu0 %2098
      %2100 = vrot.lane.b32.xlu0 %v2008, 12
      %v2101 = vpop.permute.xlu0 %2100
      %2102 = vrot.lane.b32.xlu0 %v2009, 12
      %v2103 = vpop.permute.xlu0 %2102
      %2104 = vrot.lane.b32.xlu0 %v2010, 12
      %v2105 = vpop.permute.xlu0 %2104
      %2106 = vrot.lane.b32.xlu0 %v2011, 12
      %v2107 = vpop.permute.xlu0 %2106
      %vm2140 = vcmask 126048
      %2141 = vst.msk [vmem:[#allocation3] sm:$0xf] %vm2140, %v2045
      %2142 = vst.msk [vmem:[#allocation3 + $0x4] sm:$0xf] %vm2140, %v2047
      %2143 = vst.msk [vmem:[#allocation3 + $0x8] sm:$0xf] %vm2140, %v2049
      %2144 = vst.msk [vmem:[#allocation3 + $0xc] sm:$0xf] %vm2140, %v2051
      %2145 = vst.msk [vmem:[#allocation3 + $0x10] sm:$0xf] %vm2140, %v2053
      %2146 = vst.msk [vmem:[#allocation3 + $0x14] sm:$0xf] %vm2140, %v2055
      %2147 = vst.msk [vmem:[#allocation3 + $0x18] sm:$0xf] %vm2140, %v2057
      %2148 = vst.msk [vmem:[#allocation3 + $0x1c] sm:$0xf] %vm2140, %v2059
      %2149 = vst.msk [vmem:[#allocation3 + $0x20] sm:$0xf] %vm2140, %v2061
      %2150 = vst.msk [vmem:[#allocation3 + $0x24] sm:$0xf] %vm2140, %v2063
      %2151 = vst.msk [vmem:[#allocation3 + $0x28] sm:$0xf] %vm2140, %v2065
      %2152 = vst.msk [vmem:[#allocation3 + $0x2c] sm:$0xf] %vm2140, %v2067
      %2153 = vst.msk [vmem:[#allocation3 + $0x30] sm:$0xf] %vm2140, %v2069
      %2154 = vst.msk [vmem:[#allocation3 + $0x34] sm:$0xf] %vm2140, %v2071
      %2155 = vst.msk [vmem:[#allocation3 + $0x38] sm:$0xf] %vm2140, %v2073
      %2156 = vst.msk [vmem:[#allocation3 + $0x3c] sm:$0xf] %vm2140, %v2075
      %2157 = vst.msk [vmem:[#allocation3 + $0x40] sm:$0xf] %vm2140, %v2077
      %2158 = vst.msk [vmem:[#allocation3 + $0x44] sm:$0xf] %vm2140, %v2079
      %2159 = vst.msk [vmem:[#allocation3 + $0x48] sm:$0xf] %vm2140, %v2081
      %2160 = vst.msk [vmem:[#allocation3 + $0x4c] sm:$0xf] %vm2140, %v2083
      %2161 = vst.msk [vmem:[#allocation3 + $0x50] sm:$0xf] %vm2140, %v2085
      %2162 = vst.msk [vmem:[#allocation3 + $0x54] sm:$0xf] %vm2140, %v2087
      %2163 = vst.msk [vmem:[#allocation3 + $0x58] sm:$0xf] %vm2140, %v2089
      %2164 = vst.msk [vmem:[#allocation3 + $0x5c] sm:$0xf] %vm2140, %v2091
      %2165 = vst.msk [vmem:[#allocation3 + $0x60] sm:$0xf] %vm2140, %v2093
      %2166 = vst.msk [vmem:[#allocation3 + $0x64] sm:$0xf] %vm2140, %v2095
      %2167 = vst.msk [vmem:[#allocation3 + $0x68] sm:$0xf] %vm2140, %v2097
      %2168 = vst.msk [vmem:[#allocation3 + $0x6c] sm:$0xf] %vm2140, %v2099
      %2169 = vst.msk [vmem:[#allocation3 + $0x70] sm:$0xf] %vm2140, %v2101
      %2170 = vst.msk [vmem:[#allocation3 + $0x74] sm:$0xf] %vm2140, %v2103
      %2171 = vst.msk [vmem:[#allocation3 + $0x78] sm:$0xf] %vm2140, %v2105
      %2172 = vst.msk [vmem:[#allocation3 + $0x7c] sm:$0xf] %vm2140, %v2107
      %v2173 = vld [vmem:[%s1979] sm:$0xf]
      %v2174 = vld [vmem:[%s1979 + $0x4] sm:$0xf]
      %v2175 = vld [vmem:[%s1979 + $0x8] sm:$0x1]
      %v2176 = vld [vmem:[%s1979 + $0xc] sm:$0xf]
      %v2177 = vld [vmem:[%s1979 + $0x10] sm:$0xf]
      %v2178 = vld [vmem:[%s1979 + $0x14] sm:$0x1]
      %v2179 = vld [vmem:[%s1979 + $0x18] sm:$0xf]
      %v2180 = vld [vmem:[%s1979 + $0x1c] sm:$0xf]
      %v2181 = vld [vmem:[%s1979 + $0x20] sm:$0x1]
      %v2182 = vld [vmem:[%s1979 + $0x24] sm:$0xf]
      %v2183 = vld [vmem:[%s1979 + $0x28] sm:$0xf]
      %v2184 = vld [vmem:[%s1979 + $0x2c] sm:$0x1]
      %v2185 = vld [vmem:[%s1979 + $0x30] sm:$0xf]
      %v2186 = vld [vmem:[%s1979 + $0x34] sm:$0xf]
      %v2187 = vld [vmem:[%s1979 + $0x38] sm:$0x1]
      %v2188 = vld [vmem:[%s1979 + $0x3c] sm:$0xf]
      %v2189 = vld [vmem:[%s1979 + $0x40] sm:$0xf]
      %v2190 = vld [vmem:[%s1979 + $0x44] sm:$0x1]
      %v2191 = vld [vmem:[%s1979 + $0x48] sm:$0xf]
      %v2192 = vld [vmem:[%s1979 + $0x4c] sm:$0xf]
      %v2193 = vld [vmem:[%s1979 + $0x50] sm:$0x1]
      %v2194 = vld [vmem:[%s1979 + $0x54] sm:$0xf]
      %v2195 = vld [vmem:[%s1979 + $0x58] sm:$0xf]
      %v2196 = vld [vmem:[%s1979 + $0x5c] sm:$0x1]
      %v2197 = vld [vmem:[%s1979 + $0x60] sm:$0xf]
      %v2198 = vld [vmem:[%s1979 + $0x64] sm:$0xf]
      %v2199 = vld [vmem:[%s1979 + $0x68] sm:$0x1]
      %v2200 = vld [vmem:[%s1979 + $0x6c] sm:$0xf]
      %v2201 = vld [vmem:[%s1979 + $0x70] sm:$0xf]
      %v2202 = vld [vmem:[%s1979 + $0x74] sm:$0x1]
      %v2203 = vld [vmem:[%s1979 + $0x78] sm:$0xf]
      %v2204 = vld [vmem:[%s1979 + $0x7c] sm:$0xf]
      %v2205 = vld [vmem:[%s1979 + $0x80] sm:$0x1]
      %v2206 = vld [vmem:[%s1979 + $0x84] sm:$0xf]
      %v2207 = vld [vmem:[%s1979 + $0x88] sm:$0xf]
      %v2208 = vld [vmem:[%s1979 + $0x8c] sm:$0x1]
      %v2209 = vld [vmem:[%s1979 + $0x90] sm:$0xf]
      %v2210 = vld [vmem:[%s1979 + $0x94] sm:$0xf]
      %v2211 = vld [vmem:[%s1979 + $0x98] sm:$0x1]
      %v2212 = vld [vmem:[%s1979 + $0x9c] sm:$0xf]
      %v2213 = vld [vmem:[%s1979 + $0xa0] sm:$0xf]
      %v2214 = vld [vmem:[%s1979 + $0xa4] sm:$0x1]
      %v2215 = vld [vmem:[%s1979 + $0xa8] sm:$0xf]
      %v2216 = vld [vmem:[%s1979 + $0xac] sm:$0xf]
      %v2217 = vld [vmem:[%s1979 + $0xb0] sm:$0x1]
      %v2218 = vld [vmem:[%s1979 + $0xb4] sm:$0xf]
      %v2219 = vld [vmem:[%s1979 + $0xb8] sm:$0xf]
      %v2220 = vld [vmem:[%s1979 + $0xbc] sm:$0x1]
      %v2222 = vshrl.u32 %v2173, 16
      %v2224 = vrot.slane %v2222, 4
      %v2225 = vshll.u32 %v2173, 16
      %v2227 = vrot.slane %v2225, 5
      %v2228 = vor.u32 %v2224, %v2227
      %v2229 = vrot.slane %v2228, 4
      %v2231 = vshll.u32 %v2174, 16
      %v2233 = vrot.slane %v2231, 5
      %v2234 = vsel %vm1122, %v2229, %v2233
      %v2235 = vshrl.u32 %v2174, 16
      %v2237 = vrot.slane %v2235, 4
      %v2238 = vor.u32 %v2237, %v2233
      %v2239 = vrot.slane %v2238, 4
      %v2241 = vshll.u32 %v2175, 16
      %v2243 = vrot.slane %v2241, 5
      %v2244 = vsel %vm1122, %v2239, %v2243
      %v2246 = vshrl.u32 %v2176, 16
      %v2248 = vrot.slane %v2246, 4
      %v2249 = vshll.u32 %v2176, 16
      %v2251 = vrot.slane %v2249, 5
      %v2252 = vor.u32 %v2248, %v2251
      %v2253 = vrot.slane %v2252, 4
      %v2255 = vshll.u32 %v2177, 16
      %v2257 = vrot.slane %v2255, 5
      %v2258 = vsel %vm1122, %v2253, %v2257
      %v2259 = vshrl.u32 %v2177, 16
      %v2261 = vrot.slane %v2259, 4
      %v2262 = vor.u32 %v2261, %v2257
      %v2263 = vrot.slane %v2262, 4
      %v2265 = vshll.u32 %v2178, 16
      %v2267 = vrot.slane %v2265, 5
      %v2268 = vsel %vm1122, %v2263, %v2267
      %v2270 = vshrl.u32 %v2179, 16
      %v2272 = vrot.slane %v2270, 4
      %v2273 = vshll.u32 %v2179, 16
      %v2275 = vrot.slane %v2273, 5
      %v2276 = vor.u32 %v2272, %v2275
      %v2277 = vrot.slane %v2276, 4
      %v2279 = vshll.u32 %v2180, 16
      %v2281 = vrot.slane %v2279, 5
      %v2282 = vsel %vm1122, %v2277, %v2281
      %v2283 = vshrl.u32 %v2180, 16
      %v2285 = vrot.slane %v2283, 4
      %v2286 = vor.u32 %v2285, %v2281
      %v2287 = vrot.slane %v2286, 4
      %v2289 = vshll.u32 %v2181, 16
      %v2291 = vrot.slane %v2289, 5
      %v2292 = vsel %vm1122, %v2287, %v2291
      %v2294 = vshrl.u32 %v2182, 16
      %v2296 = vrot.slane %v2294, 4
      %v2297 = vshll.u32 %v2182, 16
      %v2299 = vrot.slane %v2297, 5
      %v2300 = vor.u32 %v2296, %v2299
      %v2301 = vrot.slane %v2300, 4
      %v2303 = vshll.u32 %v2183, 16
      %v2305 = vrot.slane %v2303, 5
      %v2306 = vsel %vm1122, %v2301, %v2305
      %v2307 = vshrl.u32 %v2183, 16
      %v2309 = vrot.slane %v2307, 4
      %v2310 = vor.u32 %v2309, %v2305
      %v2311 = vrot.slane %v2310, 4
      %v2313 = vshll.u32 %v2184, 16
      %v2315 = vrot.slane %v2313, 5
      %v2316 = vsel %vm1122, %v2311, %v2315
      %v2318 = vshrl.u32 %v2185, 16
      %v2320 = vrot.slane %v2318, 4
      %v2321 = vshll.u32 %v2185, 16
      %v2323 = vrot.slane %v2321, 5
      %v2324 = vor.u32 %v2320, %v2323
      %v2325 = vrot.slane %v2324, 4
      %v2327 = vshll.u32 %v2186, 16
      %v2329 = vrot.slane %v2327, 5
      %v2330 = vsel %vm1122, %v2325, %v2329
      %v2331 = vshrl.u32 %v2186, 16
      %v2333 = vrot.slane %v2331, 4
      %v2334 = vor.u32 %v2333, %v2329
      %v2335 = vrot.slane %v2334, 4
      %v2337 = vshll.u32 %v2187, 16
      %v2339 = vrot.slane %v2337, 5
      %v2340 = vsel %vm1122, %v2335, %v2339
      %v2342 = vshrl.u32 %v2188, 16
      %v2344 = vrot.slane %v2342, 4
      %v2345 = vshll.u32 %v2188, 16
      %v2347 = vrot.slane %v2345, 5
      %v2348 = vor.u32 %v2344, %v2347
      %v2349 = vrot.slane %v2348, 4
      %v2351 = vshll.u32 %v2189, 16
      %v2353 = vrot.slane %v2351, 5
      %v2354 = vsel %vm1122, %v2349, %v2353
      %v2355 = vshrl.u32 %v2189, 16
      %v2357 = vrot.slane %v2355, 4
      %v2358 = vor.u32 %v2357, %v2353
      %v2359 = vrot.slane %v2358, 4
      %v2361 = vshll.u32 %v2190, 16
      %v2363 = vrot.slane %v2361, 5
      %v2364 = vsel %vm1122, %v2359, %v2363
      %v2366 = vshrl.u32 %v2191, 16
      %v2368 = vrot.slane %v2366, 4
      %v2369 = vshll.u32 %v2191, 16
      %v2371 = vrot.slane %v2369, 5
      %v2372 = vor.u32 %v2368, %v2371
      %v2373 = vrot.slane %v2372, 4
      %v2375 = vshll.u32 %v2192, 16
      %v2377 = vrot.slane %v2375, 5
      %v2378 = vsel %vm1122, %v2373, %v2377
      %v2379 = vshrl.u32 %v2192, 16
      %v2381 = vrot.slane %v2379, 4
      %v2382 = vor.u32 %v2381, %v2377
      %v2383 = vrot.slane %v2382, 4
      %v2385 = vshll.u32 %v2193, 16
      %v2387 = vrot.slane %v2385, 5
      %v2388 = vsel %vm1122, %v2383, %v2387
      %v2390 = vshrl.u32 %v2194, 16
      %v2392 = vrot.slane %v2390, 4
      %v2393 = vshll.u32 %v2194, 16
      %v2395 = vrot.slane %v2393, 5
      %v2396 = vor.u32 %v2392, %v2395
      %v2397 = vrot.slane %v2396, 4
      %v2399 = vshll.u32 %v2195, 16
      %v2401 = vrot.slane %v2399, 5
      %v2402 = vsel %vm1122, %v2397, %v2401
      %v2403 = vshrl.u32 %v2195, 16
      %v2405 = vrot.slane %v2403, 4
      %v2406 = vor.u32 %v2405, %v2401
      %v2407 = vrot.slane %v2406, 4
      %v2409 = vshll.u32 %v2196, 16
      %v2411 = vrot.slane %v2409, 5
      %v2412 = vsel %vm1122, %v2407, %v2411
      %v2414 = vshrl.u32 %v2197, 16
      %v2416 = vrot.slane %v2414, 4
      %v2417 = vshll.u32 %v2197, 16
      %v2419 = vrot.slane %v2417, 5
      %v2420 = vor.u32 %v2416, %v2419
      %v2421 = vrot.slane %v2420, 4
      %v2423 = vshll.u32 %v2198, 16
      %v2425 = vrot.slane %v2423, 5
      %v2426 = vsel %vm1122, %v2421, %v2425
      %v2427 = vshrl.u32 %v2198, 16
      %v2429 = vrot.slane %v2427, 4
      %v2430 = vor.u32 %v2429, %v2425
      %v2431 = vrot.slane %v2430, 4
      %v2433 = vshll.u32 %v2199, 16
      %v2435 = vrot.slane %v2433, 5
      %v2436 = vsel %vm1122, %v2431, %v2435
      %v2438 = vshrl.u32 %v2200, 16
      %v2440 = vrot.slane %v2438, 4
      %v2441 = vshll.u32 %v2200, 16
      %v2443 = vrot.slane %v2441, 5
      %v2444 = vor.u32 %v2440, %v2443
      %v2445 = vrot.slane %v2444, 4
      %v2447 = vshll.u32 %v2201, 16
      %v2449 = vrot.slane %v2447, 5
      %v2450 = vsel %vm1122, %v2445, %v2449
      %v2451 = vshrl.u32 %v2201, 16
      %v2453 = vrot.slane %v2451, 4
      %v2454 = vor.u32 %v2453, %v2449
      %v2455 = vrot.slane %v2454, 4
      %v2457 = vshll.u32 %v2202, 16
      %v2459 = vrot.slane %v2457, 5
      %v2460 = vsel %vm1122, %v2455, %v2459
      %v2462 = vshrl.u32 %v2203, 16
      %v2464 = vrot.slane %v2462, 4
      %v2465 = vshll.u32 %v2203, 16
      %v2467 = vrot.slane %v2465, 5
      %v2468 = vor.u32 %v2464, %v2467
      %v2469 = vrot.slane %v2468, 4
      %v2471 = vshll.u32 %v2204, 16
      %v2473 = vrot.slane %v2471, 5
      %v2474 = vsel %vm1122, %v2469, %v2473
      %v2475 = vshrl.u32 %v2204, 16
      %v2477 = vrot.slane %v2475, 4
      %v2478 = vor.u32 %v2477, %v2473
      %v2479 = vrot.slane %v2478, 4
      %v2481 = vshll.u32 %v2205, 16
      %v2483 = vrot.slane %v2481, 5
      %v2484 = vsel %vm1122, %v2479, %v2483
      %v2486 = vshrl.u32 %v2206, 16
      %v2488 = vrot.slane %v2486, 4
      %v2489 = vshll.u32 %v2206, 16
      %v2491 = vrot.slane %v2489, 5
      %v2492 = vor.u32 %v2488, %v2491
      %v2493 = vrot.slane %v2492, 4
      %v2495 = vshll.u32 %v2207, 16
      %v2497 = vrot.slane %v2495, 5
      %v2498 = vsel %vm1122, %v2493, %v2497
      %v2499 = vshrl.u32 %v2207, 16
      %v2501 = vrot.slane %v2499, 4
      %v2502 = vor.u32 %v2501, %v2497
      %v2503 = vrot.slane %v2502, 4
      %v2505 = vshll.u32 %v2208, 16
      %v2507 = vrot.slane %v2505, 5
      %v2508 = vsel %vm1122, %v2503, %v2507
      %v2510 = vshrl.u32 %v2209, 16
      %v2512 = vrot.slane %v2510, 4
      %v2513 = vshll.u32 %v2209, 16
      %v2515 = vrot.slane %v2513, 5
      %v2516 = vor.u32 %v2512, %v2515
      %v2517 = vrot.slane %v2516, 4
      %v2519 = vshll.u32 %v2210, 16
      %v2521 = vrot.slane %v2519, 5
      %v2522 = vsel %vm1122, %v2517, %v2521
      %v2523 = vshrl.u32 %v2210, 16
      %v2525 = vrot.slane %v2523, 4
      %v2526 = vor.u32 %v2525, %v2521
      %v2527 = vrot.slane %v2526, 4
      %v2529 = vshll.u32 %v2211, 16
      %v2531 = vrot.slane %v2529, 5
      %v2532 = vsel %vm1122, %v2527, %v2531
      %v2534 = vshrl.u32 %v2212, 16
      %v2536 = vrot.slane %v2534, 4
      %v2537 = vshll.u32 %v2212, 16
      %v2539 = vrot.slane %v2537, 5
      %v2540 = vor.u32 %v2536, %v2539
      %v2541 = vrot.slane %v2540, 4
      %v2543 = vshll.u32 %v2213, 16
      %v2545 = vrot.slane %v2543, 5
      %v2546 = vsel %vm1122, %v2541, %v2545
      %v2547 = vshrl.u32 %v2213, 16
      %v2549 = vrot.slane %v2547, 4
      %v2550 = vor.u32 %v2549, %v2545
      %v2551 = vrot.slane %v2550, 4
      %v2553 = vshll.u32 %v2214, 16
      %v2555 = vrot.slane %v2553, 5
      %v2556 = vsel %vm1122, %v2551, %v2555
      %v2558 = vshrl.u32 %v2215, 16
      %v2560 = vrot.slane %v2558, 4
      %v2561 = vshll.u32 %v2215, 16
      %v2563 = vrot.slane %v2561, 5
      %v2564 = vor.u32 %v2560, %v2563
      %v2565 = vrot.slane %v2564, 4
      %v2567 = vshll.u32 %v2216, 16
      %v2569 = vrot.slane %v2567, 5
      %v2570 = vsel %vm1122, %v2565, %v2569
      %v2571 = vshrl.u32 %v2216, 16
      %v2573 = vrot.slane %v2571, 4
      %v2574 = vor.u32 %v2573, %v2569
      %v2575 = vrot.slane %v2574, 4
      %v2577 = vshll.u32 %v2217, 16
      %v2579 = vrot.slane %v2577, 5
      %v2580 = vsel %vm1122, %v2575, %v2579
      %v2582 = vshrl.u32 %v2218, 16
      %v2584 = vrot.slane %v2582, 4
      %v2585 = vshll.u32 %v2218, 16
      %v2587 = vrot.slane %v2585, 5
      %v2588 = vor.u32 %v2584, %v2587
      %v2589 = vrot.slane %v2588, 4
      %v2591 = vshll.u32 %v2219, 16
      %v2593 = vrot.slane %v2591, 5
      %v2594 = vsel %vm1122, %v2589, %v2593
      %v2595 = vshrl.u32 %v2219, 16
      %v2597 = vrot.slane %v2595, 4
      %v2598 = vor.u32 %v2597, %v2593
      %v2599 = vrot.slane %v2598, 4
      %v2601 = vshll.u32 %v2220, 16
      %v2603 = vrot.slane %v2601, 5
      %v2604 = vsel %vm1122, %v2599, %v2603
      %2605 = vrot.lane.b32.xlu0 %v2234, 16
      %v2606 = vpop.permute.xlu0 %2605
      %2607 = vrot.lane.b32.xlu0 %v2244, 16
      %v2608 = vpop.permute.xlu0 %2607
      %2609 = vrot.lane.b32.xlu0 %v2258, 16
      %v2610 = vpop.permute.xlu0 %2609
      %2611 = vrot.lane.b32.xlu0 %v2268, 16
      %v2612 = vpop.permute.xlu0 %2611
      %2613 = vrot.lane.b32.xlu0 %v2282, 16
      %v2614 = vpop.permute.xlu0 %2613
      %2615 = vrot.lane.b32.xlu0 %v2292, 16
      %v2616 = vpop.permute.xlu0 %2615
      %2617 = vrot.lane.b32.xlu0 %v2306, 16
      %v2618 = vpop.permute.xlu0 %2617
      %2619 = vrot.lane.b32.xlu0 %v2316, 16
      %v2620 = vpop.permute.xlu0 %2619
      %2621 = vrot.lane.b32.xlu0 %v2330, 16
      %v2622 = vpop.permute.xlu0 %2621
      %2623 = vrot.lane.b32.xlu0 %v2340, 16
      %v2624 = vpop.permute.xlu0 %2623
      %2625 = vrot.lane.b32.xlu0 %v2354, 16
      %v2626 = vpop.permute.xlu0 %2625
      %2627 = vrot.lane.b32.xlu0 %v2364, 16
      %v2628 = vpop.permute.xlu0 %2627
      %2629 = vrot.lane.b32.xlu0 %v2378, 16
      %v2630 = vpop.permute.xlu0 %2629
      %2631 = vrot.lane.b32.xlu0 %v2388, 16
      %v2632 = vpop.permute.xlu0 %2631
      %2633 = vrot.lane.b32.xlu0 %v2402, 16
      %v2634 = vpop.permute.xlu0 %2633
      %2635 = vrot.lane.b32.xlu0 %v2412, 16
      %v2636 = vpop.permute.xlu0 %2635
      %2637 = vrot.lane.b32.xlu0 %v2426, 16
      %v2638 = vpop.permute.xlu0 %2637
      %2639 = vrot.lane.b32.xlu0 %v2436, 16
      %v2640 = vpop.permute.xlu0 %2639
      %2641 = vrot.lane.b32.xlu0 %v2450, 16
      %v2642 = vpop.permute.xlu0 %2641
      %2643 = vrot.lane.b32.xlu0 %v2460, 16
      %v2644 = vpop.permute.xlu0 %2643
      %2645 = vrot.lane.b32.xlu0 %v2474, 16
      %v2646 = vpop.permute.xlu0 %2645
      %2647 = vrot.lane.b32.xlu0 %v2484, 16
      %v2648 = vpop.permute.xlu0 %2647
      %2649 = vrot.lane.b32.xlu0 %v2498, 16
      %v2650 = vpop.permute.xlu0 %2649
      %2651 = vrot.lane.b32.xlu0 %v2508, 16
      %v2652 = vpop.permute.xlu0 %2651
      %2653 = vrot.lane.b32.xlu0 %v2522, 16
      %v2654 = vpop.permute.xlu0 %2653
      %2655 = vrot.lane.b32.xlu0 %v2532, 16
      %v2656 = vpop.permute.xlu0 %2655
      %2657 = vrot.lane.b32.xlu0 %v2546, 16
      %v2658 = vpop.permute.xlu0 %2657
      %2659 = vrot.lane.b32.xlu0 %v2556, 16
      %v2660 = vpop.permute.xlu0 %2659
      %2661 = vrot.lane.b32.xlu0 %v2570, 16
      %v2662 = vpop.permute.xlu0 %2661
      %2663 = vrot.lane.b32.xlu0 %v2580, 16
      %v2664 = vpop.permute.xlu0 %2663
      %2665 = vrot.lane.b32.xlu0 %v2594, 16
      %v2666 = vpop.permute.xlu0 %2665
      %2667 = vrot.lane.b32.xlu0 %v2604, 16
      %v2668 = vpop.permute.xlu0 %2667
      %vm2701 = vcmask 158848
      %2702 = vst.msk [vmem:[#allocation3] sm:$0xf] %vm2701, %v2606
      %2703 = vst.msk [vmem:[#allocation3 + $0x4] sm:$0xf] %vm2701, %v2608
      %2704 = vst.msk [vmem:[#allocation3 + $0x8] sm:$0xf] %vm2701, %v2610
      %2705 = vst.msk [vmem:[#allocation3 + $0xc] sm:$0xf] %vm2701, %v2612
      %2706 = vst.msk [vmem:[#allocation3 + $0x10] sm:$0xf] %vm2701, %v2614
      %2707 = vst.msk [vmem:[#allocation3 + $0x14] sm:$0xf] %vm2701, %v2616
      %2708 = vst.msk [vmem:[#allocation3 + $0x18] sm:$0xf] %vm2701, %v2618
      %2709 = vst.msk [vmem:[#allocation3 + $0x1c] sm:$0xf] %vm2701, %v2620
      %2710 = vst.msk [vmem:[#allocation3 + $0x20] sm:$0xf] %vm2701, %v2622
      %2711 = vst.msk [vmem:[#allocation3 + $0x24] sm:$0xf] %vm2701, %v2624
      %2712 = vst.msk [vmem:[#allocation3 + $0x28] sm:$0xf] %vm2701, %v2626
      %2713 = vst.msk [vmem:[#allocation3 + $0x2c] sm:$0xf] %vm2701, %v2628
      %2714 = vst.msk [vmem:[#allocation3 + $0x30] sm:$0xf] %vm2701, %v2630
      %2715 = vst.msk [vmem:[#allocation3 + $0x34] sm:$0xf] %vm2701, %v2632
      %2716 = vst.msk [vmem:[#allocation3 + $0x38] sm:$0xf] %vm2701, %v2634
      %2717 = vst.msk [vmem:[#allocation3 + $0x3c] sm:$0xf] %vm2701, %v2636
      %2718 = vst.msk [vmem:[#allocation3 + $0x40] sm:$0xf] %vm2701, %v2638
      %2719 = vst.msk [vmem:[#allocation3 + $0x44] sm:$0xf] %vm2701, %v2640
      %2720 = vst.msk [vmem:[#allocation3 + $0x48] sm:$0xf] %vm2701, %v2642
      %2721 = vst.msk [vmem:[#allocation3 + $0x4c] sm:$0xf] %vm2701, %v2644
      %2722 = vst.msk [vmem:[#allocation3 + $0x50] sm:$0xf] %vm2701, %v2646
      %2723 = vst.msk [vmem:[#allocation3 + $0x54] sm:$0xf] %vm2701, %v2648
      %2724 = vst.msk [vmem:[#allocation3 + $0x58] sm:$0xf] %vm2701, %v2650
      %2725 = vst.msk [vmem:[#allocation3 + $0x5c] sm:$0xf] %vm2701, %v2652
      %2726 = vst.msk [vmem:[#allocation3 + $0x60] sm:$0xf] %vm2701, %v2654
      %2727 = vst.msk [vmem:[#allocation3 + $0x64] sm:$0xf] %vm2701, %v2656
      %2728 = vst.msk [vmem:[#allocation3 + $0x68] sm:$0xf] %vm2701, %v2658
      %2729 = vst.msk [vmem:[#allocation3 + $0x6c] sm:$0xf] %vm2701, %v2660
      %2730 = vst.msk [vmem:[#allocation3 + $0x70] sm:$0xf] %vm2701, %v2662
      %2731 = vst.msk [vmem:[#allocation3 + $0x74] sm:$0xf] %vm2701, %v2664
      %2732 = vst.msk [vmem:[#allocation3 + $0x78] sm:$0xf] %vm2701, %v2666
      %2733 = vst.msk [vmem:[#allocation3 + $0x7c] sm:$0xf] %vm2701, %v2668
      %v2734 = vld [vmem:[%s1979] sm:$0xe]
      %v2735 = vld [vmem:[%s1979 + $0x4] sm:$0xf]
      %v2736 = vld [vmem:[%s1979 + $0x8] sm:$0x1]
      %v2737 = vld [vmem:[%s1979 + $0xc] sm:$0xe]
      %v2738 = vld [vmem:[%s1979 + $0x10] sm:$0xf]
      %v2739 = vld [vmem:[%s1979 + $0x14] sm:$0x1]
      %v2740 = vld [vmem:[%s1979 + $0x18] sm:$0xe]
      %v2741 = vld [vmem:[%s1979 + $0x1c] sm:$0xf]
      %v2742 = vld [vmem:[%s1979 + $0x20] sm:$0x1]
      %v2743 = vld [vmem:[%s1979 + $0x24] sm:$0xe]
      %v2744 = vld [vmem:[%s1979 + $0x28] sm:$0xf]
      %v2745 = vld [vmem:[%s1979 + $0x2c] sm:$0x1]
      %v2746 = vld [vmem:[%s1979 + $0x30] sm:$0xe]
      %v2747 = vld [vmem:[%s1979 + $0x34] sm:$0xf]
      %v2748 = vld [vmem:[%s1979 + $0x38] sm:$0x1]
      %v2749 = vld [vmem:[%s1979 + $0x3c] sm:$0xe]
      %v2750 = vld [vmem:[%s1979 + $0x40] sm:$0xf]
      %v2751 = vld [vmem:[%s1979 + $0x44] sm:$0x1]
      %v2752 = vld [vmem:[%s1979 + $0x48] sm:$0xe]
      %v2753 = vld [vmem:[%s1979 + $0x4c] sm:$0xf]
      %v2754 = vld [vmem:[%s1979 + $0x50] sm:$0x1]
      %v2755 = vld [vmem:[%s1979 + $0x54] sm:$0xe]
      %v2756 = vld [vmem:[%s1979 + $0x58] sm:$0xf]
      %v2757 = vld [vmem:[%s1979 + $0x5c] sm:$0x1]
      %v2758 = vld [vmem:[%s1979 + $0x60] sm:$0xe]
      %v2759 = vld [vmem:[%s1979 + $0x64] sm:$0xf]
      %v2760 = vld [vmem:[%s1979 + $0x68] sm:$0x1]
      %v2761 = vld [vmem:[%s1979 + $0x6c] sm:$0xe]
      %v2762 = vld [vmem:[%s1979 + $0x70] sm:$0xf]
      %v2763 = vld [vmem:[%s1979 + $0x74] sm:$0x1]
      %v2764 = vld [vmem:[%s1979 + $0x78] sm:$0xe]
      %v2765 = vld [vmem:[%s1979 + $0x7c] sm:$0xf]
      %v2766 = vld [vmem:[%s1979 + $0x80] sm:$0x1]
      %v2767 = vld [vmem:[%s1979 + $0x84] sm:$0xe]
      %v2768 = vld [vmem:[%s1979 + $0x88] sm:$0xf]
      %v2769 = vld [vmem:[%s1979 + $0x8c] sm:$0x1]
      %v2770 = vld [vmem:[%s1979 + $0x90] sm:$0xe]
      %v2771 = vld [vmem:[%s1979 + $0x94] sm:$0xf]
      %v2772 = vld [vmem:[%s1979 + $0x98] sm:$0x1]
      %v2773 = vld [vmem:[%s1979 + $0x9c] sm:$0xe]
      %v2774 = vld [vmem:[%s1979 + $0xa0] sm:$0xf]
      %v2775 = vld [vmem:[%s1979 + $0xa4] sm:$0x1]
      %v2776 = vld [vmem:[%s1979 + $0xa8] sm:$0xe]
      %v2777 = vld [vmem:[%s1979 + $0xac] sm:$0xf]
      %v2778 = vld [vmem:[%s1979 + $0xb0] sm:$0x1]
      %v2779 = vld [vmem:[%s1979 + $0xb4] sm:$0xe]
      %v2780 = vld [vmem:[%s1979 + $0xb8] sm:$0xf]
      %v2781 = vld [vmem:[%s1979 + $0xbc] sm:$0x1]
      %v2830 = vrot.slane %v2734, 5
      %v2831 = vrot.slane %v2830, 4
      %v2832 = vrot.slane %v2735, 5
      %v2833 = vsel %vm1734, %v2831, %v2832
      %v2834 = vrot.slane %v2832, 4
      %v2835 = vrot.slane %v2736, 5
      %v2836 = vsel %vm1734, %v2834, %v2835
      %v2837 = vrot.slane %v2737, 5
      %v2838 = vrot.slane %v2837, 4
      %v2839 = vrot.slane %v2738, 5
      %v2840 = vsel %vm1734, %v2838, %v2839
      %v2841 = vrot.slane %v2839, 4
      %v2842 = vrot.slane %v2739, 5
      %v2843 = vsel %vm1734, %v2841, %v2842
      %v2844 = vrot.slane %v2740, 5
      %v2845 = vrot.slane %v2844, 4
      %v2846 = vrot.slane %v2741, 5
      %v2847 = vsel %vm1734, %v2845, %v2846
      %v2848 = vrot.slane %v2846, 4
      %v2849 = vrot.slane %v2742, 5
      %v2850 = vsel %vm1734, %v2848, %v2849
      %v2851 = vrot.slane %v2743, 5
      %v2852 = vrot.slane %v2851, 4
      %v2853 = vrot.slane %v2744, 5
      %v2854 = vsel %vm1734, %v2852, %v2853
      %v2855 = vrot.slane %v2853, 4
      %v2856 = vrot.slane %v2745, 5
      %v2857 = vsel %vm1734, %v2855, %v2856
      %v2858 = vrot.slane %v2746, 5
      %v2859 = vrot.slane %v2858, 4
      %v2860 = vrot.slane %v2747, 5
      %v2861 = vsel %vm1734, %v2859, %v2860
      %v2862 = vrot.slane %v2860, 4
      %v2863 = vrot.slane %v2748, 5
      %v2864 = vsel %vm1734, %v2862, %v2863
      %v2865 = vrot.slane %v2749, 5
      %v2866 = vrot.slane %v2865, 4
      %v2867 = vrot.slane %v2750, 5
      %v2868 = vsel %vm1734, %v2866, %v2867
      %v2869 = vrot.slane %v2867, 4
      %v2870 = vrot.slane %v2751, 5
      %v2871 = vsel %vm1734, %v2869, %v2870
      %v2872 = vrot.slane %v2752, 5
      %v2873 = vrot.slane %v2872, 4
      %v2874 = vrot.slane %v2753, 5
      %v2875 = vsel %vm1734, %v2873, %v2874
      %v2876 = vrot.slane %v2874, 4
      %v2877 = vrot.slane %v2754, 5
      %v2878 = vsel %vm1734, %v2876, %v2877
      %v2879 = vrot.slane %v2755, 5
      %v2880 = vrot.slane %v2879, 4
      %v2881 = vrot.slane %v2756, 5
      %v2882 = vsel %vm1734, %v2880, %v2881
      %v2883 = vrot.slane %v2881, 4
      %v2884 = vrot.slane %v2757, 5
      %v2885 = vsel %vm1734, %v2883, %v2884
      %v2886 = vrot.slane %v2758, 5
      %v2887 = vrot.slane %v2886, 4
      %v2888 = vrot.slane %v2759, 5
      %v2889 = vsel %vm1734, %v2887, %v2888
      %v2890 = vrot.slane %v2888, 4
      %v2891 = vrot.slane %v2760, 5
      %v2892 = vsel %vm1734, %v2890, %v2891
      %v2893 = vrot.slane %v2761, 5
      %v2894 = vrot.slane %v2893, 4
      %v2895 = vrot.slane %v2762, 5
      %v2896 = vsel %vm1734, %v2894, %v2895
      %v2897 = vrot.slane %v2895, 4
      %v2898 = vrot.slane %v2763, 5
      %v2899 = vsel %vm1734, %v2897, %v2898
      %v2900 = vrot.slane %v2764, 5
      %v2901 = vrot.slane %v2900, 4
      %v2902 = vrot.slane %v2765, 5
      %v2903 = vsel %vm1734, %v2901, %v2902
      %v2904 = vrot.slane %v2902, 4
      %v2905 = vrot.slane %v2766, 5
      %v2906 = vsel %vm1734, %v2904, %v2905
      %v2907 = vrot.slane %v2767, 5
      %v2908 = vrot.slane %v2907, 4
      %v2909 = vrot.slane %v2768, 5
      %v2910 = vsel %vm1734, %v2908, %v2909
      %v2911 = vrot.slane %v2909, 4
      %v2912 = vrot.slane %v2769, 5
      %v2913 = vsel %vm1734, %v2911, %v2912
      %v2914 = vrot.slane %v2770, 5
      %v2915 = vrot.slane %v2914, 4
      %v2916 = vrot.slane %v2771, 5
      %v2917 = vsel %vm1734, %v2915, %v2916
      %v2918 = vrot.slane %v2916, 4
      %v2919 = vrot.slane %v2772, 5
      %v2920 = vsel %vm1734, %v2918, %v2919
      %v2921 = vrot.slane %v2773, 5
      %v2922 = vrot.slane %v2921, 4
      %v2923 = vrot.slane %v2774, 5
      %v2924 = vsel %vm1734, %v2922, %v2923
      %v2925 = vrot.slane %v2923, 4
      %v2926 = vrot.slane %v2775, 5
      %v2927 = vsel %vm1734, %v2925, %v2926
      %v2928 = vrot.slane %v2776, 5
      %v2929 = vrot.slane %v2928, 4
      %v2930 = vrot.slane %v2777, 5
      %v2931 = vsel %vm1734, %v2929, %v2930
      %v2932 = vrot.slane %v2930, 4
      %v2933 = vrot.slane %v2778, 5
      %v2934 = vsel %vm1734, %v2932, %v2933
      %v2935 = vrot.slane %v2779, 5
      %v2936 = vrot.slane %v2935, 4
      %v2937 = vrot.slane %v2780, 5
      %v2938 = vsel %vm1734, %v2936, %v2937
      %v2939 = vrot.slane %v2937, 4
      %v2940 = vrot.slane %v2781, 5
      %v2941 = vsel %vm1734, %v2939, %v2940
      %2942 = vrot.lane.b32.xlu0 %v2833, 20
      %v2943 = vpop.permute.xlu0 %2942
      %2944 = vrot.lane.b32.xlu0 %v2836, 20
      %v2945 = vpop.permute.xlu0 %2944
      %2946 = vrot.lane.b32.xlu0 %v2840, 20
      %v2947 = vpop.permute.xlu0 %2946
      %2948 = vrot.lane.b32.xlu0 %v2843, 20
      %v2949 = vpop.permute.xlu0 %2948
      %2950 = vrot.lane.b32.xlu0 %v2847, 20
      %v2951 = vpop.permute.xlu0 %2950
      %2952 = vrot.lane.b32.xlu0 %v2850, 20
      %v2953 = vpop.permute.xlu0 %2952
      %2954 = vrot.lane.b32.xlu0 %v2854, 20
      %v2955 = vpop.permute.xlu0 %2954
      %2956 = vrot.lane.b32.xlu0 %v2857, 20
      %v2957 = vpop.permute.xlu0 %2956
      %2958 = vrot.lane.b32.xlu0 %v2861, 20
      %v2959 = vpop.permute.xlu0 %2958
      %2960 = vrot.lane.b32.xlu0 %v2864, 20
      %v2961 = vpop.permute.xlu0 %2960
      %2962 = vrot.lane.b32.xlu0 %v2868, 20
      %v2963 = vpop.permute.xlu0 %2962
      %2964 = vrot.lane.b32.xlu0 %v2871, 20
      %v2965 = vpop.permute.xlu0 %2964
      %2966 = vrot.lane.b32.xlu0 %v2875, 20
      %v2967 = vpop.permute.xlu0 %2966
      %2968 = vrot.lane.b32.xlu0 %v2878, 20
      %v2969 = vpop.permute.xlu0 %2968
      %2970 = vrot.lane.b32.xlu0 %v2882, 20
      %v2971 = vpop.permute.xlu0 %2970
      %2972 = vrot.lane.b32.xlu0 %v2885, 20
      %v2973 = vpop.permute.xlu0 %2972
      %2974 = vrot.lane.b32.xlu0 %v2889, 20
      %v2975 = vpop.permute.xlu0 %2974
      %2976 = vrot.lane.b32.xlu0 %v2892, 20
      %v2977 = vpop.permute.xlu0 %2976
      %2978 = vrot.lane.b32.xlu0 %v2896, 20
      %v2979 = vpop.permute.xlu0 %2978
      %2980 = vrot.lane.b32.xlu0 %v2899, 20
      %v2981 = vpop.permute.xlu0 %2980
      %2982 = vrot.lane.b32.xlu0 %v2903, 20
      %v2983 = vpop.permute.xlu0 %2982
      %2984 = vrot.lane.b32.xlu0 %v2906, 20
      %v2985 = vpop.permute.xlu0 %2984
      %2986 = vrot.lane.b32.xlu0 %v2910, 20
      %v2987 = vpop.permute.xlu0 %2986
      %2988 = vrot.lane.b32.xlu0 %v2913, 20
      %v2989 = vpop.permute.xlu0 %2988
      %2990 = vrot.lane.b32.xlu0 %v2917, 20
      %v2991 = vpop.permute.xlu0 %2990
      %2992 = vrot.lane.b32.xlu0 %v2920, 20
      %v2993 = vpop.permute.xlu0 %2992
      %2994 = vrot.lane.b32.xlu0 %v2924, 20
      %v2995 = vpop.permute.xlu0 %2994
      %2996 = vrot.lane.b32.xlu0 %v2927, 20
      %v2997 = vpop.permute.xlu0 %2996
      %2998 = vrot.lane.b32.xlu0 %v2931, 20
      %v2999 = vpop.permute.xlu0 %2998
      %3000 = vrot.lane.b32.xlu0 %v2934, 20
      %v3001 = vpop.permute.xlu0 %3000
      %3002 = vrot.lane.b32.xlu0 %v2938, 20
      %v3003 = vpop.permute.xlu0 %3002
      %3004 = vrot.lane.b32.xlu0 %v2941, 20
      %v3005 = vpop.permute.xlu0 %3004
      %vm3038 = vcmask 191648
      %3039 = vst.msk [vmem:[#allocation3] sm:$0xf] %vm3038, %v2943
      %3040 = vst.msk [vmem:[#allocation3 + $0x4] sm:$0xf] %vm3038, %v2945
      %3041 = vst.msk [vmem:[#allocation3 + $0x8] sm:$0xf] %vm3038, %v2947
      %3042 = vst.msk [vmem:[#allocation3 + $0xc] sm:$0xf] %vm3038, %v2949
      %3043 = vst.msk [vmem:[#allocation3 + $0x10] sm:$0xf] %vm3038, %v2951
      %3044 = vst.msk [vmem:[#allocation3 + $0x14] sm:$0xf] %vm3038, %v2953
      %3045 = vst.msk [vmem:[#allocation3 + $0x18] sm:$0xf] %vm3038, %v2955
      %3046 = vst.msk [vmem:[#allocation3 + $0x1c] sm:$0xf] %vm3038, %v2957
      %3047 = vst.msk [vmem:[#allocation3 + $0x20] sm:$0xf] %vm3038, %v2959
      %3048 = vst.msk [vmem:[#allocation3 + $0x24] sm:$0xf] %vm3038, %v2961
      %3049 = vst.msk [vmem:[#allocation3 + $0x28] sm:$0xf] %vm3038, %v2963
      %3050 = vst.msk [vmem:[#allocation3 + $0x2c] sm:$0xf] %vm3038, %v2965
      %3051 = vst.msk [vmem:[#allocation3 + $0x30] sm:$0xf] %vm3038, %v2967
      %3052 = vst.msk [vmem:[#allocation3 + $0x34] sm:$0xf] %vm3038, %v2969
      %3053 = vst.msk [vmem:[#allocation3 + $0x38] sm:$0xf] %vm3038, %v2971
      %3054 = vst.msk [vmem:[#allocation3 + $0x3c] sm:$0xf] %vm3038, %v2973
      %3055 = vst.msk [vmem:[#allocation3 + $0x40] sm:$0xf] %vm3038, %v2975
      %3056 = vst.msk [vmem:[#allocation3 + $0x44] sm:$0xf] %vm3038, %v2977
      %3057 = vst.msk [vmem:[#allocation3 + $0x48] sm:$0xf] %vm3038, %v2979
      %3058 = vst.msk [vmem:[#allocation3 + $0x4c] sm:$0xf] %vm3038, %v2981
      %3059 = vst.msk [vmem:[#allocation3 + $0x50] sm:$0xf] %vm3038, %v2983
      %3060 = vst.msk [vmem:[#allocation3 + $0x54] sm:$0xf] %vm3038, %v2985
      %3061 = vst.msk [vmem:[#allocation3 + $0x58] sm:$0xf] %vm3038, %v2987
      %3062 = vst.msk [vmem:[#allocation3 + $0x5c] sm:$0xf] %vm3038, %v2989
      %3063 = vst.msk [vmem:[#allocation3 + $0x60] sm:$0xf] %vm3038, %v2991
      %3064 = vst.msk [vmem:[#allocation3 + $0x64] sm:$0xf] %vm3038, %v2993
      %3065 = vst.msk [vmem:[#allocation3 + $0x68] sm:$0xf] %vm3038, %v2995
      %3066 = vst.msk [vmem:[#allocation3 + $0x6c] sm:$0xf] %vm3038, %v2997
      %3067 = vst.msk [vmem:[#allocation3 + $0x70] sm:$0xf] %vm3038, %v2999
      %3068 = vst.msk [vmem:[#allocation3 + $0x74] sm:$0xf] %vm3038, %v3001
      %3069 = vst.msk [vmem:[#allocation3 + $0x78] sm:$0xf] %vm3038, %v3003
      %3070 = vst.msk [vmem:[#allocation3 + $0x7c] sm:$0xf] %vm3038, %v3005
      %s3071 = sadd.s32 %s1003, 2
      %s3072 = smul.u32 %s3071, 3
      %s3073 = smul.addr %s3072, 4
      %s3074 = scalar_lea.vmem [#allocation2], %s3073
      %v3075 = vld [vmem:[%s3074] sm:$0xf]
      %v3076 = vld [vmem:[%s3074 + $0x4] sm:$0xf]
      %v3077 = vld [vmem:[%s3074 + $0xc] sm:$0xf]
      %v3078 = vld [vmem:[%s3074 + $0x10] sm:$0xf]
      %v3079 = vld [vmem:[%s3074 + $0x18] sm:$0xf]
      %v3080 = vld [vmem:[%s3074 + $0x1c] sm:$0xf]
      %v3081 = vld [vmem:[%s3074 + $0x24] sm:$0xf]
      %v3082 = vld [vmem:[%s3074 + $0x28] sm:$0xf]
      %v3083 = vld [vmem:[%s3074 + $0x30] sm:$0xf]
      %v3084 = vld [vmem:[%s3074 + $0x34] sm:$0xf]
      %v3085 = vld [vmem:[%s3074 + $0x3c] sm:$0xf]
      %v3086 = vld [vmem:[%s3074 + $0x40] sm:$0xf]
      %v3087 = vld [vmem:[%s3074 + $0x48] sm:$0xf]
      %v3088 = vld [vmem:[%s3074 + $0x4c] sm:$0xf]
      %v3089 = vld [vmem:[%s3074 + $0x54] sm:$0xf]
      %v3090 = vld [vmem:[%s3074 + $0x58] sm:$0xf]
      %v3091 = vld [vmem:[%s3074 + $0x60] sm:$0xf]
      %v3092 = vld [vmem:[%s3074 + $0x64] sm:$0xf]
      %v3093 = vld [vmem:[%s3074 + $0x6c] sm:$0xf]
      %v3094 = vld [vmem:[%s3074 + $0x70] sm:$0xf]
      %v3095 = vld [vmem:[%s3074 + $0x78] sm:$0xf]
      %v3096 = vld [vmem:[%s3074 + $0x7c] sm:$0xf]
      %v3097 = vld [vmem:[%s3074 + $0x84] sm:$0xf]
      %v3098 = vld [vmem:[%s3074 + $0x88] sm:$0xf]
      %v3099 = vld [vmem:[%s3074 + $0x90] sm:$0xf]
      %v3100 = vld [vmem:[%s3074 + $0x94] sm:$0xf]
      %v3101 = vld [vmem:[%s3074 + $0x9c] sm:$0xf]
      %v3102 = vld [vmem:[%s3074 + $0xa0] sm:$0xf]
      %v3103 = vld [vmem:[%s3074 + $0xa8] sm:$0xf]
      %v3104 = vld [vmem:[%s3074 + $0xac] sm:$0xf]
      %v3105 = vld [vmem:[%s3074 + $0xb4] sm:$0xf]
      %v3106 = vld [vmem:[%s3074 + $0xb8] sm:$0xf]
      %3139 = vrot.lane.b32.xlu0 %v3075, 24
      %v3140 = vpop.permute.xlu0 %3139
      %3141 = vrot.lane.b32.xlu0 %v3076, 24
      %v3142 = vpop.permute.xlu0 %3141
      %3143 = vrot.lane.b32.xlu0 %v3077, 24
      %v3144 = vpop.permute.xlu0 %3143
      %3145 = vrot.lane.b32.xlu0 %v3078, 24
      %v3146 = vpop.permute.xlu0 %3145
      %3147 = vrot.lane.b32.xlu0 %v3079, 24
      %v3148 = vpop.permute.xlu0 %3147
      %3149 = vrot.lane.b32.xlu0 %v3080, 24
      %v3150 = vpop.permute.xlu0 %3149
      %3151 = vrot.lane.b32.xlu0 %v3081, 24
      %v3152 = vpop.permute.xlu0 %3151
      %3153 = vrot.lane.b32.xlu0 %v3082, 24
      %v3154 = vpop.permute.xlu0 %3153
      %3155 = vrot.lane.b32.xlu0 %v3083, 24
      %v3156 = vpop.permute.xlu0 %3155
      %3157 = vrot.lane.b32.xlu0 %v3084, 24
      %v3158 = vpop.permute.xlu0 %3157
      %3159 = vrot.lane.b32.xlu0 %v3085, 24
      %v3160 = vpop.permute.xlu0 %3159
      %3161 = vrot.lane.b32.xlu0 %v3086, 24
      %v3162 = vpop.permute.xlu0 %3161
      %3163 = vrot.lane.b32.xlu0 %v3087, 24
      %v3164 = vpop.permute.xlu0 %3163
      %3165 = vrot.lane.b32.xlu0 %v3088, 24
      %v3166 = vpop.permute.xlu0 %3165
      %3167 = vrot.lane.b32.xlu0 %v3089, 24
      %v3168 = vpop.permute.xlu0 %3167
      %3169 = vrot.lane.b32.xlu0 %v3090, 24
      %v3170 = vpop.permute.xlu0 %3169
      %3171 = vrot.lane.b32.xlu0 %v3091, 24
      %v3172 = vpop.permute.xlu0 %3171
      %3173 = vrot.lane.b32.xlu0 %v3092, 24
      %v3174 = vpop.permute.xlu0 %3173
      %3175 = vrot.lane.b32.xlu0 %v3093, 24
      %v3176 = vpop.permute.xlu0 %3175
      %3177 = vrot.lane.b32.xlu0 %v3094, 24
      %v3178 = vpop.permute.xlu0 %3177
      %3179 = vrot.lane.b32.xlu0 %v3095, 24
      %v3180 = vpop.permute.xlu0 %3179
      %3181 = vrot.lane.b32.xlu0 %v3096, 24
      %v3182 = vpop.permute.xlu0 %3181
      %3183 = vrot.lane.b32.xlu0 %v3097, 24
      %v3184 = vpop.permute.xlu0 %3183
      %3185 = vrot.lane.b32.xlu0 %v3098, 24
      %v3186 = vpop.permute.xlu0 %3185
      %3187 = vrot.lane.b32.xlu0 %v3099, 24
      %v3188 = vpop.permute.xlu0 %3187
      %3189 = vrot.lane.b32.xlu0 %v3100, 24
      %v3190 = vpop.permute.xlu0 %3189
      %3191 = vrot.lane.b32.xlu0 %v3101, 24
      %v3192 = vpop.permute.xlu0 %3191
      %3193 = vrot.lane.b32.xlu0 %v3102, 24
      %v3194 = vpop.permute.xlu0 %3193
      %3195 = vrot.lane.b32.xlu0 %v3103, 24
      %v3196 = vpop.permute.xlu0 %3195
      %3197 = vrot.lane.b32.xlu0 %v3104, 24
      %v3198 = vpop.permute.xlu0 %3197
      %3199 = vrot.lane.b32.xlu0 %v3105, 24
      %v3200 = vpop.permute.xlu0 %3199
      %3201 = vrot.lane.b32.xlu0 %v3106, 24
      %v3202 = vpop.permute.xlu0 %3201
      %vm3235 = vcmask 224448
      %3236 = vst.msk [vmem:[#allocation3] sm:$0xf] %vm3235, %v3140
      %3237 = vst.msk [vmem:[#allocation3 + $0x4] sm:$0xf] %vm3235, %v3142
      %3238 = vst.msk [vmem:[#allocation3 + $0x8] sm:$0xf] %vm3235, %v3144
      %3239 = vst.msk [vmem:[#allocation3 + $0xc] sm:$0xf] %vm3235, %v3146
      %3240 = vst.msk [vmem:[#allocation3 + $0x10] sm:$0xf] %vm3235, %v3148
      %3241 = vst.msk [vmem:[#allocation3 + $0x14] sm:$0xf] %vm3235, %v3150
      %3242 = vst.msk [vmem:[#allocation3 + $0x18] sm:$0xf] %vm3235, %v3152
      %3243 = vst.msk [vmem:[#allocation3 + $0x1c] sm:$0xf] %vm3235, %v3154
      %3244 = vst.msk [vmem:[#allocation3 + $0x20] sm:$0xf] %vm3235, %v3156
      %3245 = vst.msk [vmem:[#allocation3 + $0x24] sm:$0xf] %vm3235, %v3158
      %3246 = vst.msk [vmem:[#allocation3 + $0x28] sm:$0xf] %vm3235, %v3160
      %3247 = vst.msk [vmem:[#allocation3 + $0x2c] sm:$0xf] %vm3235, %v3162
      %3248 = vst.msk [vmem:[#allocation3 + $0x30] sm:$0xf] %vm3235, %v3164
      %3249 = vst.msk [vmem:[#allocation3 + $0x34] sm:$0xf] %vm3235, %v3166
      %3250 = vst.msk [vmem:[#allocation3 + $0x38] sm:$0xf] %vm3235, %v3168
      %3251 = vst.msk [vmem:[#allocation3 + $0x3c] sm:$0xf] %vm3235, %v3170
      %3252 = vst.msk [vmem:[#allocation3 + $0x40] sm:$0xf] %vm3235, %v3172
      %3253 = vst.msk [vmem:[#allocation3 + $0x44] sm:$0xf] %vm3235, %v3174
      %3254 = vst.msk [vmem:[#allocation3 + $0x48] sm:$0xf] %vm3235, %v3176
      %3255 = vst.msk [vmem:[#allocation3 + $0x4c] sm:$0xf] %vm3235, %v3178
      %3256 = vst.msk [vmem:[#allocation3 + $0x50] sm:$0xf] %vm3235, %v3180
      %3257 = vst.msk [vmem:[#allocation3 + $0x54] sm:$0xf] %vm3235, %v3182
      %3258 = vst.msk [vmem:[#allocation3 + $0x58] sm:$0xf] %vm3235, %v3184
      %3259 = vst.msk [vmem:[#allocation3 + $0x5c] sm:$0xf] %vm3235, %v3186
      %3260 = vst.msk [vmem:[#allocation3 + $0x60] sm:$0xf] %vm3235, %v3188
      %3261 = vst.msk [vmem:[#allocation3 + $0x64] sm:$0xf] %vm3235, %v3190
      %3262 = vst.msk [vmem:[#allocation3 + $0x68] sm:$0xf] %vm3235, %v3192
      %3263 = vst.msk [vmem:[#allocation3 + $0x6c] sm:$0xf] %vm3235, %v3194
      %3264 = vst.msk [vmem:[#allocation3 + $0x70] sm:$0xf] %vm3235, %v3196
      %3265 = vst.msk [vmem:[#allocation3 + $0x74] sm:$0xf] %vm3235, %v3198
      %3266 = vst.msk [vmem:[#allocation3 + $0x78] sm:$0xf] %vm3235, %v3200
      %3267 = vst.msk [vmem:[#allocation3 + $0x7c] sm:$0xf] %vm3235, %v3202
      %v3268 = vld [vmem:[%s3074] sm:$0xf]
      %v3269 = vld [vmem:[%s3074 + $0x4] sm:$0xf]
      %v3270 = vld [vmem:[%s3074 + $0x8] sm:$0x1]
      %v3271 = vld [vmem:[%s3074 + $0xc] sm:$0xf]
      %v3272 = vld [vmem:[%s3074 + $0x10] sm:$0xf]
      %v3273 = vld [vmem:[%s3074 + $0x14] sm:$0x1]
      %v3274 = vld [vmem:[%s3074 + $0x18] sm:$0xf]
      %v3275 = vld [vmem:[%s3074 + $0x1c] sm:$0xf]
      %v3276 = vld [vmem:[%s3074 + $0x20] sm:$0x1]
      %v3277 = vld [vmem:[%s3074 + $0x24] sm:$0xf]
      %v3278 = vld [vmem:[%s3074 + $0x28] sm:$0xf]
      %v3279 = vld [vmem:[%s3074 + $0x2c] sm:$0x1]
      %v3280 = vld [vmem:[%s3074 + $0x30] sm:$0xf]
      %v3281 = vld [vmem:[%s3074 + $0x34] sm:$0xf]
      %v3282 = vld [vmem:[%s3074 + $0x38] sm:$0x1]
      %v3283 = vld [vmem:[%s3074 + $0x3c] sm:$0xf]
      %v3284 = vld [vmem:[%s3074 + $0x40] sm:$0xf]
      %v3285 = vld [vmem:[%s3074 + $0x44] sm:$0x1]
      %v3286 = vld [vmem:[%s3074 + $0x48] sm:$0xf]
      %v3287 = vld [vmem:[%s3074 + $0x4c] sm:$0xf]
      %v3288 = vld [vmem:[%s3074 + $0x50] sm:$0x1]
      %v3289 = vld [vmem:[%s3074 + $0x54] sm:$0xf]
      %v3290 = vld [vmem:[%s3074 + $0x58] sm:$0xf]
      %v3291 = vld [vmem:[%s3074 + $0x5c] sm:$0x1]
      %v3292 = vld [vmem:[%s3074 + $0x60] sm:$0xf]
      %v3293 = vld [vmem:[%s3074 + $0x64] sm:$0xf]
      %v3294 = vld [vmem:[%s3074 + $0x68] sm:$0x1]
      %v3295 = vld [vmem:[%s3074 + $0x6c] sm:$0xf]
      %v3296 = vld [vmem:[%s3074 + $0x70] sm:$0xf]
      %v3297 = vld [vmem:[%s3074 + $0x74] sm:$0x1]
      %v3298 = vld [vmem:[%s3074 + $0x78] sm:$0xf]
      %v3299 = vld [vmem:[%s3074 + $0x7c] sm:$0xf]
      %v3300 = vld [vmem:[%s3074 + $0x80] sm:$0x1]
      %v3301 = vld [vmem:[%s3074 + $0x84] sm:$0xf]
      %v3302 = vld [vmem:[%s3074 + $0x88] sm:$0xf]
      %v3303 = vld [vmem:[%s3074 + $0x8c] sm:$0x1]
      %v3304 = vld [vmem:[%s3074 + $0x90] sm:$0xf]
      %v3305 = vld [vmem:[%s3074 + $0x94] sm:$0xf]
      %v3306 = vld [vmem:[%s3074 + $0x98] sm:$0x1]
      %v3307 = vld [vmem:[%s3074 + $0x9c] sm:$0xf]
      %v3308 = vld [vmem:[%s3074 + $0xa0] sm:$0xf]
      %v3309 = vld [vmem:[%s3074 + $0xa4] sm:$0x1]
      %v3310 = vld [vmem:[%s3074 + $0xa8] sm:$0xf]
      %v3311 = vld [vmem:[%s3074 + $0xac] sm:$0xf]
      %v3312 = vld [vmem:[%s3074 + $0xb0] sm:$0x1]
      %v3313 = vld [vmem:[%s3074 + $0xb4] sm:$0xf]
      %v3314 = vld [vmem:[%s3074 + $0xb8] sm:$0xf]
      %v3315 = vld [vmem:[%s3074 + $0xbc] sm:$0x1]
      %v3317 = vshrl.u32 %v3268, 16
      %v3319 = vrot.slane %v3317, 4
      %v3320 = vshll.u32 %v3268, 16
      %v3322 = vrot.slane %v3320, 5
      %v3323 = vor.u32 %v3319, %v3322
      %v3324 = vrot.slane %v3323, 4
      %v3326 = vshll.u32 %v3269, 16
      %v3328 = vrot.slane %v3326, 5
      %v3329 = vsel %vm1122, %v3324, %v3328
      %v3330 = vshrl.u32 %v3269, 16
      %v3332 = vrot.slane %v3330, 4
      %v3333 = vor.u32 %v3332, %v3328
      %v3334 = vrot.slane %v3333, 4
      %v3336 = vshll.u32 %v3270, 16
      %v3338 = vrot.slane %v3336, 5
      %v3339 = vsel %vm1122, %v3334, %v3338
      %v3341 = vshrl.u32 %v3271, 16
      %v3343 = vrot.slane %v3341, 4
      %v3344 = vshll.u32 %v3271, 16
      %v3346 = vrot.slane %v3344, 5
      %v3347 = vor.u32 %v3343, %v3346
      %v3348 = vrot.slane %v3347, 4
      %v3350 = vshll.u32 %v3272, 16
      %v3352 = vrot.slane %v3350, 5
      %v3353 = vsel %vm1122, %v3348, %v3352
      %v3354 = vshrl.u32 %v3272, 16
      %v3356 = vrot.slane %v3354, 4
      %v3357 = vor.u32 %v3356, %v3352
      %v3358 = vrot.slane %v3357, 4
      %v3360 = vshll.u32 %v3273, 16
      %v3362 = vrot.slane %v3360, 5
      %v3363 = vsel %vm1122, %v3358, %v3362
      %v3365 = vshrl.u32 %v3274, 16
      %v3367 = vrot.slane %v3365, 4
      %v3368 = vshll.u32 %v3274, 16
      %v3370 = vrot.slane %v3368, 5
      %v3371 = vor.u32 %v3367, %v3370
      %v3372 = vrot.slane %v3371, 4
      %v3374 = vshll.u32 %v3275, 16
      %v3376 = vrot.slane %v3374, 5
      %v3377 = vsel %vm1122, %v3372, %v3376
      %v3378 = vshrl.u32 %v3275, 16
      %v3380 = vrot.slane %v3378, 4
      %v3381 = vor.u32 %v3380, %v3376
      %v3382 = vrot.slane %v3381, 4
      %v3384 = vshll.u32 %v3276, 16
      %v3386 = vrot.slane %v3384, 5
      %v3387 = vsel %vm1122, %v3382, %v3386
      %v3389 = vshrl.u32 %v3277, 16
      %v3391 = vrot.slane %v3389, 4
      %v3392 = vshll.u32 %v3277, 16
      %v3394 = vrot.slane %v3392, 5
      %v3395 = vor.u32 %v3391, %v3394
      %v3396 = vrot.slane %v3395, 4
      %v3398 = vshll.u32 %v3278, 16
      %v3400 = vrot.slane %v3398, 5
      %v3401 = vsel %vm1122, %v3396, %v3400
      %v3402 = vshrl.u32 %v3278, 16
      %v3404 = vrot.slane %v3402, 4
      %v3405 = vor.u32 %v3404, %v3400
      %v3406 = vrot.slane %v3405, 4
      %v3408 = vshll.u32 %v3279, 16
      %v3410 = vrot.slane %v3408, 5
      %v3411 = vsel %vm1122, %v3406, %v3410
      %v3413 = vshrl.u32 %v3280, 16
      %v3415 = vrot.slane %v3413, 4
      %v3416 = vshll.u32 %v3280, 16
      %v3418 = vrot.slane %v3416, 5
      %v3419 = vor.u32 %v3415, %v3418
      %v3420 = vrot.slane %v3419, 4
      %v3422 = vshll.u32 %v3281, 16
      %v3424 = vrot.slane %v3422, 5
      %v3425 = vsel %vm1122, %v3420, %v3424
      %v3426 = vshrl.u32 %v3281, 16
      %v3428 = vrot.slane %v3426, 4
      %v3429 = vor.u32 %v3428, %v3424
      %v3430 = vrot.slane %v3429, 4
      %v3432 = vshll.u32 %v3282, 16
      %v3434 = vrot.slane %v3432, 5
      %v3435 = vsel %vm1122, %v3430, %v3434
      %v3437 = vshrl.u32 %v3283, 16
      %v3439 = vrot.slane %v3437, 4
      %v3440 = vshll.u32 %v3283, 16
      %v3442 = vrot.slane %v3440, 5
      %v3443 = vor.u32 %v3439, %v3442
      %v3444 = vrot.slane %v3443, 4
      %v3446 = vshll.u32 %v3284, 16
      %v3448 = vrot.slane %v3446, 5
      %v3449 = vsel %vm1122, %v3444, %v3448
      %v3450 = vshrl.u32 %v3284, 16
      %v3452 = vrot.slane %v3450, 4
      %v3453 = vor.u32 %v3452, %v3448
      %v3454 = vrot.slane %v3453, 4
      %v3456 = vshll.u32 %v3285, 16
      %v3458 = vrot.slane %v3456, 5
      %v3459 = vsel %vm1122, %v3454, %v3458
      %v3461 = vshrl.u32 %v3286, 16
      %v3463 = vrot.slane %v3461, 4
      %v3464 = vshll.u32 %v3286, 16
      %v3466 = vrot.slane %v3464, 5
      %v3467 = vor.u32 %v3463, %v3466
      %v3468 = vrot.slane %v3467, 4
      %v3470 = vshll.u32 %v3287, 16
      %v3472 = vrot.slane %v3470, 5
      %v3473 = vsel %vm1122, %v3468, %v3472
      %v3474 = vshrl.u32 %v3287, 16
      %v3476 = vrot.slane %v3474, 4
      %v3477 = vor.u32 %v3476, %v3472
      %v3478 = vrot.slane %v3477, 4
      %v3480 = vshll.u32 %v3288, 16
      %v3482 = vrot.slane %v3480, 5
      %v3483 = vsel %vm1122, %v3478, %v3482
      %v3485 = vshrl.u32 %v3289, 16
      %v3487 = vrot.slane %v3485, 4
      %v3488 = vshll.u32 %v3289, 16
      %v3490 = vrot.slane %v3488, 5
      %v3491 = vor.u32 %v3487, %v3490
      %v3492 = vrot.slane %v3491, 4
      %v3494 = vshll.u32 %v3290, 16
      %v3496 = vrot.slane %v3494, 5
      %v3497 = vsel %vm1122, %v3492, %v3496
      %v3498 = vshrl.u32 %v3290, 16
      %v3500 = vrot.slane %v3498, 4
      %v3501 = vor.u32 %v3500, %v3496
      %v3502 = vrot.slane %v3501, 4
      %v3504 = vshll.u32 %v3291, 16
      %v3506 = vrot.slane %v3504, 5
      %v3507 = vsel %vm1122, %v3502, %v3506
      %v3509 = vshrl.u32 %v3292, 16
      %v3511 = vrot.slane %v3509, 4
      %v3512 = vshll.u32 %v3292, 16
      %v3514 = vrot.slane %v3512, 5
      %v3515 = vor.u32 %v3511, %v3514
      %v3516 = vrot.slane %v3515, 4
      %v3518 = vshll.u32 %v3293, 16
      %v3520 = vrot.slane %v3518, 5
      %v3521 = vsel %vm1122, %v3516, %v3520
      %v3522 = vshrl.u32 %v3293, 16
      %v3524 = vrot.slane %v3522, 4
      %v3525 = vor.u32 %v3524, %v3520
      %v3526 = vrot.slane %v3525, 4
      %v3528 = vshll.u32 %v3294, 16
      %v3530 = vrot.slane %v3528, 5
      %v3531 = vsel %vm1122, %v3526, %v3530
      %v3533 = vshrl.u32 %v3295, 16
      %v3535 = vrot.slane %v3533, 4
      %v3536 = vshll.u32 %v3295, 16
      %v3538 = vrot.slane %v3536, 5
      %v3539 = vor.u32 %v3535, %v3538
      %v3540 = vrot.slane %v3539, 4
      %v3542 = vshll.u32 %v3296, 16
      %v3544 = vrot.slane %v3542, 5
      %v3545 = vsel %vm1122, %v3540, %v3544
      %v3546 = vshrl.u32 %v3296, 16
      %v3548 = vrot.slane %v3546, 4
      %v3549 = vor.u32 %v3548, %v3544
      %v3550 = vrot.slane %v3549, 4
      %v3552 = vshll.u32 %v3297, 16
      %v3554 = vrot.slane %v3552, 5
      %v3555 = vsel %vm1122, %v3550, %v3554
      %v3557 = vshrl.u32 %v3298, 16
      %v3559 = vrot.slane %v3557, 4
      %v3560 = vshll.u32 %v3298, 16
      %v3562 = vrot.slane %v3560, 5
      %v3563 = vor.u32 %v3559, %v3562
      %v3564 = vrot.slane %v3563, 4
      %v3566 = vshll.u32 %v3299, 16
      %v3568 = vrot.slane %v3566, 5
      %v3569 = vsel %vm1122, %v3564, %v3568
      %v3570 = vshrl.u32 %v3299, 16
      %v3572 = vrot.slane %v3570, 4
      %v3573 = vor.u32 %v3572, %v3568
      %v3574 = vrot.slane %v3573, 4
      %v3576 = vshll.u32 %v3300, 16
      %v3578 = vrot.slane %v3576, 5
      %v3579 = vsel %vm1122, %v3574, %v3578
      %v3581 = vshrl.u32 %v3301, 16
      %v3583 = vrot.slane %v3581, 4
      %v3584 = vshll.u32 %v3301, 16
      %v3586 = vrot.slane %v3584, 5
      %v3587 = vor.u32 %v3583, %v3586
      %v3588 = vrot.slane %v3587, 4
      %v3590 = vshll.u32 %v3302, 16
      %v3592 = vrot.slane %v3590, 5
      %v3593 = vsel %vm1122, %v3588, %v3592
      %v3594 = vshrl.u32 %v3302, 16
      %v3596 = vrot.slane %v3594, 4
      %v3597 = vor.u32 %v3596, %v3592
      %v3598 = vrot.slane %v3597, 4
      %v3600 = vshll.u32 %v3303, 16
      %v3602 = vrot.slane %v3600, 5
      %v3603 = vsel %vm1122, %v3598, %v3602
      %v3605 = vshrl.u32 %v3304, 16
      %v3607 = vrot.slane %v3605, 4
      %v3608 = vshll.u32 %v3304, 16
      %v3610 = vrot.slane %v3608, 5
      %v3611 = vor.u32 %v3607, %v3610
      %v3612 = vrot.slane %v3611, 4
      %v3614 = vshll.u32 %v3305, 16
      %v3616 = vrot.slane %v3614, 5
      %v3617 = vsel %vm1122, %v3612, %v3616
      %v3618 = vshrl.u32 %v3305, 16
      %v3620 = vrot.slane %v3618, 4
      %v3621 = vor.u32 %v3620, %v3616
      %v3622 = vrot.slane %v3621, 4
      %v3624 = vshll.u32 %v3306, 16
      %v3626 = vrot.slane %v3624, 5
      %v3627 = vsel %vm1122, %v3622, %v3626
      %v3629 = vshrl.u32 %v3307, 16
      %v3631 = vrot.slane %v3629, 4
      %v3632 = vshll.u32 %v3307, 16
      %v3634 = vrot.slane %v3632, 5
      %v3635 = vor.u32 %v3631, %v3634
      %v3636 = vrot.slane %v3635, 4
      %v3638 = vshll.u32 %v3308, 16
      %v3640 = vrot.slane %v3638, 5
      %v3641 = vsel %vm1122, %v3636, %v3640
      %v3642 = vshrl.u32 %v3308, 16
      %v3644 = vrot.slane %v3642, 4
      %v3645 = vor.u32 %v3644, %v3640
      %v3646 = vrot.slane %v3645, 4
      %v3648 = vshll.u32 %v3309, 16
      %v3650 = vrot.slane %v3648, 5
      %v3651 = vsel %vm1122, %v3646, %v3650
      %v3653 = vshrl.u32 %v3310, 16
      %v3655 = vrot.slane %v3653, 4
      %v3656 = vshll.u32 %v3310, 16
      %v3658 = vrot.slane %v3656, 5
      %v3659 = vor.u32 %v3655, %v3658
      %v3660 = vrot.slane %v3659, 4
      %v3662 = vshll.u32 %v3311, 16
      %v3664 = vrot.slane %v3662, 5
      %v3665 = vsel %vm1122, %v3660, %v3664
      %v3666 = vshrl.u32 %v3311, 16
      %v3668 = vrot.slane %v3666, 4
      %v3669 = vor.u32 %v3668, %v3664
      %v3670 = vrot.slane %v3669, 4
      %v3672 = vshll.u32 %v3312, 16
      %v3674 = vrot.slane %v3672, 5
      %v3675 = vsel %vm1122, %v3670, %v3674
      %v3677 = vshrl.u32 %v3313, 16
      %v3679 = vrot.slane %v3677, 4
      %v3680 = vshll.u32 %v3313, 16
      %v3682 = vrot.slane %v3680, 5
      %v3683 = vor.u32 %v3679, %v3682
      %v3684 = vrot.slane %v3683, 4
      %v3686 = vshll.u32 %v3314, 16
      %v3688 = vrot.slane %v3686, 5
      %v3689 = vsel %vm1122, %v3684, %v3688
      %v3690 = vshrl.u32 %v3314, 16
      %v3692 = vrot.slane %v3690, 4
      %v3693 = vor.u32 %v3692, %v3688
      %v3694 = vrot.slane %v3693, 4
      %v3696 = vshll.u32 %v3315, 16
      %v3698 = vrot.slane %v3696, 5
      %v3699 = vsel %vm1122, %v3694, %v3698
      %3700 = vrot.lane.b32.xlu0 %v3329, 28
      %v3701 = vpop.permute.xlu0 %3700
      %3702 = vrot.lane.b32.xlu0 %v3339, 28
      %v3703 = vpop.permute.xlu0 %3702
      %3704 = vrot.lane.b32.xlu0 %v3353, 28
      %v3705 = vpop.permute.xlu0 %3704
      %3706 = vrot.lane.b32.xlu0 %v3363, 28
      %v3707 = vpop.permute.xlu0 %3706
      %3708 = vrot.lane.b32.xlu0 %v3377, 28
      %v3709 = vpop.permute.xlu0 %3708
      %3710 = vrot.lane.b32.xlu0 %v3387, 28
      %v3711 = vpop.permute.xlu0 %3710
      %3712 = vrot.lane.b32.xlu0 %v3401, 28
      %v3713 = vpop.permute.xlu0 %3712
      %3714 = vrot.lane.b32.xlu0 %v3411, 28
      %v3715 = vpop.permute.xlu0 %3714
      %3716 = vrot.lane.b32.xlu0 %v3425, 28
      %v3717 = vpop.permute.xlu0 %3716
      %3718 = vrot.lane.b32.xlu0 %v3435, 28
      %v3719 = vpop.permute.xlu0 %3718
      %3720 = vrot.lane.b32.xlu0 %v3449, 28
      %v3721 = vpop.permute.xlu0 %3720
      %3722 = vrot.lane.b32.xlu0 %v3459, 28
      %v3723 = vpop.permute.xlu0 %3722
      %3724 = vrot.lane.b32.xlu0 %v3473, 28
      %v3725 = vpop.permute.xlu0 %3724
      %3726 = vrot.lane.b32.xlu0 %v3483, 28
      %v3727 = vpop.permute.xlu0 %3726
      %3728 = vrot.lane.b32.xlu0 %v3497, 28
      %v3729 = vpop.permute.xlu0 %3728
      %3730 = vrot.lane.b32.xlu0 %v3507, 28
      %v3731 = vpop.permute.xlu0 %3730
      %3732 = vrot.lane.b32.xlu0 %v3521, 28
      %v3733 = vpop.permute.xlu0 %3732
      %3734 = vrot.lane.b32.xlu0 %v3531, 28
      %v3735 = vpop.permute.xlu0 %3734
      %3736 = vrot.lane.b32.xlu0 %v3545, 28
      %v3737 = vpop.permute.xlu0 %3736
      %3738 = vrot.lane.b32.xlu0 %v3555, 28
      %v3739 = vpop.permute.xlu0 %3738
      %3740 = vrot.lane.b32.xlu0 %v3569, 28
      %v3741 = vpop.permute.xlu0 %3740
      %3742 = vrot.lane.b32.xlu0 %v3579, 28
      %v3743 = vpop.permute.xlu0 %3742
      %3744 = vrot.lane.b32.xlu0 %v3593, 28
      %v3745 = vpop.permute.xlu0 %3744
      %3746 = vrot.lane.b32.xlu0 %v3603, 28
      %v3747 = vpop.permute.xlu0 %3746
      %3748 = vrot.lane.b32.xlu0 %v3617, 28
      %v3749 = vpop.permute.xlu0 %3748
      %3750 = vrot.lane.b32.xlu0 %v3627, 28
      %v3751 = vpop.permute.xlu0 %3750
      %3752 = vrot.lane.b32.xlu0 %v3641, 28
      %v3753 = vpop.permute.xlu0 %3752
      %3754 = vrot.lane.b32.xlu0 %v3651, 28
      %v3755 = vpop.permute.xlu0 %3754
      %3756 = vrot.lane.b32.xlu0 %v3665, 28
      %v3757 = vpop.permute.xlu0 %3756
      %3758 = vrot.lane.b32.xlu0 %v3675, 28
      %v3759 = vpop.permute.xlu0 %3758
      %3760 = vrot.lane.b32.xlu0 %v3689, 28
      %v3761 = vpop.permute.xlu0 %3760
      %3762 = vrot.lane.b32.xlu0 %v3699, 28
      %v3763 = vpop.permute.xlu0 %3762
      %vm3796 = vcmask 257248
      %3797 = vst.msk [vmem:[#allocation3] sm:$0xf] %vm3796, %v3701
      %3798 = vst.msk [vmem:[#allocation3 + $0x4] sm:$0xf] %vm3796, %v3703
      %3799 = vst.msk [vmem:[#allocation3 + $0x8] sm:$0xf] %vm3796, %v3705
      %3800 = vst.msk [vmem:[#allocation3 + $0xc] sm:$0xf] %vm3796, %v3707
      %3801 = vst.msk [vmem:[#allocation3 + $0x10] sm:$0xf] %vm3796, %v3709
      %3802 = vst.msk [vmem:[#allocation3 + $0x14] sm:$0xf] %vm3796, %v3711
      %3803 = vst.msk [vmem:[#allocation3 + $0x18] sm:$0xf] %vm3796, %v3713
      %3804 = vst.msk [vmem:[#allocation3 + $0x1c] sm:$0xf] %vm3796, %v3715
      %3805 = vst.msk [vmem:[#allocation3 + $0x20] sm:$0xf] %vm3796, %v3717
      %3806 = vst.msk [vmem:[#allocation3 + $0x24] sm:$0xf] %vm3796, %v3719
      %3807 = vst.msk [vmem:[#allocation3 + $0x28] sm:$0xf] %vm3796, %v3721
      %3808 = vst.msk [vmem:[#allocation3 + $0x2c] sm:$0xf] %vm3796, %v3723
      %3809 = vst.msk [vmem:[#allocation3 + $0x30] sm:$0xf] %vm3796, %v3725
      %3810 = vst.msk [vmem:[#allocation3 + $0x34] sm:$0xf] %vm3796, %v3727
      %3811 = vst.msk [vmem:[#allocation3 + $0x38] sm:$0xf] %vm3796, %v3729
      %3812 = vst.msk [vmem:[#allocation3 + $0x3c] sm:$0xf] %vm3796, %v3731
      %3813 = vst.msk [vmem:[#allocation3 + $0x40] sm:$0xf] %vm3796, %v3733
      %3814 = vst.msk [vmem:[#allocation3 + $0x44] sm:$0xf] %vm3796, %v3735
      %3815 = vst.msk [vmem:[#allocation3 + $0x48] sm:$0xf] %vm3796, %v3737
      %3816 = vst.msk [vmem:[#allocation3 + $0x4c] sm:$0xf] %vm3796, %v3739
      %3817 = vst.msk [vmem:[#allocation3 + $0x50] sm:$0xf] %vm3796, %v3741
      %3818 = vst.msk [vmem:[#allocation3 + $0x54] sm:$0xf] %vm3796, %v3743
      %3819 = vst.msk [vmem:[#allocation3 + $0x58] sm:$0xf] %vm3796, %v3745
      %3820 = vst.msk [vmem:[#allocation3 + $0x5c] sm:$0xf] %vm3796, %v3747
      %3821 = vst.msk [vmem:[#allocation3 + $0x60] sm:$0xf] %vm3796, %v3749
      %3822 = vst.msk [vmem:[#allocation3 + $0x64] sm:$0xf] %vm3796, %v3751
      %3823 = vst.msk [vmem:[#allocation3 + $0x68] sm:$0xf] %vm3796, %v3753
      %3824 = vst.msk [vmem:[#allocation3 + $0x6c] sm:$0xf] %vm3796, %v3755
      %3825 = vst.msk [vmem:[#allocation3 + $0x70] sm:$0xf] %vm3796, %v3757
      %3826 = vst.msk [vmem:[#allocation3 + $0x74] sm:$0xf] %vm3796, %v3759
      %3827 = vst.msk [vmem:[#allocation3 + $0x78] sm:$0xf] %vm3796, %v3761
      %3828 = vst.msk [vmem:[#allocation3 + $0x7c] sm:$0xf] %vm3796, %v3763
      %v3829 = vld [vmem:[%s3074] sm:$0xe]
      %v3830 = vld [vmem:[%s3074 + $0x4] sm:$0xf]
      %v3831 = vld [vmem:[%s3074 + $0x8] sm:$0x1]
      %v3832 = vld [vmem:[%s3074 + $0xc] sm:$0xe]
      %v3833 = vld [vmem:[%s3074 + $0x10] sm:$0xf]
      %v3834 = vld [vmem:[%s3074 + $0x14] sm:$0x1]
      %v3835 = vld [vmem:[%s3074 + $0x18] sm:$0xe]
      %v3836 = vld [vmem:[%s3074 + $0x1c] sm:$0xf]
      %v3837 = vld [vmem:[%s3074 + $0x20] sm:$0x1]
      %v3838 = vld [vmem:[%s3074 + $0x24] sm:$0xe]
      %v3839 = vld [vmem:[%s3074 + $0x28] sm:$0xf]
      %v3840 = vld [vmem:[%s3074 + $0x2c] sm:$0x1]
      %v3841 = vld [vmem:[%s3074 + $0x30] sm:$0xe]
      %v3842 = vld [vmem:[%s3074 + $0x34] sm:$0xf]
      %v3843 = vld [vmem:[%s3074 + $0x38] sm:$0x1]
      %v3844 = vld [vmem:[%s3074 + $0x3c] sm:$0xe]
      %v3845 = vld [vmem:[%s3074 + $0x40] sm:$0xf]
      %v3846 = vld [vmem:[%s3074 + $0x44] sm:$0x1]
      %v3847 = vld [vmem:[%s3074 + $0x48] sm:$0xe]
      %v3848 = vld [vmem:[%s3074 + $0x4c] sm:$0xf]
      %v3849 = vld [vmem:[%s3074 + $0x50] sm:$0x1]
      %v3850 = vld [vmem:[%s3074 + $0x54] sm:$0xe]
      %v3851 = vld [vmem:[%s3074 + $0x58] sm:$0xf]
      %v3852 = vld [vmem:[%s3074 + $0x5c] sm:$0x1]
      %v3853 = vld [vmem:[%s3074 + $0x60] sm:$0xe]
      %v3854 = vld [vmem:[%s3074 + $0x64] sm:$0xf]
      %v3855 = vld [vmem:[%s3074 + $0x68] sm:$0x1]
      %v3856 = vld [vmem:[%s3074 + $0x6c] sm:$0xe]
      %v3857 = vld [vmem:[%s3074 + $0x70] sm:$0xf]
      %v3858 = vld [vmem:[%s3074 + $0x74] sm:$0x1]
      %v3859 = vld [vmem:[%s3074 + $0x78] sm:$0xe]
      %v3860 = vld [vmem:[%s3074 + $0x7c] sm:$0xf]
      %v3861 = vld [vmem:[%s3074 + $0x80] sm:$0x1]
      %v3862 = vld [vmem:[%s3074 + $0x84] sm:$0xe]
      %v3863 = vld [vmem:[%s3074 + $0x88] sm:$0xf]
      %v3864 = vld [vmem:[%s3074 + $0x8c] sm:$0x1]
      %v3865 = vld [vmem:[%s3074 + $0x90] sm:$0xe]
      %v3866 = vld [vmem:[%s3074 + $0x94] sm:$0xf]
      %v3867 = vld [vmem:[%s3074 + $0x98] sm:$0x1]
      %v3868 = vld [vmem:[%s3074 + $0x9c] sm:$0xe]
      %v3869 = vld [vmem:[%s3074 + $0xa0] sm:$0xf]
      %v3870 = vld [vmem:[%s3074 + $0xa4] sm:$0x1]
      %v3871 = vld [vmem:[%s3074 + $0xa8] sm:$0xe]
      %v3872 = vld [vmem:[%s3074 + $0xac] sm:$0xf]
      %v3873 = vld [vmem:[%s3074 + $0xb0] sm:$0x1]
      %v3874 = vld [vmem:[%s3074 + $0xb4] sm:$0xe]
      %v3875 = vld [vmem:[%s3074 + $0xb8] sm:$0xf]
      %v3876 = vld [vmem:[%s3074 + $0xbc] sm:$0x1]
      %v3925 = vrot.slane %v3829, 5
      %v3926 = vrot.slane %v3925, 4
      %v3927 = vrot.slane %v3830, 5
      %v3928 = vsel %vm1734, %v3926, %v3927
      %v3929 = vrot.slane %v3927, 4
      %v3930 = vrot.slane %v3831, 5
      %v3931 = vsel %vm1734, %v3929, %v3930
      %v3932 = vrot.slane %v3832, 5
      %v3933 = vrot.slane %v3932, 4
      %v3934 = vrot.slane %v3833, 5
      %v3935 = vsel %vm1734, %v3933, %v3934
      %v3936 = vrot.slane %v3934, 4
      %v3937 = vrot.slane %v3834, 5
      %v3938 = vsel %vm1734, %v3936, %v3937
      %v3939 = vrot.slane %v3835, 5
      %v3940 = vrot.slane %v3939, 4
      %v3941 = vrot.slane %v3836, 5
      %v3942 = vsel %vm1734, %v3940, %v3941
      %v3943 = vrot.slane %v3941, 4
      %v3944 = vrot.slane %v3837, 5
      %v3945 = vsel %vm1734, %v3943, %v3944
      %v3946 = vrot.slane %v3838, 5
      %v3947 = vrot.slane %v3946, 4
      %v3948 = vrot.slane %v3839, 5
      %v3949 = vsel %vm1734, %v3947, %v3948
      %v3950 = vrot.slane %v3948, 4
      %v3951 = vrot.slane %v3840, 5
      %v3952 = vsel %vm1734, %v3950, %v3951
      %v3953 = vrot.slane %v3841, 5
      %v3954 = vrot.slane %v3953, 4
      %v3955 = vrot.slane %v3842, 5
      %v3956 = vsel %vm1734, %v3954, %v3955
      %v3957 = vrot.slane %v3955, 4
      %v3958 = vrot.slane %v3843, 5
      %v3959 = vsel %vm1734, %v3957, %v3958
      %v3960 = vrot.slane %v3844, 5
      %v3961 = vrot.slane %v3960, 4
      %v3962 = vrot.slane %v3845, 5
      %v3963 = vsel %vm1734, %v3961, %v3962
      %v3964 = vrot.slane %v3962, 4
      %v3965 = vrot.slane %v3846, 5
      %v3966 = vsel %vm1734, %v3964, %v3965
      %v3967 = vrot.slane %v3847, 5
      %v3968 = vrot.slane %v3967, 4
      %v3969 = vrot.slane %v3848, 5
      %v3970 = vsel %vm1734, %v3968, %v3969
      %v3971 = vrot.slane %v3969, 4
      %v3972 = vrot.slane %v3849, 5
      %v3973 = vsel %vm1734, %v3971, %v3972
      %v3974 = vrot.slane %v3850, 5
      %v3975 = vrot.slane %v3974, 4
      %v3976 = vrot.slane %v3851, 5
      %v3977 = vsel %vm1734, %v3975, %v3976
      %v3978 = vrot.slane %v3976, 4
      %v3979 = vrot.slane %v3852, 5
      %v3980 = vsel %vm1734, %v3978, %v3979
      %v3981 = vrot.slane %v3853, 5
      %v3982 = vrot.slane %v3981, 4
      %v3983 = vrot.slane %v3854, 5
      %v3984 = vsel %vm1734, %v3982, %v3983
      %v3985 = vrot.slane %v3983, 4
      %v3986 = vrot.slane %v3855, 5
      %v3987 = vsel %vm1734, %v3985, %v3986
      %v3988 = vrot.slane %v3856, 5
      %v3989 = vrot.slane %v3988, 4
      %v3990 = vrot.slane %v3857, 5
      %v3991 = vsel %vm1734, %v3989, %v3990
      %v3992 = vrot.slane %v3990, 4
      %v3993 = vrot.slane %v3858, 5
      %v3994 = vsel %vm1734, %v3992, %v3993
      %v3995 = vrot.slane %v3859, 5
      %v3996 = vrot.slane %v3995, 4
      %v3997 = vrot.slane %v3860, 5
      %v3998 = vsel %vm1734, %v3996, %v3997
      %v3999 = vrot.slane %v3997, 4
      %v4000 = vrot.slane %v3861, 5
      %v4001 = vsel %vm1734, %v3999, %v4000
      %v4002 = vrot.slane %v3862, 5
      %v4003 = vrot.slane %v4002, 4
      %v4004 = vrot.slane %v3863, 5
      %v4005 = vsel %vm1734, %v4003, %v4004
      %v4006 = vrot.slane %v4004, 4
      %v4007 = vrot.slane %v3864, 5
      %v4008 = vsel %vm1734, %v4006, %v4007
      %v4009 = vrot.slane %v3865, 5
      %v4010 = vrot.slane %v4009, 4
      %v4011 = vrot.slane %v3866, 5
      %v4012 = vsel %vm1734, %v4010, %v4011
      %v4013 = vrot.slane %v4011, 4
      %v4014 = vrot.slane %v3867, 5
      %v4015 = vsel %vm1734, %v4013, %v4014
      %v4016 = vrot.slane %v3868, 5
      %v4017 = vrot.slane %v4016, 4
      %v4018 = vrot.slane %v3869, 5
      %v4019 = vsel %vm1734, %v4017, %v4018
      %v4020 = vrot.slane %v4018, 4
      %v4021 = vrot.slane %v3870, 5
      %v4022 = vsel %vm1734, %v4020, %v4021
      %v4023 = vrot.slane %v3871, 5
      %v4024 = vrot.slane %v4023, 4
      %v4025 = vrot.slane %v3872, 5
      %v4026 = vsel %vm1734, %v4024, %v4025
      %v4027 = vrot.slane %v4025, 4
      %v4028 = vrot.slane %v3873, 5
      %v4029 = vsel %vm1734, %v4027, %v4028
      %v4030 = vrot.slane %v3874, 5
      %v4031 = vrot.slane %v4030, 4
      %v4032 = vrot.slane %v3875, 5
      %v4033 = vsel %vm1734, %v4031, %v4032
      %v4034 = vrot.slane %v4032, 4
      %v4035 = vrot.slane %v3876, 5
      %v4036 = vsel %vm1734, %v4034, %v4035
      %4037 = vrot.lane.b32.xlu0 %v3928, 32
      %v4038 = vpop.permute.xlu0 %4037
      %4039 = vrot.lane.b32.xlu0 %v3931, 32
      %v4040 = vpop.permute.xlu0 %4039
      %4041 = vrot.lane.b32.xlu0 %v3935, 32
      %v4042 = vpop.permute.xlu0 %4041
      %4043 = vrot.lane.b32.xlu0 %v3938, 32
      %v4044 = vpop.permute.xlu0 %4043
      %4045 = vrot.lane.b32.xlu0 %v3942, 32
      %v4046 = vpop.permute.xlu0 %4045
      %4047 = vrot.lane.b32.xlu0 %v3945, 32
      %v4048 = vpop.permute.xlu0 %4047
      %4049 = vrot.lane.b32.xlu0 %v3949, 32
      %v4050 = vpop.permute.xlu0 %4049
      %4051 = vrot.lane.b32.xlu0 %v3952, 32
      %v4052 = vpop.permute.xlu0 %4051
      %4053 = vrot.lane.b32.xlu0 %v3956, 32
      %v4054 = vpop.permute.xlu0 %4053
      %4055 = vrot.lane.b32.xlu0 %v3959, 32
      %v4056 = vpop.permute.xlu0 %4055
      %4057 = vrot.lane.b32.xlu0 %v3963, 32
      %v4058 = vpop.permute.xlu0 %4057
      %4059 = vrot.lane.b32.xlu0 %v3966, 32
      %v4060 = vpop.permute.xlu0 %4059
      %4061 = vrot.lane.b32.xlu0 %v3970, 32
      %v4062 = vpop.permute.xlu0 %4061
      %4063 = vrot.lane.b32.xlu0 %v3973, 32
      %v4064 = vpop.permute.xlu0 %4063
      %4065 = vrot.lane.b32.xlu0 %v3977, 32
      %v4066 = vpop.permute.xlu0 %4065
      %4067 = vrot.lane.b32.xlu0 %v3980, 32
      %v4068 = vpop.permute.xlu0 %4067
      %4069 = vrot.lane.b32.xlu0 %v3984, 32
      %v4070 = vpop.permute.xlu0 %4069
      %4071 = vrot.lane.b32.xlu0 %v3987, 32
      %v4072 = vpop.permute.xlu0 %4071
      %4073 = vrot.lane.b32.xlu0 %v3991, 32
      %v4074 = vpop.permute.xlu0 %4073
      %4075 = vrot.lane.b32.xlu0 %v3994, 32
      %v4076 = vpop.permute.xlu0 %4075
      %4077 = vrot.lane.b32.xlu0 %v3998, 32
      %v4078 = vpop.permute.xlu0 %4077
      %4079 = vrot.lane.b32.xlu0 %v4001, 32
      %v4080 = vpop.permute.xlu0 %4079
      %4081 = vrot.lane.b32.xlu0 %v4005, 32
      %v4082 = vpop.permute.xlu0 %4081
      %4083 = vrot.lane.b32.xlu0 %v4008, 32
      %v4084 = vpop.permute.xlu0 %4083
      %4085 = vrot.lane.b32.xlu0 %v4012, 32
      %v4086 = vpop.permute.xlu0 %4085
      %4087 = vrot.lane.b32.xlu0 %v4015, 32
      %v4088 = vpop.permute.xlu0 %4087
      %4089 = vrot.lane.b32.xlu0 %v4019, 32
      %v4090 = vpop.permute.xlu0 %4089
      %4091 = vrot.lane.b32.xlu0 %v4022, 32
      %v4092 = vpop.permute.xlu0 %4091
      %4093 = vrot.lane.b32.xlu0 %v4026, 32
      %v4094 = vpop.permute.xlu0 %4093
      %4095 = vrot.lane.b32.xlu0 %v4029, 32
      %v4096 = vpop.permute.xlu0 %4095
      %4097 = vrot.lane.b32.xlu0 %v4033, 32
      %v4098 = vpop.permute.xlu0 %4097
      %4099 = vrot.lane.b32.xlu0 %v4036, 32
      %v4100 = vpop.permute.xlu0 %4099
      %vm4133 = vcmask 290048
      %4134 = vst.msk [vmem:[#allocation3] sm:$0xf] %vm4133, %v4038
      %4135 = vst.msk [vmem:[#allocation3 + $0x4] sm:$0xf] %vm4133, %v4040
      %4136 = vst.msk [vmem:[#allocation3 + $0x8] sm:$0xf] %vm4133, %v4042
      %4137 = vst.msk [vmem:[#allocation3 + $0xc] sm:$0xf] %vm4133, %v4044
      %4138 = vst.msk [vmem:[#allocation3 + $0x10] sm:$0xf] %vm4133, %v4046
      %4139 = vst.msk [vmem:[#allocation3 + $0x14] sm:$0xf] %vm4133, %v4048
      %4140 = vst.msk [vmem:[#allocation3 + $0x18] sm:$0xf] %vm4133, %v4050
      %4141 = vst.msk [vmem:[#allocation3 + $0x1c] sm:$0xf] %vm4133, %v4052
      %4142 = vst.msk [vmem:[#allocation3 + $0x20] sm:$0xf] %vm4133, %v4054
      %4143 = vst.msk [vmem:[#allocation3 + $0x24] sm:$0xf] %vm4133, %v4056
      %4144 = vst.msk [vmem:[#allocation3 + $0x28] sm:$0xf] %vm4133, %v4058
      %4145 = vst.msk [vmem:[#allocation3 + $0x2c] sm:$0xf] %vm4133, %v4060
      %4146 = vst.msk [vmem:[#allocation3 + $0x30] sm:$0xf] %vm4133, %v4062
      %4147 = vst.msk [vmem:[#allocation3 + $0x34] sm:$0xf] %vm4133, %v4064
      %4148 = vst.msk [vmem:[#allocation3 + $0x38] sm:$0xf] %vm4133, %v4066
      %4149 = vst.msk [vmem:[#allocation3 + $0x3c] sm:$0xf] %vm4133, %v4068
      %4150 = vst.msk [vmem:[#allocation3 + $0x40] sm:$0xf] %vm4133, %v4070
      %4151 = vst.msk [vmem:[#allocation3 + $0x44] sm:$0xf] %vm4133, %v4072
      %4152 = vst.msk [vmem:[#allocation3 + $0x48] sm:$0xf] %vm4133, %v4074
      %4153 = vst.msk [vmem:[#allocation3 + $0x4c] sm:$0xf] %vm4133, %v4076
      %4154 = vst.msk [vmem:[#allocation3 + $0x50] sm:$0xf] %vm4133, %v4078
      %4155 = vst.msk [vmem:[#allocation3 + $0x54] sm:$0xf] %vm4133, %v4080
      %4156 = vst.msk [vmem:[#allocation3 + $0x58] sm:$0xf] %vm4133, %v4082
      %4157 = vst.msk [vmem:[#allocation3 + $0x5c] sm:$0xf] %vm4133, %v4084
      %4158 = vst.msk [vmem:[#allocation3 + $0x60] sm:$0xf] %vm4133, %v4086
      %4159 = vst.msk [vmem:[#allocation3 + $0x64] sm:$0xf] %vm4133, %v4088
      %4160 = vst.msk [vmem:[#allocation3 + $0x68] sm:$0xf] %vm4133, %v4090
      %4161 = vst.msk [vmem:[#allocation3 + $0x6c] sm:$0xf] %vm4133, %v4092
      %4162 = vst.msk [vmem:[#allocation3 + $0x70] sm:$0xf] %vm4133, %v4094
      %4163 = vst.msk [vmem:[#allocation3 + $0x74] sm:$0xf] %vm4133, %v4096
      %4164 = vst.msk [vmem:[#allocation3 + $0x78] sm:$0xf] %vm4133, %v4098
      %4165 = vst.msk [vmem:[#allocation3 + $0x7c] sm:$0xf] %vm4133, %v4100
      %v4166 = vld [vmem:[#allocation3] sm:$0xf]
      %v4167 = vld [vmem:[#allocation3 + $0x4] sm:$0xf]
      %v4168 = vld [vmem:[#allocation3 + $0x8] sm:$0xf]
      %v4169 = vld [vmem:[#allocation3 + $0xc] sm:$0xf]
      %v4170 = vld [vmem:[#allocation3 + $0x10] sm:$0xf]
      %v4171 = vld [vmem:[#allocation3 + $0x14] sm:$0xf]
      %v4172 = vld [vmem:[#allocation3 + $0x18] sm:$0xf]
      %v4173 = vld [vmem:[#allocation3 + $0x1c] sm:$0xf]
      %v4174 = vld [vmem:[#allocation3 + $0x20] sm:$0xf]
      %v4175 = vld [vmem:[#allocation3 + $0x24] sm:$0xf]
      %v4176 = vld [vmem:[#allocation3 + $0x28] sm:$0xf]
      %v4177 = vld [vmem:[#allocation3 + $0x2c] sm:$0xf]
      %v4178 = vld [vmem:[#allocation3 + $0x30] sm:$0xf]
      %v4179 = vld [vmem:[#allocation3 + $0x34] sm:$0xf]
      %v4180 = vld [vmem:[#allocation3 + $0x38] sm:$0xf]
      %v4181 = vld [vmem:[#allocation3 + $0x3c] sm:$0xf]
      %v4182 = vld [vmem:[#allocation3 + $0x40] sm:$0xf]
      %v4183 = vld [vmem:[#allocation3 + $0x44] sm:$0xf]
      %v4184 = vld [vmem:[#allocation3 + $0x48] sm:$0xf]
      %v4185 = vld [vmem:[#allocation3 + $0x4c] sm:$0xf]
      %v4186 = vld [vmem:[#allocation3 + $0x50] sm:$0xf]
      %v4187 = vld [vmem:[#allocation3 + $0x54] sm:$0xf]
      %v4188 = vld [vmem:[#allocation3 + $0x58] sm:$0xf]
      %v4189 = vld [vmem:[#allocation3 + $0x5c] sm:$0xf]
      %v4190 = vld [vmem:[#allocation3 + $0x60] sm:$0xf]
      %v4191 = vld [vmem:[#allocation3 + $0x64] sm:$0xf]
      %v4192 = vld [vmem:[#allocation3 + $0x68] sm:$0xf]
      %v4193 = vld [vmem:[#allocation3 + $0x6c] sm:$0xf]
      %v4194 = vld [vmem:[#allocation3 + $0x70] sm:$0xf]
      %v4195 = vld [vmem:[#allocation3 + $0x74] sm:$0xf]
      %v4196 = vld [vmem:[#allocation3 + $0x78] sm:$0xf]
      %v4197 = vld [vmem:[#allocation3 + $0x7c] sm:$0xf]
      %v4198 = vld [vmem:[%s3] sm:$0xf]
      %v4199 = vld [vmem:[%s3 + $0x4] sm:$0xf]
      %v4200 = vld [vmem:[%s3 + $0x8] sm:$0xf]
      %v4201 = vld [vmem:[%s3 + $0xc] sm:$0xf]
      %v4202 = vld [vmem:[%s3 + $0x10] sm:$0x3]
      %v4235 = vunpack.c.l.b16 %v4166
      %v4236 = vunpack.c.l.b16 %v4167
      %v4237 = vunpack.c.l.b16 %v4168
      %v4238 = vunpack.c.l.b16 %v4169
      %v4239 = vunpack.c.l.b16 %v4170
      %v4240 = vunpack.c.l.b16 %v4171
      %v4241 = vunpack.c.l.b16 %v4172
      %v4242 = vunpack.c.l.b16 %v4173
      %v4243 = vunpack.c.l.b16 %v4174
      %v4244 = vunpack.c.l.b16 %v4175
      %v4245 = vunpack.c.l.b16 %v4176
      %v4246 = vunpack.c.l.b16 %v4177
      %v4247 = vunpack.c.l.b16 %v4178
      %v4248 = vunpack.c.l.b16 %v4179
      %v4249 = vunpack.c.l.b16 %v4180
      %v4250 = vunpack.c.l.b16 %v4181
      %v4251 = vunpack.c.l.b16 %v4182
      %v4252 = vunpack.c.l.b16 %v4183
      %v4253 = vunpack.c.l.b16 %v4184
      %v4254 = vunpack.c.l.b16 %v4185
      %v4255 = vunpack.c.l.b16 %v4186
      %v4256 = vunpack.c.l.b16 %v4187
      %v4257 = vunpack.c.l.b16 %v4188
      %v4258 = vunpack.c.l.b16 %v4189
      %v4259 = vunpack.c.l.b16 %v4190
      %v4260 = vunpack.c.l.b16 %v4191
      %v4261 = vunpack.c.l.b16 %v4192
      %v4262 = vunpack.c.l.b16 %v4193
      %v4263 = vunpack.c.l.b16 %v4194
      %v4264 = vunpack.c.l.b16 %v4195
      %v4265 = vunpack.c.l.b16 %v4196
      %v4266 = vunpack.c.l.b16 %v4197
      %v4267 = vpack.c.b16 %v4236, %v4235
      %v4268 = vpack.c.b16 %v4238, %v4237
      %v4269 = vpack.c.b16 %v4240, %v4239
      %v4270 = vpack.c.b16 %v4242, %v4241
      %v4271 = vpack.c.b16 %v4244, %v4243
      %v4272 = vpack.c.b16 %v4246, %v4245
      %v4273 = vpack.c.b16 %v4248, %v4247
      %v4274 = vpack.c.b16 %v4250, %v4249
      %v4275 = vpack.c.b16 %v4252, %v4251
      %v4276 = vpack.c.b16 %v4254, %v4253
      %v4277 = vpack.c.b16 %v4256, %v4255
      %v4278 = vpack.c.b16 %v4258, %v4257
      %v4279 = vpack.c.b16 %v4260, %v4259
      %v4280 = vpack.c.b16 %v4262, %v4261
      %v4281 = vpack.c.b16 %v4264, %v4263
      %v4282 = vpack.c.b16 %v4266, %v4265
      %v4288 = vunpack.c.l.b16 %v4198
      %v4289 = vunpack.c.l.b16 %v4199
      %v4290 = vunpack.c.l.b16 %v4200
      %v4291 = vunpack.c.l.b16 %v4201
      %v4292 = vunpack.c.l.b16 %v4202
      %v4293 = vpack.c.b16 %v4289, %v4288
      %v4294 = vpack.c.b16 %v4291, %v4290
      %v4295 = vpack.c.b16 %v4292, %v4292
      %vm4298 = vcmask 293888
      %v4300 = vsel %vm4298, %v4267, 0
      %v4303 = vsel %vm4298, %v4268, 0
      %v4306 = vsel %vm4298, %v4269, 0
      %v4309 = vsel %vm4298, %v4270, 0
      %v4312 = vsel %vm4298, %v4271, 0
      %v4315 = vsel %vm4298, %v4272, 0
      %v4318 = vsel %vm4298, %v4273, 0
      %v4321 = vsel %vm4298, %v4274, 0
      %v4324 = vsel %vm4298, %v4275, 0
      %v4327 = vsel %vm4298, %v4276, 0
      %v4330 = vsel %vm4298, %v4277, 0
      %v4333 = vsel %vm4298, %v4278, 0
      %v4336 = vsel %vm4298, %v4279, 0
      %v4339 = vsel %vm4298, %v4280, 0
      %v4342 = vsel %vm4298, %v4281, 0
      %v4345 = vsel %vm4298, %v4282, 0
      %vm4347 = vcmask 1041408
      %v4349 = vsel %vm4347, %v4295, 0
      %4351 = vmatprep.subr.bf16.mxu0 0
      %4352 = vmatpush1.bf16.msra.mxu0 0
      %4353 = vmatprep.subr.bf16.mxu0 0
      %4354 = vmatpush1.bf16.msra.mxu0 0
      %4355 = vmatprep.subr.bf16.mxu0 0
      %4356 = vmatpush1.bf16.msra.mxu0 0
      %4357 = vmatprep.subr.bf16.mxu0 0
      %4358 = vmatpush1.bf16.msra.mxu0 0
      %4359 = vmatprep.subr.bf16.mxu0 0
      %4360 = vmatpush1.bf16.msra.mxu0 0
      %4361 = vmatprep.subr.bf16.mxu0 0
      %4362 = vmatpush1.bf16.msra.mxu0 %v4349
      %4363 = vmatprep.subr.bf16.mxu0 0
      %4364 = vmatpush1.bf16.msra.mxu0 %v4294
      %4365 = vmatprep.subr.bf16.mxu0 0
      %4366 = vmatpush1.bf16.msra.mxu0 %v4293
      %4367 = vmatprep.subr.bf16.mxu0 0
      %4368 = vmatpush2.bf16.msra.mxu0 0
      %4369 = vmatprep.subr.bf16.mxu0 0
      %4370 = vmatpush2.bf16.msra.mxu0 0
      %4371 = vmatprep.subr.bf16.mxu0 0
      %4372 = vmatpush2.bf16.msra.mxu0 0
      %4373 = vmatprep.subr.bf16.mxu0 0
      %4374 = vmatpush2.bf16.msra.mxu0 0
      %4375 = vmatprep.subr.bf16.mxu0 0
      %4376 = vmatpush2.bf16.msra.mxu0 0
      %4377 = vmatprep.subr.bf16.mxu0 0
      %4378 = vmatpush2.bf16.msra.mxu0 0
      %4379 = vmatprep.subr.bf16.mxu0 0
      %4380 = vmatpush2.bf16.msra.mxu0 0
      %4381 = vmatprep.subr.bf16.mxu0 0
      %4382 = vmatpush2.bf16.msra.mxu0 0
      %4383 = vmatprep.mubr.bf16.mxu0 0
      %4384 = vmatmul.mubr.bf16.gmra.mxu0 %v4300
      %v4385 = vpop.f32.mrf.mxu0
      %v4386 = vadd.f32 0.0, %v4385
      %v4387 = vpop.f32.mrf.mxu0
      %v4388 = vpop.f32.mrf.mxu0
      %v4389 = vadd.f32 0.0, %v4388
      %v4390 = vpop.f32.mrf.mxu0
      %4391 = vmatprep.mubr.bf16.mxu0 0
      %4392 = vmatmul.mubr.bf16.gmra.mxu0 %v4303
      %v4393 = vpop.f32.mrf.mxu0
      %v4394 = vadd.f32 0.0, %v4393
      %v4395 = vpop.f32.mrf.mxu0
      %v4396 = vpop.f32.mrf.mxu0
      %v4397 = vadd.f32 0.0, %v4396
      %v4398 = vpop.f32.mrf.mxu0
      %4399 = vmatprep.mubr.bf16.mxu0 0
      %4400 = vmatmul.mubr.bf16.gmra.mxu0 %v4306
      %v4401 = vpop.f32.mrf.mxu0
      %v4402 = vadd.f32 0.0, %v4401
      %v4403 = vpop.f32.mrf.mxu0
      %v4404 = vpop.f32.mrf.mxu0
      %v4405 = vadd.f32 0.0, %v4404
      %v4406 = vpop.f32.mrf.mxu0
      %4407 = vmatprep.mubr.bf16.mxu0 0
      %4408 = vmatmul.mubr.bf16.gmra.mxu0 %v4309
      %v4409 = vpop.f32.mrf.mxu0
      %v4410 = vadd.f32 0.0, %v4409
      %v4411 = vpop.f32.mrf.mxu0
      %v4412 = vpop.f32.mrf.mxu0
      %v4413 = vadd.f32 0.0, %v4412
      %v4414 = vpop.f32.mrf.mxu0
      %4415 = vmatprep.mubr.bf16.mxu0 0
      %4416 = vmatmul.mubr.bf16.gmra.mxu0 %v4312
      %v4417 = vpop.f32.mrf.mxu0
      %v4418 = vadd.f32 0.0, %v4417
      %v4419 = vpop.f32.mrf.mxu0
      %v4420 = vpop.f32.mrf.mxu0
      %v4421 = vadd.f32 0.0, %v4420
      %v4422 = vpop.f32.mrf.mxu0
      %4423 = vmatprep.mubr.bf16.mxu0 0
      %4424 = vmatmul.mubr.bf16.gmra.mxu0 %v4315
      %v4425 = vpop.f32.mrf.mxu0
      %v4426 = vadd.f32 0.0, %v4425
      %v4427 = vpop.f32.mrf.mxu0
      %v4428 = vpop.f32.mrf.mxu0
      %v4429 = vadd.f32 0.0, %v4428
      %v4430 = vpop.f32.mrf.mxu0
      %4431 = vmatprep.mubr.bf16.mxu0 0
      %4432 = vmatmul.mubr.bf16.gmra.mxu0 %v4318
      %v4433 = vpop.f32.mrf.mxu0
      %v4434 = vadd.f32 0.0, %v4433
      %v4435 = vpop.f32.mrf.mxu0
      %v4436 = vpop.f32.mrf.mxu0
      %v4437 = vadd.f32 0.0, %v4436
      %v4438 = vpop.f32.mrf.mxu0
      %4439 = vmatprep.mubr.bf16.mxu0 0
      %4440 = vmatmul.mubr.bf16.gmra.mxu0 %v4321
      %v4441 = vpop.f32.mrf.mxu0
      %v4442 = vadd.f32 0.0, %v4441
      %v4443 = vpop.f32.mrf.mxu0
      %v4444 = vpop.f32.mrf.mxu0
      %v4445 = vadd.f32 0.0, %v4444
      %v4446 = vpop.f32.mrf.mxu0
      %4447 = vmatprep.mubr.bf16.mxu0 0
      %4448 = vmatmul.mubr.bf16.gmra.mxu0 %v4324
      %v4449 = vpop.f32.mrf.mxu0
      %v4450 = vadd.f32 0.0, %v4449
      %v4451 = vpop.f32.mrf.mxu0
      %v4452 = vpop.f32.mrf.mxu0
      %v4453 = vadd.f32 0.0, %v4452
      %v4454 = vpop.f32.mrf.mxu0
      %4455 = vmatprep.mubr.bf16.mxu0 0
      %4456 = vmatmul.mubr.bf16.gmra.mxu0 %v4327
      %v4457 = vpop.f32.mrf.mxu0
      %v4458 = vadd.f32 0.0, %v4457
      %v4459 = vpop.f32.mrf.mxu0
      %v4460 = vpop.f32.mrf.mxu0
      %v4461 = vadd.f32 0.0, %v4460
      %v4462 = vpop.f32.mrf.mxu0
      %4463 = vmatprep.mubr.bf16.mxu0 0
      %4464 = vmatmul.mubr.bf16.gmra.mxu0 %v4330
      %v4465 = vpop.f32.mrf.mxu0
      %v4466 = vadd.f32 0.0, %v4465
      %v4467 = vpop.f32.mrf.mxu0
      %v4468 = vpop.f32.mrf.mxu0
      %v4469 = vadd.f32 0.0, %v4468
      %v4470 = vpop.f32.mrf.mxu0
      %4471 = vmatprep.mubr.bf16.mxu0 0
      %4472 = vmatmul.mubr.bf16.gmra.mxu0 %v4333
      %v4473 = vpop.f32.mrf.mxu0
      %v4474 = vadd.f32 0.0, %v4473
      %v4475 = vpop.f32.mrf.mxu0
      %v4476 = vpop.f32.mrf.mxu0
      %v4477 = vadd.f32 0.0, %v4476
      %v4478 = vpop.f32.mrf.mxu0
      %4479 = vmatprep.mubr.bf16.mxu0 0
      %4480 = vmatmul.mubr.bf16.gmra.mxu0 %v4336
      %v4481 = vpop.f32.mrf.mxu0
      %v4482 = vadd.f32 0.0, %v4481
      %v4483 = vpop.f32.mrf.mxu0
      %v4484 = vpop.f32.mrf.mxu0
      %v4485 = vadd.f32 0.0, %v4484
      %v4486 = vpop.f32.mrf.mxu0
      %4487 = vmatprep.mubr.bf16.mxu0 0
      %4488 = vmatmul.mubr.bf16.gmra.mxu0 %v4339
      %v4489 = vpop.f32.mrf.mxu0
      %v4490 = vadd.f32 0.0, %v4489
      %v4491 = vpop.f32.mrf.mxu0
      %v4492 = vpop.f32.mrf.mxu0
      %v4493 = vadd.f32 0.0, %v4492
      %v4494 = vpop.f32.mrf.mxu0
      %4495 = vmatprep.mubr.bf16.mxu0 0
      %4496 = vmatmul.mubr.bf16.gmra.mxu0 %v4342
      %v4497 = vpop.f32.mrf.mxu0
      %v4498 = vadd.f32 0.0, %v4497
      %v4499 = vpop.f32.mrf.mxu0
      %v4500 = vpop.f32.mrf.mxu0
      %v4501 = vadd.f32 0.0, %v4500
      %v4502 = vpop.f32.mrf.mxu0
      %4503 = vmatprep.mubr.bf16.mxu0 0
      %4504 = vmatmul.mubr.bf16.gmra.mxu0 %v4345
      %v4505 = vpop.f32.mrf.mxu0
      %v4506 = vadd.f32 0.0, %v4505
      %v4507 = vpop.f32.mrf.mxu0
      %v4508 = vpop.f32.mrf.mxu0
      %v4509 = vadd.f32 0.0, %v4508
      %v4510 = vpop.f32.mrf.mxu0
      %4511 = vdwg.mxu0
      %vm4512 = vcmask 31744
      %4513 = vst.msk [vmem:[%s255] sm:$0xff] %vm4512, %v4386
      %4514 = vst.msk [vmem:[%s255 + $0x8] sm:$0xff] %vm4512, %v4389
      %4515 = vst.msk [vmem:[%s255 + $0x10] sm:$0xff] %vm4512, %v4394
      %4516 = vst.msk [vmem:[%s255 + $0x18] sm:$0xff] %vm4512, %v4397
      %4517 = vst.msk [vmem:[%s255 + $0x20] sm:$0xff] %vm4512, %v4402
      %4518 = vst.msk [vmem:[%s255 + $0x28] sm:$0xff] %vm4512, %v4405
      %4519 = vst.msk [vmem:[%s255 + $0x30] sm:$0xff] %vm4512, %v4410
      %4520 = vst.msk [vmem:[%s255 + $0x38] sm:$0xff] %vm4512, %v4413
      %4521 = vst.msk [vmem:[%s255 + $0x40] sm:$0xff] %vm4512, %v4418
      %4522 = vst.msk [vmem:[%s255 + $0x48] sm:$0xff] %vm4512, %v4421
      %4523 = vst.msk [vmem:[%s255 + $0x50] sm:$0xff] %vm4512, %v4426
      %4524 = vst.msk [vmem:[%s255 + $0x58] sm:$0xff] %vm4512, %v4429
      %4525 = vst.msk [vmem:[%s255 + $0x60] sm:$0xff] %vm4512, %v4434
      %4526 = vst.msk [vmem:[%s255 + $0x68] sm:$0xff] %vm4512, %v4437
      %4527 = vst.msk [vmem:[%s255 + $0x70] sm:$0xff] %vm4512, %v4442
      %4528 = vst.msk [vmem:[%s255 + $0x78] sm:$0xff] %vm4512, %v4445
      %4529 = vst.msk [vmem:[%s255 + $0x80] sm:$0xff] %vm4512, %v4450
      %4530 = vst.msk [vmem:[%s255 + $0x88] sm:$0xff] %vm4512, %v4453
      %4531 = vst.msk [vmem:[%s255 + $0x90] sm:$0xff] %vm4512, %v4458
      %4532 = vst.msk [vmem:[%s255 + $0x98] sm:$0xff] %vm4512, %v4461
      %4533 = vst.msk [vmem:[%s255 + $0xa0] sm:$0xff] %vm4512, %v4466
      %4534 = vst.msk [vmem:[%s255 + $0xa8] sm:$0xff] %vm4512, %v4469
      %4535 = vst.msk [vmem:[%s255 + $0xb0] sm:$0xff] %vm4512, %v4474
      %4536 = vst.msk [vmem:[%s255 + $0xb8] sm:$0xff] %vm4512, %v4477
      %4537 = vst.msk [vmem:[%s255 + $0xc0] sm:$0xff] %vm4512, %v4482
      %4538 = vst.msk [vmem:[%s255 + $0xc8] sm:$0xff] %vm4512, %v4485
      %4539 = vst.msk [vmem:[%s255 + $0xd0] sm:$0xff] %vm4512, %v4490
      %4540 = vst.msk [vmem:[%s255 + $0xd8] sm:$0xff] %vm4512, %v4493
      %4541 = vst.msk [vmem:[%s255 + $0xe0] sm:$0xff] %vm4512, %v4498
      %4542 = vst.msk [vmem:[%s255 + $0xe8] sm:$0xff] %vm4512, %v4501
      %4543 = vst.msk [vmem:[%s255 + $0xf0] sm:$0xff] %vm4512, %v4506
      %4544 = vst.msk [vmem:[%s255 + $0xf8] sm:$0xff] %vm4512, %v4509
      %v4545 = vsel %vm4512, %v4386, 0.0
      %v4546 = vsel %vm4512, %v4389, 0.0
      %v4547 = vadd.f32 %v4545, %v4546
      %v4548 = vsel %vm4512, %v4394, 0.0
      %v4549 = vadd.f32 %v4547, %v4548
      %v4550 = vsel %vm4512, %v4397, 0.0
      %v4551 = vadd.f32 %v4549, %v4550
      %v4552 = vsel %vm4512, %v4402, 0.0
      %v4553 = vadd.f32 %v4551, %v4552
      %v4554 = vsel %vm4512, %v4405, 0.0
      %v4555 = vadd.f32 %v4553, %v4554
      %v4556 = vsel %vm4512, %v4410, 0.0
      %v4557 = vadd.f32 %v4555, %v4556
      %v4558 = vsel %vm4512, %v4413, 0.0
      %v4559 = vadd.f32 %v4557, %v4558
      %v4560 = vsel %vm4512, %v4418, 0.0
      %v4561 = vadd.f32 %v4559, %v4560
      %v4562 = vsel %vm4512, %v4421, 0.0
      %v4563 = vadd.f32 %v4561, %v4562
      %v4564 = vsel %vm4512, %v4426, 0.0
      %v4565 = vadd.f32 %v4563, %v4564
      %v4566 = vsel %vm4512, %v4429, 0.0
      %v4567 = vadd.f32 %v4565, %v4566
      %v4568 = vsel %vm4512, %v4434, 0.0
      %v4569 = vadd.f32 %v4567, %v4568
      %v4570 = vsel %vm4512, %v4437, 0.0
      %v4571 = vadd.f32 %v4569, %v4570
      %v4572 = vsel %vm4512, %v4442, 0.0
      %v4573 = vadd.f32 %v4571, %v4572
      %v4574 = vsel %vm4512, %v4445, 0.0
      %v4575 = vadd.f32 %v4573, %v4574
      %v4576 = vsel %vm4512, %v4450, 0.0
      %v4577 = vadd.f32 %v4575, %v4576
      %v4578 = vsel %vm4512, %v4453, 0.0
      %v4579 = vadd.f32 %v4577, %v4578
      %v4580 = vsel %vm4512, %v4458, 0.0
      %v4581 = vadd.f32 %v4579, %v4580
      %v4582 = vsel %vm4512, %v4461, 0.0
      %v4583 = vadd.f32 %v4581, %v4582
      %v4584 = vsel %vm4512, %v4466, 0.0
      %v4585 = vadd.f32 %v4583, %v4584
      %v4586 = vsel %vm4512, %v4469, 0.0
      %v4587 = vadd.f32 %v4585, %v4586
      %v4588 = vsel %vm4512, %v4474, 0.0
      %v4589 = vadd.f32 %v4587, %v4588
      %v4590 = vsel %vm4512, %v4477, 0.0
      %v4591 = vadd.f32 %v4589, %v4590
      %v4592 = vsel %vm4512, %v4482, 0.0
      %v4593 = vadd.f32 %v4591, %v4592
      %v4594 = vsel %vm4512, %v4485, 0.0
      %v4595 = vadd.f32 %v4593, %v4594
      %v4596 = vsel %vm4512, %v4490, 0.0
      %v4597 = vadd.f32 %v4595, %v4596
      %v4598 = vsel %vm4512, %v4493, 0.0
      %v4599 = vadd.f32 %v4597, %v4598
      %v4600 = vsel %vm4512, %v4498, 0.0
      %v4601 = vadd.f32 %v4599, %v4600
      %v4602 = vsel %vm4512, %v4501, 0.0
      %v4603 = vadd.f32 %v4601, %v4602
      %v4604 = vsel %vm4512, %v4506, 0.0
      %v4605 = vadd.f32 %v4603, %v4604
      %v4606 = vsel %vm4512, %v4509, 0.0
      %v4607 = vadd.f32 %v4605, %v4606
      %v4608 = vrot.slane %v4607, 4
      %v4609 = vadd.f32 %v4607, %v4608
      %v4610 = vrot.slane %v4609, 2
      %v4611 = vadd.f32 %v4609, %v4610
      %v4612 = vrot.slane %v4611, 1
      %v4613 = vadd.f32 %v4611, %v4612
      %v4614 = vmul.f32 %v4386, %v4386
      %v4615 = vmul.f32 %v4389, %v4389
      %v4616 = vmul.f32 %v4394, %v4394
      %v4617 = vmul.f32 %v4397, %v4397
      %v4618 = vmul.f32 %v4402, %v4402
      %v4619 = vmul.f32 %v4405, %v4405
      %v4620 = vmul.f32 %v4410, %v4410
      %v4621 = vmul.f32 %v4413, %v4413
      %v4622 = vmul.f32 %v4418, %v4418
      %v4623 = vmul.f32 %v4421, %v4421
      %v4624 = vmul.f32 %v4426, %v4426
      %v4625 = vmul.f32 %v4429, %v4429
      %v4626 = vmul.f32 %v4434, %v4434
      %v4627 = vmul.f32 %v4437, %v4437
      %v4628 = vmul.f32 %v4442, %v4442
      %v4629 = vmul.f32 %v4445, %v4445
      %v4630 = vmul.f32 %v4450, %v4450
      %v4631 = vmul.f32 %v4453, %v4453
      %v4632 = vmul.f32 %v4458, %v4458
      %v4633 = vmul.f32 %v4461, %v4461
      %v4634 = vmul.f32 %v4466, %v4466
      %v4635 = vmul.f32 %v4469, %v4469
      %v4636 = vmul.f32 %v4474, %v4474
      %v4637 = vmul.f32 %v4477, %v4477
      %v4638 = vmul.f32 %v4482, %v4482
      %v4639 = vmul.f32 %v4485, %v4485
      %v4640 = vmul.f32 %v4490, %v4490
      %v4641 = vmul.f32 %v4493, %v4493
      %v4642 = vmul.f32 %v4498, %v4498
      %v4643 = vmul.f32 %v4501, %v4501
      %v4644 = vmul.f32 %v4506, %v4506
      %v4645 = vmul.f32 %v4509, %v4509
      %v4646 = vsel %vm4512, %v4614, 0.0
      %v4647 = vsel %vm4512, %v4615, 0.0
      %v4648 = vadd.f32 %v4646, %v4647
      %v4649 = vsel %vm4512, %v4616, 0.0
      %v4650 = vadd.f32 %v4648, %v4649
      %v4651 = vsel %vm4512, %v4617, 0.0
      %v4652 = vadd.f32 %v4650, %v4651
      %v4653 = vsel %vm4512, %v4618, 0.0
      %v4654 = vadd.f32 %v4652, %v4653
      %v4655 = vsel %vm4512, %v4619, 0.0
      %v4656 = vadd.f32 %v4654, %v4655
      %v4657 = vsel %vm4512, %v4620, 0.0
      %v4658 = vadd.f32 %v4656, %v4657
      %v4659 = vsel %vm4512, %v4621, 0.0
      %v4660 = vadd.f32 %v4658, %v4659
      %v4661 = vsel %vm4512, %v4622, 0.0
      %v4662 = vadd.f32 %v4660, %v4661
      %v4663 = vsel %vm4512, %v4623, 0.0
      %v4664 = vadd.f32 %v4662, %v4663
      %v4665 = vsel %vm4512, %v4624, 0.0
      %v4666 = vadd.f32 %v4664, %v4665
      %v4667 = vsel %vm4512, %v4625, 0.0
      %v4668 = vadd.f32 %v4666, %v4667
      %v4669 = vsel %vm4512, %v4626, 0.0
      %v4670 = vadd.f32 %v4668, %v4669
      %v4671 = vsel %vm4512, %v4627, 0.0
      %v4672 = vadd.f32 %v4670, %v4671
      %v4673 = vsel %vm4512, %v4628, 0.0
      %v4674 = vadd.f32 %v4672, %v4673
      %v4675 = vsel %vm4512, %v4629, 0.0
      %v4676 = vadd.f32 %v4674, %v4675
      %v4677 = vsel %vm4512, %v4630, 0.0
      %v4678 = vadd.f32 %v4676, %v4677
      %v4679 = vsel %vm4512, %v4631, 0.0
      %v4680 = vadd.f32 %v4678, %v4679
      %v4681 = vsel %vm4512, %v4632, 0.0
      %v4682 = vadd.f32 %v4680, %v4681
      %v4683 = vsel %vm4512, %v4633, 0.0
      %v4684 = vadd.f32 %v4682, %v4683
      %v4685 = vsel %vm4512, %v4634, 0.0
      %v4686 = vadd.f32 %v4684, %v4685
      %v4687 = vsel %vm4512, %v4635, 0.0
      %v4688 = vadd.f32 %v4686, %v4687
      %v4689 = vsel %vm4512, %v4636, 0.0
      %v4690 = vadd.f32 %v4688, %v4689
      %v4691 = vsel %vm4512, %v4637, 0.0
      %v4692 = vadd.f32 %v4690, %v4691
      %v4693 = vsel %vm4512, %v4638, 0.0
      %v4694 = vadd.f32 %v4692, %v4693
      %v4695 = vsel %vm4512, %v4639, 0.0
      %v4696 = vadd.f32 %v4694, %v4695
      %v4697 = vsel %vm4512, %v4640, 0.0
      %v4698 = vadd.f32 %v4696, %v4697
      %v4699 = vsel %vm4512, %v4641, 0.0
      %v4700 = vadd.f32 %v4698, %v4699
      %v4701 = vsel %vm4512, %v4642, 0.0
      %v4702 = vadd.f32 %v4700, %v4701
      %v4703 = vsel %vm4512, %v4643, 0.0
      %v4704 = vadd.f32 %v4702, %v4703
      %v4705 = vsel %vm4512, %v4644, 0.0
      %v4706 = vadd.f32 %v4704, %v4705
      %v4707 = vsel %vm4512, %v4645, 0.0
      %v4708 = vadd.f32 %v4706, %v4707
      %v4709 = vrot.slane %v4708, 4
      %v4710 = vadd.f32 %v4708, %v4709
      %v4711 = vrot.slane %v4710, 2
      %v4712 = vadd.f32 %v4710, %v4711
      %v4713 = vrot.slane %v4712, 1
      %v4714 = vadd.f32 %v4712, %v4713
      %v4715 = vld [vmem:[%s260] sm:$0x3]
      %vm4716 = vcmask 1040384
      %v4717 = vsel %vm4716, %v4613, %v4714
      %v4718 = vadd.f32 %v4715, %v4717
      %vm4719 = vcmask 25600
      %4720 = vst.msk [vmem:[%s260] sm:$0x3] %vm4719, %v4718
      %s4721 = smul.u32 16, %s22
      %p4722 = scmp.lt.s32.totalorder %s21, 1
      %s4723 = scalar_select %p4722, %s21, 1
      %p4724 = scmp.lt.s32.totalorder %s4721, 15
      %s4725 = scalar_select %p4724, %s4721, 15
      %s4726 = smul.addr %s4725, 2
      %s4727 = smul.addr %s4723, 32
      %s4728 = sadd.s32 %s4726, %s4727
      %s4729 = smul.addr %s4728, 8
      %s4730 = scalar_lea.vmem %s4, %s4729
      %p4731 = scmp.lt.s32.totalorder %s21, 1
      %s4732 = scalar_select %p4731, %s21, 1
      %s4733 = smul.addr %s4732, 2
      %s4734 = scalar_lea.vmem %s5, %s4733
      // Predicated region
      $region41: #{up_forward.4} parent=35 // pred_check
        %p4735 = pneg %p138
      $region42: #{up_forward.4} parent=35 // pred_check_branch
        %4737 = sbr.rel (%p4735) target = $region44
      $region43: #{up_forward.4} parent=35 // pred_region
        %s4738 = smul.u32 16, %s22
      $region44: #{up_forward.4} parent=35 // pred_fallthru
        _
      // Predicated region
      $region45: #{up_forward.4} parent=35 // pred_check
        %p4739 = pneg %p164
      $region46: #{up_forward.4} parent=35 // pred_check_branch
        %4741 = sbr.rel (%p4739) target = $region48
      $region47: #{up_forward.4} parent=35 // pred_region
        _
      $region48: #{up_forward.4} parent=35 // pred_fallthru
        _
    $region36: #{up_forward.4} parent=5 // pred_fallthru
      _
    %p4742 = scmp.le.s32.totalorder 2, %s12
    // Predicated region
    $region49: #{up_forward.4} parent=5 // pred_check
      %p4743 = pneg %p4742
    $region50: #{up_forward.4} parent=5 // pred_check_branch
      %4745 = sbr.rel (%p4743) target = $region52
    $region51: #{up_forward.4} parent=5 // pred_region
      %s4746 = ssub.s32 %s12, 2
      // Predicated region
      $region53: #{up_forward.4} parent=51 // pred_check
        %p4747 = pneg %p144
      $region54: #{up_forward.4} parent=51 // pred_check_branch
        %4749 = sbr.rel (%p4747) target = $region56
      $region55: #{up_forward.4} parent=51 // pred_region
        %s4750 = smul.u32 16, %s24
        %p4751 = scmp.lt.s32.totalorder %s23, 1
        %s4752 = scalar_select %p4751, %s23, 1
        %p4753 = scmp.lt.s32.totalorder %s4750, 15
        %s4754 = scalar_select %p4753, %s4750, 15
        %s4755 = smul.addr %s4754, 2
        %s4756 = smul.addr %s4752, 32
        %s4757 = sadd.s32 %s4755, %s4756
        %s4758 = smul.addr %s4757, 8
        %s4759 = scalar_lea.vmem %s4, %s4758
      $region56: #{up_forward.4} parent=51 // pred_fallthru
        _
      // Predicated region
      $region57: #{up_forward.4} parent=51 // pred_check
        %p4760 = pneg %p170
      $region58: #{up_forward.4} parent=51 // pred_check_branch
        %4762 = sbr.rel (%p4760) target = $region60
      $region59: #{up_forward.4} parent=51 // pred_region
        %p4763 = scmp.lt.s32.totalorder %s23, 1
        %s4764 = scalar_select %p4763, %s23, 1
        %s4765 = smul.addr %s4764, 2
        %s4766 = scalar_lea.vmem %s5, %s4765
      $region60: #{up_forward.4} parent=51 // pred_fallthru
        _
    $region52: #{up_forward.4} parent=5 // pred_fallthru
      _
  $region6: #{up_forward.4} parent=0 // loop_footer
    %s16 = sadd.s32 1, %s12
  $region7: #{up_forward.4} parent=0 // loop_footer_branch
    %11 = sbr.rel target = $region3
  $region8: #{up_forward.4} parent=0 // loop_exit
    _

// kernel: up_forward.3
$region0: #{up_forward.3}
  #allocation0 [shape = 'u32[]', space=smem, size = 0x4, offset = 0x4, fixed_abs, tag = 'smem constant byte address 0x4 - core index']
  #allocation1 [shape = 'u32[144,128]{1,0:T(1,128)}', space=vmem, size = 0x12000, scoped, tag = 'internal scratch']
  #allocation2 [shape = 'bf16[18,18,8]{2,1,0:T(8,128)(2,1)}', space=vmem, size = 0x1b000, scoped, tag = 'scratch operand']
  #allocation3 [shape = 'bf16[256,72]{1,0:T(8,128)(2,1)}', space=vmem, size = 0x10000, scoped, tag = 'scratch operand']
  %s0 = inlined_call_operand.vmem [shape: f32[2,8,8,8], index: 0, kind: input, shape index: {}]
  %s1 = inlined_call_operand.vmem [shape: f32[2,16,16,4], index: 1, kind: input, shape index: {}]
  %s2 = inlined_call_operand.vmem [shape: bf16[8,16], index: 2, kind: input, shape index: {}]
  %s3 = inlined_call_operand.vmem [shape: f32[1,16], index: 3, kind: input, shape index: {}]
  %s4 = inlined_call_operand.vmem [shape: bf16[72,4], index: 4, kind: input, shape index: {}]
  %s5 = inlined_call_operand.vmem [shape: f32[2,16,16,4], index: 5, kind: output, shape index: {0}]
  %s6 = inlined_call_operand.vmem [shape: f32[2,2,4], index: 6, kind: output, shape index: {1}]
  %7 = xla_tuple %s5, %s6
  %s8 = sld [smem:[#allocation0]]
  $region65: #{up_forward.3} parent=0
    _
  %s10 = ssub.s32 1, %s8
  %s11 = scalar_select 0, %s10, %s8
  loop: start=0, step=1, limit=4
  $region2: #{up_forward.3} parent=0 // loop_pre_header
    _
  $region3: #{up_forward.3} parent=0 // loop_header
    %s13 = sphi 0, %s17
    %p14 = scmp.ge.s32.totalorder %s13, 4
    %s20 = sphi 0, %s32
    %s21 = sphi 0, %s28
    %s22 = sphi 0, %s20
    %s23 = sphi 0, %s21
    %s24 = sphi 0, %s22
    %s25 = sphi 0, %s23
    %s35 = sphi 0, %s37
    %s38 = sphi 0, %s35
    %s39 = sphi 0, %s38
    %s55 = sphi 0, %s39
    %s61 = sphi 0, %s63
    %s64 = sphi 0, %s61
    %s65 = sphi 0, %s64
    %s81 = sphi 0, %s65
    %s85 = sphi 0, %s85
    %s87 = sphi 0, %s85
    %s88 = sphi 0, %s87
    %s102 = sphi 0, %s88
    %s106 = sphi 0, %s106
    %s108 = sphi 0, %s106
    %s109 = sphi 0, %s108
    %s123 = sphi 0, %s109
    %s127 = sphi 0, %s127
    %s129 = sphi 0, %s127
    %s130 = sphi 0, %s129
    %s144 = sphi 0, %s130
    %s152 = sphi 0, %s154
    %s155 = sphi 0, %s152
    %s156 = sphi 0, %s155
    %s172 = sphi 0, %s156
    %s178 = sphi 0, %s180
    %s181 = sphi 0, %s178
    %s182 = sphi 0, %s181
    %s198 = sphi 0, %s182
  $region4: #{up_forward.3} parent=0 // loop_header_branch
    %16 = sbr.rel (%p14) target = $region8
  $region5: #{up_forward.3} parent=0 // loop_body
    %s18 = ssub.s32 %s13, 1
    %s19 = ssub.s32 %s13, 2
    %s26 = sadd.s32 1, %s21
    %p27 = scmp.ge.s32.totalorder %s26, 1
    %s28 = scalar_select %p27, 0, %s26
    %s29 = sadd.s32 1, %s20
    %s30 = scalar_select %p27, %s29, %s20
    %p31 = scmp.ge.s32.totalorder %s30, 2
    %s32 = scalar_select %p31, 0, %s30
    %s33 = ssub.s32 %s20, %s32
    %p34 = scmp.eq.s32.totalorder %s33, 0
    %s36 = sadd.s32 %s35, 1
    %s37 = scalar_select %p34, %s35, %s36
    %p40 = pneg %p34
    %p41 = scmp.eq.s32.totalorder %s13, 1
    %p42 = por %p40, %p41
    %p43 = scmp.ne.s32.totalorder %s35, %s38
    %p44 = scmp.eq.s32.totalorder %s13, 0
    %p45 = por %p43, %p44
    %p46 = scmp.ne.s32.totalorder %s35, %s38
    %p47 = scmp.eq.s32.totalorder %s18, 1
    %p48 = por %p46, %p47
    %p49 = scmp.ne.s32.totalorder %s38, %s39
    %p50 = scmp.eq.s32.totalorder %s18, 0
    %p51 = por %p49, %p50
    %p52 = scmp.ne.s32.totalorder %s38, %s39
    %p53 = scmp.eq.s32.totalorder %s19, 1
    %p54 = por %p52, %p53
    %p56 = scmp.ne.s32.totalorder %s39, %s55
    %p57 = scmp.eq.s32.totalorder %s19, 0
    %p58 = por %p56, %p57
    %s59 = ssub.s32 %s20, %s32
    %p60 = scmp.eq.s32.totalorder %s59, 0
    %s62 = sadd.s32 %s61, 1
    %s63 = scalar_select %p60, %s61, %s62
    %p66 = pneg %p60
    %p67 = scmp.eq.s32.totalorder %s13, 1
    %p68 = por %p66, %p67
    %p69 = scmp.ne.s32.totalorder %s61, %s64
    %p70 = scmp.eq.s32.totalorder %s13, 0
    %p71 = por %p69, %p70
    %p72 = scmp.ne.s32.totalorder %s61, %s64
    %p73 = scmp.eq.s32.totalorder %s18, 1
    %p74 = por %p72, %p73
    %p75 = scmp.ne.s32.totalorder %s64, %s65
    %p76 = scmp.eq.s32.totalorder %s18, 0
    %p77 = por %p75, %p76
    %p78 = scmp.ne.s32.totalorder %s64, %s65
    %p79 = scmp.eq.s32.totalorder %s19, 1
    %p80 = por %p78, %p79
    %p82 = scmp.ne.s32.totalorder %s65, %s81
    %p83 = scmp.eq.s32.totalorder %s19, 0
    %p84 = por %p82, %p83
    %s86 = sadd.s32 %s85, 1
    %p89 = scmp.eq.s32.totalorder %s13, 1
    %p90 = scmp.ne.s32.totalorder %s85, %s87
    %p91 = scmp.eq.s32.totalorder %s13, 0
    %p92 = por %p90, %p91
    %p93 = scmp.ne.s32.totalorder %s85, %s87
    %p94 = scmp.eq.s32.totalorder %s18, 1
    %p95 = por %p93, %p94
    %p96 = scmp.ne.s32.totalorder %s87, %s88
    %p97 = scmp.eq.s32.totalorder %s18, 0
    %p98 = por %p96, %p97
    %p99 = scmp.ne.s32.totalorder %s87, %s88
    %p100 = scmp.eq.s32.totalorder %s19, 1
    %p101 = por %p99, %p100
    %p103 = scmp.ne.s32.totalorder %s88, %s102
    %p104 = scmp.eq.s32.totalorder %s19, 0
    %p105 = por %p103, %p104
    %s107 = sadd.s32 %s106, 1
    %p110 = scmp.eq.s32.totalorder %s13, 1
    %p111 = scmp.ne.s32.totalorder %s106, %s108
    %p112 = scmp.eq.s32.totalorder %s13, 0
    %p113 = por %p111, %p112
    %p114 = scmp.ne.s32.totalorder %s106, %s108
    %p115 = scmp.eq.s32.totalorder %s18, 1
    %p116 = por %p114, %p115
    %p117 = scmp.ne.s32.totalorder %s108, %s109
    %p118 = scmp.eq.s32.totalorder %s18, 0
    %p119 = por %p117, %p118
    %p120 = scmp.ne.s32.totalorder %s108, %s109
    %p121 = scmp.eq.s32.totalorder %s19, 1
    %p122 = por %p120, %p121
    %p124 = scmp.ne.s32.totalorder %s109, %s123
    %p125 = scmp.eq.s32.totalorder %s19, 0
    %p126 = por %p124, %p125
    %s128 = sadd.s32 %s127, 1
    %p131 = scmp.eq.s32.totalorder %s13, 1
    %p132 = scmp.ne.s32.totalorder %s127, %s129
    %p133 = scmp.eq.s32.totalorder %s13, 0
    %p134 = por %p132, %p133
    %p135 = scmp.ne.s32.totalorder %s127, %s129
    %p136 = scmp.eq.s32.totalorder %s18, 1
    %p137 = por %p135, %p136
    %p138 = scmp.ne.s32.totalorder %s129, %s130
    %p139 = scmp.eq.s32.totalorder %s18, 0
    %p140 = por %p138, %p139
    %p141 = scmp.ne.s32.totalorder %s129, %s130
    %p142 = scmp.eq.s32.totalorder %s19, 1
    %p143 = por %p141, %p142
    %p145 = scmp.ne.s32.totalorder %s130, %s144
    %p146 = scmp.eq.s32.totalorder %s19, 0
    %p147 = por %p145, %p146
    %s148 = ssub.s32 %s20, %s32
    %s149 = ssub.s32 %s21, %s28
    %s150 = sor.u32 %s148, %s149
    %p151 = scmp.eq.s32.totalorder %s150, 0
    %s153 = sadd.s32 %s152, 1
    %s154 = scalar_select %p151, %s152, %s153
    %p157 = pneg %p151
    %p158 = scmp.eq.s32.totalorder %s13, 1
    %p159 = por %p157, %p158
    %p160 = scmp.ne.s32.totalorder %s152, %s155
    %p161 = scmp.eq.s32.totalorder %s13, 0
    %p162 = por %p160, %p161
    %p163 = scmp.ne.s32.totalorder %s152, %s155
    %p164 = scmp.eq.s32.totalorder %s18, 1
    %p165 = por %p163, %p164
    %p166 = scmp.ne.s32.totalorder %s155, %s156
    %p167 = scmp.eq.s32.totalorder %s18, 0
    %p168 = por %p166, %p167
    %p169 = scmp.ne.s32.totalorder %s155, %s156
    %p170 = scmp.eq.s32.totalorder %s19, 1
    %p171 = por %p169, %p170
    %p173 = scmp.ne.s32.totalorder %s156, %s172
    %p174 = scmp.eq.s32.totalorder %s19, 0
    %p175 = por %p173, %p174
    %s176 = ssub.s32 %s20, %s32
    %p177 = scmp.eq.s32.totalorder %s176, 0
    %s179 = sadd.s32 %s178, 1
    %s180 = scalar_select %p177, %s178, %s179
    %p183 = pneg %p177
    %p184 = scmp.eq.s32.totalorder %s13, 1
    %p185 = por %p183, %p184
    %p186 = scmp.ne.s32.totalorder %s178, %s181
    %p187 = scmp.eq.s32.totalorder %s13, 0
    %p188 = por %p186, %p187
    %p189 = scmp.ne.s32.totalorder %s178, %s181
    %p190 = scmp.eq.s32.totalorder %s18, 1
    %p191 = por %p189, %p190
    %p192 = scmp.ne.s32.totalorder %s181, %s182
    %p193 = scmp.eq.s32.totalorder %s18, 0
    %p194 = por %p192, %p193
    %p195 = scmp.ne.s32.totalorder %s181, %s182
    %p196 = scmp.eq.s32.totalorder %s19, 1
    %p197 = por %p195, %p196
    %p199 = scmp.ne.s32.totalorder %s182, %s198
    %p200 = scmp.eq.s32.totalorder %s19, 0
    %p201 = por %p199, %p200
    %p202 = scmp.le.s32.totalorder 1, %s13
    %p203 = scmp.lt.s32.totalorder %s13, 3
    %p204 = pnand %p202, %p203
    %p205 = pneg %p204
    // Predicated region
    $region9: #{up_forward.3} parent=5 // pred_check
      _
    $region10: #{up_forward.3} parent=5 // pred_check_branch
      %207 = sbr.rel (%p204) target = $region12
    $region11: #{up_forward.3} parent=5 // pred_region
      %s208 = ssub.s32 %s13, 1
      // Predicated region
      $region13: #{up_forward.3} parent=11 // pred_check
        %p209 = pneg %p98
      $region14: #{up_forward.3} parent=11 // pred_check_branch
        %211 = sbr.rel (%p209) target = $region16
      $region15: #{up_forward.3} parent=11 // pred_region
        _
      $region16: #{up_forward.3} parent=11 // pred_fallthru
        _
      // Predicated region
      $region17: #{up_forward.3} parent=11 // pred_check
        %p212 = pneg %p119
      $region18: #{up_forward.3} parent=11 // pred_check_branch
        %214 = sbr.rel (%p212) target = $region20
      $region19: #{up_forward.3} parent=11 // pred_region
        _
      $region20: #{up_forward.3} parent=11 // pred_fallthru
        _
      // Predicated region
      $region21: #{up_forward.3} parent=11 // pred_check
        %p215 = pneg %p140
      $region22: #{up_forward.3} parent=11 // pred_check_branch
        %217 = sbr.rel (%p215) target = $region24
      $region23: #{up_forward.3} parent=11 // pred_region
        _
      $region24: #{up_forward.3} parent=11 // pred_fallthru
        _
    $region12: #{up_forward.3} parent=5 // pred_fallthru
      _
    %p218 = scmp.lt.s32.totalorder %s13, 2
    // Predicated region
    $region25: #{up_forward.3} parent=5 // pred_check
      %p219 = pneg %p218
    $region26: #{up_forward.3} parent=5 // pred_check_branch
      %221 = sbr.rel (%p219) target = $region28
    $region27: #{up_forward.3} parent=5 // pred_region
      // Predicated region
      $region29: #{up_forward.3} parent=27 // pred_check
        %p222 = pneg %p45
      $region30: #{up_forward.3} parent=27 // pred_check_branch
        %224 = sbr.rel (%p222) target = $region32
      $region31: #{up_forward.3} parent=27 // pred_region
        %p225 = scmp.lt.s32.totalorder %s20, 1
        %s226 = scalar_select %p225, %s20, 1
        %s227 = smul.addr %s226, 8
        %s228 = smul.addr %s227, 8
        %s229 = scalar_lea.vmem %s0, %s228
      $region32: #{up_forward.3} parent=27 // pred_fallthru
        _
      // Predicated region
      $region33: #{up_forward.3} parent=27 // pred_check
        %p230 = pneg %p71
      $region34: #{up_forward.3} parent=27 // pred_check_branch
        %232 = sbr.rel (%p230) target = $region36
      $region35: #{up_forward.3} parent=27 // pred_region
        %p233 = scmp.lt.s32.totalorder %s20, 1
        %s234 = scalar_select %p233, %s20, 1
        %s235 = smul.addr %s234, 32
        %s236 = smul.addr %s235, 8
        %s237 = scalar_lea.vmem %s1, %s236
      $region36: #{up_forward.3} parent=27 // pred_fallthru
        _
    $region28: #{up_forward.3} parent=5 // pred_fallthru
      _
    %p238 = scmp.le.s32.totalorder 1, %s13
    %p239 = scmp.lt.s32.totalorder %s13, 3
    %p240 = pnand %p238, %p239
    %p241 = pneg %p240
    // Predicated region
    $region37: #{up_forward.3} parent=5 // pred_check
      _
    $region38: #{up_forward.3} parent=5 // pred_check_branch
      %243 = sbr.rel (%p240) target = $region40
    $region39: #{up_forward.3} parent=5 // pred_region
      %s244 = ssub.s32 %s13, 1
      %p245 = scmp.lt.s32.totalorder %s22, 1
      %s246 = scalar_select %p245, %s22, 1
      %s247 = smul.addr %s246, 8
      %s248 = smul.addr %s247, 8
      %s249 = scalar_lea.vmem %s0, %s248
      %p250 = pneg %p51
      %p251 = pneg %p48
      %p252 = scmp.lt.s32.totalorder %s22, 1
      %s253 = scalar_select %p252, %s22, 1
      %s254 = smul.addr %s253, 32
      %s255 = smul.addr %s254, 8
      %s256 = scalar_lea.vmem %s1, %s255
      %p257 = pneg %p77
      %p258 = pneg %p74
      %p259 = pneg %p98
      %p260 = pneg %p95
      %p261 = pneg %p119
      %p262 = pneg %p116
      %p263 = pneg %p140
      %p264 = pneg %p137
      %p265 = pneg %p168
      %p266 = pneg %p165
      %s267 = smul.u32 16, %s23
      %p268 = scmp.lt.s32.totalorder %s22, 1
      %s269 = scalar_select %p268, %s22, 1
      %p270 = scmp.lt.s32.totalorder %s267, 15
      %s271 = scalar_select %p270, %s267, 15
      %s272 = smul.addr %s271, 2
      %s273 = smul.addr %s269, 32
      %s274 = sadd.s32 %s272, %s273
      %s275 = smul.addr %s274, 8
      %s276 = scalar_lea.vmem %s5, %s275
      %p277 = pneg %p194
      %p278 = pneg %p191
      %p279 = scmp.lt.s32.totalorder %s22, 1
      %s280 = scalar_select %p279, %s22, 1
      %s281 = smul.addr %s280, 2
      %s282 = scalar_lea.vmem %s6, %s281
      %p283 = scmp.lt.s32.totalorder %s22, 1
      %s284 = scalar_select %p283, %s22, 1
      %s285 = smul.addr %s284, 8
      %s286 = smul.addr %s285, 8
      %s287 = scalar_lea.vmem %s0, %s286
      %p288 = scmp.lt.s32.totalorder %s22, 1
      %s289 = scalar_select %p288, %s22, 1
      %s290 = smul.addr %s289, 32
      %s291 = smul.addr %s290, 8
      %s292 = scalar_lea.vmem %s1, %s291
      %s293 = smul.u32 16, %s23
      %p294 = scmp.lt.s32.totalorder %s22, 1
      %s295 = scalar_select %p294, %s22, 1
      %p296 = scmp.lt.s32.totalorder %s293, 15
      %s297 = scalar_select %p296, %s293, 15
      %s298 = smul.addr %s297, 2
      %s299 = smul.addr %s295, 32
      %s300 = sadd.s32 %s298, %s299
      %s301 = smul.addr %s300, 8
      %s302 = scalar_lea.vmem %s5, %s301
      %s303 = smul.u32 16, %s23
      %p304 = scmp.lt.s32.totalorder %s22, 1
      %s305 = scalar_select %p304, %s22, 1
      %s306 = smul.addr %s305, 2
      %s307 = scalar_lea.vmem %s6, %s306
      %p309 = scmp.eq.s32.totalorder %s23, 0
      // Predicated region
      $region41: #{up_forward.3} parent=39 // pred_check
        %p310 = pneg %p309
      $region42: #{up_forward.3} parent=39 // pred_check_branch
        %312 = sbr.rel (%p310) target = $region44
      $region43: #{up_forward.3} parent=39 // pred_region
        %vm313 = vcmask 60416
        %314 = vst.msk [vmem:[#allocation2] sm:$0xf] %vm313, 0
        %315 = vst.msk [vmem:[#allocation2 + $0x4] sm:$0xf] %vm313, 0
        %vm316 = vcmask 57344
        %317 = vst.msk [vmem:[#allocation2 + $0x8] sm:$0x1] %vm316, 0
        %318 = vst.msk [vmem:[#allocation2 + $0xc] sm:$0xf] %vm313, 0
        %319 = vst.msk [vmem:[#allocation2 + $0x10] sm:$0xf] %vm313, 0
        %320 = vst.msk [vmem:[#allocation2 + $0x14] sm:$0x1] %vm316, 0
        %321 = vst.msk [vmem:[#allocation2 + $0x18] sm:$0xf] %vm313, 0
        %322 = vst.msk [vmem:[#allocation2 + $0x1c] sm:$0xf] %vm313, 0
        %323 = vst.msk [vmem:[#allocation2 + $0x20] sm:$0x1] %vm316, 0
        %324 = vst.msk [vmem:[#allocation2 + $0x24] sm:$0xf] %vm313, 0
        %325 = vst.msk [vmem:[#allocation2 + $0x28] sm:$0xf] %vm313, 0
        %326 = vst.msk [vmem:[#allocation2 + $0x2c] sm:$0x1] %vm316, 0
        %327 = vst.msk [vmem:[#allocation2 + $0x30] sm:$0xf] %vm313, 0
        %328 = vst.msk [vmem:[#allocation2 + $0x34] sm:$0xf] %vm313, 0
        %329 = vst.msk [vmem:[#allocation2 + $0x38] sm:$0x1] %vm316, 0
        %330 = vst.msk [vmem:[#allocation2 + $0x3c] sm:$0xf] %vm313, 0
        %331 = vst.msk [vmem:[#allocation2 + $0x40] sm:$0xf] %vm313, 0
        %332 = vst.msk [vmem:[#allocation2 + $0x44] sm:$0x1] %vm316, 0
        %333 = vst.msk [vmem:[#allocation2 + $0x48] sm:$0xf] %vm313, 0
        %334 = vst.msk [vmem:[#allocation2 + $0x4c] sm:$0xf] %vm313, 0
        %335 = vst.msk [vmem:[#allocation2 + $0x50] sm:$0x1] %vm316, 0
        %336 = vst.msk [vmem:[#allocation2 + $0x54] sm:$0xf] %vm313, 0
        %337 = vst.msk [vmem:[#allocation2 + $0x58] sm:$0xf] %vm313, 0
        %338 = vst.msk [vmem:[#allocation2 + $0x5c] sm:$0x1] %vm316, 0
        %339 = vst.msk [vmem:[#allocation2 + $0x60] sm:$0xf] %vm313, 0
        %340 = vst.msk [vmem:[#allocation2 + $0x64] sm:$0xf] %vm313, 0
        %341 = vst.msk [vmem:[#allocation2 + $0x68] sm:$0x1] %vm316, 0
        %342 = vst.msk [vmem:[#allocation2 + $0x6c] sm:$0xf] %vm313, 0
        %343 = vst.msk [vmem:[#allocation2 + $0x70] sm:$0xf] %vm313, 0
        %344 = vst.msk [vmem:[#allocation2 + $0x74] sm:$0x1] %vm316, 0
        %345 = vst.msk [vmem:[#allocation2 + $0x78] sm:$0xf] %vm313, 0
        %346 = vst.msk [vmem:[#allocation2 + $0x7c] sm:$0xf] %vm313, 0
        %347 = vst.msk [vmem:[#allocation2 + $0x80] sm:$0x1] %vm316, 0
        %348 = vst.msk [vmem:[#allocation2 + $0x84] sm:$0xf] %vm313, 0
        %349 = vst.msk [vmem:[#allocation2 + $0x88] sm:$0xf] %vm313, 0
        %350 = vst.msk [vmem:[#allocation2 + $0x8c] sm:$0x1] %vm316, 0
        %351 = vst.msk [vmem:[#allocation2 + $0x90] sm:$0xf] %vm313, 0
        %352 = vst.msk [vmem:[#allocation2 + $0x94] sm:$0xf] %vm313, 0
        %353 = vst.msk [vmem:[#allocation2 + $0x98] sm:$0x1] %vm316, 0
        %354 = vst.msk [vmem:[#allocation2 + $0x9c] sm:$0xf] %vm313, 0
        %355 = vst.msk [vmem:[#allocation2 + $0xa0] sm:$0xf] %vm313, 0
        %356 = vst.msk [vmem:[#allocation2 + $0xa4] sm:$0x1] %vm316, 0
        %357 = vst.msk [vmem:[#allocation2 + $0xa8] sm:$0xf] %vm313, 0
        %358 = vst.msk [vmem:[#allocation2 + $0xac] sm:$0xf] %vm313, 0
        %359 = vst.msk [vmem:[#allocation2 + $0xb0] sm:$0x1] %vm316, 0
        %360 = vst.msk [vmem:[#allocation2 + $0xb4] sm:$0xf] %vm313, 0
        %361 = vst.msk [vmem:[#allocation2 + $0xb8] sm:$0xf] %vm313, 0
        %362 = vst.msk [vmem:[#allocation2 + $0xbc] sm:$0x1] %vm316, 0
        %363 = vst.msk [vmem:[#allocation2 + $0xc0] sm:$0xf] %vm313, 0
        %364 = vst.msk [vmem:[#allocation2 + $0xc4] sm:$0xf] %vm313, 0
        %365 = vst.msk [vmem:[#allocation2 + $0xc8] sm:$0x1] %vm316, 0
        %366 = vst.msk [vmem:[#allocation2 + $0xcc] sm:$0xf] %vm313, 0
        %367 = vst.msk [vmem:[#allocation2 + $0xd0] sm:$0xf] %vm313, 0
        %368 = vst.msk [vmem:[#allocation2 + $0xd4] sm:$0x1] %vm316, 0
        %v369 = vld [vmem:[%s292] sm:$0xff]
        %v370 = vld [vmem:[%s292 + $0x8] sm:$0xff]
        %v371 = vld [vmem:[%s292 + $0x10] sm:$0xff]
        %v372 = vld [vmem:[%s292 + $0x18] sm:$0xff]
        %v373 = vld [vmem:[%s292 + $0x20] sm:$0xff]
        %v374 = vld [vmem:[%s292 + $0x28] sm:$0xff]
        %v375 = vld [vmem:[%s292 + $0x30] sm:$0xff]
        %v376 = vld [vmem:[%s292 + $0x38] sm:$0xff]
        %v377 = vld [vmem:[%s292 + $0x40] sm:$0xff]
        %v378 = vld [vmem:[%s292 + $0x48] sm:$0xff]
        %v379 = vld [vmem:[%s292 + $0x50] sm:$0xff]
        %v380 = vld [vmem:[%s292 + $0x58] sm:$0xff]
        %v381 = vld [vmem:[%s292 + $0x60] sm:$0xff]
        %v382 = vld [vmem:[%s292 + $0x68] sm:$0xff]
        %v383 = vld [vmem:[%s292 + $0x70] sm:$0xff]
        %v384 = vld [vmem:[%s292 + $0x78] sm:$0xff]
        %v385 = vld [vmem:[%s292 + $0x80] sm:$0xff]
        %v386 = vld [vmem:[%s292 + $0x88] sm:$0xff]
        %v387 = vld [vmem:[%s292 + $0x90] sm:$0xff]
        %v388 = vld [vmem:[%s292 + $0x98] sm:$0xff]
        %v389 = vld [vmem:[%s292 + $0xa0] sm:$0xff]
        %v390 = vld [vmem:[%s292 + $0xa8] sm:$0xff]
        %v391 = vld [vmem:[%s292 + $0xb0] sm:$0xff]
        %v392 = vld [vmem:[%s292 + $0xb8] sm:$0xff]
        %v393 = vld [vmem:[%s292 + $0xc0] sm:$0xff]
        %v394 = vld [vmem:[%s292 + $0xc8] sm:$0xff]
        %v395 = vld [vmem:[%s292 + $0xd0] sm:$0xff]
        %v396 = vld [vmem:[%s292 + $0xd8] sm:$0xff]
        %v397 = vld [vmem:[%s292 + $0xe0] sm:$0xff]
        %v398 = vld [vmem:[%s292 + $0xe8] sm:$0xff]
        %v399 = vld [vmem:[%s292 + $0xf0] sm:$0xff]
        %v400 = vld [vmem:[%s292 + $0xf8] sm:$0xff]
        %v401 = vpack.c.bf16 %v370, %v369
        %v402 = vpack.c.bf16 %v372, %v371
        %v403 = vpack.c.bf16 %v374, %v373
        %v404 = vpack.c.bf16 %v376, %v375
        %v405 = vpack.c.bf16 %v378, %v377
        %v406 = vpack.c.bf16 %v380, %v379
        %v407 = vpack.c.bf16 %v382, %v381
        %v408 = vpack.c.bf16 %v384, %v383
        %v409 = vpack.c.bf16 %v386, %v385
        %v410 = vpack.c.bf16 %v388, %v387
        %v411 = vpack.c.bf16 %v390, %v389
        %v412 = vpack.c.bf16 %v392, %v391
        %v413 = vpack.c.bf16 %v394, %v393
        %v414 = vpack.c.bf16 %v396, %v395
        %v415 = vpack.c.bf16 %v398, %v397
        %v416 = vpack.c.bf16 %v400, %v399
        %v433 = vunpack.c.l.b16 %v401
        %v434 = vunpack.c.h.b16 %v401
        %v435 = vunpack.c.l.b16 %v402
        %v436 = vunpack.c.h.b16 %v402
        %v437 = vunpack.c.l.b16 %v403
        %v438 = vunpack.c.h.b16 %v403
        %v439 = vunpack.c.l.b16 %v404
        %v440 = vunpack.c.h.b16 %v404
        %v441 = vunpack.c.l.b16 %v405
        %v442 = vunpack.c.h.b16 %v405
        %v443 = vunpack.c.l.b16 %v406
        %v444 = vunpack.c.h.b16 %v406
        %v445 = vunpack.c.l.b16 %v407
        %v446 = vunpack.c.h.b16 %v407
        %v447 = vunpack.c.l.b16 %v408
        %v448 = vunpack.c.h.b16 %v408
        %v449 = vunpack.c.l.b16 %v409
        %v450 = vunpack.c.h.b16 %v409
        %v451 = vunpack.c.l.b16 %v410
        %v452 = vunpack.c.h.b16 %v410
        %v453 = vunpack.c.l.b16 %v411
        %v454 = vunpack.c.h.b16 %v411
        %v455 = vunpack.c.l.b16 %v412
        %v456 = vunpack.c.h.b16 %v412
        %v457 = vunpack.c.l.b16 %v413
        %v458 = vunpack.c.h.b16 %v413
        %v459 = vunpack.c.l.b16 %v414
        %v460 = vunpack.c.h.b16 %v414
        %v461 = vunpack.c.l.b16 %v415
        %v462 = vunpack.c.h.b16 %v415
        %v463 = vunpack.c.l.b16 %v416
        %v464 = vunpack.c.h.b16 %v416
        %v465 = vpack.c.b16 %v433, %v433
        %v466 = vpack.c.b16 %v434, %v434
        %v467 = vpack.c.b16 %v435, %v435
        %v468 = vpack.c.b16 %v436, %v436
        %v469 = vpack.c.b16 %v437, %v437
        %v470 = vpack.c.b16 %v438, %v438
        %v471 = vpack.c.b16 %v439, %v439
        %v472 = vpack.c.b16 %v440, %v440
        %v473 = vpack.c.b16 %v441, %v441
        %v474 = vpack.c.b16 %v442, %v442
        %v475 = vpack.c.b16 %v443, %v443
        %v476 = vpack.c.b16 %v444, %v444
        %v477 = vpack.c.b16 %v445, %v445
        %v478 = vpack.c.b16 %v446, %v446
        %v479 = vpack.c.b16 %v447, %v447
        %v480 = vpack.c.b16 %v448, %v448
        %v481 = vpack.c.b16 %v449, %v449
        %v482 = vpack.c.b16 %v450, %v450
        %v483 = vpack.c.b16 %v451, %v451
        %v484 = vpack.c.b16 %v452, %v452
        %v485 = vpack.c.b16 %v453, %v453
        %v486 = vpack.c.b16 %v454, %v454
        %v487 = vpack.c.b16 %v455, %v455
        %v488 = vpack.c.b16 %v456, %v456
        %v489 = vpack.c.b16 %v457, %v457
        %v490 = vpack.c.b16 %v458, %v458
        %v491 = vpack.c.b16 %v459, %v459
        %v492 = vpack.c.b16 %v460, %v460
        %v493 = vpack.c.b16 %v461, %v461
        %v494 = vpack.c.b16 %v462, %v462
        %v495 = vpack.c.b16 %v463, %v463
        %v496 = vpack.c.b16 %v464, %v464
        %vm497 = vsmask.f32 256
        %vm498 = vsmask.f32 4368
        %vm499 = vmor %vm497, %vm498
        %v501 = vshrl.u32 %v465, 16
        %v503 = vrot.slane %v501, 7
        %v504 = vshll.u32 %v465, 16
        %v506 = vor.u32 %v503, %v504
        %v507 = vrot.slane %v503, 4
        %v509 = vshrl.u32 %v466, 16
        %v511 = vrot.slane %v509, 7
        %v512 = vshll.u32 %v466, 16
        %v514 = vor.u32 %v511, %v512
        %v515 = vsel %vm499, %v507, %v514
        %v516 = vrot.slane %v511, 4
        %v518 = vshrl.u32 %v467, 16
        %v520 = vrot.slane %v518, 7
        %v521 = vshll.u32 %v467, 16
        %v523 = vor.u32 %v520, %v521
        %v524 = vrot.slane %v520, 4
        %v526 = vshrl.u32 %v468, 16
        %v528 = vrot.slane %v526, 7
        %v529 = vshll.u32 %v468, 16
        %v531 = vor.u32 %v528, %v529
        %v532 = vsel %vm499, %v524, %v531
        %v533 = vrot.slane %v528, 4
        %v535 = vshrl.u32 %v469, 16
        %v537 = vrot.slane %v535, 7
        %v538 = vshll.u32 %v469, 16
        %v540 = vor.u32 %v537, %v538
        %v541 = vrot.slane %v537, 4
        %v543 = vshrl.u32 %v470, 16
        %v545 = vrot.slane %v543, 7
        %v546 = vshll.u32 %v470, 16
        %v548 = vor.u32 %v545, %v546
        %v549 = vsel %vm499, %v541, %v548
        %v550 = vrot.slane %v545, 4
        %v552 = vshrl.u32 %v471, 16
        %v554 = vrot.slane %v552, 7
        %v555 = vshll.u32 %v471, 16
        %v557 = vor.u32 %v554, %v555
        %v558 = vrot.slane %v554, 4
        %v560 = vshrl.u32 %v472, 16
        %v562 = vrot.slane %v560, 7
        %v563 = vshll.u32 %v472, 16
        %v565 = vor.u32 %v562, %v563
        %v566 = vsel %vm499, %v558, %v565
        %v567 = vrot.slane %v562, 4
        %v569 = vshrl.u32 %v473, 16
        %v571 = vrot.slane %v569, 7
        %v572 = vshll.u32 %v473, 16
        %v574 = vor.u32 %v571, %v572
        %v575 = vrot.slane %v571, 4
        %v577 = vshrl.u32 %v474, 16
        %v579 = vrot.slane %v577, 7
        %v580 = vshll.u32 %v474, 16
        %v582 = vor.u32 %v579, %v580
        %v583 = vsel %vm499, %v575, %v582
        %v584 = vrot.slane %v579, 4
        %v586 = vshrl.u32 %v475, 16
        %v588 = vrot.slane %v586, 7
        %v589 = vshll.u32 %v475, 16
        %v591 = vor.u32 %v588, %v589
        %v592 = vrot.slane %v588, 4
        %v594 = vshrl.u32 %v476, 16
        %v596 = vrot.slane %v594, 7
        %v597 = vshll.u32 %v476, 16
        %v599 = vor.u32 %v596, %v597
        %v600 = vsel %vm499, %v592, %v599
        %v601 = vrot.slane %v596, 4
        %v603 = vshrl.u32 %v477, 16
        %v605 = vrot.slane %v603, 7
        %v606 = vshll.u32 %v477, 16
        %v608 = vor.u32 %v605, %v606
        %v609 = vrot.slane %v605, 4
        %v611 = vshrl.u32 %v478, 16
        %v613 = vrot.slane %v611, 7
        %v614 = vshll.u32 %v478, 16
        %v616 = vor.u32 %v613, %v614
        %v617 = vsel %vm499, %v609, %v616
        %v618 = vrot.slane %v613, 4
        %v620 = vshrl.u32 %v479, 16
        %v622 = vrot.slane %v620, 7
        %v623 = vshll.u32 %v479, 16
        %v625 = vor.u32 %v622, %v623
        %v626 = vrot.slane %v622, 4
        %v628 = vshrl.u32 %v480, 16
        %v630 = vrot.slane %v628, 7
        %v631 = vshll.u32 %v480, 16
        %v633 = vor.u32 %v630, %v631
        %v634 = vsel %vm499, %v626, %v633
        %v635 = vrot.slane %v630, 4
        %v637 = vshrl.u32 %v481, 16
        %v639 = vrot.slane %v637, 7
        %v640 = vshll.u32 %v481, 16
        %v642 = vor.u32 %v639, %v640
        %v643 = vrot.slane %v639, 4
        %v645 = vshrl.u32 %v482, 16
        %v647 = vrot.slane %v645, 7
        %v648 = vshll.u32 %v482, 16
        %v650 = vor.u32 %v647, %v648
        %v651 = vsel %vm499, %v643, %v650
        %v652 = vrot.slane %v647, 4
        %v654 = vshrl.u32 %v483, 16
        %v656 = vrot.slane %v654, 7
        %v657 = vshll.u32 %v483, 16
        %v659 = vor.u32 %v656, %v657
        %v660 = vrot.slane %v656, 4
        %v662 = vshrl.u32 %v484, 16
        %v664 = vrot.slane %v662, 7
        %v665 = vshll.u32 %v484, 16
        %v667 = vor.u32 %v664, %v665
        %v668 = vsel %vm499, %v660, %v667
        %v669 = vrot.slane %v664, 4
        %v671 = vshrl.u32 %v485, 16
        %v673 = vrot.slane %v671, 7
        %v674 = vshll.u32 %v485, 16
        %v676 = vor.u32 %v673, %v674
        %v677 = vrot.slane %v673, 4
        %v679 = vshrl.u32 %v486, 16
        %v681 = vrot.slane %v679, 7
        %v682 = vshll.u32 %v486, 16
        %v684 = vor.u32 %v681, %v682
        %v685 = vsel %vm499, %v677, %v684
        %v686 = vrot.slane %v681, 4
        %v688 = vshrl.u32 %v487, 16
        %v690 = vrot.slane %v688, 7
        %v691 = vshll.u32 %v487, 16
        %v693 = vor.u32 %v690, %v691
        %v694 = vrot.slane %v690, 4
        %v696 = vshrl.u32 %v488, 16
        %v698 = vrot.slane %v696, 7
        %v699 = vshll.u32 %v488, 16
        %v701 = vor.u32 %v698, %v699
        %v702 = vsel %vm499, %v694, %v701
        %v703 = vrot.slane %v698, 4
        %v705 = vshrl.u32 %v489, 16
        %v707 = vrot.slane %v705, 7
        %v708 = vshll.u32 %v489, 16
        %v710 = vor.u32 %v707, %v708
        %v711 = vrot.slane %v707, 4
        %v713 = vshrl.u32 %v490, 16
        %v715 = vrot.slane %v713, 7
        %v716 = vshll.u32 %v490, 16
        %v718 = vor.u32 %v715, %v716
        %v719 = vsel %vm499, %v711, %v718
        %v720 = vrot.slane %v715, 4
        %v722 = vshrl.u32 %v491, 16
        %v724 = vrot.slane %v722, 7
        %v725 = vshll.u32 %v491, 16
        %v727 = vor.u32 %v724, %v725
        %v728 = vrot.slane %v724, 4
        %v730 = vshrl.u32 %v492, 16
        %v732 = vrot.slane %v730, 7
        %v733 = vshll.u32 %v492, 16
        %v735 = vor.u32 %v732, %v733
        %v736 = vsel %vm499, %v728, %v735
        %v737 = vrot.slane %v732, 4
        %v739 = vshrl.u32 %v493, 16
        %v741 = vrot.slane %v739, 7
        %v742 = vshll.u32 %v493, 16
        %v744 = vor.u32 %v741, %v742
        %v745 = vrot.slane %v741, 4
        %v747 = vshrl.u32 %v494, 16
        %v749 = vrot.slane %v747, 7
        %v750 = vshll.u32 %v494, 16
        %v752 = vor.u32 %v749, %v750
        %v753 = vsel %vm499, %v745, %v752
        %v754 = vrot.slane %v749, 4
        %v756 = vshrl.u32 %v495, 16
        %v758 = vrot.slane %v756, 7
        %v759 = vshll.u32 %v495, 16
        %v761 = vor.u32 %v758, %v759
        %v762 = vrot.slane %v758, 4
        %v764 = vshrl.u32 %v496, 16
        %v766 = vrot.slane %v764, 7
        %v767 = vshll.u32 %v496, 16
        %v769 = vor.u32 %v766, %v767
        %v770 = vsel %vm499, %v762, %v769
        %v771 = vrot.slane %v766, 4
        %s820 = scalar_lea.vmem [#allocation2], 12
        %vm821 = vcmask 27648
        %vm822 = vsmask.f32 7938
        %vm823 = vmand %vm821, %vm822
        %v824 = vld [vmem:[%s820] sm:$0xf]
        %v825 = vsel %vm823, %v506, %v824
        %826 = vst [vmem:[%s820] sm:$0xf] %v825
        %vm827 = vcmask 27648
        %828 = vst.msk [vmem:[%s820 + $0x4] sm:$0xf] %vm827, %v515
        %vm829 = vcmask 24576
        %vm830 = vmand %vm829, %vm497
        %v831 = vld [vmem:[%s820 + $0x8] sm:$0x1]
        %v832 = vsel %vm830, %v516, %v831
        %833 = vst [vmem:[%s820 + $0x8] sm:$0x1] %v832
        %v834 = vld [vmem:[%s820 + $0xc] sm:$0xf]
        %v835 = vsel %vm823, %v523, %v834
        %836 = vst [vmem:[%s820 + $0xc] sm:$0xf] %v835
        %837 = vst.msk [vmem:[%s820 + $0x10] sm:$0xf] %vm827, %v532
        %v838 = vld [vmem:[%s820 + $0x14] sm:$0x1]
        %v839 = vsel %vm830, %v533, %v838
        %840 = vst [vmem:[%s820 + $0x14] sm:$0x1] %v839
        %v841 = vld [vmem:[%s820 + $0x18] sm:$0xf]
        %v842 = vsel %vm823, %v540, %v841
        %843 = vst [vmem:[%s820 + $0x18] sm:$0xf] %v842
        %844 = vst.msk [vmem:[%s820 + $0x1c] sm:$0xf] %vm827, %v549
        %v845 = vld [vmem:[%s820 + $0x20] sm:$0x1]
        %v846 = vsel %vm830, %v550, %v845
        %847 = vst [vmem:[%s820 + $0x20] sm:$0x1] %v846
        %v848 = vld [vmem:[%s820 + $0x24] sm:$0xf]
        %v849 = vsel %vm823, %v557, %v848
        %850 = vst [vmem:[%s820 + $0x24] sm:$0xf] %v849
        %851 = vst.msk [vmem:[%s820 + $0x28] sm:$0xf] %vm827, %v566
        %v852 = vld [vmem:[%s820 + $0x2c] sm:$0x1]
        %v853 = vsel %vm830, %v567, %v852
        %854 = vst [vmem:[%s820 + $0x2c] sm:$0x1] %v853
        %v855 = vld [vmem:[%s820 + $0x30] sm:$0xf]
        %v856 = vsel %vm823, %v574, %v855
        %857 = vst [vmem:[%s820 + $0x30] sm:$0xf] %v856
        %858 = vst.msk [vmem:[%s820 + $0x34] sm:$0xf] %vm827, %v583
        %v859 = vld [vmem:[%s820 + $0x38] sm:$0x1]
        %v860 = vsel %vm830, %v584, %v859
        %861 = vst [vmem:[%s820 + $0x38] sm:$0x1] %v860
        %v862 = vld [vmem:[%s820 + $0x3c] sm:$0xf]
        %v863 = vsel %vm823, %v591, %v862
        %864 = vst [vmem:[%s820 + $0x3c] sm:$0xf] %v863
        %865 = vst.msk [vmem:[%s820 + $0x40] sm:$0xf] %vm827, %v600
        %v866 = vld [vmem:[%s820 + $0x44] sm:$0x1]
        %v867 = vsel %vm830, %v601, %v866
        %868 = vst [vmem:[%s820 + $0x44] sm:$0x1] %v867
        %v869 = vld [vmem:[%s820 + $0x48] sm:$0xf]
        %v870 = vsel %vm823, %v608, %v869
        %871 = vst [vmem:[%s820 + $0x48] sm:$0xf] %v870
        %872 = vst.msk [vmem:[%s820 + $0x4c] sm:$0xf] %vm827, %v617
        %v873 = vld [vmem:[%s820 + $0x50] sm:$0x1]
        %v874 = vsel %vm830, %v618, %v873
        %875 = vst [vmem:[%s820 + $0x50] sm:$0x1] %v874
        %v876 = vld [vmem:[%s820 + $0x54] sm:$0xf]
        %v877 = vsel %vm823, %v625, %v876
        %878 = vst [vmem:[%s820 + $0x54] sm:$0xf] %v877
        %879 = vst.msk [vmem:[%s820 + $0x58] sm:$0xf] %vm827, %v634
        %v880 = vld [vmem:[%s820 + $0x5c] sm:$0x1]
        %v881 = vsel %vm830, %v635, %v880
        %882 = vst [vmem:[%s820 + $0x5c] sm:$0x1] %v881
        %v883 = vld [vmem:[%s820 + $0x60] sm:$0xf]
        %v884 = vsel %vm823, %v642, %v883
        %885 = vst [vmem:[%s820 + $0x60] sm:$0xf] %v884
        %886 = vst.msk [vmem:[%s820 + $0x64] sm:$0xf] %vm827, %v651
        %v887 = vld [vmem:[%s820 + $0x68] sm:$0x1]
        %v888 = vsel %vm830, %v652, %v887
        %889 = vst [vmem:[%s820 + $0x68] sm:$0x1] %v888
        %v890 = vld [vmem:[%s820 + $0x6c] sm:$0xf]
        %v891 = vsel %vm823, %v659, %v890
        %892 = vst [vmem:[%s820 + $0x6c] sm:$0xf] %v891
        %893 = vst.msk [vmem:[%s820 + $0x70] sm:$0xf] %vm827, %v668
        %v894 = vld [vmem:[%s820 + $0x74] sm:$0x1]
        %v895 = vsel %vm830, %v669, %v894
        %896 = vst [vmem:[%s820 + $0x74] sm:$0x1] %v895
        %v897 = vld [vmem:[%s820 + $0x78] sm:$0xf]
        %v898 = vsel %vm823, %v676, %v897
        %899 = vst [vmem:[%s820 + $0x78] sm:$0xf] %v898
        %900 = vst.msk [vmem:[%s820 + $0x7c] sm:$0xf] %vm827, %v685
        %v901 = vld [vmem:[%s820 + $0x80] sm:$0x1]
        %v902 = vsel %vm830, %v686, %v901
        %903 = vst [vmem:[%s820 + $0x80] sm:$0x1] %v902
        %v904 = vld [vmem:[%s820 + $0x84] sm:$0xf]
        %v905 = vsel %vm823, %v693, %v904
        %906 = vst [vmem:[%s820 + $0x84] sm:$0xf] %v905
        %907 = vst.msk [vmem:[%s820 + $0x88] sm:$0xf] %vm827, %v702
        %v908 = vld [vmem:[%s820 + $0x8c] sm:$0x1]
        %v909 = vsel %vm830, %v703, %v908
        %910 = vst [vmem:[%s820 + $0x8c] sm:$0x1] %v909
        %v911 = vld [vmem:[%s820 + $0x90] sm:$0xf]
        %v912 = vsel %vm823, %v710, %v911
        %913 = vst [vmem:[%s820 + $0x90] sm:$0xf] %v912
        %914 = vst.msk [vmem:[%s820 + $0x94] sm:$0xf] %vm827, %v719
        %v915 = vld [vmem:[%s820 + $0x98] sm:$0x1]
        %v916 = vsel %vm830, %v720, %v915
        %917 = vst [vmem:[%s820 + $0x98] sm:$0x1] %v916
        %v918 = vld [vmem:[%s820 + $0x9c] sm:$0xf]
        %v919 = vsel %vm823, %v727, %v918
        %920 = vst [vmem:[%s820 + $0x9c] sm:$0xf] %v919
        %921 = vst.msk [vmem:[%s820 + $0xa0] sm:$0xf] %vm827, %v736
        %v922 = vld [vmem:[%s820 + $0xa4] sm:$0x1]
        %v923 = vsel %vm830, %v737, %v922
        %924 = vst [vmem:[%s820 + $0xa4] sm:$0x1] %v923
        %v925 = vld [vmem:[%s820 + $0xa8] sm:$0xf]
        %v926 = vsel %vm823, %v744, %v925
        %927 = vst [vmem:[%s820 + $0xa8] sm:$0xf] %v926
        %928 = vst.msk [vmem:[%s820 + $0xac] sm:$0xf] %vm827, %v753
        %v929 = vld [vmem:[%s820 + $0xb0] sm:$0x1]
        %v930 = vsel %vm830, %v754, %v929
        %931 = vst [vmem:[%s820 + $0xb0] sm:$0x1] %v930
        %v932 = vld [vmem:[%s820 + $0xb4] sm:$0xf]
        %v933 = vsel %vm823, %v761, %v932
        %934 = vst [vmem:[%s820 + $0xb4] sm:$0xf] %v933
        %935 = vst.msk [vmem:[%s820 + $0xb8] sm:$0xf] %vm827, %v770
        %v936 = vld [vmem:[%s820 + $0xbc] sm:$0x1]
        %v937 = vsel %vm830, %v771, %v936
        %938 = vst [vmem:[%s820 + $0xbc] sm:$0x1] %v937
        %v939 = vld [vmem:[%s287] sm:$0xff]
        %v940 = vld [vmem:[%s287 + $0x8] sm:$0xff]
        %v941 = vld [vmem:[%s287 + $0x10] sm:$0xff]
        %v942 = vld [vmem:[%s287 + $0x18] sm:$0xff]
        %v943 = vld [vmem:[%s287 + $0x20] sm:$0xff]
        %v944 = vld [vmem:[%s287 + $0x28] sm:$0xff]
        %v945 = vld [vmem:[%s287 + $0x30] sm:$0xff]
        %v946 = vld [vmem:[%s287 + $0x38] sm:$0xff]
        %v947 = vpack.c.bf16 %v940, %v939
        %v948 = vpack.c.bf16 %v942, %v941
        %v949 = vpack.c.bf16 %v944, %v943
        %v950 = vpack.c.bf16 %v946, %v945
        %v951 = vld [vmem:[%s2] sm:$0xf]
        %v952 = vld [vmem:[%s3] sm:$0x1]
        %v954 = vlaneseq
        %v955 = vshrl.u32 %v954, 7
        %v956 = vsub.s32 0, %v955
        %v957 = vrot.slane %v952, %v956
        %vm959 = vcmask 64512
        %v961 = vsel %vm959, %v947, 0
        %v964 = vsel %vm959, %v948, 0
        %v967 = vsel %vm959, %v949, 0
        %v970 = vsel %vm959, %v950, 0
        %vm972 = vcmask 1043456
        %v974 = vsel %vm972, %v951, 0
        %976 = vmatprep.subr.bf16.mxu0 0
        %977 = vmatpush1.bf16.msra.mxu0 0
        %978 = vmatprep.subr.bf16.mxu0 0
        %979 = vmatpush1.bf16.msra.mxu0 0
        %980 = vmatprep.subr.bf16.mxu0 0
        %981 = vmatpush1.bf16.msra.mxu0 0
        %982 = vmatprep.subr.bf16.mxu0 0
        %983 = vmatpush1.bf16.msra.mxu0 0
        %984 = vmatprep.subr.bf16.mxu0 0
        %985 = vmatpush1.bf16.msra.mxu0 0
        %986 = vmatprep.subr.bf16.mxu0 0
        %987 = vmatpush1.bf16.msra.mxu0 0
        %988 = vmatprep.subr.bf16.mxu0 0
        %989 = vmatpush1.bf16.msra.mxu0 0
        %990 = vmatprep.subr.bf16.mxu0 0
        %991 = vmatpush1.bf16.msra.mxu0 %v974
        %992 = vmatprep.subr.bf16.mxu0 0
        %993 = vmatpush2.bf16.msra.mxu0 0
        %994 = vmatprep.subr.bf16.mxu0 0
        %995 = vmatpush2.bf16.msra.mxu0 0
        %996 = vmatprep.subr.bf16.mxu0 0
        %997 = vmatpush2.bf16.msra.mxu0 0
        %998 = vmatprep.subr.bf16.mxu0 0
        %999 = vmatpush2.bf16.msra.mxu0 0
        %1000 = vmatprep.subr.bf16.mxu0 0
        %1001 = vmatpush2.bf16.msra.mxu0 0
        %1002 = vmatprep.subr.bf16.mxu0 0
        %1003 = vmatpush2.bf16.msra.mxu0 0
        %1004 = vmatprep.subr.bf16.mxu0 0
        %1005 = vmatpush2.bf16.msra.mxu0 0
        %1006 = vmatprep.subr.bf16.mxu0 0
        %1007 = vmatpush2.bf16.msra.mxu0 0
        %1008 = vmatprep.mubr.bf16.mxu0 0
        %1009 = vmatmul.mubr.bf16.gmra.mxu0 %v961
        %v1010 = vpop.f32.mrf.mxu0
        %v1011 = vadd.f32 %v957, %v1010
        %v1012 = vpop.f32.mrf.mxu0
        %v1013 = vpop.f32.mrf.mxu0
        %v1014 = vadd.f32 %v957, %v1013
        %v1015 = vpop.f32.mrf.mxu0
        %1016 = vmatprep.mubr.bf16.mxu0 0
        %1017 = vmatmul.mubr.bf16.gmra.mxu0 %v964
        %v1018 = vpop.f32.mrf.mxu0
        %v1019 = vadd.f32 %v957, %v1018
        %v1020 = vpop.f32.mrf.mxu0
        %v1021 = vpop.f32.mrf.mxu0
        %v1022 = vadd.f32 %v957, %v1021
        %v1023 = vpop.f32.mrf.mxu0
        %1024 = vmatprep.mubr.bf16.mxu0 0
        %1025 = vmatmul.mubr.bf16.gmra.mxu0 %v967
        %v1026 = vpop.f32.mrf.mxu0
        %v1027 = vadd.f32 %v957, %v1026
        %v1028 = vpop.f32.mrf.mxu0
        %v1029 = vpop.f32.mrf.mxu0
        %v1030 = vadd.f32 %v957, %v1029
        %v1031 = vpop.f32.mrf.mxu0
        %1032 = vmatprep.mubr.bf16.mxu0 0
        %1033 = vmatmul.mubr.bf16.gmra.mxu0 %v970
        %v1034 = vpop.f32.mrf.mxu0
        %v1035 = vadd.f32 %v957, %v1034
        %v1036 = vpop.f32.mrf.mxu0
        %v1037 = vpop.f32.mrf.mxu0
        %v1038 = vadd.f32 %v957, %v1037
        %v1039 = vpop.f32.mrf.mxu0
        %1040 = vdwg.mxu0
        %v1049 = vcombine.high %v1011, %v1011
        %v1051 = vunpack.c.l.s4 1966171168
        %v1052 = vunpack.c.0.s8 %v1051
        %v1053 = vlaneseq
        %v1054 = vshrl.u32 %v1053, 7
        %v1055 = vsub.s32 %v1052, %v1054
        %v1056 = vrot.slane %v1011, %v1055
        %v1058 = vunpack.c.l.s4 1966171168
        %v1059 = vunpack.c.0.s8 %v1058
        %v1060 = vlaneseq
        %v1061 = vshrl.u32 %v1060, 7
        %v1062 = vsub.s32 %v1059, %v1061
        %v1063 = vrot.slane %v1049, %v1062
        %v1064 = vcombine.high %v1056, %v1056
        %v1065 = vcombine.high %v1063, %v1063
        %v1067 = vunpack.c.l.s4 1966171168
        %v1068 = vunpack.c.0.s8 %v1067
        %v1069 = vlaneseq
        %v1070 = vshrl.u32 %v1069, 7
        %v1071 = vsub.s32 %v1068, %v1070
        %v1072 = vrot.slane %v1056, %v1071
        %v1074 = vunpack.c.l.s4 1966171168
        %v1075 = vunpack.c.0.s8 %v1074
        %v1076 = vlaneseq
        %v1077 = vshrl.u32 %v1076, 7
        %v1078 = vsub.s32 %v1075, %v1077
        %v1079 = vrot.slane %v1063, %v1078
        %v1081 = vunpack.c.l.s4 1966171168
        %v1082 = vunpack.c.0.s8 %v1081
        %v1083 = vlaneseq
        %v1084 = vshrl.u32 %v1083, 7
        %v1085 = vsub.s32 %v1082, %v1084
        %v1086 = vrot.slane %v1064, %v1085
        %v1088 = vunpack.c.l.s4 1966171168
        %v1089 = vunpack.c.0.s8 %v1088
        %v1090 = vlaneseq
        %v1091 = vshrl.u32 %v1090, 7
        %v1092 = vsub.s32 %v1089, %v1091
        %v1093 = vrot.slane %v1065, %v1092
        %v1094 = vcombine.high %v1072, %v1072
        %v1095 = vcombine.high %v1079, %v1079
        %v1096 = vcombine.high %v1086, %v1086
        %v1097 = vcombine.high %v1093, %v1093
        %v1098 = vcombine.high %v1014, %v1014
        %v1100 = vunpack.c.l.s4 1966171168
        %v1101 = vunpack.c.0.s8 %v1100
        %v1102 = vlaneseq
        %v1103 = vshrl.u32 %v1102, 7
        %v1104 = vsub.s32 %v1101, %v1103
        %v1105 = vrot.slane %v1014, %v1104
        %v1107 = vunpack.c.l.s4 1966171168
        %v1108 = vunpack.c.0.s8 %v1107
        %v1109 = vlaneseq
        %v1110 = vshrl.u32 %v1109, 7
        %v1111 = vsub.s32 %v1108, %v1110
        %v1112 = vrot.slane %v1098, %v1111
        %v1113 = vcombine.high %v1105, %v1105
        %v1114 = vcombine.high %v1112, %v1112
        %v1116 = vunpack.c.l.s4 1966171168
        %v1117 = vunpack.c.0.s8 %v1116
        %v1118 = vlaneseq
        %v1119 = vshrl.u32 %v1118, 7
        %v1120 = vsub.s32 %v1117, %v1119
        %v1121 = vrot.slane %v1105, %v1120
        %v1123 = vunpack.c.l.s4 1966171168
        %v1124 = vunpack.c.0.s8 %v1123
        %v1125 = vlaneseq
        %v1126 = vshrl.u32 %v1125, 7
        %v1127 = vsub.s32 %v1124, %v1126
        %v1128 = vrot.slane %v1112, %v1127
        %v1130 = vunpack.c.l.s4 1966171168
        %v1131 = vunpack.c.0.s8 %v1130
        %v1132 = vlaneseq
        %v1133 = vshrl.u32 %v1132, 7
        %v1134 = vsub.s32 %v1131, %v1133
        %v1135 = vrot.slane %v1113, %v1134
        %v1137 = vunpack.c.l.s4 1966171168
        %v1138 = vunpack.c.0.s8 %v1137
        %v1139 = vlaneseq
        %v1140 = vshrl.u32 %v1139, 7
        %v1141 = vsub.s32 %v1138, %v1140
        %v1142 = vrot.slane %v1114, %v1141
        %v1143 = vcombine.high %v1121, %v1121
        %v1144 = vcombine.high %v1128, %v1128
        %v1145 = vcombine.high %v1135, %v1135
        %v1146 = vcombine.high %v1142, %v1142
        %v1147 = vcombine.high %v1019, %v1019
        %v1149 = vunpack.c.l.s4 1966171168
        %v1150 = vunpack.c.0.s8 %v1149
        %v1151 = vlaneseq
        %v1152 = vshrl.u32 %v1151, 7
        %v1153 = vsub.s32 %v1150, %v1152
        %v1154 = vrot.slane %v1019, %v1153
        %v1156 = vunpack.c.l.s4 1966171168
        %v1157 = vunpack.c.0.s8 %v1156
        %v1158 = vlaneseq
        %v1159 = vshrl.u32 %v1158, 7
        %v1160 = vsub.s32 %v1157, %v1159
        %v1161 = vrot.slane %v1147, %v1160
        %v1162 = vcombine.high %v1154, %v1154
        %v1163 = vcombine.high %v1161, %v1161
        %v1165 = vunpack.c.l.s4 1966171168
        %v1166 = vunpack.c.0.s8 %v1165
        %v1167 = vlaneseq
        %v1168 = vshrl.u32 %v1167, 7
        %v1169 = vsub.s32 %v1166, %v1168
        %v1170 = vrot.slane %v1154, %v1169
        %v1172 = vunpack.c.l.s4 1966171168
        %v1173 = vunpack.c.0.s8 %v1172
        %v1174 = vlaneseq
        %v1175 = vshrl.u32 %v1174, 7
        %v1176 = vsub.s32 %v1173, %v1175
        %v1177 = vrot.slane %v1161, %v1176
        %v1179 = vunpack.c.l.s4 1966171168
        %v1180 = vunpack.c.0.s8 %v1179
        %v1181 = vlaneseq
        %v1182 = vshrl.u32 %v1181, 7
        %v1183 = vsub.s32 %v1180, %v1182
        %v1184 = vrot.slane %v1162, %v1183
        %v1186 = vunpack.c.l.s4 1966171168
        %v1187 = vunpack.c.0.s8 %v1186
        %v1188 = vlaneseq
        %v1189 = vshrl.u32 %v1188, 7
        %v1190 = vsub.s32 %v1187, %v1189
        %v1191 = vrot.slane %v1163, %v1190
        %v1192 = vcombine.high %v1170, %v1170
        %v1193 = vcombine.high %v1177, %v1177
        %v1194 = vcombine.high %v1184, %v1184
        %v1195 = vcombine.high %v1191, %v1191
        %v1196 = vcombine.high %v1022, %v1022
        %v1198 = vunpack.c.l.s4 1966171168
        %v1199 = vunpack.c.0.s8 %v1198
        %v1200 = vlaneseq
        %v1201 = vshrl.u32 %v1200, 7
        %v1202 = vsub.s32 %v1199, %v1201
        %v1203 = vrot.slane %v1022, %v1202
        %v1205 = vunpack.c.l.s4 1966171168
        %v1206 = vunpack.c.0.s8 %v1205
        %v1207 = vlaneseq
        %v1208 = vshrl.u32 %v1207, 7
        %v1209 = vsub.s32 %v1206, %v1208
        %v1210 = vrot.slane %v1196, %v1209
        %v1211 = vcombine.high %v1203, %v1203
        %v1212 = vcombine.high %v1210, %v1210
        %v1214 = vunpack.c.l.s4 1966171168
        %v1215 = vunpack.c.0.s8 %v1214
        %v1216 = vlaneseq
        %v1217 = vshrl.u32 %v1216, 7
        %v1218 = vsub.s32 %v1215, %v1217
        %v1219 = vrot.slane %v1203, %v1218
        %v1221 = vunpack.c.l.s4 1966171168
        %v1222 = vunpack.c.0.s8 %v1221
        %v1223 = vlaneseq
        %v1224 = vshrl.u32 %v1223, 7
        %v1225 = vsub.s32 %v1222, %v1224
        %v1226 = vrot.slane %v1210, %v1225
        %v1228 = vunpack.c.l.s4 1966171168
        %v1229 = vunpack.c.0.s8 %v1228
        %v1230 = vlaneseq
        %v1231 = vshrl.u32 %v1230, 7
        %v1232 = vsub.s32 %v1229, %v1231
        %v1233 = vrot.slane %v1211, %v1232
        %v1235 = vunpack.c.l.s4 1966171168
        %v1236 = vunpack.c.0.s8 %v1235
        %v1237 = vlaneseq
        %v1238 = vshrl.u32 %v1237, 7
        %v1239 = vsub.s32 %v1236, %v1238
        %v1240 = vrot.slane %v1212, %v1239
        %v1241 = vcombine.high %v1219, %v1219
        %v1242 = vcombine.high %v1226, %v1226
        %v1243 = vcombine.high %v1233, %v1233
        %v1244 = vcombine.high %v1240, %v1240
        %v1245 = vcombine.high %v1027, %v1027
        %v1247 = vunpack.c.l.s4 1966171168
        %v1248 = vunpack.c.0.s8 %v1247
        %v1249 = vlaneseq
        %v1250 = vshrl.u32 %v1249, 7
        %v1251 = vsub.s32 %v1248, %v1250
        %v1252 = vrot.slane %v1027, %v1251
        %v1254 = vunpack.c.l.s4 1966171168
        %v1255 = vunpack.c.0.s8 %v1254
        %v1256 = vlaneseq
        %v1257 = vshrl.u32 %v1256, 7
        %v1258 = vsub.s32 %v1255, %v1257
        %v1259 = vrot.slane %v1245, %v1258
        %v1260 = vcombine.high %v1252, %v1252
        %v1261 = vcombine.high %v1259, %v1259
        %v1263 = vunpack.c.l.s4 1966171168
        %v1264 = vunpack.c.0.s8 %v1263
        %v1265 = vlaneseq
        %v1266 = vshrl.u32 %v1265, 7
        %v1267 = vsub.s32 %v1264, %v1266
        %v1268 = vrot.slane %v1252, %v1267
        %v1270 = vunpack.c.l.s4 1966171168
        %v1271 = vunpack.c.0.s8 %v1270
        %v1272 = vlaneseq
        %v1273 = vshrl.u32 %v1272, 7
        %v1274 = vsub.s32 %v1271, %v1273
        %v1275 = vrot.slane %v1259, %v1274
        %v1277 = vunpack.c.l.s4 1966171168
        %v1278 = vunpack.c.0.s8 %v1277
        %v1279 = vlaneseq
        %v1280 = vshrl.u32 %v1279, 7
        %v1281 = vsub.s32 %v1278, %v1280
        %v1282 = vrot.slane %v1260, %v1281
        %v1284 = vunpack.c.l.s4 1966171168
        %v1285 = vunpack.c.0.s8 %v1284
        %v1286 = vlaneseq
        %v1287 = vshrl.u32 %v1286, 7
        %v1288 = vsub.s32 %v1285, %v1287
        %v1289 = vrot.slane %v1261, %v1288
        %v1290 = vcombine.high %v1268, %v1268
        %v1291 = vcombine.high %v1275, %v1275
        %v1292 = vcombine.high %v1282, %v1282
        %v1293 = vcombine.high %v1289, %v1289
        %v1294 = vcombine.high %v1030, %v1030
        %v1296 = vunpack.c.l.s4 1966171168
        %v1297 = vunpack.c.0.s8 %v1296
        %v1298 = vlaneseq
        %v1299 = vshrl.u32 %v1298, 7
        %v1300 = vsub.s32 %v1297, %v1299
        %v1301 = vrot.slane %v1030, %v1300
        %v1303 = vunpack.c.l.s4 1966171168
        %v1304 = vunpack.c.0.s8 %v1303
        %v1305 = vlaneseq
        %v1306 = vshrl.u32 %v1305, 7
        %v1307 = vsub.s32 %v1304, %v1306
        %v1308 = vrot.slane %v1294, %v1307
        %v1309 = vcombine.high %v1301, %v1301
        %v1310 = vcombine.high %v1308, %v1308
        %v1312 = vunpack.c.l.s4 1966171168
        %v1313 = vunpack.c.0.s8 %v1312
        %v1314 = vlaneseq
        %v1315 = vshrl.u32 %v1314, 7
        %v1316 = vsub.s32 %v1313, %v1315
        %v1317 = vrot.slane %v1301, %v1316
        %v1319 = vunpack.c.l.s4 1966171168
        %v1320 = vunpack.c.0.s8 %v1319
        %v1321 = vlaneseq
        %v1322 = vshrl.u32 %v1321, 7
        %v1323 = vsub.s32 %v1320, %v1322
        %v1324 = vrot.slane %v1308, %v1323
        %v1326 = vunpack.c.l.s4 1966171168
        %v1327 = vunpack.c.0.s8 %v1326
        %v1328 = vlaneseq
        %v1329 = vshrl.u32 %v1328, 7
        %v1330 = vsub.s32 %v1327, %v1329
        %v1331 = vrot.slane %v1309, %v1330
        %v1333 = vunpack.c.l.s4 1966171168
        %v1334 = vunpack.c.0.s8 %v1333
        %v1335 = vlaneseq
        %v1336 = vshrl.u32 %v1335, 7
        %v1337 = vsub.s32 %v1334, %v1336
        %v1338 = vrot.slane %v1310, %v1337
        %v1339 = vcombine.high %v1317, %v1317
        %v1340 = vcombine.high %v1324, %v1324
        %v1341 = vcombine.high %v1331, %v1331
        %v1342 = vcombine.high %v1338, %v1338
        %v1343 = vcombine.high %v1035, %v1035
        %v1345 = vunpack.c.l.s4 1966171168
        %v1346 = vunpack.c.0.s8 %v1345
        %v1347 = vlaneseq
        %v1348 = vshrl.u32 %v1347, 7
        %v1349 = vsub.s32 %v1346, %v1348
        %v1350 = vrot.slane %v1035, %v1349
        %v1352 = vunpack.c.l.s4 1966171168
        %v1353 = vunpack.c.0.s8 %v1352
        %v1354 = vlaneseq
        %v1355 = vshrl.u32 %v1354, 7
        %v1356 = vsub.s32 %v1353, %v1355
        %v1357 = vrot.slane %v1343, %v1356
        %v1358 = vcombine.high %v1350, %v1350
        %v1359 = vcombine.high %v1357, %v1357
        %v1361 = vunpack.c.l.s4 1966171168
        %v1362 = vunpack.c.0.s8 %v1361
        %v1363 = vlaneseq
        %v1364 = vshrl.u32 %v1363, 7
        %v1365 = vsub.s32 %v1362, %v1364
        %v1366 = vrot.slane %v1350, %v1365
        %v1368 = vunpack.c.l.s4 1966171168
        %v1369 = vunpack.c.0.s8 %v1368
        %v1370 = vlaneseq
        %v1371 = vshrl.u32 %v1370, 7
        %v1372 = vsub.s32 %v1369, %v1371
        %v1373 = vrot.slane %v1357, %v1372
        %v1375 = vunpack.c.l.s4 1966171168
        %v1376 = vunpack.c.0.s8 %v1375
        %v1377 = vlaneseq
        %v1378 = vshrl.u32 %v1377, 7
        %v1379 = vsub.s32 %v1376, %v1378
        %v1380 = vrot.slane %v1358, %v1379
        %v1382 = vunpack.c.l.s4 1966171168
        %v1383 = vunpack.c.0.s8 %v1382
        %v1384 = vlaneseq
        %v1385 = vshrl.u32 %v1384, 7
        %v1386 = vsub.s32 %v1383, %v1385
        %v1387 = vrot.slane %v1359, %v1386
        %v1388 = vcombine.high %v1366, %v1366
        %v1389 = vcombine.high %v1373, %v1373
        %v1390 = vcombine.high %v1380, %v1380
        %v1391 = vcombine.high %v1387, %v1387
        %v1392 = vcombine.high %v1038, %v1038
        %v1394 = vunpack.c.l.s4 1966171168
        %v1395 = vunpack.c.0.s8 %v1394
        %v1396 = vlaneseq
        %v1397 = vshrl.u32 %v1396, 7
        %v1398 = vsub.s32 %v1395, %v1397
        %v1399 = vrot.slane %v1038, %v1398
        %v1401 = vunpack.c.l.s4 1966171168
        %v1402 = vunpack.c.0.s8 %v1401
        %v1403 = vlaneseq
        %v1404 = vshrl.u32 %v1403, 7
        %v1405 = vsub.s32 %v1402, %v1404
        %v1406 = vrot.slane %v1392, %v1405
        %v1407 = vcombine.high %v1399, %v1399
        %v1408 = vcombine.high %v1406, %v1406
        %v1410 = vunpack.c.l.s4 1966171168
        %v1411 = vunpack.c.0.s8 %v1410
        %v1412 = vlaneseq
        %v1413 = vshrl.u32 %v1412, 7
        %v1414 = vsub.s32 %v1411, %v1413
        %v1415 = vrot.slane %v1399, %v1414
        %v1417 = vunpack.c.l.s4 1966171168
        %v1418 = vunpack.c.0.s8 %v1417
        %v1419 = vlaneseq
        %v1420 = vshrl.u32 %v1419, 7
        %v1421 = vsub.s32 %v1418, %v1420
        %v1422 = vrot.slane %v1406, %v1421
        %v1424 = vunpack.c.l.s4 1966171168
        %v1425 = vunpack.c.0.s8 %v1424
        %v1426 = vlaneseq
        %v1427 = vshrl.u32 %v1426, 7
        %v1428 = vsub.s32 %v1425, %v1427
        %v1429 = vrot.slane %v1407, %v1428
        %v1431 = vunpack.c.l.s4 1966171168
        %v1432 = vunpack.c.0.s8 %v1431
        %v1433 = vlaneseq
        %v1434 = vshrl.u32 %v1433, 7
        %v1435 = vsub.s32 %v1432, %v1434
        %v1436 = vrot.slane %v1408, %v1435
        %v1437 = vcombine.high %v1415, %v1415
        %v1438 = vcombine.high %v1422, %v1422
        %v1439 = vcombine.high %v1429, %v1429
        %v1440 = vcombine.high %v1436, %v1436
        %v1505 = vlaneseq
        %v1506 = vshrl.u32 %v1505, 7
        %v1507 = vsub.s32 0, %v1506
        %v1508 = vrot.slane %v1072, %v1507
        %v1509 = vlaneseq
        %v1510 = vshrl.u32 %v1509, 7
        %v1511 = vsub.s32 0, %v1510
        %v1512 = vrot.slane %v1086, %v1511
        %v1513 = vlaneseq
        %v1514 = vshrl.u32 %v1513, 7
        %v1515 = vsub.s32 0, %v1514
        %v1516 = vrot.slane %v1094, %v1515
        %v1517 = vlaneseq
        %v1518 = vshrl.u32 %v1517, 7
        %v1519 = vsub.s32 0, %v1518
        %v1520 = vrot.slane %v1096, %v1519
        %v1521 = vlaneseq
        %v1522 = vshrl.u32 %v1521, 7
        %v1523 = vsub.s32 0, %v1522
        %v1524 = vrot.slane %v1079, %v1523
        %v1525 = vlaneseq
        %v1526 = vshrl.u32 %v1525, 7
        %v1527 = vsub.s32 0, %v1526
        %v1528 = vrot.slane %v1093, %v1527
        %v1529 = vlaneseq
        %v1530 = vshrl.u32 %v1529, 7
        %v1531 = vsub.s32 0, %v1530
        %v1532 = vrot.slane %v1095, %v1531
        %v1533 = vlaneseq
        %v1534 = vshrl.u32 %v1533, 7
        %v1535 = vsub.s32 0, %v1534
        %v1536 = vrot.slane %v1097, %v1535
        %v1537 = vlaneseq
        %v1538 = vshrl.u32 %v1537, 7
        %v1539 = vsub.s32 0, %v1538
        %v1540 = vrot.slane %v1121, %v1539
        %v1541 = vlaneseq
        %v1542 = vshrl.u32 %v1541, 7
        %v1543 = vsub.s32 0, %v1542
        %v1544 = vrot.slane %v1135, %v1543
        %v1545 = vlaneseq
        %v1546 = vshrl.u32 %v1545, 7
        %v1547 = vsub.s32 0, %v1546
        %v1548 = vrot.slane %v1143, %v1547
        %v1549 = vlaneseq
        %v1550 = vshrl.u32 %v1549, 7
        %v1551 = vsub.s32 0, %v1550
        %v1552 = vrot.slane %v1145, %v1551
        %v1553 = vlaneseq
        %v1554 = vshrl.u32 %v1553, 7
        %v1555 = vsub.s32 0, %v1554
        %v1556 = vrot.slane %v1128, %v1555
        %v1557 = vlaneseq
        %v1558 = vshrl.u32 %v1557, 7
        %v1559 = vsub.s32 0, %v1558
        %v1560 = vrot.slane %v1142, %v1559
        %v1561 = vlaneseq
        %v1562 = vshrl.u32 %v1561, 7
        %v1563 = vsub.s32 0, %v1562
        %v1564 = vrot.slane %v1144, %v1563
        %v1565 = vlaneseq
        %v1566 = vshrl.u32 %v1565, 7
        %v1567 = vsub.s32 0, %v1566
        %v1568 = vrot.slane %v1146, %v1567
        %v1569 = vlaneseq
        %v1570 = vshrl.u32 %v1569, 7
        %v1571 = vsub.s32 0, %v1570
        %v1572 = vrot.slane %v1170, %v1571
        %v1573 = vlaneseq
        %v1574 = vshrl.u32 %v1573, 7
        %v1575 = vsub.s32 0, %v1574
        %v1576 = vrot.slane %v1184, %v1575
        %v1577 = vlaneseq
        %v1578 = vshrl.u32 %v1577, 7
        %v1579 = vsub.s32 0, %v1578
        %v1580 = vrot.slane %v1192, %v1579
        %v1581 = vlaneseq
        %v1582 = vshrl.u32 %v1581, 7
        %v1583 = vsub.s32 0, %v1582
        %v1584 = vrot.slane %v1194, %v1583
        %v1585 = vlaneseq
        %v1586 = vshrl.u32 %v1585, 7
        %v1587 = vsub.s32 0, %v1586
        %v1588 = vrot.slane %v1177, %v1587
        %v1589 = vlaneseq
        %v1590 = vshrl.u32 %v1589, 7
        %v1591 = vsub.s32 0, %v1590
        %v1592 = vrot.slane %v1191, %v1591
        %v1593 = vlaneseq
        %v1594 = vshrl.u32 %v1593, 7
        %v1595 = vsub.s32 0, %v1594
        %v1596 = vrot.slane %v1193, %v1595
        %v1597 = vlaneseq
        %v1598 = vshrl.u32 %v1597, 7
        %v1599 = vsub.s32 0, %v1598
        %v1600 = vrot.slane %v1195, %v1599
        %v1601 = vlaneseq
        %v1602 = vshrl.u32 %v1601, 7
        %v1603 = vsub.s32 0, %v1602
        %v1604 = vrot.slane %v1219, %v1603
        %v1605 = vlaneseq
        %v1606 = vshrl.u32 %v1605, 7
        %v1607 = vsub.s32 0, %v1606
        %v1608 = vrot.slane %v1233, %v1607
        %v1609 = vlaneseq
        %v1610 = vshrl.u32 %v1609, 7
        %v1611 = vsub.s32 0, %v1610
        %v1612 = vrot.slane %v1241, %v1611
        %v1613 = vlaneseq
        %v1614 = vshrl.u32 %v1613, 7
        %v1615 = vsub.s32 0, %v1614
        %v1616 = vrot.slane %v1243, %v1615
        %v1617 = vlaneseq
        %v1618 = vshrl.u32 %v1617, 7
        %v1619 = vsub.s32 0, %v1618
        %v1620 = vrot.slane %v1226, %v1619
        %v1621 = vlaneseq
        %v1622 = vshrl.u32 %v1621, 7
        %v1623 = vsub.s32 0, %v1622
        %v1624 = vrot.slane %v1240, %v1623
        %v1625 = vlaneseq
        %v1626 = vshrl.u32 %v1625, 7
        %v1627 = vsub.s32 0, %v1626
        %v1628 = vrot.slane %v1242, %v1627
        %v1629 = vlaneseq
        %v1630 = vshrl.u32 %v1629, 7
        %v1631 = vsub.s32 0, %v1630
        %v1632 = vrot.slane %v1244, %v1631
        %v1633 = vlaneseq
        %v1634 = vshrl.u32 %v1633, 7
        %v1635 = vsub.s32 0, %v1634
        %v1636 = vrot.slane %v1268, %v1635
        %v1637 = vlaneseq
        %v1638 = vshrl.u32 %v1637, 7
        %v1639 = vsub.s32 0, %v1638
        %v1640 = vrot.slane %v1282, %v1639
        %v1641 = vlaneseq
        %v1642 = vshrl.u32 %v1641, 7
        %v1643 = vsub.s32 0, %v1642
        %v1644 = vrot.slane %v1290, %v1643
        %v1645 = vlaneseq
        %v1646 = vshrl.u32 %v1645, 7
        %v1647 = vsub.s32 0, %v1646
        %v1648 = vrot.slane %v1292, %v1647
        %v1649 = vlaneseq
        %v1650 = vshrl.u32 %v1649, 7
        %v1651 = vsub.s32 0, %v1650
        %v1652 = vrot.slane %v1275, %v1651
        %v1653 = vlaneseq
        %v1654 = vshrl.u32 %v1653, 7
        %v1655 = vsub.s32 0, %v1654
        %v1656 = vrot.slane %v1289, %v1655
        %v1657 = vlaneseq
        %v1658 = vshrl.u32 %v1657, 7
        %v1659 = vsub.s32 0, %v1658
        %v1660 = vrot.slane %v1291, %v1659
        %v1661 = vlaneseq
        %v1662 = vshrl.u32 %v1661, 7
        %v1663 = vsub.s32 0, %v1662
        %v1664 = vrot.slane %v1293, %v1663
        %v1665 = vlaneseq
        %v1666 = vshrl.u32 %v1665, 7
        %v1667 = vsub.s32 0, %v1666
        %v1668 = vrot.slane %v1317, %v1667
        %v1669 = vlaneseq
        %v1670 = vshrl.u32 %v1669, 7
        %v1671 = vsub.s32 0, %v1670
        %v1672 = vrot.slane %v1331, %v1671
        %v1673 = vlaneseq
        %v1674 = vshrl.u32 %v1673, 7
        %v1675 = vsub.s32 0, %v1674
        %v1676 = vrot.slane %v1339, %v1675
        %v1677 = vlaneseq
        %v1678 = vshrl.u32 %v1677, 7
        %v1679 = vsub.s32 0, %v1678
        %v1680 = vrot.slane %v1341, %v1679
        %v1681 = vlaneseq
        %v1682 = vshrl.u32 %v1681, 7
        %v1683 = vsub.s32 0, %v1682
        %v1684 = vrot.slane %v1324, %v1683
        %v1685 = vlaneseq
        %v1686 = vshrl.u32 %v1685, 7
        %v1687 = vsub.s32 0, %v1686
        %v1688 = vrot.slane %v1338, %v1687
        %v1689 = vlaneseq
        %v1690 = vshrl.u32 %v1689, 7
        %v1691 = vsub.s32 0, %v1690
        %v1692 = vrot.slane %v1340, %v1691
        %v1693 = vlaneseq
        %v1694 = vshrl.u32 %v1693, 7
        %v1695 = vsub.s32 0, %v1694
        %v1696 = vrot.slane %v1342, %v1695
        %v1697 = vlaneseq
        %v1698 = vshrl.u32 %v1697, 7
        %v1699 = vsub.s32 0, %v1698
        %v1700 = vrot.slane %v1366, %v1699
        %v1701 = vlaneseq
        %v1702 = vshrl.u32 %v1701, 7
        %v1703 = vsub.s32 0, %v1702
        %v1704 = vrot.slane %v1380, %v1703
        %v1705 = vlaneseq
        %v1706 = vshrl.u32 %v1705, 7
        %v1707 = vsub.s32 0, %v1706
        %v1708 = vrot.slane %v1388, %v1707
        %v1709 = vlaneseq
        %v1710 = vshrl.u32 %v1709, 7
        %v1711 = vsub.s32 0, %v1710
        %v1712 = vrot.slane %v1390, %v1711
        %v1713 = vlaneseq
        %v1714 = vshrl.u32 %v1713, 7
        %v1715 = vsub.s32 0, %v1714
        %v1716 = vrot.slane %v1373, %v1715
        %v1717 = vlaneseq
        %v1718 = vshrl.u32 %v1717, 7
        %v1719 = vsub.s32 0, %v1718
        %v1720 = vrot.slane %v1387, %v1719
        %v1721 = vlaneseq
        %v1722 = vshrl.u32 %v1721, 7
        %v1723 = vsub.s32 0, %v1722
        %v1724 = vrot.slane %v1389, %v1723
        %v1725 = vlaneseq
        %v1726 = vshrl.u32 %v1725, 7
        %v1727 = vsub.s32 0, %v1726
        %v1728 = vrot.slane %v1391, %v1727
        %v1729 = vlaneseq
        %v1730 = vshrl.u32 %v1729, 7
        %v1731 = vsub.s32 0, %v1730
        %v1732 = vrot.slane %v1415, %v1731
        %v1733 = vlaneseq
        %v1734 = vshrl.u32 %v1733, 7
        %v1735 = vsub.s32 0, %v1734
        %v1736 = vrot.slane %v1429, %v1735
        %v1737 = vlaneseq
        %v1738 = vshrl.u32 %v1737, 7
        %v1739 = vsub.s32 0, %v1738
        %v1740 = vrot.slane %v1437, %v1739
        %v1741 = vlaneseq
        %v1742 = vshrl.u32 %v1741, 7
        %v1743 = vsub.s32 0, %v1742
        %v1744 = vrot.slane %v1439, %v1743
        %v1745 = vlaneseq
        %v1746 = vshrl.u32 %v1745, 7
        %v1747 = vsub.s32 0, %v1746
        %v1748 = vrot.slane %v1422, %v1747
        %v1749 = vlaneseq
        %v1750 = vshrl.u32 %v1749, 7
        %v1751 = vsub.s32 0, %v1750
        %v1752 = vrot.slane %v1436, %v1751
        %v1753 = vlaneseq
        %v1754 = vshrl.u32 %v1753, 7
        %v1755 = vsub.s32 0, %v1754
        %v1756 = vrot.slane %v1438, %v1755
        %v1757 = vlaneseq
        %v1758 = vshrl.u32 %v1757, 7
        %v1759 = vsub.s32 0, %v1758
        %v1760 = vrot.slane %v1440, %v1759
        %1761 = vrot.lane.b32.xlu0 %v1508, 124
        %v1762 = vpop.permute.xlu0 %1761
        %1763 = vrot.lane.b32.xlu0 %v1512, 124
        %v1764 = vpop.permute.xlu0 %1763
        %1765 = vrot.lane.b32.xlu0 %v1516, 124
        %v1766 = vpop.permute.xlu0 %1765
        %1767 = vrot.lane.b32.xlu0 %v1520, 124
        %v1768 = vpop.permute.xlu0 %1767
        %1769 = vrot.lane.b32.xlu0 %v1524, 124
        %v1770 = vpop.permute.xlu0 %1769
        %1771 = vrot.lane.b32.xlu0 %v1528, 124
        %v1772 = vpop.permute.xlu0 %1771
        %1773 = vrot.lane.b32.xlu0 %v1532, 124
        %v1774 = vpop.permute.xlu0 %1773
        %1775 = vrot.lane.b32.xlu0 %v1536, 124
        %v1776 = vpop.permute.xlu0 %1775
        %1777 = vrot.lane.b32.xlu0 %v1540, 124
        %v1778 = vpop.permute.xlu0 %1777
        %1779 = vrot.lane.b32.xlu0 %v1544, 124
        %v1780 = vpop.permute.xlu0 %1779
        %1781 = vrot.lane.b32.xlu0 %v1548, 124
        %v1782 = vpop.permute.xlu0 %1781
        %1783 = vrot.lane.b32.xlu0 %v1552, 124
        %v1784 = vpop.permute.xlu0 %1783
        %1785 = vrot.lane.b32.xlu0 %v1556, 124
        %v1786 = vpop.permute.xlu0 %1785
        %1787 = vrot.lane.b32.xlu0 %v1560, 124
        %v1788 = vpop.permute.xlu0 %1787
        %1789 = vrot.lane.b32.xlu0 %v1564, 124
        %v1790 = vpop.permute.xlu0 %1789
        %1791 = vrot.lane.b32.xlu0 %v1568, 124
        %v1792 = vpop.permute.xlu0 %1791
        %1793 = vrot.lane.b32.xlu0 %v1572, 124
        %v1794 = vpop.permute.xlu0 %1793
        %1795 = vrot.lane.b32.xlu0 %v1576, 124
        %v1796 = vpop.permute.xlu0 %1795
        %1797 = vrot.lane.b32.xlu0 %v1580, 124
        %v1798 = vpop.permute.xlu0 %1797
        %1799 = vrot.lane.b32.xlu0 %v1584, 124
        %v1800 = vpop.permute.xlu0 %1799
        %1801 = vrot.lane.b32.xlu0 %v1588, 124
        %v1802 = vpop.permute.xlu0 %1801
        %1803 = vrot.lane.b32.xlu0 %v1592, 124
        %v1804 = vpop.permute.xlu0 %1803
        %1805 = vrot.lane.b32.xlu0 %v1596, 124
        %v1806 = vpop.permute.xlu0 %1805
        %1807 = vrot.lane.b32.xlu0 %v1600, 124
        %v1808 = vpop.permute.xlu0 %1807
        %1809 = vrot.lane.b32.xlu0 %v1604, 124
        %v1810 = vpop.permute.xlu0 %1809
        %1811 = vrot.lane.b32.xlu0 %v1608, 124
        %v1812 = vpop.permute.xlu0 %1811
        %1813 = vrot.lane.b32.xlu0 %v1612, 124
        %v1814 = vpop.permute.xlu0 %1813
        %1815 = vrot.lane.b32.xlu0 %v1616, 124
        %v1816 = vpop.permute.xlu0 %1815
        %1817 = vrot.lane.b32.xlu0 %v1620, 124
        %v1818 = vpop.permute.xlu0 %1817
        %1819 = vrot.lane.b32.xlu0 %v1624, 124
        %v1820 = vpop.permute.xlu0 %1819
        %1821 = vrot.lane.b32.xlu0 %v1628, 124
        %v1822 = vpop.permute.xlu0 %1821
        %1823 = vrot.lane.b32.xlu0 %v1632, 124
        %v1824 = vpop.permute.xlu0 %1823
        %1825 = vrot.lane.b32.xlu0 %v1636, 124
        %v1826 = vpop.permute.xlu0 %1825
        %1827 = vrot.lane.b32.xlu0 %v1640, 124
        %v1828 = vpop.permute.xlu0 %1827
        %1829 = vrot.lane.b32.xlu0 %v1644, 124
        %v1830 = vpop.permute.xlu0 %1829
        %1831 = vrot.lane.b32.xlu0 %v1648, 124
        %v1832 = vpop.permute.xlu0 %1831
        %1833 = vrot.lane.b32.xlu0 %v1652, 124
        %v1834 = vpop.permute.xlu0 %1833
        %1835 = vrot.lane.b32.xlu0 %v1656, 124
        %v1836 = vpop.permute.xlu0 %1835
        %1837 = vrot.lane.b32.xlu0 %v1660, 124
        %v1838 = vpop.permute.xlu0 %1837
        %1839 = vrot.lane.b32.xlu0 %v1664, 124
        %v1840 = vpop.permute.xlu0 %1839
        %1841 = vrot.lane.b32.xlu0 %v1668, 124
        %v1842 = vpop.permute.xlu0 %1841
        %1843 = vrot.lane.b32.xlu0 %v1672, 124
        %v1844 = vpop.permute.xlu0 %1843
        %1845 = vrot.lane.b32.xlu0 %v1676, 124
        %v1846 = vpop.permute.xlu0 %1845
        %1847 = vrot.lane.b32.xlu0 %v1680, 124
        %v1848 = vpop.permute.xlu0 %1847
        %1849 = vrot.lane.b32.xlu0 %v1684, 124
        %v1850 = vpop.permute.xlu0 %1849
        %1851 = vrot.lane.b32.xlu0 %v1688, 124
        %v1852 = vpop.permute.xlu0 %1851
        %1853 = vrot.lane.b32.xlu0 %v1692, 124
        %v1854 = vpop.permute.xlu0 %1853
        %1855 = vrot.lane.b32.xlu0 %v1696, 124
        %v1856 = vpop.permute.xlu0 %1855
        %1857 = vrot.lane.b32.xlu0 %v1700, 124
        %v1858 = vpop.permute.xlu0 %1857
        %1859 = vrot.lane.b32.xlu0 %v1704, 124
        %v1860 = vpop.permute.xlu0 %1859
        %1861 = vrot.lane.b32.xlu0 %v1708, 124
        %v1862 = vpop.permute.xlu0 %1861
        %1863 = vrot.lane.b32.xlu0 %v1712, 124
        %v1864 = vpop.permute.xlu0 %1863
        %1865 = vrot.lane.b32.xlu0 %v1716, 124
        %v1866 = vpop.permute.xlu0 %1865
        %1867 = vrot.lane.b32.xlu0 %v1720, 124
        %v1868 = vpop.permute.xlu0 %1867
        %1869 = vrot.lane.b32.xlu0 %v1724, 124
        %v1870 = vpop.permute.xlu0 %1869
        %1871 = vrot.lane.b32.xlu0 %v1728, 124
        %v1872 = vpop.permute.xlu0 %1871
        %1873 = vrot.lane.b32.xlu0 %v1732, 124
        %v1874 = vpop.permute.xlu0 %1873
        %1875 = vrot.lane.b32.xlu0 %v1736, 124
        %v1876 = vpop.permute.xlu0 %1875
        %1877 = vrot.lane.b32.xlu0 %v1740, 124
        %v1878 = vpop.permute.xlu0 %1877
        %1879 = vrot.lane.b32.xlu0 %v1744, 124
        %v1880 = vpop.permute.xlu0 %1879
        %1881 = vrot.lane.b32.xlu0 %v1748, 124
        %v1882 = vpop.permute.xlu0 %1881
        %1883 = vrot.lane.b32.xlu0 %v1752, 124
        %v1884 = vpop.permute.xlu0 %1883
        %1885 = vrot.lane.b32.xlu0 %v1756, 124
        %v1886 = vpop.permute.xlu0 %1885
        %1887 = vrot.lane.b32.xlu0 %v1760, 124
        %v1888 = vpop.permute.xlu0 %1887
        %vm1953 = vcmask 1040384
        %v1954 = vsel %vm1953, %v1072, %v1762
        %v1955 = vsel %vm1953, %v1086, %v1764
        %v1956 = vsel %vm1953, %v1094, %v1766
        %v1957 = vsel %vm1953, %v1096, %v1768
        %v1958 = vsel %vm1953, %v1079, %v1770
        %v1959 = vsel %vm1953, %v1093, %v1772
        %v1960 = vsel %vm1953, %v1095, %v1774
        %v1961 = vsel %vm1953, %v1097, %v1776
        %v1962 = vsel %vm1953, %v1121, %v1778
        %v1963 = vsel %vm1953, %v1135, %v1780
        %v1964 = vsel %vm1953, %v1143, %v1782
        %v1965 = vsel %vm1953, %v1145, %v1784
        %v1966 = vsel %vm1953, %v1128, %v1786
        %v1967 = vsel %vm1953, %v1142, %v1788
        %v1968 = vsel %vm1953, %v1144, %v1790
        %v1969 = vsel %vm1953, %v1146, %v1792
        %v1970 = vsel %vm1953, %v1170, %v1794
        %v1971 = vsel %vm1953, %v1184, %v1796
        %v1972 = vsel %vm1953, %v1192, %v1798
        %v1973 = vsel %vm1953, %v1194, %v1800
        %v1974 = vsel %vm1953, %v1177, %v1802
        %v1975 = vsel %vm1953, %v1191, %v1804
        %v1976 = vsel %vm1953, %v1193, %v1806
        %v1977 = vsel %vm1953, %v1195, %v1808
        %v1978 = vsel %vm1953, %v1219, %v1810
        %v1979 = vsel %vm1953, %v1233, %v1812
        %v1980 = vsel %vm1953, %v1241, %v1814
        %v1981 = vsel %vm1953, %v1243, %v1816
        %v1982 = vsel %vm1953, %v1226, %v1818
        %v1983 = vsel %vm1953, %v1240, %v1820
        %v1984 = vsel %vm1953, %v1242, %v1822
        %v1985 = vsel %vm1953, %v1244, %v1824
        %v1986 = vsel %vm1953, %v1268, %v1826
        %v1987 = vsel %vm1953, %v1282, %v1828
        %v1988 = vsel %vm1953, %v1290, %v1830
        %v1989 = vsel %vm1953, %v1292, %v1832
        %v1990 = vsel %vm1953, %v1275, %v1834
        %v1991 = vsel %vm1953, %v1289, %v1836
        %v1992 = vsel %vm1953, %v1291, %v1838
        %v1993 = vsel %vm1953, %v1293, %v1840
        %v1994 = vsel %vm1953, %v1317, %v1842
        %v1995 = vsel %vm1953, %v1331, %v1844
        %v1996 = vsel %vm1953, %v1339, %v1846
        %v1997 = vsel %vm1953, %v1341, %v1848
        %v1998 = vsel %vm1953, %v1324, %v1850
        %v1999 = vsel %vm1953, %v1338, %v1852
        %v2000 = vsel %vm1953, %v1340, %v1854
        %v2001 = vsel %vm1953, %v1342, %v1856
        %v2002 = vsel %vm1953, %v1366, %v1858
        %v2003 = vsel %vm1953, %v1380, %v1860
        %v2004 = vsel %vm1953, %v1388, %v1862
        %v2005 = vsel %vm1953, %v1390, %v1864
        %v2006 = vsel %vm1953, %v1373, %v1866
        %v2007 = vsel %vm1953, %v1387, %v1868
        %v2008 = vsel %vm1953, %v1389, %v1870
        %v2009 = vsel %vm1953, %v1391, %v1872
        %v2010 = vsel %vm1953, %v1415, %v1874
        %v2011 = vsel %vm1953, %v1429, %v1876
        %v2012 = vsel %vm1953, %v1437, %v1878
        %v2013 = vsel %vm1953, %v1439, %v1880
        %v2014 = vsel %vm1953, %v1422, %v1882
        %v2015 = vsel %vm1953, %v1436, %v1884
        %v2016 = vsel %vm1953, %v1438, %v1886
        %v2017 = vsel %vm1953, %v1440, %v1888
        %2082 = vrot.lane.b32.xlu0 %v1954, 120
        %v2083 = vpop.permute.xlu0 %2082
        %2084 = vrot.lane.b32.xlu0 %v1955, 120
        %v2085 = vpop.permute.xlu0 %2084
        %2086 = vrot.lane.b32.xlu0 %v1956, 120
        %v2087 = vpop.permute.xlu0 %2086
        %2088 = vrot.lane.b32.xlu0 %v1957, 120
        %v2089 = vpop.permute.xlu0 %2088
        %2090 = vrot.lane.b32.xlu0 %v1958, 120
        %v2091 = vpop.permute.xlu0 %2090
        %2092 = vrot.lane.b32.xlu0 %v1959, 120
        %v2093 = vpop.permute.xlu0 %2092
        %2094 = vrot.lane.b32.xlu0 %v1960, 120
        %v2095 = vpop.permute.xlu0 %2094
        %2096 = vrot.lane.b32.xlu0 %v1961, 120
        %v2097 = vpop.permute.xlu0 %2096
        %2098 = vrot.lane.b32.xlu0 %v1962, 120
        %v2099 = vpop.permute.xlu0 %2098
        %2100 = vrot.lane.b32.xlu0 %v1963, 120
        %v2101 = vpop.permute.xlu0 %2100
        %2102 = vrot.lane.b32.xlu0 %v1964, 120
        %v2103 = vpop.permute.xlu0 %2102
        %2104 = vrot.lane.b32.xlu0 %v1965, 120
        %v2105 = vpop.permute.xlu0 %2104
        %2106 = vrot.lane.b32.xlu0 %v1966, 120
        %v2107 = vpop.permute.xlu0 %2106
        %2108 = vrot.lane.b32.xlu0 %v1967, 120
        %v2109 = vpop.permute.xlu0 %2108
        %2110 = vrot.lane.b32.xlu0 %v1968, 120
        %v2111 = vpop.permute.xlu0 %2110
        %2112 = vrot.lane.b32.xlu0 %v1969, 120
        %v2113 = vpop.permute.xlu0 %2112
        %2114 = vrot.lane.b32.xlu0 %v1970, 120
        %v2115 = vpop.permute.xlu0 %2114
        %2116 = vrot.lane.b32.xlu0 %v1971, 120
        %v2117 = vpop.permute.xlu0 %2116
        %2118 = vrot.lane.b32.xlu0 %v1972, 120
        %v2119 = vpop.permute.xlu0 %2118
        %2120 = vrot.lane.b32.xlu0 %v1973, 120
        %v2121 = vpop.permute.xlu0 %2120
        %2122 = vrot.lane.b32.xlu0 %v1974, 120
        %v2123 = vpop.permute.xlu0 %2122
        %2124 = vrot.lane.b32.xlu0 %v1975, 120
        %v2125 = vpop.permute.xlu0 %2124
        %2126 = vrot.lane.b32.xlu0 %v1976, 120
        %v2127 = vpop.permute.xlu0 %2126
        %2128 = vrot.lane.b32.xlu0 %v1977, 120
        %v2129 = vpop.permute.xlu0 %2128
        %2130 = vrot.lane.b32.xlu0 %v1978, 120
        %v2131 = vpop.permute.xlu0 %2130
        %2132 = vrot.lane.b32.xlu0 %v1979, 120
        %v2133 = vpop.permute.xlu0 %2132
        %2134 = vrot.lane.b32.xlu0 %v1980, 120
        %v2135 = vpop.permute.xlu0 %2134
        %2136 = vrot.lane.b32.xlu0 %v1981, 120
        %v2137 = vpop.permute.xlu0 %2136
        %2138 = vrot.lane.b32.xlu0 %v1982, 120
        %v2139 = vpop.permute.xlu0 %2138
        %2140 = vrot.lane.b32.xlu0 %v1983, 120
        %v2141 = vpop.permute.xlu0 %2140
        %2142 = vrot.lane.b32.xlu0 %v1984, 120
        %v2143 = vpop.permute.xlu0 %2142
        %2144 = vrot.lane.b32.xlu0 %v1985, 120
        %v2145 = vpop.permute.xlu0 %2144
        %2146 = vrot.lane.b32.xlu0 %v1986, 120
        %v2147 = vpop.permute.xlu0 %2146
        %2148 = vrot.lane.b32.xlu0 %v1987, 120
        %v2149 = vpop.permute.xlu0 %2148
        %2150 = vrot.lane.b32.xlu0 %v1988, 120
        %v2151 = vpop.permute.xlu0 %2150
        %2152 = vrot.lane.b32.xlu0 %v1989, 120
        %v2153 = vpop.permute.xlu0 %2152
        %2154 = vrot.lane.b32.xlu0 %v1990, 120
        %v2155 = vpop.permute.xlu0 %2154
        %2156 = vrot.lane.b32.xlu0 %v1991, 120
        %v2157 = vpop.permute.xlu0 %2156
        %2158 = vrot.lane.b32.xlu0 %v1992, 120
        %v2159 = vpop.permute.xlu0 %2158
        %2160 = vrot.lane.b32.xlu0 %v1993, 120
        %v2161 = vpop.permute.xlu0 %2160
        %2162 = vrot.lane.b32.xlu0 %v1994, 120
        %v2163 = vpop.permute.xlu0 %2162
        %2164 = vrot.lane.b32.xlu0 %v1995, 120
        %v2165 = vpop.permute.xlu0 %2164
        %2166 = vrot.lane.b32.xlu0 %v1996, 120
        %v2167 = vpop.permute.xlu0 %2166
        %2168 = vrot.lane.b32.xlu0 %v1997, 120
        %v2169 = vpop.permute.xlu0 %2168
        %2170 = vrot.lane.b32.xlu0 %v1998, 120
        %v2171 = vpop.permute.xlu0 %2170
        %2172 = vrot.lane.b32.xlu0 %v1999, 120
        %v2173 = vpop.permute.xlu0 %2172
        %2174 = vrot.lane.b32.xlu0 %v2000, 120
        %v2175 = vpop.permute.xlu0 %2174
        %2176 = vrot.lane.b32.xlu0 %v2001, 120
        %v2177 = vpop.permute.xlu0 %2176
        %2178 = vrot.lane.b32.xlu0 %v2002, 120
        %v2179 = vpop.permute.xlu0 %2178
        %2180 = vrot.lane.b32.xlu0 %v2003, 120
        %v2181 = vpop.permute.xlu0 %2180
        %2182 = vrot.lane.b32.xlu0 %v2004, 120
        %v2183 = vpop.permute.xlu0 %2182
        %2184 = vrot.lane.b32.xlu0 %v2005, 120
        %v2185 = vpop.permute.xlu0 %2184
        %2186 = vrot.lane.b32.xlu0 %v2006, 120
        %v2187 = vpop.permute.xlu0 %2186
        %2188 = vrot.lane.b32.xlu0 %v2007, 120
        %v2189 = vpop.permute.xlu0 %2188
        %2190 = vrot.lane.b32.xlu0 %v2008, 120
        %v2191 = vpop.permute.xlu0 %2190
        %2192 = vrot.lane.b32.xlu0 %v2009, 120
        %v2193 = vpop.permute.xlu0 %2192
        %2194 = vrot.lane.b32.xlu0 %v2010, 120
        %v2195 = vpop.permute.xlu0 %2194
        %2196 = vrot.lane.b32.xlu0 %v2011, 120
        %v2197 = vpop.permute.xlu0 %2196
        %2198 = vrot.lane.b32.xlu0 %v2012, 120
        %v2199 = vpop.permute.xlu0 %2198
        %2200 = vrot.lane.b32.xlu0 %v2013, 120
        %v2201 = vpop.permute.xlu0 %2200
        %2202 = vrot.lane.b32.xlu0 %v2014, 120
        %v2203 = vpop.permute.xlu0 %2202
        %2204 = vrot.lane.b32.xlu0 %v2015, 120
        %v2205 = vpop.permute.xlu0 %2204
        %2206 = vrot.lane.b32.xlu0 %v2016, 120
        %v2207 = vpop.permute.xlu0 %2206
        %2208 = vrot.lane.b32.xlu0 %v2017, 120
        %v2209 = vpop.permute.xlu0 %2208
        %v2210 = vcombine.low %v1954, %v1955
        %v2211 = vcombine.low %v1956, %v1957
        %v2213 = vunpack.c.l.s4 1983009808
        %v2214 = vunpack.c.0.s8 %v2213
        %v2215 = vlaneseq
        %v2216 = vshrl.u32 %v2215, 7
        %v2217 = vsub.s32 %v2214, %v2216
        %v2218 = vrot.slane %v2210, %v2217
        %v2220 = vunpack.c.l.s4 1983009808
        %v2221 = vunpack.c.0.s8 %v2220
        %v2222 = vlaneseq
        %v2223 = vshrl.u32 %v2222, 7
        %v2224 = vsub.s32 %v2221, %v2223
        %v2225 = vrot.slane %v2211, %v2224
        %v2226 = vcombine.low %v2218, %v2225
        %v2227 = vcombine.low %v1958, %v1959
        %v2228 = vcombine.low %v1960, %v1961
        %v2230 = vunpack.c.l.s4 1983009808
        %v2231 = vunpack.c.0.s8 %v2230
        %v2232 = vlaneseq
        %v2233 = vshrl.u32 %v2232, 7
        %v2234 = vsub.s32 %v2231, %v2233
        %v2235 = vrot.slane %v2227, %v2234
        %v2237 = vunpack.c.l.s4 1983009808
        %v2238 = vunpack.c.0.s8 %v2237
        %v2239 = vlaneseq
        %v2240 = vshrl.u32 %v2239, 7
        %v2241 = vsub.s32 %v2238, %v2240
        %v2242 = vrot.slane %v2228, %v2241
        %v2243 = vcombine.low %v2235, %v2242
        %v2244 = vcombine.low %v2083, %v2085
        %v2245 = vcombine.low %v2087, %v2089
        %v2247 = vunpack.c.l.s4 1983009808
        %v2248 = vunpack.c.0.s8 %v2247
        %v2249 = vlaneseq
        %v2250 = vshrl.u32 %v2249, 7
        %v2251 = vsub.s32 %v2248, %v2250
        %v2252 = vrot.slane %v2244, %v2251
        %v2254 = vunpack.c.l.s4 1983009808
        %v2255 = vunpack.c.0.s8 %v2254
        %v2256 = vlaneseq
        %v2257 = vshrl.u32 %v2256, 7
        %v2258 = vsub.s32 %v2255, %v2257
        %v2259 = vrot.slane %v2245, %v2258
        %v2260 = vcombine.low %v2252, %v2259
        %v2261 = vcombine.low %v2091, %v2093
        %v2262 = vcombine.low %v2095, %v2097
        %v2264 = vunpack.c.l.s4 1983009808
        %v2265 = vunpack.c.0.s8 %v2264
        %v2266 = vlaneseq
        %v2267 = vshrl.u32 %v2266, 7
        %v2268 = vsub.s32 %v2265, %v2267
        %v2269 = vrot.slane %v2261, %v2268
        %v2271 = vunpack.c.l.s4 1983009808
        %v2272 = vunpack.c.0.s8 %v2271
        %v2273 = vlaneseq
        %v2274 = vshrl.u32 %v2273, 7
        %v2275 = vsub.s32 %v2272, %v2274
        %v2276 = vrot.slane %v2262, %v2275
        %v2277 = vcombine.low %v2269, %v2276
        %v2278 = vcombine.low %v1962, %v1963
        %v2279 = vcombine.low %v1964, %v1965
        %v2281 = vunpack.c.l.s4 1983009808
        %v2282 = vunpack.c.0.s8 %v2281
        %v2283 = vlaneseq
        %v2284 = vshrl.u32 %v2283, 7
        %v2285 = vsub.s32 %v2282, %v2284
        %v2286 = vrot.slane %v2278, %v2285
        %v2288 = vunpack.c.l.s4 1983009808
        %v2289 = vunpack.c.0.s8 %v2288
        %v2290 = vlaneseq
        %v2291 = vshrl.u32 %v2290, 7
        %v2292 = vsub.s32 %v2289, %v2291
        %v2293 = vrot.slane %v2279, %v2292
        %v2294 = vcombine.low %v2286, %v2293
        %v2295 = vcombine.low %v1966, %v1967
        %v2296 = vcombine.low %v1968, %v1969
        %v2298 = vunpack.c.l.s4 1983009808
        %v2299 = vunpack.c.0.s8 %v2298
        %v2300 = vlaneseq
        %v2301 = vshrl.u32 %v2300, 7
        %v2302 = vsub.s32 %v2299, %v2301
        %v2303 = vrot.slane %v2295, %v2302
        %v2305 = vunpack.c.l.s4 1983009808
        %v2306 = vunpack.c.0.s8 %v2305
        %v2307 = vlaneseq
        %v2308 = vshrl.u32 %v2307, 7
        %v2309 = vsub.s32 %v2306, %v2308
        %v2310 = vrot.slane %v2296, %v2309
        %v2311 = vcombine.low %v2303, %v2310
        %v2312 = vcombine.low %v2099, %v2101
        %v2313 = vcombine.low %v2103, %v2105
        %v2315 = vunpack.c.l.s4 1983009808
        %v2316 = vunpack.c.0.s8 %v2315
        %v2317 = vlaneseq
        %v2318 = vshrl.u32 %v2317, 7
        %v2319 = vsub.s32 %v2316, %v2318
        %v2320 = vrot.slane %v2312, %v2319
        %v2322 = vunpack.c.l.s4 1983009808
        %v2323 = vunpack.c.0.s8 %v2322
        %v2324 = vlaneseq
        %v2325 = vshrl.u32 %v2324, 7
        %v2326 = vsub.s32 %v2323, %v2325
        %v2327 = vrot.slane %v2313, %v2326
        %v2328 = vcombine.low %v2320, %v2327
        %v2329 = vcombine.low %v2107, %v2109
        %v2330 = vcombine.low %v2111, %v2113
        %v2332 = vunpack.c.l.s4 1983009808
        %v2333 = vunpack.c.0.s8 %v2332
        %v2334 = vlaneseq
        %v2335 = vshrl.u32 %v2334, 7
        %v2336 = vsub.s32 %v2333, %v2335
        %v2337 = vrot.slane %v2329, %v2336
        %v2339 = vunpack.c.l.s4 1983009808
        %v2340 = vunpack.c.0.s8 %v2339
        %v2341 = vlaneseq
        %v2342 = vshrl.u32 %v2341, 7
        %v2343 = vsub.s32 %v2340, %v2342
        %v2344 = vrot.slane %v2330, %v2343
        %v2345 = vcombine.low %v2337, %v2344
        %v2346 = vcombine.low %v1970, %v1971
        %v2347 = vcombine.low %v1972, %v1973
        %v2349 = vunpack.c.l.s4 1983009808
        %v2350 = vunpack.c.0.s8 %v2349
        %v2351 = vlaneseq
        %v2352 = vshrl.u32 %v2351, 7
        %v2353 = vsub.s32 %v2350, %v2352
        %v2354 = vrot.slane %v2346, %v2353
        %v2356 = vunpack.c.l.s4 1983009808
        %v2357 = vunpack.c.0.s8 %v2356
        %v2358 = vlaneseq
        %v2359 = vshrl.u32 %v2358, 7
        %v2360 = vsub.s32 %v2357, %v2359
        %v2361 = vrot.slane %v2347, %v2360
        %v2362 = vcombine.low %v2354, %v2361
        %v2363 = vcombine.low %v1974, %v1975
        %v2364 = vcombine.low %v1976, %v1977
        %v2366 = vunpack.c.l.s4 1983009808
        %v2367 = vunpack.c.0.s8 %v2366
        %v2368 = vlaneseq
        %v2369 = vshrl.u32 %v2368, 7
        %v2370 = vsub.s32 %v2367, %v2369
        %v2371 = vrot.slane %v2363, %v2370
        %v2373 = vunpack.c.l.s4 1983009808
        %v2374 = vunpack.c.0.s8 %v2373
        %v2375 = vlaneseq
        %v2376 = vshrl.u32 %v2375, 7
        %v2377 = vsub.s32 %v2374, %v2376
        %v2378 = vrot.slane %v2364, %v2377
        %v2379 = vcombine.low %v2371, %v2378
        %v2380 = vcombine.low %v2115, %v2117
        %v2381 = vcombine.low %v2119, %v2121
        %v2383 = vunpack.c.l.s4 1983009808
        %v2384 = vunpack.c.0.s8 %v2383
        %v2385 = vlaneseq
        %v2386 = vshrl.u32 %v2385, 7
        %v2387 = vsub.s32 %v2384, %v2386
        %v2388 = vrot.slane %v2380, %v2387
        %v2390 = vunpack.c.l.s4 1983009808
        %v2391 = vunpack.c.0.s8 %v2390
        %v2392 = vlaneseq
        %v2393 = vshrl.u32 %v2392, 7
        %v2394 = vsub.s32 %v2391, %v2393
        %v2395 = vrot.slane %v2381, %v2394
        %v2396 = vcombine.low %v2388, %v2395
        %v2397 = vcombine.low %v2123, %v2125
        %v2398 = vcombine.low %v2127, %v2129
        %v2400 = vunpack.c.l.s4 1983009808
        %v2401 = vunpack.c.0.s8 %v2400
        %v2402 = vlaneseq
        %v2403 = vshrl.u32 %v2402, 7
        %v2404 = vsub.s32 %v2401, %v2403
        %v2405 = vrot.slane %v2397, %v2404
        %v2407 = vunpack.c.l.s4 1983009808
        %v2408 = vunpack.c.0.s8 %v2407
        %v2409 = vlaneseq
        %v2410 = vshrl.u32 %v2409, 7
        %v2411 = vsub.s32 %v2408, %v2410
        %v2412 = vrot.slane %v2398, %v2411
        %v2413 = vcombine.low %v2405, %v2412
        %v2414 = vcombine.low %v1978, %v1979
        %v2415 = vcombine.low %v1980, %v1981
        %v2417 = vunpack.c.l.s4 1983009808
        %v2418 = vunpack.c.0.s8 %v2417
        %v2419 = vlaneseq
        %v2420 = vshrl.u32 %v2419, 7
        %v2421 = vsub.s32 %v2418, %v2420
        %v2422 = vrot.slane %v2414, %v2421
        %v2424 = vunpack.c.l.s4 1983009808
        %v2425 = vunpack.c.0.s8 %v2424
        %v2426 = vlaneseq
        %v2427 = vshrl.u32 %v2426, 7
        %v2428 = vsub.s32 %v2425, %v2427
        %v2429 = vrot.slane %v2415, %v2428
        %v2430 = vcombine.low %v2422, %v2429
        %v2431 = vcombine.low %v1982, %v1983
        %v2432 = vcombine.low %v1984, %v1985
        %v2434 = vunpack.c.l.s4 1983009808
        %v2435 = vunpack.c.0.s8 %v2434
        %v2436 = vlaneseq
        %v2437 = vshrl.u32 %v2436, 7
        %v2438 = vsub.s32 %v2435, %v2437
        %v2439 = vrot.slane %v2431, %v2438
        %v2441 = vunpack.c.l.s4 1983009808
        %v2442 = vunpack.c.0.s8 %v2441
        %v2443 = vlaneseq
        %v2444 = vshrl.u32 %v2443, 7
        %v2445 = vsub.s32 %v2442, %v2444
        %v2446 = vrot.slane %v2432, %v2445
        %v2447 = vcombine.low %v2439, %v2446
        %v2448 = vcombine.low %v2131, %v2133
        %v2449 = vcombine.low %v2135, %v2137
        %v2451 = vunpack.c.l.s4 1983009808
        %v2452 = vunpack.c.0.s8 %v2451
        %v2453 = vlaneseq
        %v2454 = vshrl.u32 %v2453, 7
        %v2455 = vsub.s32 %v2452, %v2454
        %v2456 = vrot.slane %v2448, %v2455
        %v2458 = vunpack.c.l.s4 1983009808
        %v2459 = vunpack.c.0.s8 %v2458
        %v2460 = vlaneseq
        %v2461 = vshrl.u32 %v2460, 7
        %v2462 = vsub.s32 %v2459, %v2461
        %v2463 = vrot.slane %v2449, %v2462
        %v2464 = vcombine.low %v2456, %v2463
        %v2465 = vcombine.low %v2139, %v2141
        %v2466 = vcombine.low %v2143, %v2145
        %v2468 = vunpack.c.l.s4 1983009808
        %v2469 = vunpack.c.0.s8 %v2468
        %v2470 = vlaneseq
        %v2471 = vshrl.u32 %v2470, 7
        %v2472 = vsub.s32 %v2469, %v2471
        %v2473 = vrot.slane %v2465, %v2472
        %v2475 = vunpack.c.l.s4 1983009808
        %v2476 = vunpack.c.0.s8 %v2475
        %v2477 = vlaneseq
        %v2478 = vshrl.u32 %v2477, 7
        %v2479 = vsub.s32 %v2476, %v2478
        %v2480 = vrot.slane %v2466, %v2479
        %v2481 = vcombine.low %v2473, %v2480
        %v2482 = vcombine.low %v1986, %v1987
        %v2483 = vcombine.low %v1988, %v1989
        %v2485 = vunpack.c.l.s4 1983009808
        %v2486 = vunpack.c.0.s8 %v2485
        %v2487 = vlaneseq
        %v2488 = vshrl.u32 %v2487, 7
        %v2489 = vsub.s32 %v2486, %v2488
        %v2490 = vrot.slane %v2482, %v2489
        %v2492 = vunpack.c.l.s4 1983009808
        %v2493 = vunpack.c.0.s8 %v2492
        %v2494 = vlaneseq
        %v2495 = vshrl.u32 %v2494, 7
        %v2496 = vsub.s32 %v2493, %v2495
        %v2497 = vrot.slane %v2483, %v2496
        %v2498 = vcombine.low %v2490, %v2497
        %v2499 = vcombine.low %v1990, %v1991
        %v2500 = vcombine.low %v1992, %v1993
        %v2502 = vunpack.c.l.s4 1983009808
        %v2503 = vunpack.c.0.s8 %v2502
        %v2504 = vlaneseq
        %v2505 = vshrl.u32 %v2504, 7
        %v2506 = vsub.s32 %v2503, %v2505
        %v2507 = vrot.slane %v2499, %v2506
        %v2509 = vunpack.c.l.s4 1983009808
        %v2510 = vunpack.c.0.s8 %v2509
        %v2511 = vlaneseq
        %v2512 = vshrl.u32 %v2511, 7
        %v2513 = vsub.s32 %v2510, %v2512
        %v2514 = vrot.slane %v2500, %v2513
        %v2515 = vcombine.low %v2507, %v2514
        %v2516 = vcombine.low %v2147, %v2149
        %v2517 = vcombine.low %v2151, %v2153
        %v2519 = vunpack.c.l.s4 1983009808
        %v2520 = vunpack.c.0.s8 %v2519
        %v2521 = vlaneseq
        %v2522 = vshrl.u32 %v2521, 7
        %v2523 = vsub.s32 %v2520, %v2522
        %v2524 = vrot.slane %v2516, %v2523
        %v2526 = vunpack.c.l.s4 1983009808
        %v2527 = vunpack.c.0.s8 %v2526
        %v2528 = vlaneseq
        %v2529 = vshrl.u32 %v2528, 7
        %v2530 = vsub.s32 %v2527, %v2529
        %v2531 = vrot.slane %v2517, %v2530
        %v2532 = vcombine.low %v2524, %v2531
        %v2533 = vcombine.low %v2155, %v2157
        %v2534 = vcombine.low %v2159, %v2161
        %v2536 = vunpack.c.l.s4 1983009808
        %v2537 = vunpack.c.0.s8 %v2536
        %v2538 = vlaneseq
        %v2539 = vshrl.u32 %v2538, 7
        %v2540 = vsub.s32 %v2537, %v2539
        %v2541 = vrot.slane %v2533, %v2540
        %v2543 = vunpack.c.l.s4 1983009808
        %v2544 = vunpack.c.0.s8 %v2543
        %v2545 = vlaneseq
        %v2546 = vshrl.u32 %v2545, 7
        %v2547 = vsub.s32 %v2544, %v2546
        %v2548 = vrot.slane %v2534, %v2547
        %v2549 = vcombine.low %v2541, %v2548
        %v2550 = vcombine.low %v1994, %v1995
        %v2551 = vcombine.low %v1996, %v1997
        %v2553 = vunpack.c.l.s4 1983009808
        %v2554 = vunpack.c.0.s8 %v2553
        %v2555 = vlaneseq
        %v2556 = vshrl.u32 %v2555, 7
        %v2557 = vsub.s32 %v2554, %v2556
        %v2558 = vrot.slane %v2550, %v2557
        %v2560 = vunpack.c.l.s4 1983009808
        %v2561 = vunpack.c.0.s8 %v2560
        %v2562 = vlaneseq
        %v2563 = vshrl.u32 %v2562, 7
        %v2564 = vsub.s32 %v2561, %v2563
        %v2565 = vrot.slane %v2551, %v2564
        %v2566 = vcombine.low %v2558, %v2565
        %v2567 = vcombine.low %v1998, %v1999
        %v2568 = vcombine.low %v2000, %v2001
        %v2570 = vunpack.c.l.s4 1983009808
        %v2571 = vunpack.c.0.s8 %v2570
        %v2572 = vlaneseq
        %v2573 = vshrl.u32 %v2572, 7
        %v2574 = vsub.s32 %v2571, %v2573
        %v2575 = vrot.slane %v2567, %v2574
        %v2577 = vunpack.c.l.s4 1983009808
        %v2578 = vunpack.c.0.s8 %v2577
        %v2579 = vlaneseq
        %v2580 = vshrl.u32 %v2579, 7
        %v2581 = vsub.s32 %v2578, %v2580
        %v2582 = vrot.slane %v2568, %v2581
        %v2583 = vcombine.low %v2575, %v2582
        %v2584 = vcombine.low %v2163, %v2165
        %v2585 = vcombine.low %v2167, %v2169
        %v2587 = vunpack.c.l.s4 1983009808
        %v2588 = vunpack.c.0.s8 %v2587
        %v2589 = vlaneseq
        %v2590 = vshrl.u32 %v2589, 7
        %v2591 = vsub.s32 %v2588, %v2590
        %v2592 = vrot.slane %v2584, %v2591
        %v2594 = vunpack.c.l.s4 1983009808
        %v2595 = vunpack.c.0.s8 %v2594
        %v2596 = vlaneseq
        %v2597 = vshrl.u32 %v2596, 7
        %v2598 = vsub.s32 %v2595, %v2597
        %v2599 = vrot.slane %v2585, %v2598
        %v2600 = vcombine.low %v2592, %v2599
        %v2601 = vcombine.low %v2171, %v2173
        %v2602 = vcombine.low %v2175, %v2177
        %v2604 = vunpack.c.l.s4 1983009808
        %v2605 = vunpack.c.0.s8 %v2604
        %v2606 = vlaneseq
        %v2607 = vshrl.u32 %v2606, 7
        %v2608 = vsub.s32 %v2605, %v2607
        %v2609 = vrot.slane %v2601, %v2608
        %v2611 = vunpack.c.l.s4 1983009808
        %v2612 = vunpack.c.0.s8 %v2611
        %v2613 = vlaneseq
        %v2614 = vshrl.u32 %v2613, 7
        %v2615 = vsub.s32 %v2612, %v2614
        %v2616 = vrot.slane %v2602, %v2615
        %v2617 = vcombine.low %v2609, %v2616
        %v2618 = vcombine.low %v2002, %v2003
        %v2619 = vcombine.low %v2004, %v2005
        %v2621 = vunpack.c.l.s4 1983009808
        %v2622 = vunpack.c.0.s8 %v2621
        %v2623 = vlaneseq
        %v2624 = vshrl.u32 %v2623, 7
        %v2625 = vsub.s32 %v2622, %v2624
        %v2626 = vrot.slane %v2618, %v2625
        %v2628 = vunpack.c.l.s4 1983009808
        %v2629 = vunpack.c.0.s8 %v2628
        %v2630 = vlaneseq
        %v2631 = vshrl.u32 %v2630, 7
        %v2632 = vsub.s32 %v2629, %v2631
        %v2633 = vrot.slane %v2619, %v2632
        %v2634 = vcombine.low %v2626, %v2633
        %v2635 = vcombine.low %v2006, %v2007
        %v2636 = vcombine.low %v2008, %v2009
        %v2638 = vunpack.c.l.s4 1983009808
        %v2639 = vunpack.c.0.s8 %v2638
        %v2640 = vlaneseq
        %v2641 = vshrl.u32 %v2640, 7
        %v2642 = vsub.s32 %v2639, %v2641
        %v2643 = vrot.slane %v2635, %v2642
        %v2645 = vunpack.c.l.s4 1983009808
        %v2646 = vunpack.c.0.s8 %v2645
        %v2647 = vlaneseq
        %v2648 = vshrl.u32 %v2647, 7
        %v2649 = vsub.s32 %v2646, %v2648
        %v2650 = vrot.slane %v2636, %v2649
        %v2651 = vcombine.low %v2643, %v2650
        %v2652 = vcombine.low %v2179, %v2181
        %v2653 = vcombine.low %v2183, %v2185
        %v2655 = vunpack.c.l.s4 1983009808
        %v2656 = vunpack.c.0.s8 %v2655
        %v2657 = vlaneseq
        %v2658 = vshrl.u32 %v2657, 7
        %v2659 = vsub.s32 %v2656, %v2658
        %v2660 = vrot.slane %v2652, %v2659
        %v2662 = vunpack.c.l.s4 1983009808
        %v2663 = vunpack.c.0.s8 %v2662
        %v2664 = vlaneseq
        %v2665 = vshrl.u32 %v2664, 7
        %v2666 = vsub.s32 %v2663, %v2665
        %v2667 = vrot.slane %v2653, %v2666
        %v2668 = vcombine.low %v2660, %v2667
        %v2669 = vcombine.low %v2187, %v2189
        %v2670 = vcombine.low %v2191, %v2193
        %v2672 = vunpack.c.l.s4 1983009808
        %v2673 = vunpack.c.0.s8 %v2672
        %v2674 = vlaneseq
        %v2675 = vshrl.u32 %v2674, 7
        %v2676 = vsub.s32 %v2673, %v2675
        %v2677 = vrot.slane %v2669, %v2676
        %v2679 = vunpack.c.l.s4 1983009808
        %v2680 = vunpack.c.0.s8 %v2679
        %v2681 = vlaneseq
        %v2682 = vshrl.u32 %v2681, 7
        %v2683 = vsub.s32 %v2680, %v2682
        %v2684 = vrot.slane %v2670, %v2683
        %v2685 = vcombine.low %v2677, %v2684
        %v2686 = vcombine.low %v2010, %v2011
        %v2687 = vcombine.low %v2012, %v2013
        %v2689 = vunpack.c.l.s4 1983009808
        %v2690 = vunpack.c.0.s8 %v2689
        %v2691 = vlaneseq
        %v2692 = vshrl.u32 %v2691, 7
        %v2693 = vsub.s32 %v2690, %v2692
        %v2694 = vrot.slane %v2686, %v2693
        %v2696 = vunpack.c.l.s4 1983009808
        %v2697 = vunpack.c.0.s8 %v2696
        %v2698 = vlaneseq
        %v2699 = vshrl.u32 %v2698, 7
        %v2700 = vsub.s32 %v2697, %v2699
        %v2701 = vrot.slane %v2687, %v2700
        %v2702 = vcombine.low %v2694, %v2701
        %v2703 = vcombine.low %v2014, %v2015
        %v2704 = vcombine.low %v2016, %v2017
        %v2706 = vunpack.c.l.s4 1983009808
        %v2707 = vunpack.c.0.s8 %v2706
        %v2708 = vlaneseq
        %v2709 = vshrl.u32 %v2708, 7
        %v2710 = vsub.s32 %v2707, %v2709
        %v2711 = vrot.slane %v2703, %v2710
        %v2713 = vunpack.c.l.s4 1983009808
        %v2714 = vunpack.c.0.s8 %v2713
        %v2715 = vlaneseq
        %v2716 = vshrl.u32 %v2715, 7
        %v2717 = vsub.s32 %v2714, %v2716
        %v2718 = vrot.slane %v2704, %v2717
        %v2719 = vcombine.low %v2711, %v2718
        %v2720 = vcombine.low %v2195, %v2197
        %v2721 = vcombine.low %v2199, %v2201
        %v2723 = vunpack.c.l.s4 1983009808
        %v2724 = vunpack.c.0.s8 %v2723
        %v2725 = vlaneseq
        %v2726 = vshrl.u32 %v2725, 7
        %v2727 = vsub.s32 %v2724, %v2726
        %v2728 = vrot.slane %v2720, %v2727
        %v2730 = vunpack.c.l.s4 1983009808
        %v2731 = vunpack.c.0.s8 %v2730
        %v2732 = vlaneseq
        %v2733 = vshrl.u32 %v2732, 7
        %v2734 = vsub.s32 %v2731, %v2733
        %v2735 = vrot.slane %v2721, %v2734
        %v2736 = vcombine.low %v2728, %v2735
        %v2737 = vcombine.low %v2203, %v2205
        %v2738 = vcombine.low %v2207, %v2209
        %v2740 = vunpack.c.l.s4 1983009808
        %v2741 = vunpack.c.0.s8 %v2740
        %v2742 = vlaneseq
        %v2743 = vshrl.u32 %v2742, 7
        %v2744 = vsub.s32 %v2741, %v2743
        %v2745 = vrot.slane %v2737, %v2744
        %v2747 = vunpack.c.l.s4 1983009808
        %v2748 = vunpack.c.0.s8 %v2747
        %v2749 = vlaneseq
        %v2750 = vshrl.u32 %v2749, 7
        %v2751 = vsub.s32 %v2748, %v2750
        %v2752 = vrot.slane %v2738, %v2751
        %v2753 = vcombine.low %v2745, %v2752
        %v2786 = vpack.c.bf16 %v2243, %v2226
        %v2787 = vpack.c.bf16 %v2277, %v2260
        %v2788 = vpack.c.bf16 %v2311, %v2294
        %v2789 = vpack.c.bf16 %v2345, %v2328
        %v2790 = vpack.c.bf16 %v2379, %v2362
        %v2791 = vpack.c.bf16 %v2413, %v2396
        %v2792 = vpack.c.bf16 %v2447, %v2430
        %v2793 = vpack.c.bf16 %v2481, %v2464
        %v2794 = vpack.c.bf16 %v2515, %v2498
        %v2795 = vpack.c.bf16 %v2549, %v2532
        %v2796 = vpack.c.bf16 %v2583, %v2566
        %v2797 = vpack.c.bf16 %v2617, %v2600
        %v2798 = vpack.c.bf16 %v2651, %v2634
        %v2799 = vpack.c.bf16 %v2685, %v2668
        %v2800 = vpack.c.bf16 %v2719, %v2702
        %v2801 = vpack.c.bf16 %v2753, %v2736
        %v2818 = vunpack.c.l.b16 %v2786
        %v2819 = vunpack.c.h.b16 %v2786
        %v2820 = vunpack.c.l.b16 %v2787
        %v2821 = vunpack.c.h.b16 %v2787
        %v2822 = vunpack.c.l.b16 %v2788
        %v2823 = vunpack.c.h.b16 %v2788
        %v2824 = vunpack.c.l.b16 %v2789
        %v2825 = vunpack.c.h.b16 %v2789
        %v2826 = vunpack.c.l.b16 %v2790
        %v2827 = vunpack.c.h.b16 %v2790
        %v2828 = vunpack.c.l.b16 %v2791
        %v2829 = vunpack.c.h.b16 %v2791
        %v2830 = vunpack.c.l.b16 %v2792
        %v2831 = vunpack.c.h.b16 %v2792
        %v2832 = vunpack.c.l.b16 %v2793
        %v2833 = vunpack.c.h.b16 %v2793
        %v2834 = vunpack.c.l.b16 %v2794
        %v2835 = vunpack.c.h.b16 %v2794
        %v2836 = vunpack.c.l.b16 %v2795
        %v2837 = vunpack.c.h.b16 %v2795
        %v2838 = vunpack.c.l.b16 %v2796
        %v2839 = vunpack.c.h.b16 %v2796
        %v2840 = vunpack.c.l.b16 %v2797
        %v2841 = vunpack.c.h.b16 %v2797
        %v2842 = vunpack.c.l.b16 %v2798
        %v2843 = vunpack.c.h.b16 %v2798
        %v2844 = vunpack.c.l.b16 %v2799
        %v2845 = vunpack.c.h.b16 %v2799
        %v2846 = vunpack.c.l.b16 %v2800
        %v2847 = vunpack.c.h.b16 %v2800
        %v2848 = vunpack.c.l.b16 %v2801
        %v2849 = vunpack.c.h.b16 %v2801
        %v2850 = vpack.c.b16 %v2818, %v2818
        %v2851 = vpack.c.b16 %v2819, %v2819
        %v2852 = vpack.c.b16 %v2820, %v2820
        %v2853 = vpack.c.b16 %v2821, %v2821
        %v2854 = vpack.c.b16 %v2822, %v2822
        %v2855 = vpack.c.b16 %v2823, %v2823
        %v2856 = vpack.c.b16 %v2824, %v2824
        %v2857 = vpack.c.b16 %v2825, %v2825
        %v2858 = vpack.c.b16 %v2826, %v2826
        %v2859 = vpack.c.b16 %v2827, %v2827
        %v2860 = vpack.c.b16 %v2828, %v2828
        %v2861 = vpack.c.b16 %v2829, %v2829
        %v2862 = vpack.c.b16 %v2830, %v2830
        %v2863 = vpack.c.b16 %v2831, %v2831
        %v2864 = vpack.c.b16 %v2832, %v2832
        %v2865 = vpack.c.b16 %v2833, %v2833
        %v2866 = vpack.c.b16 %v2834, %v2834
        %v2867 = vpack.c.b16 %v2835, %v2835
        %v2868 = vpack.c.b16 %v2836, %v2836
        %v2869 = vpack.c.b16 %v2837, %v2837
        %v2870 = vpack.c.b16 %v2838, %v2838
        %v2871 = vpack.c.b16 %v2839, %v2839
        %v2872 = vpack.c.b16 %v2840, %v2840
        %v2873 = vpack.c.b16 %v2841, %v2841
        %v2874 = vpack.c.b16 %v2842, %v2842
        %v2875 = vpack.c.b16 %v2843, %v2843
        %v2876 = vpack.c.b16 %v2844, %v2844
        %v2877 = vpack.c.b16 %v2845, %v2845
        %v2878 = vpack.c.b16 %v2846, %v2846
        %v2879 = vpack.c.b16 %v2847, %v2847
        %v2880 = vpack.c.b16 %v2848, %v2848
        %v2881 = vpack.c.b16 %v2849, %v2849
        %v2883 = vshrl.u32 %v2850, 16
        %v2885 = vrot.slane %v2883, 7
        %v2886 = vshll.u32 %v2850, 16
        %v2888 = vor.u32 %v2885, %v2886
        %v2889 = vrot.slane %v2885, 4
        %v2891 = vshrl.u32 %v2851, 16
        %v2893 = vrot.slane %v2891, 7
        %v2894 = vshll.u32 %v2851, 16
        %v2896 = vor.u32 %v2893, %v2894
        %v2897 = vsel %vm499, %v2889, %v2896
        %v2898 = vrot.slane %v2893, 4
        %v2900 = vshrl.u32 %v2852, 16
        %v2902 = vrot.slane %v2900, 7
        %v2903 = vshll.u32 %v2852, 16
        %v2905 = vor.u32 %v2902, %v2903
        %v2906 = vrot.slane %v2902, 4
        %v2908 = vshrl.u32 %v2853, 16
        %v2910 = vrot.slane %v2908, 7
        %v2911 = vshll.u32 %v2853, 16
        %v2913 = vor.u32 %v2910, %v2911
        %v2914 = vsel %vm499, %v2906, %v2913
        %v2915 = vrot.slane %v2910, 4
        %v2917 = vshrl.u32 %v2854, 16
        %v2919 = vrot.slane %v2917, 7
        %v2920 = vshll.u32 %v2854, 16
        %v2922 = vor.u32 %v2919, %v2920
        %v2923 = vrot.slane %v2919, 4
        %v2925 = vshrl.u32 %v2855, 16
        %v2927 = vrot.slane %v2925, 7
        %v2928 = vshll.u32 %v2855, 16
        %v2930 = vor.u32 %v2927, %v2928
        %v2931 = vsel %vm499, %v2923, %v2930
        %v2932 = vrot.slane %v2927, 4
        %v2934 = vshrl.u32 %v2856, 16
        %v2936 = vrot.slane %v2934, 7
        %v2937 = vshll.u32 %v2856, 16
        %v2939 = vor.u32 %v2936, %v2937
        %v2940 = vrot.slane %v2936, 4
        %v2942 = vshrl.u32 %v2857, 16
        %v2944 = vrot.slane %v2942, 7
        %v2945 = vshll.u32 %v2857, 16
        %v2947 = vor.u32 %v2944, %v2945
        %v2948 = vsel %vm499, %v2940, %v2947
        %v2949 = vrot.slane %v2944, 4
        %v2951 = vshrl.u32 %v2858, 16
        %v2953 = vrot.slane %v2951, 7
        %v2954 = vshll.u32 %v2858, 16
        %v2956 = vor.u32 %v2953, %v2954
        %v2957 = vrot.slane %v2953, 4
        %v2959 = vshrl.u32 %v2859, 16
        %v2961 = vrot.slane %v2959, 7
        %v2962 = vshll.u32 %v2859, 16
        %v2964 = vor.u32 %v2961, %v2962
        %v2965 = vsel %vm499, %v2957, %v2964
        %v2966 = vrot.slane %v2961, 4
        %v2968 = vshrl.u32 %v2860, 16
        %v2970 = vrot.slane %v2968, 7
        %v2971 = vshll.u32 %v2860, 16
        %v2973 = vor.u32 %v2970, %v2971
        %v2974 = vrot.slane %v2970, 4
        %v2976 = vshrl.u32 %v2861, 16
        %v2978 = vrot.slane %v2976, 7
        %v2979 = vshll.u32 %v2861, 16
        %v2981 = vor.u32 %v2978, %v2979
        %v2982 = vsel %vm499, %v2974, %v2981
        %v2983 = vrot.slane %v2978, 4
        %v2985 = vshrl.u32 %v2862, 16
        %v2987 = vrot.slane %v2985, 7
        %v2988 = vshll.u32 %v2862, 16
        %v2990 = vor.u32 %v2987, %v2988
        %v2991 = vrot.slane %v2987, 4
        %v2993 = vshrl.u32 %v2863, 16
        %v2995 = vrot.slane %v2993, 7
        %v2996 = vshll.u32 %v2863, 16
        %v2998 = vor.u32 %v2995, %v2996
        %v2999 = vsel %vm499, %v2991, %v2998
        %v3000 = vrot.slane %v2995, 4
        %v3002 = vshrl.u32 %v2864, 16
        %v3004 = vrot.slane %v3002, 7
        %v3005 = vshll.u32 %v2864, 16
        %v3007 = vor.u32 %v3004, %v3005
        %v3008 = vrot.slane %v3004, 4
        %v3010 = vshrl.u32 %v2865, 16
        %v3012 = vrot.slane %v3010, 7
        %v3013 = vshll.u32 %v2865, 16
        %v3015 = vor.u32 %v3012, %v3013
        %v3016 = vsel %vm499, %v3008, %v3015
        %v3017 = vrot.slane %v3012, 4
        %v3019 = vshrl.u32 %v2866, 16
        %v3021 = vrot.slane %v3019, 7
        %v3022 = vshll.u32 %v2866, 16
        %v3024 = vor.u32 %v3021, %v3022
        %v3025 = vrot.slane %v3021, 4
        %v3027 = vshrl.u32 %v2867, 16
        %v3029 = vrot.slane %v3027, 7
        %v3030 = vshll.u32 %v2867, 16
        %v3032 = vor.u32 %v3029, %v3030
        %v3033 = vsel %vm499, %v3025, %v3032
        %v3034 = vrot.slane %v3029, 4
        %v3036 = vshrl.u32 %v2868, 16
        %v3038 = vrot.slane %v3036, 7
        %v3039 = vshll.u32 %v2868, 16
        %v3041 = vor.u32 %v3038, %v3039
        %v3042 = vrot.slane %v3038, 4
        %v3044 = vshrl.u32 %v2869, 16
        %v3046 = vrot.slane %v3044, 7
        %v3047 = vshll.u32 %v2869, 16
        %v3049 = vor.u32 %v3046, %v3047
        %v3050 = vsel %vm499, %v3042, %v3049
        %v3051 = vrot.slane %v3046, 4
        %v3053 = vshrl.u32 %v2870, 16
        %v3055 = vrot.slane %v3053, 7
        %v3056 = vshll.u32 %v2870, 16
        %v3058 = vor.u32 %v3055, %v3056
        %v3059 = vrot.slane %v3055, 4
        %v3061 = vshrl.u32 %v2871, 16
        %v3063 = vrot.slane %v3061, 7
        %v3064 = vshll.u32 %v2871, 16
        %v3066 = vor.u32 %v3063, %v3064
        %v3067 = vsel %vm499, %v3059, %v3066
        %v3068 = vrot.slane %v3063, 4
        %v3070 = vshrl.u32 %v2872, 16
        %v3072 = vrot.slane %v3070, 7
        %v3073 = vshll.u32 %v2872, 16
        %v3075 = vor.u32 %v3072, %v3073
        %v3076 = vrot.slane %v3072, 4
        %v3078 = vshrl.u32 %v2873, 16
        %v3080 = vrot.slane %v3078, 7
        %v3081 = vshll.u32 %v2873, 16
        %v3083 = vor.u32 %v3080, %v3081
        %v3084 = vsel %vm499, %v3076, %v3083
        %v3085 = vrot.slane %v3080, 4
        %v3087 = vshrl.u32 %v2874, 16
        %v3089 = vrot.slane %v3087, 7
        %v3090 = vshll.u32 %v2874, 16
        %v3092 = vor.u32 %v3089, %v3090
        %v3093 = vrot.slane %v3089, 4
        %v3095 = vshrl.u32 %v2875, 16
        %v3097 = vrot.slane %v3095, 7
        %v3098 = vshll.u32 %v2875, 16
        %v3100 = vor.u32 %v3097, %v3098
        %v3101 = vsel %vm499, %v3093, %v3100
        %v3102 = vrot.slane %v3097, 4
        %v3104 = vshrl.u32 %v2876, 16
        %v3106 = vrot.slane %v3104, 7
        %v3107 = vshll.u32 %v2876, 16
        %v3109 = vor.u32 %v3106, %v3107
        %v3110 = vrot.slane %v3106, 4
        %v3112 = vshrl.u32 %v2877, 16
        %v3114 = vrot.slane %v3112, 7
        %v3115 = vshll.u32 %v2877, 16
        %v3117 = vor.u32 %v3114, %v3115
        %v3118 = vsel %vm499, %v3110, %v3117
        %v3119 = vrot.slane %v3114, 4
        %v3121 = vshrl.u32 %v2878, 16
        %v3123 = vrot.slane %v3121, 7
        %v3124 = vshll.u32 %v2878, 16
        %v3126 = vor.u32 %v3123, %v3124
        %v3127 = vrot.slane %v3123, 4
        %v3129 = vshrl.u32 %v2879, 16
        %v3131 = vrot.slane %v3129, 7
        %v3132 = vshll.u32 %v2879, 16
        %v3134 = vor.u32 %v3131, %v3132
        %v3135 = vsel %vm499, %v3127, %v3134
        %v3136 = vrot.slane %v3131, 4
        %v3138 = vshrl.u32 %v2880, 16
        %v3140 = vrot.slane %v3138, 7
        %v3141 = vshll.u32 %v2880, 16
        %v3143 = vor.u32 %v3140, %v3141
        %v3144 = vrot.slane %v3140, 4
        %v3146 = vshrl.u32 %v2881, 16
        %v3148 = vrot.slane %v3146, 7
        %v3149 = vshll.u32 %v2881, 16
        %v3151 = vor.u32 %v3148, %v3149
        %v3152 = vsel %vm499, %v3144, %v3151
        %v3153 = vrot.slane %v3148, 4
        %3154 = vrot.lane.b32.xlu0 %v2888, 4
        %v3155 = vpop.permute.xlu0 %3154
        %3156 = vrot.lane.b32.xlu0 %v2897, 4
        %v3157 = vpop.permute.xlu0 %3156
        %3158 = vrot.lane.b32.xlu0 %v2898, 4
        %v3159 = vpop.permute.xlu0 %3158
        %3160 = vrot.lane.b32.xlu0 %v2905, 4
        %v3161 = vpop.permute.xlu0 %3160
        %3162 = vrot.lane.b32.xlu0 %v2914, 4
        %v3163 = vpop.permute.xlu0 %3162
        %3164 = vrot.lane.b32.xlu0 %v2915, 4
        %v3165 = vpop.permute.xlu0 %3164
        %3166 = vrot.lane.b32.xlu0 %v2922, 4
        %v3167 = vpop.permute.xlu0 %3166
        %3168 = vrot.lane.b32.xlu0 %v2931, 4
        %v3169 = vpop.permute.xlu0 %3168
        %3170 = vrot.lane.b32.xlu0 %v2932, 4
        %v3171 = vpop.permute.xlu0 %3170
        %3172 = vrot.lane.b32.xlu0 %v2939, 4
        %v3173 = vpop.permute.xlu0 %3172
        %3174 = vrot.lane.b32.xlu0 %v2948, 4
        %v3175 = vpop.permute.xlu0 %3174
        %3176 = vrot.lane.b32.xlu0 %v2949, 4
        %v3177 = vpop.permute.xlu0 %3176
        %3178 = vrot.lane.b32.xlu0 %v2956, 4
        %v3179 = vpop.permute.xlu0 %3178
        %3180 = vrot.lane.b32.xlu0 %v2965, 4
        %v3181 = vpop.permute.xlu0 %3180
        %3182 = vrot.lane.b32.xlu0 %v2966, 4
        %v3183 = vpop.permute.xlu0 %3182
        %3184 = vrot.lane.b32.xlu0 %v2973, 4
        %v3185 = vpop.permute.xlu0 %3184
        %3186 = vrot.lane.b32.xlu0 %v2982, 4
        %v3187 = vpop.permute.xlu0 %3186
        %3188 = vrot.lane.b32.xlu0 %v2983, 4
        %v3189 = vpop.permute.xlu0 %3188
        %3190 = vrot.lane.b32.xlu0 %v2990, 4
        %v3191 = vpop.permute.xlu0 %3190
        %3192 = vrot.lane.b32.xlu0 %v2999, 4
        %v3193 = vpop.permute.xlu0 %3192
        %3194 = vrot.lane.b32.xlu0 %v3000, 4
        %v3195 = vpop.permute.xlu0 %3194
        %3196 = vrot.lane.b32.xlu0 %v3007, 4
        %v3197 = vpop.permute.xlu0 %3196
        %3198 = vrot.lane.b32.xlu0 %v3016, 4
        %v3199 = vpop.permute.xlu0 %3198
        %3200 = vrot.lane.b32.xlu0 %v3017, 4
        %v3201 = vpop.permute.xlu0 %3200
        %3202 = vrot.lane.b32.xlu0 %v3024, 4
        %v3203 = vpop.permute.xlu0 %3202
        %3204 = vrot.lane.b32.xlu0 %v3033, 4
        %v3205 = vpop.permute.xlu0 %3204
        %3206 = vrot.lane.b32.xlu0 %v3034, 4
        %v3207 = vpop.permute.xlu0 %3206
        %3208 = vrot.lane.b32.xlu0 %v3041, 4
        %v3209 = vpop.permute.xlu0 %3208
        %3210 = vrot.lane.b32.xlu0 %v3050, 4
        %v3211 = vpop.permute.xlu0 %3210
        %3212 = vrot.lane.b32.xlu0 %v3051, 4
        %v3213 = vpop.permute.xlu0 %3212
        %3214 = vrot.lane.b32.xlu0 %v3058, 4
        %v3215 = vpop.permute.xlu0 %3214
        %3216 = vrot.lane.b32.xlu0 %v3067, 4
        %v3217 = vpop.permute.xlu0 %3216
        %3218 = vrot.lane.b32.xlu0 %v3068, 4
        %v3219 = vpop.permute.xlu0 %3218
        %3220 = vrot.lane.b32.xlu0 %v3075, 4
        %v3221 = vpop.permute.xlu0 %3220
        %3222 = vrot.lane.b32.xlu0 %v3084, 4
        %v3223 = vpop.permute.xlu0 %3222
        %3224 = vrot.lane.b32.xlu0 %v3085, 4
        %v3225 = vpop.permute.xlu0 %3224
        %3226 = vrot.lane.b32.xlu0 %v3092, 4
        %v3227 = vpop.permute.xlu0 %3226
        %3228 = vrot.lane.b32.xlu0 %v3101, 4
        %v3229 = vpop.permute.xlu0 %3228
        %3230 = vrot.lane.b32.xlu0 %v3102, 4
        %v3231 = vpop.permute.xlu0 %3230
        %3232 = vrot.lane.b32.xlu0 %v3109, 4
        %v3233 = vpop.permute.xlu0 %3232
        %3234 = vrot.lane.b32.xlu0 %v3118, 4
        %v3235 = vpop.permute.xlu0 %3234
        %3236 = vrot.lane.b32.xlu0 %v3119, 4
        %v3237 = vpop.permute.xlu0 %3236
        %3238 = vrot.lane.b32.xlu0 %v3126, 4
        %v3239 = vpop.permute.xlu0 %3238
        %3240 = vrot.lane.b32.xlu0 %v3135, 4
        %v3241 = vpop.permute.xlu0 %3240
        %3242 = vrot.lane.b32.xlu0 %v3136, 4
        %v3243 = vpop.permute.xlu0 %3242
        %3244 = vrot.lane.b32.xlu0 %v3143, 4
        %v3245 = vpop.permute.xlu0 %3244
        %3246 = vrot.lane.b32.xlu0 %v3152, 4
        %v3247 = vpop.permute.xlu0 %3246
        %3248 = vrot.lane.b32.xlu0 %v3153, 4
        %v3249 = vpop.permute.xlu0 %3248
        %vm3298 = vcmask 60448
        %vm3299 = vmand %vm3298, %vm822
        %v3300 = vld [vmem:[%s820] sm:$0xf]
        %v3301 = vsel %vm3299, %v3155, %v3300
        %3302 = vst [vmem:[%s820] sm:$0xf] %v3301
        %vm3303 = vcmask 60448
        %3304 = vst.msk [vmem:[%s820 + $0x4] sm:$0xf] %vm3303, %v3157
        %vm3305 = vcmask 57376
        %vm3306 = vmand %vm3305, %vm497
        %v3307 = vld [vmem:[%s820 + $0x8] sm:$0x1]
        %v3308 = vsel %vm3306, %v3159, %v3307
        %3309 = vst [vmem:[%s820 + $0x8] sm:$0x1] %v3308
        %v3310 = vld [vmem:[%s820 + $0xc] sm:$0xf]
        %v3311 = vsel %vm3299, %v3161, %v3310
        %3312 = vst [vmem:[%s820 + $0xc] sm:$0xf] %v3311
        %3313 = vst.msk [vmem:[%s820 + $0x10] sm:$0xf] %vm3303, %v3163
        %v3314 = vld [vmem:[%s820 + $0x14] sm:$0x1]
        %v3315 = vsel %vm3306, %v3165, %v3314
        %3316 = vst [vmem:[%s820 + $0x14] sm:$0x1] %v3315
        %v3317 = vld [vmem:[%s820 + $0x18] sm:$0xf]
        %v3318 = vsel %vm3299, %v3167, %v3317
        %3319 = vst [vmem:[%s820 + $0x18] sm:$0xf] %v3318
        %3320 = vst.msk [vmem:[%s820 + $0x1c] sm:$0xf] %vm3303, %v3169
        %v3321 = vld [vmem:[%s820 + $0x20] sm:$0x1]
        %v3322 = vsel %vm3306, %v3171, %v3321
        %3323 = vst [vmem:[%s820 + $0x20] sm:$0x1] %v3322
        %v3324 = vld [vmem:[%s820 + $0x24] sm:$0xf]
        %v3325 = vsel %vm3299, %v3173, %v3324
        %3326 = vst [vmem:[%s820 + $0x24] sm:$0xf] %v3325
        %3327 = vst.msk [vmem:[%s820 + $0x28] sm:$0xf] %vm3303, %v3175
        %v3328 = vld [vmem:[%s820 + $0x2c] sm:$0x1]
        %v3329 = vsel %vm3306, %v3177, %v3328
        %3330 = vst [vmem:[%s820 + $0x2c] sm:$0x1] %v3329
        %v3331 = vld [vmem:[%s820 + $0x30] sm:$0xf]
        %v3332 = vsel %vm3299, %v3179, %v3331
        %3333 = vst [vmem:[%s820 + $0x30] sm:$0xf] %v3332
        %3334 = vst.msk [vmem:[%s820 + $0x34] sm:$0xf] %vm3303, %v3181
        %v3335 = vld [vmem:[%s820 + $0x38] sm:$0x1]
        %v3336 = vsel %vm3306, %v3183, %v3335
        %3337 = vst [vmem:[%s820 + $0x38] sm:$0x1] %v3336
        %v3338 = vld [vmem:[%s820 + $0x3c] sm:$0xf]
        %v3339 = vsel %vm3299, %v3185, %v3338
        %3340 = vst [vmem:[%s820 + $0x3c] sm:$0xf] %v3339
        %3341 = vst.msk [vmem:[%s820 + $0x40] sm:$0xf] %vm3303, %v3187
        %v3342 = vld [vmem:[%s820 + $0x44] sm:$0x1]
        %v3343 = vsel %vm3306, %v3189, %v3342
        %3344 = vst [vmem:[%s820 + $0x44] sm:$0x1] %v3343
        %v3345 = vld [vmem:[%s820 + $0x48] sm:$0xf]
        %v3346 = vsel %vm3299, %v3191, %v3345
        %3347 = vst [vmem:[%s820 + $0x48] sm:$0xf] %v3346
        %3348 = vst.msk [vmem:[%s820 + $0x4c] sm:$0xf] %vm3303, %v3193
        %v3349 = vld [vmem:[%s820 + $0x50] sm:$0x1]
        %v3350 = vsel %vm3306, %v3195, %v3349
        %3351 = vst [vmem:[%s820 + $0x50] sm:$0x1] %v3350
        %v3352 = vld [vmem:[%s820 + $0x54] sm:$0xf]
        %v3353 = vsel %vm3299, %v3197, %v3352
        %3354 = vst [vmem:[%s820 + $0x54] sm:$0xf] %v3353
        %3355 = vst.msk [vmem:[%s820 + $0x58] sm:$0xf] %vm3303, %v3199
        %v3356 = vld [vmem:[%s820 + $0x5c] sm:$0x1]
        %v3357 = vsel %vm3306, %v3201, %v3356
        %3358 = vst [vmem:[%s820 + $0x5c] sm:$0x1] %v3357
        %v3359 = vld [vmem:[%s820 + $0x60] sm:$0xf]
        %v3360 = vsel %vm3299, %v3203, %v3359
        %3361 = vst [vmem:[%s820 + $0x60] sm:$0xf] %v3360
        %3362 = vst.msk [vmem:[%s820 + $0x64] sm:$0xf] %vm3303, %v3205
        %v3363 = vld [vmem:[%s820 + $0x68] sm:$0x1]
        %v3364 = vsel %vm3306, %v3207, %v3363
        %3365 = vst [vmem:[%s820 + $0x68] sm:$0x1] %v3364
        %v3366 = vld [vmem:[%s820 + $0x6c] sm:$0xf]
        %v3367 = vsel %vm3299, %v3209, %v3366
        %3368 = vst [vmem:[%s820 + $0x6c] sm:$0xf] %v3367
        %3369 = vst.msk [vmem:[%s820 + $0x70] sm:$0xf] %vm3303, %v3211
        %v3370 = vld [vmem:[%s820 + $0x74] sm:$0x1]
        %v3371 = vsel %vm3306, %v3213, %v3370
        %3372 = vst [vmem:[%s820 + $0x74] sm:$0x1] %v3371
        %v3373 = vld [vmem:[%s820 + $0x78] sm:$0xf]
        %v3374 = vsel %vm3299, %v3215, %v3373
        %3375 = vst [vmem:[%s820 + $0x78] sm:$0xf] %v3374
        %3376 = vst.msk [vmem:[%s820 + $0x7c] sm:$0xf] %vm3303, %v3217
        %v3377 = vld [vmem:[%s820 + $0x80] sm:$0x1]
        %v3378 = vsel %vm3306, %v3219, %v3377
        %3379 = vst [vmem:[%s820 + $0x80] sm:$0x1] %v3378
        %v3380 = vld [vmem:[%s820 + $0x84] sm:$0xf]
        %v3381 = vsel %vm3299, %v3221, %v3380
        %3382 = vst [vmem:[%s820 + $0x84] sm:$0xf] %v3381
        %3383 = vst.msk [vmem:[%s820 + $0x88] sm:$0xf] %vm3303, %v3223
        %v3384 = vld [vmem:[%s820 + $0x8c] sm:$0x1]
        %v3385 = vsel %vm3306, %v3225, %v3384
        %3386 = vst [vmem:[%s820 + $0x8c] sm:$0x1] %v3385
        %v3387 = vld [vmem:[%s820 + $0x90] sm:$0xf]
        %v3388 = vsel %vm3299, %v3227, %v3387
        %3389 = vst [vmem:[%s820 + $0x90] sm:$0xf] %v3388
        %3390 = vst.msk [vmem:[%s820 + $0x94] sm:$0xf] %vm3303, %v3229
        %v3391 = vld [vmem:[%s820 + $0x98] sm:$0x1]
        %v3392 = vsel %vm3306, %v3231, %v3391
        %3393 = vst [vmem:[%s820 + $0x98] sm:$0x1] %v3392
        %v3394 = vld [vmem:[%s820 + $0x9c] sm:$0xf]
        %v3395 = vsel %vm3299, %v3233, %v3394
        %3396 = vst [vmem:[%s820 + $0x9c] sm:$0xf] %v3395
        %3397 = vst.msk [vmem:[%s820 + $0xa0] sm:$0xf] %vm3303, %v3235
        %v3398 = vld [vmem:[%s820 + $0xa4] sm:$0x1]
        %v3399 = vsel %vm3306, %v3237, %v3398
        %3400 = vst [vmem:[%s820 + $0xa4] sm:$0x1] %v3399
        %v3401 = vld [vmem:[%s820 + $0xa8] sm:$0xf]
        %v3402 = vsel %vm3299, %v3239, %v3401
        %3403 = vst [vmem:[%s820 + $0xa8] sm:$0xf] %v3402
        %3404 = vst.msk [vmem:[%s820 + $0xac] sm:$0xf] %vm3303, %v3241
        %v3405 = vld [vmem:[%s820 + $0xb0] sm:$0x1]
        %v3406 = vsel %vm3306, %v3243, %v3405
        %3407 = vst [vmem:[%s820 + $0xb0] sm:$0x1] %v3406
        %v3408 = vld [vmem:[%s820 + $0xb4] sm:$0xf]
        %v3409 = vsel %vm3299, %v3245, %v3408
        %3410 = vst [vmem:[%s820 + $0xb4] sm:$0xf] %v3409
        %3411 = vst.msk [vmem:[%s820 + $0xb8] sm:$0xf] %vm3303, %v3247
        %v3412 = vld [vmem:[%s820 + $0xbc] sm:$0x1]
        %v3413 = vsel %vm3306, %v3249, %v3412
        %3414 = vst [vmem:[%s820 + $0xbc] sm:$0x1] %v3413
        %vm3415 = vcmask 25600
        %3416 = vst.msk [vmem:[%s307] sm:$0x3] %vm3415, 0.0
      $region44: #{up_forward.3} parent=39 // pred_fallthru
        _
      %s3417 = smul.u32 %s23, 16
      %s3418 = smul.u32 %s3417, 3
      %s3419 = smul.addr %s3418, 4
      %s3420 = scalar_lea.vmem [#allocation2], %s3419
      %v3421 = vld [vmem:[%s3420] sm:$0xf]
      %v3422 = vld [vmem:[%s3420 + $0x4] sm:$0xf]
      %v3423 = vld [vmem:[%s3420 + $0xc] sm:$0xf]
      %v3424 = vld [vmem:[%s3420 + $0x10] sm:$0xf]
      %v3425 = vld [vmem:[%s3420 + $0x18] sm:$0xf]
      %v3426 = vld [vmem:[%s3420 + $0x1c] sm:$0xf]
      %v3427 = vld [vmem:[%s3420 + $0x24] sm:$0xf]
      %v3428 = vld [vmem:[%s3420 + $0x28] sm:$0xf]
      %v3429 = vld [vmem:[%s3420 + $0x30] sm:$0xf]
      %v3430 = vld [vmem:[%s3420 + $0x34] sm:$0xf]
      %v3431 = vld [vmem:[%s3420 + $0x3c] sm:$0xf]
      %v3432 = vld [vmem:[%s3420 + $0x40] sm:$0xf]
      %v3433 = vld [vmem:[%s3420 + $0x48] sm:$0xf]
      %v3434 = vld [vmem:[%s3420 + $0x4c] sm:$0xf]
      %v3435 = vld [vmem:[%s3420 + $0x54] sm:$0xf]
      %v3436 = vld [vmem:[%s3420 + $0x58] sm:$0xf]
      %v3437 = vld [vmem:[%s3420 + $0x60] sm:$0xf]
      %v3438 = vld [vmem:[%s3420 + $0x64] sm:$0xf]
      %v3439 = vld [vmem:[%s3420 + $0x6c] sm:$0xf]
      %v3440 = vld [vmem:[%s3420 + $0x70] sm:$0xf]
      %v3441 = vld [vmem:[%s3420 + $0x78] sm:$0xf]
      %v3442 = vld [vmem:[%s3420 + $0x7c] sm:$0xf]
      %v3443 = vld [vmem:[%s3420 + $0x84] sm:$0xf]
      %v3444 = vld [vmem:[%s3420 + $0x88] sm:$0xf]
      %v3445 = vld [vmem:[%s3420 + $0x90] sm:$0xf]
      %v3446 = vld [vmem:[%s3420 + $0x94] sm:$0xf]
      %v3447 = vld [vmem:[%s3420 + $0x9c] sm:$0xf]
      %v3448 = vld [vmem:[%s3420 + $0xa0] sm:$0xf]
      %v3449 = vld [vmem:[%s3420 + $0xa8] sm:$0xf]
      %v3450 = vld [vmem:[%s3420 + $0xac] sm:$0xf]
      %v3451 = vld [vmem:[%s3420 + $0xb4] sm:$0xf]
      %v3452 = vld [vmem:[%s3420 + $0xb8] sm:$0xf]
      %vm3453 = vcmask 60416
      %3454 = vst.msk [vmem:[#allocation3] sm:$0xf] %vm3453, %v3421
      %3455 = vst.msk [vmem:[#allocation3 + $0x4] sm:$0xf] %vm3453, %v3422
      %3456 = vst.msk [vmem:[#allocation3 + $0x8] sm:$0xf] %vm3453, %v3423
      %3457 = vst.msk [vmem:[#allocation3 + $0xc] sm:$0xf] %vm3453, %v3424
      %3458 = vst.msk [vmem:[#allocation3 + $0x10] sm:$0xf] %vm3453, %v3425
      %3459 = vst.msk [vmem:[#allocation3 + $0x14] sm:$0xf] %vm3453, %v3426
      %3460 = vst.msk [vmem:[#allocation3 + $0x18] sm:$0xf] %vm3453, %v3427
      %3461 = vst.msk [vmem:[#allocation3 + $0x1c] sm:$0xf] %vm3453, %v3428
      %3462 = vst.msk [vmem:[#allocation3 + $0x20] sm:$0xf] %vm3453, %v3429
      %3463 = vst.msk [vmem:[#allocation3 + $0x24] sm:$0xf] %vm3453, %v3430
      %3464 = vst.msk [vmem:[#allocation3 + $0x28] sm:$0xf] %vm3453, %v3431
      %3465 = vst.msk [vmem:[#allocation3 + $0x2c] sm:$0xf] %vm3453, %v3432
      %3466 = vst.msk [vmem:[#allocation3 + $0x30] sm:$0xf] %vm3453, %v3433
      %3467 = vst.msk [vmem:[#allocation3 + $0x34] sm:$0xf] %vm3453, %v3434
      %3468 = vst.msk [vmem:[#allocation3 + $0x38] sm:$0xf] %vm3453, %v3435
      %3469 = vst.msk [vmem:[#allocation3 + $0x3c] sm:$0xf] %vm3453, %v3436
      %3470 = vst.msk [vmem:[#allocation3 + $0x40] sm:$0xf] %vm3453, %v3437
      %3471 = vst.msk [vmem:[#allocation3 + $0x44] sm:$0xf] %vm3453, %v3438
      %3472 = vst.msk [vmem:[#allocation3 + $0x48] sm:$0xf] %vm3453, %v3439
      %3473 = vst.msk [vmem:[#allocation3 + $0x4c] sm:$0xf] %vm3453, %v3440
      %3474 = vst.msk [vmem:[#allocation3 + $0x50] sm:$0xf] %vm3453, %v3441
      %3475 = vst.msk [vmem:[#allocation3 + $0x54] sm:$0xf] %vm3453, %v3442
      %3476 = vst.msk [vmem:[#allocation3 + $0x58] sm:$0xf] %vm3453, %v3443
      %3477 = vst.msk [vmem:[#allocation3 + $0x5c] sm:$0xf] %vm3453, %v3444
      %3478 = vst.msk [vmem:[#allocation3 + $0x60] sm:$0xf] %vm3453, %v3445
      %3479 = vst.msk [vmem:[#allocation3 + $0x64] sm:$0xf] %vm3453, %v3446
      %3480 = vst.msk [vmem:[#allocation3 + $0x68] sm:$0xf] %vm3453, %v3447
      %3481 = vst.msk [vmem:[#allocation3 + $0x6c] sm:$0xf] %vm3453, %v3448
      %3482 = vst.msk [vmem:[#allocation3 + $0x70] sm:$0xf] %vm3453, %v3449
      %3483 = vst.msk [vmem:[#allocation3 + $0x74] sm:$0xf] %vm3453, %v3450
      %3484 = vst.msk [vmem:[#allocation3 + $0x78] sm:$0xf] %vm3453, %v3451
      %3485 = vst.msk [vmem:[#allocation3 + $0x7c] sm:$0xf] %vm3453, %v3452
      %v3486 = vld [vmem:[%s3420] sm:$0xf]
      %v3487 = vld [vmem:[%s3420 + $0x4] sm:$0xf]
      %v3488 = vld [vmem:[%s3420 + $0x8] sm:$0x1]
      %v3489 = vld [vmem:[%s3420 + $0xc] sm:$0xf]
      %v3490 = vld [vmem:[%s3420 + $0x10] sm:$0xf]
      %v3491 = vld [vmem:[%s3420 + $0x14] sm:$0x1]
      %v3492 = vld [vmem:[%s3420 + $0x18] sm:$0xf]
      %v3493 = vld [vmem:[%s3420 + $0x1c] sm:$0xf]
      %v3494 = vld [vmem:[%s3420 + $0x20] sm:$0x1]
      %v3495 = vld [vmem:[%s3420 + $0x24] sm:$0xf]
      %v3496 = vld [vmem:[%s3420 + $0x28] sm:$0xf]
      %v3497 = vld [vmem:[%s3420 + $0x2c] sm:$0x1]
      %v3498 = vld [vmem:[%s3420 + $0x30] sm:$0xf]
      %v3499 = vld [vmem:[%s3420 + $0x34] sm:$0xf]
      %v3500 = vld [vmem:[%s3420 + $0x38] sm:$0x1]
      %v3501 = vld [vmem:[%s3420 + $0x3c] sm:$0xf]
      %v3502 = vld [vmem:[%s3420 + $0x40] sm:$0xf]
      %v3503 = vld [vmem:[%s3420 + $0x44] sm:$0x1]
      %v3504 = vld [vmem:[%s3420 + $0x48] sm:$0xf]
      %v3505 = vld [vmem:[%s3420 + $0x4c] sm:$0xf]
      %v3506 = vld [vmem:[%s3420 + $0x50] sm:$0x1]
      %v3507 = vld [vmem:[%s3420 + $0x54] sm:$0xf]
      %v3508 = vld [vmem:[%s3420 + $0x58] sm:$0xf]
      %v3509 = vld [vmem:[%s3420 + $0x5c] sm:$0x1]
      %v3510 = vld [vmem:[%s3420 + $0x60] sm:$0xf]
      %v3511 = vld [vmem:[%s3420 + $0x64] sm:$0xf]
      %v3512 = vld [vmem:[%s3420 + $0x68] sm:$0x1]
      %v3513 = vld [vmem:[%s3420 + $0x6c] sm:$0xf]
      %v3514 = vld [vmem:[%s3420 + $0x70] sm:$0xf]
      %v3515 = vld [vmem:[%s3420 + $0x74] sm:$0x1]
      %v3516 = vld [vmem:[%s3420 + $0x78] sm:$0xf]
      %v3517 = vld [vmem:[%s3420 + $0x7c] sm:$0xf]
      %v3518 = vld [vmem:[%s3420 + $0x80] sm:$0x1]
      %v3519 = vld [vmem:[%s3420 + $0x84] sm:$0xf]
      %v3520 = vld [vmem:[%s3420 + $0x88] sm:$0xf]
      %v3521 = vld [vmem:[%s3420 + $0x8c] sm:$0x1]
      %v3522 = vld [vmem:[%s3420 + $0x90] sm:$0xf]
      %v3523 = vld [vmem:[%s3420 + $0x94] sm:$0xf]
      %v3524 = vld [vmem:[%s3420 + $0x98] sm:$0x1]
      %v3525 = vld [vmem:[%s3420 + $0x9c] sm:$0xf]
      %v3526 = vld [vmem:[%s3420 + $0xa0] sm:$0xf]
      %v3527 = vld [vmem:[%s3420 + $0xa4] sm:$0x1]
      %v3528 = vld [vmem:[%s3420 + $0xa8] sm:$0xf]
      %v3529 = vld [vmem:[%s3420 + $0xac] sm:$0xf]
      %v3530 = vld [vmem:[%s3420 + $0xb0] sm:$0x1]
      %v3531 = vld [vmem:[%s3420 + $0xb4] sm:$0xf]
      %v3532 = vld [vmem:[%s3420 + $0xb8] sm:$0xf]
      %v3533 = vld [vmem:[%s3420 + $0xbc] sm:$0x1]
      %vm3534 = vsmask.f32 3328
      %vm3535 = vsmask.f32 7440
      %vm3536 = vmor %vm3534, %vm3535
      %v3538 = vshrl.u32 %v3486, 16
      %v3540 = vrot.slane %v3538, 4
      %v3541 = vshll.u32 %v3486, 16
      %v3543 = vrot.slane %v3541, 5
      %v3544 = vor.u32 %v3540, %v3543
      %v3545 = vrot.slane %v3544, 4
      %v3547 = vshll.u32 %v3487, 16
      %v3549 = vrot.slane %v3547, 5
      %v3550 = vsel %vm3536, %v3545, %v3549
      %v3551 = vshrl.u32 %v3487, 16
      %v3553 = vrot.slane %v3551, 4
      %v3554 = vor.u32 %v3553, %v3549
      %v3555 = vrot.slane %v3554, 4
      %v3557 = vshll.u32 %v3488, 16
      %v3559 = vrot.slane %v3557, 5
      %v3560 = vsel %vm3536, %v3555, %v3559
      %v3562 = vshrl.u32 %v3489, 16
      %v3564 = vrot.slane %v3562, 4
      %v3565 = vshll.u32 %v3489, 16
      %v3567 = vrot.slane %v3565, 5
      %v3568 = vor.u32 %v3564, %v3567
      %v3569 = vrot.slane %v3568, 4
      %v3571 = vshll.u32 %v3490, 16
      %v3573 = vrot.slane %v3571, 5
      %v3574 = vsel %vm3536, %v3569, %v3573
      %v3575 = vshrl.u32 %v3490, 16
      %v3577 = vrot.slane %v3575, 4
      %v3578 = vor.u32 %v3577, %v3573
      %v3579 = vrot.slane %v3578, 4
      %v3581 = vshll.u32 %v3491, 16
      %v3583 = vrot.slane %v3581, 5
      %v3584 = vsel %vm3536, %v3579, %v3583
      %v3586 = vshrl.u32 %v3492, 16
      %v3588 = vrot.slane %v3586, 4
      %v3589 = vshll.u32 %v3492, 16
      %v3591 = vrot.slane %v3589, 5
      %v3592 = vor.u32 %v3588, %v3591
      %v3593 = vrot.slane %v3592, 4
      %v3595 = vshll.u32 %v3493, 16
      %v3597 = vrot.slane %v3595, 5
      %v3598 = vsel %vm3536, %v3593, %v3597
      %v3599 = vshrl.u32 %v3493, 16
      %v3601 = vrot.slane %v3599, 4
      %v3602 = vor.u32 %v3601, %v3597
      %v3603 = vrot.slane %v3602, 4
      %v3605 = vshll.u32 %v3494, 16
      %v3607 = vrot.slane %v3605, 5
      %v3608 = vsel %vm3536, %v3603, %v3607
      %v3610 = vshrl.u32 %v3495, 16
      %v3612 = vrot.slane %v3610, 4
      %v3613 = vshll.u32 %v3495, 16
      %v3615 = vrot.slane %v3613, 5
      %v3616 = vor.u32 %v3612, %v3615
      %v3617 = vrot.slane %v3616, 4
      %v3619 = vshll.u32 %v3496, 16
      %v3621 = vrot.slane %v3619, 5
      %v3622 = vsel %vm3536, %v3617, %v3621
      %v3623 = vshrl.u32 %v3496, 16
      %v3625 = vrot.slane %v3623, 4
      %v3626 = vor.u32 %v3625, %v3621
      %v3627 = vrot.slane %v3626, 4
      %v3629 = vshll.u32 %v3497, 16
      %v3631 = vrot.slane %v3629, 5
      %v3632 = vsel %vm3536, %v3627, %v3631
      %v3634 = vshrl.u32 %v3498, 16
      %v3636 = vrot.slane %v3634, 4
      %v3637 = vshll.u32 %v3498, 16
      %v3639 = vrot.slane %v3637, 5
      %v3640 = vor.u32 %v3636, %v3639
      %v3641 = vrot.slane %v3640, 4
      %v3643 = vshll.u32 %v3499, 16
      %v3645 = vrot.slane %v3643, 5
      %v3646 = vsel %vm3536, %v3641, %v3645
      %v3647 = vshrl.u32 %v3499, 16
      %v3649 = vrot.slane %v3647, 4
      %v3650 = vor.u32 %v3649, %v3645
      %v3651 = vrot.slane %v3650, 4
      %v3653 = vshll.u32 %v3500, 16
      %v3655 = vrot.slane %v3653, 5
      %v3656 = vsel %vm3536, %v3651, %v3655
      %v3658 = vshrl.u32 %v3501, 16
      %v3660 = vrot.slane %v3658, 4
      %v3661 = vshll.u32 %v3501, 16
      %v3663 = vrot.slane %v3661, 5
      %v3664 = vor.u32 %v3660, %v3663
      %v3665 = vrot.slane %v3664, 4
      %v3667 = vshll.u32 %v3502, 16
      %v3669 = vrot.slane %v3667, 5
      %v3670 = vsel %vm3536, %v3665, %v3669
      %v3671 = vshrl.u32 %v3502, 16
      %v3673 = vrot.slane %v3671, 4
      %v3674 = vor.u32 %v3673, %v3669
      %v3675 = vrot.slane %v3674, 4
      %v3677 = vshll.u32 %v3503, 16
      %v3679 = vrot.slane %v3677, 5
      %v3680 = vsel %vm3536, %v3675, %v3679
      %v3682 = vshrl.u32 %v3504, 16
      %v3684 = vrot.slane %v3682, 4
      %v3685 = vshll.u32 %v3504, 16
      %v3687 = vrot.slane %v3685, 5
      %v3688 = vor.u32 %v3684, %v3687
      %v3689 = vrot.slane %v3688, 4
      %v3691 = vshll.u32 %v3505, 16
      %v3693 = vrot.slane %v3691, 5
      %v3694 = vsel %vm3536, %v3689, %v3693
      %v3695 = vshrl.u32 %v3505, 16
      %v3697 = vrot.slane %v3695, 4
      %v3698 = vor.u32 %v3697, %v3693
      %v3699 = vrot.slane %v3698, 4
      %v3701 = vshll.u32 %v3506, 16
      %v3703 = vrot.slane %v3701, 5
      %v3704 = vsel %vm3536, %v3699, %v3703
      %v3706 = vshrl.u32 %v3507, 16
      %v3708 = vrot.slane %v3706, 4
      %v3709 = vshll.u32 %v3507, 16
      %v3711 = vrot.slane %v3709, 5
      %v3712 = vor.u32 %v3708, %v3711
      %v3713 = vrot.slane %v3712, 4
      %v3715 = vshll.u32 %v3508, 16
      %v3717 = vrot.slane %v3715, 5
      %v3718 = vsel %vm3536, %v3713, %v3717
      %v3719 = vshrl.u32 %v3508, 16
      %v3721 = vrot.slane %v3719, 4
      %v3722 = vor.u32 %v3721, %v3717
      %v3723 = vrot.slane %v3722, 4
      %v3725 = vshll.u32 %v3509, 16
      %v3727 = vrot.slane %v3725, 5
      %v3728 = vsel %vm3536, %v3723, %v3727
      %v3730 = vshrl.u32 %v3510, 16
      %v3732 = vrot.slane %v3730, 4
      %v3733 = vshll.u32 %v3510, 16
      %v3735 = vrot.slane %v3733, 5
      %v3736 = vor.u32 %v3732, %v3735
      %v3737 = vrot.slane %v3736, 4
      %v3739 = vshll.u32 %v3511, 16
      %v3741 = vrot.slane %v3739, 5
      %v3742 = vsel %vm3536, %v3737, %v3741
      %v3743 = vshrl.u32 %v3511, 16
      %v3745 = vrot.slane %v3743, 4
      %v3746 = vor.u32 %v3745, %v3741
      %v3747 = vrot.slane %v3746, 4
      %v3749 = vshll.u32 %v3512, 16
      %v3751 = vrot.slane %v3749, 5
      %v3752 = vsel %vm3536, %v3747, %v3751
      %v3754 = vshrl.u32 %v3513, 16
      %v3756 = vrot.slane %v3754, 4
      %v3757 = vshll.u32 %v3513, 16
      %v3759 = vrot.slane %v3757, 5
      %v3760 = vor.u32 %v3756, %v3759
      %v3761 = vrot.slane %v3760, 4
      %v3763 = vshll.u32 %v3514, 16
      %v3765 = vrot.slane %v3763, 5
      %v3766 = vsel %vm3536, %v3761, %v3765
      %v3767 = vshrl.u32 %v3514, 16
      %v3769 = vrot.slane %v3767, 4
      %v3770 = vor.u32 %v3769, %v3765
      %v3771 = vrot.slane %v3770, 4
      %v3773 = vshll.u32 %v3515, 16
      %v3775 = vrot.slane %v3773, 5
      %v3776 = vsel %vm3536, %v3771, %v3775
      %v3778 = vshrl.u32 %v3516, 16
      %v3780 = vrot.slane %v3778, 4
      %v3781 = vshll.u32 %v3516, 16
      %v3783 = vrot.slane %v3781, 5
      %v3784 = vor.u32 %v3780, %v3783
      %v3785 = vrot.slane %v3784, 4
      %v3787 = vshll.u32 %v3517, 16
      %v3789 = vrot.slane %v3787, 5
      %v3790 = vsel %vm3536, %v3785, %v3789
      %v3791 = vshrl.u32 %v3517, 16
      %v3793 = vrot.slane %v3791, 4
      %v3794 = vor.u32 %v3793, %v3789
      %v3795 = vrot.slane %v3794, 4
      %v3797 = vshll.u32 %v3518, 16
      %v3799 = vrot.slane %v3797, 5
      %v3800 = vsel %vm3536, %v3795, %v3799
      %v3802 = vshrl.u32 %v3519, 16
      %v3804 = vrot.slane %v3802, 4
      %v3805 = vshll.u32 %v3519, 16
      %v3807 = vrot.slane %v3805, 5
      %v3808 = vor.u32 %v3804, %v3807
      %v3809 = vrot.slane %v3808, 4
      %v3811 = vshll.u32 %v3520, 16
      %v3813 = vrot.slane %v3811, 5
      %v3814 = vsel %vm3536, %v3809, %v3813
      %v3815 = vshrl.u32 %v3520, 16
      %v3817 = vrot.slane %v3815, 4
      %v3818 = vor.u32 %v3817, %v3813
      %v3819 = vrot.slane %v3818, 4
      %v3821 = vshll.u32 %v3521, 16
      %v3823 = vrot.slane %v3821, 5
      %v3824 = vsel %vm3536, %v3819, %v3823
      %v3826 = vshrl.u32 %v3522, 16
      %v3828 = vrot.slane %v3826, 4
      %v3829 = vshll.u32 %v3522, 16
      %v3831 = vrot.slane %v3829, 5
      %v3832 = vor.u32 %v3828, %v3831
      %v3833 = vrot.slane %v3832, 4
      %v3835 = vshll.u32 %v3523, 16
      %v3837 = vrot.slane %v3835, 5
      %v3838 = vsel %vm3536, %v3833, %v3837
      %v3839 = vshrl.u32 %v3523, 16
      %v3841 = vrot.slane %v3839, 4
      %v3842 = vor.u32 %v3841, %v3837
      %v3843 = vrot.slane %v3842, 4
      %v3845 = vshll.u32 %v3524, 16
      %v3847 = vrot.slane %v3845, 5
      %v3848 = vsel %vm3536, %v3843, %v3847
      %v3850 = vshrl.u32 %v3525, 16
      %v3852 = vrot.slane %v3850, 4
      %v3853 = vshll.u32 %v3525, 16
      %v3855 = vrot.slane %v3853, 5
      %v3856 = vor.u32 %v3852, %v3855
      %v3857 = vrot.slane %v3856, 4
      %v3859 = vshll.u32 %v3526, 16
      %v3861 = vrot.slane %v3859, 5
      %v3862 = vsel %vm3536, %v3857, %v3861
      %v3863 = vshrl.u32 %v3526, 16
      %v3865 = vrot.slane %v3863, 4
      %v3866 = vor.u32 %v3865, %v3861
      %v3867 = vrot.slane %v3866, 4
      %v3869 = vshll.u32 %v3527, 16
      %v3871 = vrot.slane %v3869, 5
      %v3872 = vsel %vm3536, %v3867, %v3871
      %v3874 = vshrl.u32 %v3528, 16
      %v3876 = vrot.slane %v3874, 4
      %v3877 = vshll.u32 %v3528, 16
      %v3879 = vrot.slane %v3877, 5
      %v3880 = vor.u32 %v3876, %v3879
      %v3881 = vrot.slane %v3880, 4
      %v3883 = vshll.u32 %v3529, 16
      %v3885 = vrot.slane %v3883, 5
      %v3886 = vsel %vm3536, %v3881, %v3885
      %v3887 = vshrl.u32 %v3529, 16
      %v3889 = vrot.slane %v3887, 4
      %v3890 = vor.u32 %v3889, %v3885
      %v3891 = vrot.slane %v3890, 4
      %v3893 = vshll.u32 %v3530, 16
      %v3895 = vrot.slane %v3893, 5
      %v3896 = vsel %vm3536, %v3891, %v3895
      %v3898 = vshrl.u32 %v3531, 16
      %v3900 = vrot.slane %v3898, 4
      %v3901 = vshll.u32 %v3531, 16
      %v3903 = vrot.slane %v3901, 5
      %v3904 = vor.u32 %v3900, %v3903
      %v3905 = vrot.slane %v3904, 4
      %v3907 = vshll.u32 %v3532, 16
      %v3909 = vrot.slane %v3907, 5
      %v3910 = vsel %vm3536, %v3905, %v3909
      %v3911 = vshrl.u32 %v3532, 16
      %v3913 = vrot.slane %v3911, 4
      %v3914 = vor.u32 %v3913, %v3909
      %v3915 = vrot.slane %v3914, 4
      %v3917 = vshll.u32 %v3533, 16
      %v3919 = vrot.slane %v3917, 5
      %v3920 = vsel %vm3536, %v3915, %v3919
      %3921 = vrot.lane.b32.xlu0 %v3550, 8
      %v3922 = vpop.permute.xlu0 %3921
      %3923 = vrot.lane.b32.xlu0 %v3560, 8
      %v3924 = vpop.permute.xlu0 %3923
      %3925 = vrot.lane.b32.xlu0 %v3574, 8
      %v3926 = vpop.permute.xlu0 %3925
      %3927 = vrot.lane.b32.xlu0 %v3584, 8
      %v3928 = vpop.permute.xlu0 %3927
      %3929 = vrot.lane.b32.xlu0 %v3598, 8
      %v3930 = vpop.permute.xlu0 %3929
      %3931 = vrot.lane.b32.xlu0 %v3608, 8
      %v3932 = vpop.permute.xlu0 %3931
      %3933 = vrot.lane.b32.xlu0 %v3622, 8
      %v3934 = vpop.permute.xlu0 %3933
      %3935 = vrot.lane.b32.xlu0 %v3632, 8
      %v3936 = vpop.permute.xlu0 %3935
      %3937 = vrot.lane.b32.xlu0 %v3646, 8
      %v3938 = vpop.permute.xlu0 %3937
      %3939 = vrot.lane.b32.xlu0 %v3656, 8
      %v3940 = vpop.permute.xlu0 %3939
      %3941 = vrot.lane.b32.xlu0 %v3670, 8
      %v3942 = vpop.permute.xlu0 %3941
      %3943 = vrot.lane.b32.xlu0 %v3680, 8
      %v3944 = vpop.permute.xlu0 %3943
      %3945 = vrot.lane.b32.xlu0 %v3694, 8
      %v3946 = vpop.permute.xlu0 %3945
      %3947 = vrot.lane.b32.xlu0 %v3704, 8
      %v3948 = vpop.permute.xlu0 %3947
      %3949 = vrot.lane.b32.xlu0 %v3718, 8
      %v3950 = vpop.permute.xlu0 %3949
      %3951 = vrot.lane.b32.xlu0 %v3728, 8
      %v3952 = vpop.permute.xlu0 %3951
      %3953 = vrot.lane.b32.xlu0 %v3742, 8
      %v3954 = vpop.permute.xlu0 %3953
      %3955 = vrot.lane.b32.xlu0 %v3752, 8
      %v3956 = vpop.permute.xlu0 %3955
      %3957 = vrot.lane.b32.xlu0 %v3766, 8
      %v3958 = vpop.permute.xlu0 %3957
      %3959 = vrot.lane.b32.xlu0 %v3776, 8
      %v3960 = vpop.permute.xlu0 %3959
      %3961 = vrot.lane.b32.xlu0 %v3790, 8
      %v3962 = vpop.permute.xlu0 %3961
      %3963 = vrot.lane.b32.xlu0 %v3800, 8
      %v3964 = vpop.permute.xlu0 %3963
      %3965 = vrot.lane.b32.xlu0 %v3814, 8
      %v3966 = vpop.permute.xlu0 %3965
      %3967 = vrot.lane.b32.xlu0 %v3824, 8
      %v3968 = vpop.permute.xlu0 %3967
      %3969 = vrot.lane.b32.xlu0 %v3838, 8
      %v3970 = vpop.permute.xlu0 %3969
      %3971 = vrot.lane.b32.xlu0 %v3848, 8
      %v3972 = vpop.permute.xlu0 %3971
      %3973 = vrot.lane.b32.xlu0 %v3862, 8
      %v3974 = vpop.permute.xlu0 %3973
      %3975 = vrot.lane.b32.xlu0 %v3872, 8
      %v3976 = vpop.permute.xlu0 %3975
      %3977 = vrot.lane.b32.xlu0 %v3886, 8
      %v3978 = vpop.permute.xlu0 %3977
      %3979 = vrot.lane.b32.xlu0 %v3896, 8
      %v3980 = vpop.permute.xlu0 %3979
      %3981 = vrot.lane.b32.xlu0 %v3910, 8
      %v3982 = vpop.permute.xlu0 %3981
      %3983 = vrot.lane.b32.xlu0 %v3920, 8
      %v3984 = vpop.permute.xlu0 %3983
      %vm4017 = vcmask 126016
      %4018 = vst.msk [vmem:[#allocation3] sm:$0xf] %vm4017, %v3922
      %4019 = vst.msk [vmem:[#allocation3 + $0x4] sm:$0xf] %vm4017, %v3924
      %4020 = vst.msk [vmem:[#allocation3 + $0x8] sm:$0xf] %vm4017, %v3926
      %4021 = vst.msk [vmem:[#allocation3 + $0xc] sm:$0xf] %vm4017, %v3928
      %4022 = vst.msk [vmem:[#allocation3 + $0x10] sm:$0xf] %vm4017, %v3930
      %4023 = vst.msk [vmem:[#allocation3 + $0x14] sm:$0xf] %vm4017, %v3932
      %4024 = vst.msk [vmem:[#allocation3 + $0x18] sm:$0xf] %vm4017, %v3934
      %4025 = vst.msk [vmem:[#allocation3 + $0x1c] sm:$0xf] %vm4017, %v3936
      %4026 = vst.msk [vmem:[#allocation3 + $0x20] sm:$0xf] %vm4017, %v3938
      %4027 = vst.msk [vmem:[#allocation3 + $0x24] sm:$0xf] %vm4017, %v3940
      %4028 = vst.msk [vmem:[#allocation3 + $0x28] sm:$0xf] %vm4017, %v3942
      %4029 = vst.msk [vmem:[#allocation3 + $0x2c] sm:$0xf] %vm4017, %v3944
      %4030 = vst.msk [vmem:[#allocation3 + $0x30] sm:$0xf] %vm4017, %v3946
      %4031 = vst.msk [vmem:[#allocation3 + $0x34] sm:$0xf] %vm4017, %v3948
      %4032 = vst.msk [vmem:[#allocation3 + $0x38] sm:$0xf] %vm4017, %v3950
      %4033 = vst.msk [vmem:[#allocation3 + $0x3c] sm:$0xf] %vm4017, %v3952
      %4034 = vst.msk [vmem:[#allocation3 + $0x40] sm:$0xf] %vm4017, %v3954
      %4035 = vst.msk [vmem:[#allocation3 + $0x44] sm:$0xf] %vm4017, %v3956
      %4036 = vst.msk [vmem:[#allocation3 + $0x48] sm:$0xf] %vm4017, %v3958
      %4037 = vst.msk [vmem:[#allocation3 + $0x4c] sm:$0xf] %vm4017, %v3960
      %4038 = vst.msk [vmem:[#allocation3 + $0x50] sm:$0xf] %vm4017, %v3962
      %4039 = vst.msk [vmem:[#allocation3 + $0x54] sm:$0xf] %vm4017, %v3964
      %4040 = vst.msk [vmem:[#allocation3 + $0x58] sm:$0xf] %vm4017, %v3966
      %4041 = vst.msk [vmem:[#allocation3 + $0x5c] sm:$0xf] %vm4017, %v3968
      %4042 = vst.msk [vmem:[#allocation3 + $0x60] sm:$0xf] %vm4017, %v3970
      %4043 = vst.msk [vmem:[#allocation3 + $0x64] sm:$0xf] %vm4017, %v3972
      %4044 = vst.msk [vmem:[#allocation3 + $0x68] sm:$0xf] %vm4017, %v3974
      %4045 = vst.msk [vmem:[#allocation3 + $0x6c] sm:$0xf] %vm4017, %v3976
      %4046 = vst.msk [vmem:[#allocation3 + $0x70] sm:$0xf] %vm4017, %v3978
      %4047 = vst.msk [vmem:[#allocation3 + $0x74] sm:$0xf] %vm4017, %v3980
      %4048 = vst.msk [vmem:[#allocation3 + $0x78] sm:$0xf] %vm4017, %v3982
      %4049 = vst.msk [vmem:[#allocation3 + $0x7c] sm:$0xf] %vm4017, %v3984
      %v4050 = vld [vmem:[%s3420] sm:$0xe]
      %v4051 = vld [vmem:[%s3420 + $0x4] sm:$0xf]
      %v4052 = vld [vmem:[%s3420 + $0x8] sm:$0x1]
      %v4053 = vld [vmem:[%s3420 + $0xc] sm:$0xe]
      %v4054 = vld [vmem:[%s3420 + $0x10] sm:$0xf]
      %v4055 = vld [vmem:[%s3420 + $0x14] sm:$0x1]
      %v4056 = vld [vmem:[%s3420 + $0x18] sm:$0xe]
      %v4057 = vld [vmem:[%s3420 + $0x1c] sm:$0xf]
      %v4058 = vld [vmem:[%s3420 + $0x20] sm:$0x1]
      %v4059 = vld [vmem:[%s3420 + $0x24] sm:$0xe]
      %v4060 = vld [vmem:[%s3420 + $0x28] sm:$0xf]
      %v4061 = vld [vmem:[%s3420 + $0x2c] sm:$0x1]
      %v4062 = vld [vmem:[%s3420 + $0x30] sm:$0xe]
      %v4063 = vld [vmem:[%s3420 + $0x34] sm:$0xf]
      %v4064 = vld [vmem:[%s3420 + $0x38] sm:$0x1]
      %v4065 = vld [vmem:[%s3420 + $0x3c] sm:$0xe]
      %v4066 = vld [vmem:[%s3420 + $0x40] sm:$0xf]
      %v4067 = vld [vmem:[%s3420 + $0x44] sm:$0x1]
      %v4068 = vld [vmem:[%s3420 + $0x48] sm:$0xe]
      %v4069 = vld [vmem:[%s3420 + $0x4c] sm:$0xf]
      %v4070 = vld [vmem:[%s3420 + $0x50] sm:$0x1]
      %v4071 = vld [vmem:[%s3420 + $0x54] sm:$0xe]
      %v4072 = vld [vmem:[%s3420 + $0x58] sm:$0xf]
      %v4073 = vld [vmem:[%s3420 + $0x5c] sm:$0x1]
      %v4074 = vld [vmem:[%s3420 + $0x60] sm:$0xe]
      %v4075 = vld [vmem:[%s3420 + $0x64] sm:$0xf]
      %v4076 = vld [vmem:[%s3420 + $0x68] sm:$0x1]
      %v4077 = vld [vmem:[%s3420 + $0x6c] sm:$0xe]
      %v4078 = vld [vmem:[%s3420 + $0x70] sm:$0xf]
      %v4079 = vld [vmem:[%s3420 + $0x74] sm:$0x1]
      %v4080 = vld [vmem:[%s3420 + $0x78] sm:$0xe]
      %v4081 = vld [vmem:[%s3420 + $0x7c] sm:$0xf]
      %v4082 = vld [vmem:[%s3420 + $0x80] sm:$0x1]
      %v4083 = vld [vmem:[%s3420 + $0x84] sm:$0xe]
      %v4084 = vld [vmem:[%s3420 + $0x88] sm:$0xf]
      %v4085 = vld [vmem:[%s3420 + $0x8c] sm:$0x1]
      %v4086 = vld [vmem:[%s3420 + $0x90] sm:$0xe]
      %v4087 = vld [vmem:[%s3420 + $0x94] sm:$0xf]
      %v4088 = vld [vmem:[%s3420 + $0x98] sm:$0x1]
      %v4089 = vld [vmem:[%s3420 + $0x9c] sm:$0xe]
      %v4090 = vld [vmem:[%s3420 + $0xa0] sm:$0xf]
      %v4091 = vld [vmem:[%s3420 + $0xa4] sm:$0x1]
      %v4092 = vld [vmem:[%s3420 + $0xa8] sm:$0xe]
      %v4093 = vld [vmem:[%s3420 + $0xac] sm:$0xf]
      %v4094 = vld [vmem:[%s3420 + $0xb0] sm:$0x1]
      %v4095 = vld [vmem:[%s3420 + $0xb4] sm:$0xe]
      %v4096 = vld [vmem:[%s3420 + $0xb8] sm:$0xf]
      %v4097 = vld [vmem:[%s3420 + $0xbc] sm:$0x1]
      %vm4146 = vcmask 1042432
      %vm4147 = vcmask 1046532
      %vm4148 = vmor %vm4146, %vm4147
      %v4149 = vrot.slane %v4050, 5
      %v4150 = vrot.slane %v4149, 4
      %v4151 = vrot.slane %v4051, 5
      %v4152 = vsel %vm4148, %v4150, %v4151
      %v4153 = vrot.slane %v4151, 4
      %v4154 = vrot.slane %v4052, 5
      %v4155 = vsel %vm4148, %v4153, %v4154
      %v4156 = vrot.slane %v4053, 5
      %v4157 = vrot.slane %v4156, 4
      %v4158 = vrot.slane %v4054, 5
      %v4159 = vsel %vm4148, %v4157, %v4158
      %v4160 = vrot.slane %v4158, 4
      %v4161 = vrot.slane %v4055, 5
      %v4162 = vsel %vm4148, %v4160, %v4161
      %v4163 = vrot.slane %v4056, 5
      %v4164 = vrot.slane %v4163, 4
      %v4165 = vrot.slane %v4057, 5
      %v4166 = vsel %vm4148, %v4164, %v4165
      %v4167 = vrot.slane %v4165, 4
      %v4168 = vrot.slane %v4058, 5
      %v4169 = vsel %vm4148, %v4167, %v4168
      %v4170 = vrot.slane %v4059, 5
      %v4171 = vrot.slane %v4170, 4
      %v4172 = vrot.slane %v4060, 5
      %v4173 = vsel %vm4148, %v4171, %v4172
      %v4174 = vrot.slane %v4172, 4
      %v4175 = vrot.slane %v4061, 5
      %v4176 = vsel %vm4148, %v4174, %v4175
      %v4177 = vrot.slane %v4062, 5
      %v4178 = vrot.slane %v4177, 4
      %v4179 = vrot.slane %v4063, 5
      %v4180 = vsel %vm4148, %v4178, %v4179
      %v4181 = vrot.slane %v4179, 4
      %v4182 = vrot.slane %v4064, 5
      %v4183 = vsel %vm4148, %v4181, %v4182
      %v4184 = vrot.slane %v4065, 5
      %v4185 = vrot.slane %v4184, 4
      %v4186 = vrot.slane %v4066, 5
      %v4187 = vsel %vm4148, %v4185, %v4186
      %v4188 = vrot.slane %v4186, 4
      %v4189 = vrot.slane %v4067, 5
      %v4190 = vsel %vm4148, %v4188, %v4189
      %v4191 = vrot.slane %v4068, 5
      %v4192 = vrot.slane %v4191, 4
      %v4193 = vrot.slane %v4069, 5
      %v4194 = vsel %vm4148, %v4192, %v4193
      %v4195 = vrot.slane %v4193, 4
      %v4196 = vrot.slane %v4070, 5
      %v4197 = vsel %vm4148, %v4195, %v4196
      %v4198 = vrot.slane %v4071, 5
      %v4199 = vrot.slane %v4198, 4
      %v4200 = vrot.slane %v4072, 5
      %v4201 = vsel %vm4148, %v4199, %v4200
      %v4202 = vrot.slane %v4200, 4
      %v4203 = vrot.slane %v4073, 5
      %v4204 = vsel %vm4148, %v4202, %v4203
      %v4205 = vrot.slane %v4074, 5
      %v4206 = vrot.slane %v4205, 4
      %v4207 = vrot.slane %v4075, 5
      %v4208 = vsel %vm4148, %v4206, %v4207
      %v4209 = vrot.slane %v4207, 4
      %v4210 = vrot.slane %v4076, 5
      %v4211 = vsel %vm4148, %v4209, %v4210
      %v4212 = vrot.slane %v4077, 5
      %v4213 = vrot.slane %v4212, 4
      %v4214 = vrot.slane %v4078, 5
      %v4215 = vsel %vm4148, %v4213, %v4214
      %v4216 = vrot.slane %v4214, 4
      %v4217 = vrot.slane %v4079, 5
      %v4218 = vsel %vm4148, %v4216, %v4217
      %v4219 = vrot.slane %v4080, 5
      %v4220 = vrot.slane %v4219, 4
      %v4221 = vrot.slane %v4081, 5
      %v4222 = vsel %vm4148, %v4220, %v4221
      %v4223 = vrot.slane %v4221, 4
      %v4224 = vrot.slane %v4082, 5
      %v4225 = vsel %vm4148, %v4223, %v4224
      %v4226 = vrot.slane %v4083, 5
      %v4227 = vrot.slane %v4226, 4
      %v4228 = vrot.slane %v4084, 5
      %v4229 = vsel %vm4148, %v4227, %v4228
      %v4230 = vrot.slane %v4228, 4
      %v4231 = vrot.slane %v4085, 5
      %v4232 = vsel %vm4148, %v4230, %v4231
      %v4233 = vrot.slane %v4086, 5
      %v4234 = vrot.slane %v4233, 4
      %v4235 = vrot.slane %v4087, 5
      %v4236 = vsel %vm4148, %v4234, %v4235
      %v4237 = vrot.slane %v4235, 4
      %v4238 = vrot.slane %v4088, 5
      %v4239 = vsel %vm4148, %v4237, %v4238
      %v4240 = vrot.slane %v4089, 5
      %v4241 = vrot.slane %v4240, 4
      %v4242 = vrot.slane %v4090, 5
      %v4243 = vsel %vm4148, %v4241, %v4242
      %v4244 = vrot.slane %v4242, 4
      %v4245 = vrot.slane %v4091, 5
      %v4246 = vsel %vm4148, %v4244, %v4245
      %v4247 = vrot.slane %v4092, 5
      %v4248 = vrot.slane %v4247, 4
      %v4249 = vrot.slane %v4093, 5
      %v4250 = vsel %vm4148, %v4248, %v4249
      %v4251 = vrot.slane %v4249, 4
      %v4252 = vrot.slane %v4094, 5
      %v4253 = vsel %vm4148, %v4251, %v4252
      %v4254 = vrot.slane %v4095, 5
      %v4255 = vrot.slane %v4254, 4
      %v4256 = vrot.slane %v4096, 5
      %v4257 = vsel %vm4148, %v4255, %v4256
      %v4258 = vrot.slane %v4256, 4
      %v4259 = vrot.slane %v4097, 5
      %v4260 = vsel %vm4148, %v4258, %v4259
      %4261 = vrot.lane.b32.xlu0 %v4152, 16
      %v4262 = vpop.permute.xlu0 %4261
      %4263 = vrot.lane.b32.xlu0 %v4155, 16
      %v4264 = vpop.permute.xlu0 %4263
      %4265 = vrot.lane.b32.xlu0 %v4159, 16
      %v4266 = vpop.permute.xlu0 %4265
      %4267 = vrot.lane.b32.xlu0 %v4162, 16
      %v4268 = vpop.permute.xlu0 %4267
      %4269 = vrot.lane.b32.xlu0 %v4166, 16
      %v4270 = vpop.permute.xlu0 %4269
      %4271 = vrot.lane.b32.xlu0 %v4169, 16
      %v4272 = vpop.permute.xlu0 %4271
      %4273 = vrot.lane.b32.xlu0 %v4173, 16
      %v4274 = vpop.permute.xlu0 %4273
      %4275 = vrot.lane.b32.xlu0 %v4176, 16
      %v4276 = vpop.permute.xlu0 %4275
      %4277 = vrot.lane.b32.xlu0 %v4180, 16
      %v4278 = vpop.permute.xlu0 %4277
      %4279 = vrot.lane.b32.xlu0 %v4183, 16
      %v4280 = vpop.permute.xlu0 %4279
      %4281 = vrot.lane.b32.xlu0 %v4187, 16
      %v4282 = vpop.permute.xlu0 %4281
      %4283 = vrot.lane.b32.xlu0 %v4190, 16
      %v4284 = vpop.permute.xlu0 %4283
      %4285 = vrot.lane.b32.xlu0 %v4194, 16
      %v4286 = vpop.permute.xlu0 %4285
      %4287 = vrot.lane.b32.xlu0 %v4197, 16
      %v4288 = vpop.permute.xlu0 %4287
      %4289 = vrot.lane.b32.xlu0 %v4201, 16
      %v4290 = vpop.permute.xlu0 %4289
      %4291 = vrot.lane.b32.xlu0 %v4204, 16
      %v4292 = vpop.permute.xlu0 %4291
      %4293 = vrot.lane.b32.xlu0 %v4208, 16
      %v4294 = vpop.permute.xlu0 %4293
      %4295 = vrot.lane.b32.xlu0 %v4211, 16
      %v4296 = vpop.permute.xlu0 %4295
      %4297 = vrot.lane.b32.xlu0 %v4215, 16
      %v4298 = vpop.permute.xlu0 %4297
      %4299 = vrot.lane.b32.xlu0 %v4218, 16
      %v4300 = vpop.permute.xlu0 %4299
      %4301 = vrot.lane.b32.xlu0 %v4222, 16
      %v4302 = vpop.permute.xlu0 %4301
      %4303 = vrot.lane.b32.xlu0 %v4225, 16
      %v4304 = vpop.permute.xlu0 %4303
      %4305 = vrot.lane.b32.xlu0 %v4229, 16
      %v4306 = vpop.permute.xlu0 %4305
      %4307 = vrot.lane.b32.xlu0 %v4232, 16
      %v4308 = vpop.permute.xlu0 %4307
      %4309 = vrot.lane.b32.xlu0 %v4236, 16
      %v4310 = vpop.permute.xlu0 %4309
      %4311 = vrot.lane.b32.xlu0 %v4239, 16
      %v4312 = vpop.permute.xlu0 %4311
      %4313 = vrot.lane.b32.xlu0 %v4243, 16
      %v4314 = vpop.permute.xlu0 %4313
      %4315 = vrot.lane.b32.xlu0 %v4246, 16
      %v4316 = vpop.permute.xlu0 %4315
      %4317 = vrot.lane.b32.xlu0 %v4250, 16
      %v4318 = vpop.permute.xlu0 %4317
      %4319 = vrot.lane.b32.xlu0 %v4253, 16
      %v4320 = vpop.permute.xlu0 %4319
      %4321 = vrot.lane.b32.xlu0 %v4257, 16
      %v4322 = vpop.permute.xlu0 %4321
      %4323 = vrot.lane.b32.xlu0 %v4260, 16
      %v4324 = vpop.permute.xlu0 %4323
      %vm4357 = vcmask 191616
      %4358 = vst.msk [vmem:[#allocation3] sm:$0xf] %vm4357, %v4262
      %4359 = vst.msk [vmem:[#allocation3 + $0x4] sm:$0xf] %vm4357, %v4264
      %4360 = vst.msk [vmem:[#allocation3 + $0x8] sm:$0xf] %vm4357, %v4266
      %4361 = vst.msk [vmem:[#allocation3 + $0xc] sm:$0xf] %vm4357, %v4268
      %4362 = vst.msk [vmem:[#allocation3 + $0x10] sm:$0xf] %vm4357, %v4270
      %4363 = vst.msk [vmem:[#allocation3 + $0x14] sm:$0xf] %vm4357, %v4272
      %4364 = vst.msk [vmem:[#allocation3 + $0x18] sm:$0xf] %vm4357, %v4274
      %4365 = vst.msk [vmem:[#allocation3 + $0x1c] sm:$0xf] %vm4357, %v4276
      %4366 = vst.msk [vmem:[#allocation3 + $0x20] sm:$0xf] %vm4357, %v4278
      %4367 = vst.msk [vmem:[#allocation3 + $0x24] sm:$0xf] %vm4357, %v4280
      %4368 = vst.msk [vmem:[#allocation3 + $0x28] sm:$0xf] %vm4357, %v4282
      %4369 = vst.msk [vmem:[#allocation3 + $0x2c] sm:$0xf] %vm4357, %v4284
      %4370 = vst.msk [vmem:[#allocation3 + $0x30] sm:$0xf] %vm4357, %v4286
      %4371 = vst.msk [vmem:[#allocation3 + $0x34] sm:$0xf] %vm4357, %v4288
      %4372 = vst.msk [vmem:[#allocation3 + $0x38] sm:$0xf] %vm4357, %v4290
      %4373 = vst.msk [vmem:[#allocation3 + $0x3c] sm:$0xf] %vm4357, %v4292
      %4374 = vst.msk [vmem:[#allocation3 + $0x40] sm:$0xf] %vm4357, %v4294
      %4375 = vst.msk [vmem:[#allocation3 + $0x44] sm:$0xf] %vm4357, %v4296
      %4376 = vst.msk [vmem:[#allocation3 + $0x48] sm:$0xf] %vm4357, %v4298
      %4377 = vst.msk [vmem:[#allocation3 + $0x4c] sm:$0xf] %vm4357, %v4300
      %4378 = vst.msk [vmem:[#allocation3 + $0x50] sm:$0xf] %vm4357, %v4302
      %4379 = vst.msk [vmem:[#allocation3 + $0x54] sm:$0xf] %vm4357, %v4304
      %4380 = vst.msk [vmem:[#allocation3 + $0x58] sm:$0xf] %vm4357, %v4306
      %4381 = vst.msk [vmem:[#allocation3 + $0x5c] sm:$0xf] %vm4357, %v4308
      %4382 = vst.msk [vmem:[#allocation3 + $0x60] sm:$0xf] %vm4357, %v4310
      %4383 = vst.msk [vmem:[#allocation3 + $0x64] sm:$0xf] %vm4357, %v4312
      %4384 = vst.msk [vmem:[#allocation3 + $0x68] sm:$0xf] %vm4357, %v4314
      %4385 = vst.msk [vmem:[#allocation3 + $0x6c] sm:$0xf] %vm4357, %v4316
      %4386 = vst.msk [vmem:[#allocation3 + $0x70] sm:$0xf] %vm4357, %v4318
      %4387 = vst.msk [vmem:[#allocation3 + $0x74] sm:$0xf] %vm4357, %v4320
      %4388 = vst.msk [vmem:[#allocation3 + $0x78] sm:$0xf] %vm4357, %v4322
      %4389 = vst.msk [vmem:[#allocation3 + $0x7c] sm:$0xf] %vm4357, %v4324
      %s4390 = sadd.s32 %s3417, 1
      %s4391 = smul.u32 %s4390, 3
      %s4392 = smul.addr %s4391, 4
      %s4393 = scalar_lea.vmem [#allocation2], %s4392
      %v4394 = vld [vmem:[%s4393] sm:$0xf]
      %v4395 = vld [vmem:[%s4393 + $0x4] sm:$0xf]
      %v4396 = vld [vmem:[%s4393 + $0xc] sm:$0xf]
      %v4397 = vld [vmem:[%s4393 + $0x10] sm:$0xf]
      %v4398 = vld [vmem:[%s4393 + $0x18] sm:$0xf]
      %v4399 = vld [vmem:[%s4393 + $0x1c] sm:$0xf]
      %v4400 = vld [vmem:[%s4393 + $0x24] sm:$0xf]
      %v4401 = vld [vmem:[%s4393 + $0x28] sm:$0xf]
      %v4402 = vld [vmem:[%s4393 + $0x30] sm:$0xf]
      %v4403 = vld [vmem:[%s4393 + $0x34] sm:$0xf]
      %v4404 = vld [vmem:[%s4393 + $0x3c] sm:$0xf]
      %v4405 = vld [vmem:[%s4393 + $0x40] sm:$0xf]
      %v4406 = vld [vmem:[%s4393 + $0x48] sm:$0xf]
      %v4407 = vld [vmem:[%s4393 + $0x4c] sm:$0xf]
      %v4408 = vld [vmem:[%s4393 + $0x54] sm:$0xf]
      %v4409 = vld [vmem:[%s4393 + $0x58] sm:$0xf]
      %v4410 = vld [vmem:[%s4393 + $0x60] sm:$0xf]
      %v4411 = vld [vmem:[%s4393 + $0x64] sm:$0xf]
      %v4412 = vld [vmem:[%s4393 + $0x6c] sm:$0xf]
      %v4413 = vld [vmem:[%s4393 + $0x70] sm:$0xf]
      %v4414 = vld [vmem:[%s4393 + $0x78] sm:$0xf]
      %v4415 = vld [vmem:[%s4393 + $0x7c] sm:$0xf]
      %v4416 = vld [vmem:[%s4393 + $0x84] sm:$0xf]
      %v4417 = vld [vmem:[%s4393 + $0x88] sm:$0xf]
      %v4418 = vld [vmem:[%s4393 + $0x90] sm:$0xf]
      %v4419 = vld [vmem:[%s4393 + $0x94] sm:$0xf]
      %v4420 = vld [vmem:[%s4393 + $0x9c] sm:$0xf]
      %v4421 = vld [vmem:[%s4393 + $0xa0] sm:$0xf]
      %v4422 = vld [vmem:[%s4393 + $0xa8] sm:$0xf]
      %v4423 = vld [vmem:[%s4393 + $0xac] sm:$0xf]
      %v4424 = vld [vmem:[%s4393 + $0xb4] sm:$0xf]
      %v4425 = vld [vmem:[%s4393 + $0xb8] sm:$0xf]
      %4458 = vrot.lane.b32.xlu0 %v4394, 24
      %v4459 = vpop.permute.xlu0 %4458
      %4460 = vrot.lane.b32.xlu0 %v4395, 24
      %v4461 = vpop.permute.xlu0 %4460
      %4462 = vrot.lane.b32.xlu0 %v4396, 24
      %v4463 = vpop.permute.xlu0 %4462
      %4464 = vrot.lane.b32.xlu0 %v4397, 24
      %v4465 = vpop.permute.xlu0 %4464
      %4466 = vrot.lane.b32.xlu0 %v4398, 24
      %v4467 = vpop.permute.xlu0 %4466
      %4468 = vrot.lane.b32.xlu0 %v4399, 24
      %v4469 = vpop.permute.xlu0 %4468
      %4470 = vrot.lane.b32.xlu0 %v4400, 24
      %v4471 = vpop.permute.xlu0 %4470
      %4472 = vrot.lane.b32.xlu0 %v4401, 24
      %v4473 = vpop.permute.xlu0 %4472
      %4474 = vrot.lane.b32.xlu0 %v4402, 24
      %v4475 = vpop.permute.xlu0 %4474
      %4476 = vrot.lane.b32.xlu0 %v4403, 24
      %v4477 = vpop.permute.xlu0 %4476
      %4478 = vrot.lane.b32.xlu0 %v4404, 24
      %v4479 = vpop.permute.xlu0 %4478
      %4480 = vrot.lane.b32.xlu0 %v4405, 24
      %v4481 = vpop.permute.xlu0 %4480
      %4482 = vrot.lane.b32.xlu0 %v4406, 24
      %v4483 = vpop.permute.xlu0 %4482
      %4484 = vrot.lane.b32.xlu0 %v4407, 24
      %v4485 = vpop.permute.xlu0 %4484
      %4486 = vrot.lane.b32.xlu0 %v4408, 24
      %v4487 = vpop.permute.xlu0 %4486
      %4488 = vrot.lane.b32.xlu0 %v4409, 24
      %v4489 = vpop.permute.xlu0 %4488
      %4490 = vrot.lane.b32.xlu0 %v4410, 24
      %v4491 = vpop.permute.xlu0 %4490
      %4492 = vrot.lane.b32.xlu0 %v4411, 24
      %v4493 = vpop.permute.xlu0 %4492
      %4494 = vrot.lane.b32.xlu0 %v4412, 24
      %v4495 = vpop.permute.xlu0 %4494
      %4496 = vrot.lane.b32.xlu0 %v4413, 24
      %v4497 = vpop.permute.xlu0 %4496
      %4498 = vrot.lane.b32.xlu0 %v4414, 24
      %v4499 = vpop.permute.xlu0 %4498
      %4500 = vrot.lane.b32.xlu0 %v4415, 24
      %v4501 = vpop.permute.xlu0 %4500
      %4502 = vrot.lane.b32.xlu0 %v4416, 24
      %v4503 = vpop.permute.xlu0 %4502
      %4504 = vrot.lane.b32.xlu0 %v4417, 24
      %v4505 = vpop.permute.xlu0 %4504
      %4506 = vrot.lane.b32.xlu0 %v4418, 24
      %v4507 = vpop.permute.xlu0 %4506
      %4508 = vrot.lane.b32.xlu0 %v4419, 24
      %v4509 = vpop.permute.xlu0 %4508
      %4510 = vrot.lane.b32.xlu0 %v4420, 24
      %v4511 = vpop.permute.xlu0 %4510
      %4512 = vrot.lane.b32.xlu0 %v4421, 24
      %v4513 = vpop.permute.xlu0 %4512
      %4514 = vrot.lane.b32.xlu0 %v4422, 24
      %v4515 = vpop.permute.xlu0 %4514
      %4516 = vrot.lane.b32.xlu0 %v4423, 24
      %v4517 = vpop.permute.xlu0 %4516
      %4518 = vrot.lane.b32.xlu0 %v4424, 24
      %v4519 = vpop.permute.xlu0 %4518
      %4520 = vrot.lane.b32.xlu0 %v4425, 24
      %v4521 = vpop.permute.xlu0 %4520
      %vm4554 = vcmask 257216
      %4555 = vst.msk [vmem:[#allocation3] sm:$0xf] %vm4554, %v4459
      %4556 = vst.msk [vmem:[#allocation3 + $0x4] sm:$0xf] %vm4554, %v4461
      %4557 = vst.msk [vmem:[#allocation3 + $0x8] sm:$0xf] %vm4554, %v4463
      %4558 = vst.msk [vmem:[#allocation3 + $0xc] sm:$0xf] %vm4554, %v4465
      %4559 = vst.msk [vmem:[#allocation3 + $0x10] sm:$0xf] %vm4554, %v4467
      %4560 = vst.msk [vmem:[#allocation3 + $0x14] sm:$0xf] %vm4554, %v4469
      %4561 = vst.msk [vmem:[#allocation3 + $0x18] sm:$0xf] %vm4554, %v4471
      %4562 = vst.msk [vmem:[#allocation3 + $0x1c] sm:$0xf] %vm4554, %v4473
      %4563 = vst.msk [vmem:[#allocation3 + $0x20] sm:$0xf] %vm4554, %v4475
      %4564 = vst.msk [vmem:[#allocation3 + $0x24] sm:$0xf] %vm4554, %v4477
      %4565 = vst.msk [vmem:[#allocation3 + $0x28] sm:$0xf] %vm4554, %v4479
      %4566 = vst.msk [vmem:[#allocation3 + $0x2c] sm:$0xf] %vm4554, %v4481
      %4567 = vst.msk [vmem:[#allocation3 + $0x30] sm:$0xf] %vm4554, %v4483
      %4568 = vst.msk [vmem:[#allocation3 + $0x34] sm:$0xf] %vm4554, %v4485
      %4569 = vst.msk [vmem:[#allocation3 + $0x38] sm:$0xf] %vm4554, %v4487
      %4570 = vst.msk [vmem:[#allocation3 + $0x3c] sm:$0xf] %vm4554, %v4489
      %4571 = vst.msk [vmem:[#allocation3 + $0x40] sm:$0xf] %vm4554, %v4491
      %4572 = vst.msk [vmem:[#allocation3 + $0x44] sm:$0xf] %vm4554, %v4493
      %4573 = vst.msk [vmem:[#allocation3 + $0x48] sm:$0xf] %vm4554, %v4495
      %4574 = vst.msk [vmem:[#allocation3 + $0x4c] sm:$0xf] %vm4554, %v4497
      %4575 = vst.msk [vmem:[#allocation3 + $0x50] sm:$0xf] %vm4554, %v4499
      %4576 = vst.msk [vmem:[#allocation3 + $0x54] sm:$0xf] %vm4554, %v4501
      %4577 = vst.msk [vmem:[#allocation3 + $0x58] sm:$0xf] %vm4554, %v4503
      %4578 = vst.msk [vmem:[#allocation3 + $0x5c] sm:$0xf] %vm4554, %v4505
      %4579 = vst.msk [vmem:[#allocation3 + $0x60] sm:$0xf] %vm4554, %v4507
      %4580 = vst.msk [vmem:[#allocation3 + $0x64] sm:$0xf] %vm4554, %v4509
      %4581 = vst.msk [vmem:[#allocation3 + $0x68] sm:$0xf] %vm4554, %v4511
      %4582 = vst.msk [vmem:[#allocation3 + $0x6c] sm:$0xf] %vm4554, %v4513
      %4583 = vst.msk [vmem:[#allocation3 + $0x70] sm:$0xf] %vm4554, %v4515
      %4584 = vst.msk [vmem:[#allocation3 + $0x74] sm:$0xf] %vm4554, %v4517
      %4585 = vst.msk [vmem:[#allocation3 + $0x78] sm:$0xf] %vm4554, %v4519
      %4586 = vst.msk [vmem:[#allocation3 + $0x7c] sm:$0xf] %vm4554, %v4521
      %v4587 = vld [vmem:[%s4393] sm:$0xf]
      %v4588 = vld [vmem:[%s4393 + $0x4] sm:$0xf]
      %v4589 = vld [vmem:[%s4393 + $0x8] sm:$0x1]
      %v4590 = vld [vmem:[%s4393 + $0xc] sm:$0xf]
      %v4591 = vld [vmem:[%s4393 + $0x10] sm:$0xf]
      %v4592 = vld [vmem:[%s4393 + $0x14] sm:$0x1]
      %v4593 = vld [vmem:[%s4393 + $0x18] sm:$0xf]
      %v4594 = vld [vmem:[%s4393 + $0x1c] sm:$0xf]
      %v4595 = vld [vmem:[%s4393 + $0x20] sm:$0x1]
      %v4596 = vld [vmem:[%s4393 + $0x24] sm:$0xf]
      %v4597 = vld [vmem:[%s4393 + $0x28] sm:$0xf]
      %v4598 = vld [vmem:[%s4393 + $0x2c] sm:$0x1]
      %v4599 = vld [vmem:[%s4393 + $0x30] sm:$0xf]
      %v4600 = vld [vmem:[%s4393 + $0x34] sm:$0xf]
      %v4601 = vld [vmem:[%s4393 + $0x38] sm:$0x1]
      %v4602 = vld [vmem:[%s4393 + $0x3c] sm:$0xf]
      %v4603 = vld [vmem:[%s4393 + $0x40] sm:$0xf]
      %v4604 = vld [vmem:[%s4393 + $0x44] sm:$0x1]
      %v4605 = vld [vmem:[%s4393 + $0x48] sm:$0xf]
      %v4606 = vld [vmem:[%s4393 + $0x4c] sm:$0xf]
      %v4607 = vld [vmem:[%s4393 + $0x50] sm:$0x1]
      %v4608 = vld [vmem:[%s4393 + $0x54] sm:$0xf]
      %v4609 = vld [vmem:[%s4393 + $0x58] sm:$0xf]
      %v4610 = vld [vmem:[%s4393 + $0x5c] sm:$0x1]
      %v4611 = vld [vmem:[%s4393 + $0x60] sm:$0xf]
      %v4612 = vld [vmem:[%s4393 + $0x64] sm:$0xf]
      %v4613 = vld [vmem:[%s4393 + $0x68] sm:$0x1]
      %v4614 = vld [vmem:[%s4393 + $0x6c] sm:$0xf]
      %v4615 = vld [vmem:[%s4393 + $0x70] sm:$0xf]
      %v4616 = vld [vmem:[%s4393 + $0x74] sm:$0x1]
      %v4617 = vld [vmem:[%s4393 + $0x78] sm:$0xf]
      %v4618 = vld [vmem:[%s4393 + $0x7c] sm:$0xf]
      %v4619 = vld [vmem:[%s4393 + $0x80] sm:$0x1]
      %v4620 = vld [vmem:[%s4393 + $0x84] sm:$0xf]
      %v4621 = vld [vmem:[%s4393 + $0x88] sm:$0xf]
      %v4622 = vld [vmem:[%s4393 + $0x8c] sm:$0x1]
      %v4623 = vld [vmem:[%s4393 + $0x90] sm:$0xf]
      %v4624 = vld [vmem:[%s4393 + $0x94] sm:$0xf]
      %v4625 = vld [vmem:[%s4393 + $0x98] sm:$0x1]
      %v4626 = vld [vmem:[%s4393 + $0x9c] sm:$0xf]
      %v4627 = vld [vmem:[%s4393 + $0xa0] sm:$0xf]
      %v4628 = vld [vmem:[%s4393 + $0xa4] sm:$0x1]
      %v4629 = vld [vmem:[%s4393 + $0xa8] sm:$0xf]
      %v4630 = vld [vmem:[%s4393 + $0xac] sm:$0xf]
      %v4631 = vld [vmem:[%s4393 + $0xb0] sm:$0x1]
      %v4632 = vld [vmem:[%s4393 + $0xb4] sm:$0xf]
      %v4633 = vld [vmem:[%s4393 + $0xb8] sm:$0xf]
      %v4634 = vld [vmem:[%s4393 + $0xbc] sm:$0x1]
      %v4636 = vshrl.u32 %v4587, 16
      %v4638 = vrot.slane %v4636, 4
      %v4639 = vshll.u32 %v4587, 16
      %v4641 = vrot.slane %v4639, 5
      %v4642 = vor.u32 %v4638, %v4641
      %v4643 = vrot.slane %v4642, 4
      %v4645 = vshll.u32 %v4588, 16
      %v4647 = vrot.slane %v4645, 5
      %v4648 = vsel %vm3536, %v4643, %v4647
      %v4649 = vshrl.u32 %v4588, 16
      %v4651 = vrot.slane %v4649, 4
      %v4652 = vor.u32 %v4651, %v4647
      %v4653 = vrot.slane %v4652, 4
      %v4655 = vshll.u32 %v4589, 16
      %v4657 = vrot.slane %v4655, 5
      %v4658 = vsel %vm3536, %v4653, %v4657
      %v4660 = vshrl.u32 %v4590, 16
      %v4662 = vrot.slane %v4660, 4
      %v4663 = vshll.u32 %v4590, 16
      %v4665 = vrot.slane %v4663, 5
      %v4666 = vor.u32 %v4662, %v4665
      %v4667 = vrot.slane %v4666, 4
      %v4669 = vshll.u32 %v4591, 16
      %v4671 = vrot.slane %v4669, 5
      %v4672 = vsel %vm3536, %v4667, %v4671
      %v4673 = vshrl.u32 %v4591, 16
      %v4675 = vrot.slane %v4673, 4
      %v4676 = vor.u32 %v4675, %v4671
      %v4677 = vrot.slane %v4676, 4
      %v4679 = vshll.u32 %v4592, 16
      %v4681 = vrot.slane %v4679, 5
      %v4682 = vsel %vm3536, %v4677, %v4681
      %v4684 = vshrl.u32 %v4593, 16
      %v4686 = vrot.slane %v4684, 4
      %v4687 = vshll.u32 %v4593, 16
      %v4689 = vrot.slane %v4687, 5
      %v4690 = vor.u32 %v4686, %v4689
      %v4691 = vrot.slane %v4690, 4
      %v4693 = vshll.u32 %v4594, 16
      %v4695 = vrot.slane %v4693, 5
      %v4696 = vsel %vm3536, %v4691, %v4695
      %v4697 = vshrl.u32 %v4594, 16
      %v4699 = vrot.slane %v4697, 4
      %v4700 = vor.u32 %v4699, %v4695
      %v4701 = vrot.slane %v4700, 4
      %v4703 = vshll.u32 %v4595, 16
      %v4705 = vrot.slane %v4703, 5
      %v4706 = vsel %vm3536, %v4701, %v4705
      %v4708 = vshrl.u32 %v4596, 16
      %v4710 = vrot.slane %v4708, 4
      %v4711 = vshll.u32 %v4596, 16
      %v4713 = vrot.slane %v4711, 5
      %v4714 = vor.u32 %v4710, %v4713
      %v4715 = vrot.slane %v4714, 4
      %v4717 = vshll.u32 %v4597, 16
      %v4719 = vrot.slane %v4717, 5
      %v4720 = vsel %vm3536, %v4715, %v4719
      %v4721 = vshrl.u32 %v4597, 16
      %v4723 = vrot.slane %v4721, 4
      %v4724 = vor.u32 %v4723, %v4719
      %v4725 = vrot.slane %v4724, 4
      %v4727 = vshll.u32 %v4598, 16
      %v4729 = vrot.slane %v4727, 5
      %v4730 = vsel %vm3536, %v4725, %v4729
      %v4732 = vshrl.u32 %v4599, 16
      %v4734 = vrot.slane %v4732, 4
      %v4735 = vshll.u32 %v4599, 16
      %v4737 = vrot.slane %v4735, 5
      %v4738 = vor.u32 %v4734, %v4737
      %v4739 = vrot.slane %v4738, 4
      %v4741 = vshll.u32 %v4600, 16
      %v4743 = vrot.slane %v4741, 5
      %v4744 = vsel %vm3536, %v4739, %v4743
      %v4745 = vshrl.u32 %v4600, 16
      %v4747 = vrot.slane %v4745, 4
      %v4748 = vor.u32 %v4747, %v4743
      %v4749 = vrot.slane %v4748, 4
      %v4751 = vshll.u32 %v4601, 16
      %v4753 = vrot.slane %v4751, 5
      %v4754 = vsel %vm3536, %v4749, %v4753
      %v4756 = vshrl.u32 %v4602, 16
      %v4758 = vrot.slane %v4756, 4
      %v4759 = vshll.u32 %v4602, 16
      %v4761 = vrot.slane %v4759, 5
      %v4762 = vor.u32 %v4758, %v4761
      %v4763 = vrot.slane %v4762, 4
      %v4765 = vshll.u32 %v4603, 16
      %v4767 = vrot.slane %v4765, 5
      %v4768 = vsel %vm3536, %v4763, %v4767
      %v4769 = vshrl.u32 %v4603, 16
      %v4771 = vrot.slane %v4769, 4
      %v4772 = vor.u32 %v4771, %v4767
      %v4773 = vrot.slane %v4772, 4
      %v4775 = vshll.u32 %v4604, 16
      %v4777 = vrot.slane %v4775, 5
      %v4778 = vsel %vm3536, %v4773, %v4777
      %v4780 = vshrl.u32 %v4605, 16
      %v4782 = vrot.slane %v4780, 4
      %v4783 = vshll.u32 %v4605, 16
      %v4785 = vrot.slane %v4783, 5
      %v4786 = vor.u32 %v4782, %v4785
      %v4787 = vrot.slane %v4786, 4
      %v4789 = vshll.u32 %v4606, 16
      %v4791 = vrot.slane %v4789, 5
      %v4792 = vsel %vm3536, %v4787, %v4791
      %v4793 = vshrl.u32 %v4606, 16
      %v4795 = vrot.slane %v4793, 4
      %v4796 = vor.u32 %v4795, %v4791
      %v4797 = vrot.slane %v4796, 4
      %v4799 = vshll.u32 %v4607, 16
      %v4801 = vrot.slane %v4799, 5
      %v4802 = vsel %vm3536, %v4797, %v4801
      %v4804 = vshrl.u32 %v4608, 16
      %v4806 = vrot.slane %v4804, 4
      %v4807 = vshll.u32 %v4608, 16
      %v4809 = vrot.slane %v4807, 5
      %v4810 = vor.u32 %v4806, %v4809
      %v4811 = vrot.slane %v4810, 4
      %v4813 = vshll.u32 %v4609, 16
      %v4815 = vrot.slane %v4813, 5
      %v4816 = vsel %vm3536, %v4811, %v4815
      %v4817 = vshrl.u32 %v4609, 16
      %v4819 = vrot.slane %v4817, 4
      %v4820 = vor.u32 %v4819, %v4815
      %v4821 = vrot.slane %v4820, 4
      %v4823 = vshll.u32 %v4610, 16
      %v4825 = vrot.slane %v4823, 5
      %v4826 = vsel %vm3536, %v4821, %v4825
      %v4828 = vshrl.u32 %v4611, 16
      %v4830 = vrot.slane %v4828, 4
      %v4831 = vshll.u32 %v4611, 16
      %v4833 = vrot.slane %v4831, 5
      %v4834 = vor.u32 %v4830, %v4833
      %v4835 = vrot.slane %v4834, 4
      %v4837 = vshll.u32 %v4612, 16
      %v4839 = vrot.slane %v4837, 5
      %v4840 = vsel %vm3536, %v4835, %v4839
      %v4841 = vshrl.u32 %v4612, 16
      %v4843 = vrot.slane %v4841, 4
      %v4844 = vor.u32 %v4843, %v4839
      %v4845 = vrot.slane %v4844, 4
      %v4847 = vshll.u32 %v4613, 16
      %v4849 = vrot.slane %v4847, 5
      %v4850 = vsel %vm3536, %v4845, %v4849
      %v4852 = vshrl.u32 %v4614, 16
      %v4854 = vrot.slane %v4852, 4
      %v4855 = vshll.u32 %v4614, 16
      %v4857 = vrot.slane %v4855, 5
      %v4858 = vor.u32 %v4854, %v4857
      %v4859 = vrot.slane %v4858, 4
      %v4861 = vshll.u32 %v4615, 16
      %v4863 = vrot.slane %v4861, 5
      %v4864 = vsel %vm3536, %v4859, %v4863
      %v4865 = vshrl.u32 %v4615, 16
      %v4867 = vrot.slane %v4865, 4
      %v4868 = vor.u32 %v4867, %v4863
      %v4869 = vrot.slane %v4868, 4
      %v4871 = vshll.u32 %v4616, 16
      %v4873 = vrot.slane %v4871, 5
      %v4874 = vsel %vm3536, %v4869, %v4873
      %v4876 = vshrl.u32 %v4617, 16
      %v4878 = vrot.slane %v4876, 4
      %v4879 = vshll.u32 %v4617, 16
      %v4881 = vrot.slane %v4879, 5
      %v4882 = vor.u32 %v4878, %v4881
      %v4883 = vrot.slane %v4882, 4
      %v4885 = vshll.u32 %v4618, 16
      %v4887 = vrot.slane %v4885, 5
      %v4888 = vsel %vm3536, %v4883, %v4887
      %v4889 = vshrl.u32 %v4618, 16
      %v4891 = vrot.slane %v4889, 4
      %v4892 = vor.u32 %v4891, %v4887
      %v4893 = vrot.slane %v4892, 4
      %v4895 = vshll.u32 %v4619, 16
      %v4897 = vrot.slane %v4895, 5
      %v4898 = vsel %vm3536, %v4893, %v4897
      %v4900 = vshrl.u32 %v4620, 16
      %v4902 = vrot.slane %v4900, 4
      %v4903 = vshll.u32 %v4620, 16
      %v4905 = vrot.slane %v4903, 5
      %v4906 = vor.u32 %v4902, %v4905
      %v4907 = vrot.slane %v4906, 4
      %v4909 = vshll.u32 %v4621, 16
      %v4911 = vrot.slane %v4909, 5
      %v4912 = vsel %vm3536, %v4907, %v4911
      %v4913 = vshrl.u32 %v4621, 16
      %v4915 = vrot.slane %v4913, 4
      %v4916 = vor.u32 %v4915, %v4911
      %v4917 = vrot.slane %v4916, 4
      %v4919 = vshll.u32 %v4622, 16
      %v4921 = vrot.slane %v4919, 5
      %v4922 = vsel %vm3536, %v4917, %v4921
      %v4924 = vshrl.u32 %v4623, 16
      %v4926 = vrot.slane %v4924, 4
      %v4927 = vshll.u32 %v4623, 16
      %v4929 = vrot.slane %v4927, 5
      %v4930 = vor.u32 %v4926, %v4929
      %v4931 = vrot.slane %v4930, 4
      %v4933 = vshll.u32 %v4624, 16
      %v4935 = vrot.slane %v4933, 5
      %v4936 = vsel %vm3536, %v4931, %v4935
      %v4937 = vshrl.u32 %v4624, 16
      %v4939 = vrot.slane %v4937, 4
      %v4940 = vor.u32 %v4939, %v4935
      %v4941 = vrot.slane %v4940, 4
      %v4943 = vshll.u32 %v4625, 16
      %v4945 = vrot.slane %v4943, 5
      %v4946 = vsel %vm3536, %v4941, %v4945
      %v4948 = vshrl.u32 %v4626, 16
      %v4950 = vrot.slane %v4948, 4
      %v4951 = vshll.u32 %v4626, 16
      %v4953 = vrot.slane %v4951, 5
      %v4954 = vor.u32 %v4950, %v4953
      %v4955 = vrot.slane %v4954, 4
      %v4957 = vshll.u32 %v4627, 16
      %v4959 = vrot.slane %v4957, 5
      %v4960 = vsel %vm3536, %v4955, %v4959
      %v4961 = vshrl.u32 %v4627, 16
      %v4963 = vrot.slane %v4961, 4
      %v4964 = vor.u32 %v4963, %v4959
      %v4965 = vrot.slane %v4964, 4
      %v4967 = vshll.u32 %v4628, 16
      %v4969 = vrot.slane %v4967, 5
      %v4970 = vsel %vm3536, %v4965, %v4969
      %v4972 = vshrl.u32 %v4629, 16
      %v4974 = vrot.slane %v4972, 4
      %v4975 = vshll.u32 %v4629, 16
      %v4977 = vrot.slane %v4975, 5
      %v4978 = vor.u32 %v4974, %v4977
      %v4979 = vrot.slane %v4978, 4
      %v4981 = vshll.u32 %v4630, 16
      %v4983 = vrot.slane %v4981, 5
      %v4984 = vsel %vm3536, %v4979, %v4983
      %v4985 = vshrl.u32 %v4630, 16
      %v4987 = vrot.slane %v4985, 4
      %v4988 = vor.u32 %v4987, %v4983
      %v4989 = vrot.slane %v4988, 4
      %v4991 = vshll.u32 %v4631, 16
      %v4993 = vrot.slane %v4991, 5
      %v4994 = vsel %vm3536, %v4989, %v4993
      %v4996 = vshrl.u32 %v4632, 16
      %v4998 = vrot.slane %v4996, 4
      %v4999 = vshll.u32 %v4632, 16
      %v5001 = vrot.slane %v4999, 5
      %v5002 = vor.u32 %v4998, %v5001
      %v5003 = vrot.slane %v5002, 4
      %v5005 = vshll.u32 %v4633, 16
      %v5007 = vrot.slane %v5005, 5
      %v5008 = vsel %vm3536, %v5003, %v5007
      %v5009 = vshrl.u32 %v4633, 16
      %v5011 = vrot.slane %v5009, 4
      %v5012 = vor.u32 %v5011, %v5007
      %v5013 = vrot.slane %v5012, 4
      %v5015 = vshll.u32 %v4634, 16
      %v5017 = vrot.slane %v5015, 5
      %v5018 = vsel %vm3536, %v5013, %v5017
      %5019 = vrot.lane.b32.xlu0 %v4648, 32
      %v5020 = vpop.permute.xlu0 %5019
      %5021 = vrot.lane.b32.xlu0 %v4658, 32
      %v5022 = vpop.permute.xlu0 %5021
      %5023 = vrot.lane.b32.xlu0 %v4672, 32
      %v5024 = vpop.permute.xlu0 %5023
      %5025 = vrot.lane.b32.xlu0 %v4682, 32
      %v5026 = vpop.permute.xlu0 %5025
      %5027 = vrot.lane.b32.xlu0 %v4696, 32
      %v5028 = vpop.permute.xlu0 %5027
      %5029 = vrot.lane.b32.xlu0 %v4706, 32
      %v5030 = vpop.permute.xlu0 %5029
      %5031 = vrot.lane.b32.xlu0 %v4720, 32
      %v5032 = vpop.permute.xlu0 %5031
      %5033 = vrot.lane.b32.xlu0 %v4730, 32
      %v5034 = vpop.permute.xlu0 %5033
      %5035 = vrot.lane.b32.xlu0 %v4744, 32
      %v5036 = vpop.permute.xlu0 %5035
      %5037 = vrot.lane.b32.xlu0 %v4754, 32
      %v5038 = vpop.permute.xlu0 %5037
      %5039 = vrot.lane.b32.xlu0 %v4768, 32
      %v5040 = vpop.permute.xlu0 %5039
      %5041 = vrot.lane.b32.xlu0 %v4778, 32
      %v5042 = vpop.permute.xlu0 %5041
      %5043 = vrot.lane.b32.xlu0 %v4792, 32
      %v5044 = vpop.permute.xlu0 %5043
      %5045 = vrot.lane.b32.xlu0 %v4802, 32
      %v5046 = vpop.permute.xlu0 %5045
      %5047 = vrot.lane.b32.xlu0 %v4816, 32
      %v5048 = vpop.permute.xlu0 %5047
      %5049 = vrot.lane.b32.xlu0 %v4826, 32
      %v5050 = vpop.permute.xlu0 %5049
      %5051 = vrot.lane.b32.xlu0 %v4840, 32
      %v5052 = vpop.permute.xlu0 %5051
      %5053 = vrot.lane.b32.xlu0 %v4850, 32
      %v5054 = vpop.permute.xlu0 %5053
      %5055 = vrot.lane.b32.xlu0 %v4864, 32
      %v5056 = vpop.permute.xlu0 %5055
      %5057 = vrot.lane.b32.xlu0 %v4874, 32
      %v5058 = vpop.permute.xlu0 %5057
      %5059 = vrot.lane.b32.xlu0 %v4888, 32
      %v5060 = vpop.permute.xlu0 %5059
      %5061 = vrot.lane.b32.xlu0 %v4898, 32
      %v5062 = vpop.permute.xlu0 %5061
      %5063 = vrot.lane.b32.xlu0 %v4912, 32
      %v5064 = vpop.permute.xlu0 %5063
      %5065 = vrot.lane.b32.xlu0 %v4922, 32
      %v5066 = vpop.permute.xlu0 %5065
      %5067 = vrot.lane.b32.xlu0 %v4936, 32
      %v5068 = vpop.permute.xlu0 %5067
      %5069 = vrot.lane.b32.xlu0 %v4946, 32
      %v5070 = vpop.permute.xlu0 %5069
      %5071 = vrot.lane.b32.xlu0 %v4960, 32
      %v5072 = vpop.permute.xlu0 %5071
      %5073 = vrot.lane.b32.xlu0 %v4970, 32
      %v5074 = vpop.permute.xlu0 %5073
      %5075 = vrot.lane.b32.xlu0 %v4984, 32
      %v5076 = vpop.permute.xlu0 %5075
      %5077 = vrot.lane.b32.xlu0 %v4994, 32
      %v5078 = vpop.permute.xlu0 %5077
      %5079 = vrot.lane.b32.xlu0 %v5008, 32
      %v5080 = vpop.permute.xlu0 %5079
      %5081 = vrot.lane.b32.xlu0 %v5018, 32
      %v5082 = vpop.permute.xlu0 %5081
      %vm5115 = vcmask 322816
      %5116 = vst.msk [vmem:[#allocation3] sm:$0xf] %vm5115, %v5020
      %5117 = vst.msk [vmem:[#allocation3 + $0x4] sm:$0xf] %vm5115, %v5022
      %5118 = vst.msk [vmem:[#allocation3 + $0x8] sm:$0xf] %vm5115, %v5024
      %5119 = vst.msk [vmem:[#allocation3 + $0xc] sm:$0xf] %vm5115, %v5026
      %5120 = vst.msk [vmem:[#allocation3 + $0x10] sm:$0xf] %vm5115, %v5028
      %5121 = vst.msk [vmem:[#allocation3 + $0x14] sm:$0xf] %vm5115, %v5030
      %5122 = vst.msk [vmem:[#allocation3 + $0x18] sm:$0xf] %vm5115, %v5032
      %5123 = vst.msk [vmem:[#allocation3 + $0x1c] sm:$0xf] %vm5115, %v5034
      %5124 = vst.msk [vmem:[#allocation3 + $0x20] sm:$0xf] %vm5115, %v5036
      %5125 = vst.msk [vmem:[#allocation3 + $0x24] sm:$0xf] %vm5115, %v5038
      %5126 = vst.msk [vmem:[#allocation3 + $0x28] sm:$0xf] %vm5115, %v5040
      %5127 = vst.msk [vmem:[#allocation3 + $0x2c] sm:$0xf] %vm5115, %v5042
      %5128 = vst.msk [vmem:[#allocation3 + $0x30] sm:$0xf] %vm5115, %v5044
      %5129 = vst.msk [vmem:[#allocation3 + $0x34] sm:$0xf] %vm5115, %v5046
      %5130 = vst.msk [vmem:[#allocation3 + $0x38] sm:$0xf] %vm5115, %v5048
      %5131 = vst.msk [vmem:[#allocation3 + $0x3c] sm:$0xf] %vm5115, %v5050
      %5132 = vst.msk [vmem:[#allocation3 + $0x40] sm:$0xf] %vm5115, %v5052
      %5133 = vst.msk [vmem:[#allocation3 + $0x44] sm:$0xf] %vm5115, %v5054
      %5134 = vst.msk [vmem:[#allocation3 + $0x48] sm:$0xf] %vm5115, %v5056
      %5135 = vst.msk [vmem:[#allocation3 + $0x4c] sm:$0xf] %vm5115, %v5058
      %5136 = vst.msk [vmem:[#allocation3 + $0x50] sm:$0xf] %vm5115, %v5060
      %5137 = vst.msk [vmem:[#allocation3 + $0x54] sm:$0xf] %vm5115, %v5062
      %5138 = vst.msk [vmem:[#allocation3 + $0x58] sm:$0xf] %vm5115, %v5064
      %5139 = vst.msk [vmem:[#allocation3 + $0x5c] sm:$0xf] %vm5115, %v5066
      %5140 = vst.msk [vmem:[#allocation3 + $0x60] sm:$0xf] %vm5115, %v5068
      %5141 = vst.msk [vmem:[#allocation3 + $0x64] sm:$0xf] %vm5115, %v5070
      %5142 = vst.msk [vmem:[#allocation3 + $0x68] sm:$0xf] %vm5115, %v5072
      %5143 = vst.msk [vmem:[#allocation3 + $0x6c] sm:$0xf] %vm5115, %v5074
      %5144 = vst.msk [vmem:[#allocation3 + $0x70] sm:$0xf] %vm5115, %v5076
      %5145 = vst.msk [vmem:[#allocation3 + $0x74] sm:$0xf] %vm5115, %v5078
      %5146 = vst.msk [vmem:[#allocation3 + $0x78] sm:$0xf] %vm5115, %v5080
      %5147 = vst.msk [vmem:[#allocation3 + $0x7c] sm:$0xf] %vm5115, %v5082
      %v5148 = vld [vmem:[%s4393] sm:$0xe]
      %v5149 = vld [vmem:[%s4393 + $0x4] sm:$0xf]
      %v5150 = vld [vmem:[%s4393 + $0x8] sm:$0x1]
      %v5151 = vld [vmem:[%s4393 + $0xc] sm:$0xe]
      %v5152 = vld [vmem:[%s4393 + $0x10] sm:$0xf]
      %v5153 = vld [vmem:[%s4393 + $0x14] sm:$0x1]
      %v5154 = vld [vmem:[%s4393 + $0x18] sm:$0xe]
      %v5155 = vld [vmem:[%s4393 + $0x1c] sm:$0xf]
      %v5156 = vld [vmem:[%s4393 + $0x20] sm:$0x1]
      %v5157 = vld [vmem:[%s4393 + $0x24] sm:$0xe]
      %v5158 = vld [vmem:[%s4393 + $0x28] sm:$0xf]
      %v5159 = vld [vmem:[%s4393 + $0x2c] sm:$0x1]
      %v5160 = vld [vmem:[%s4393 + $0x30] sm:$0xe]
      %v5161 = vld [vmem:[%s4393 + $0x34] sm:$0xf]
      %v5162 = vld [vmem:[%s4393 + $0x38] sm:$0x1]
      %v5163 = vld [vmem:[%s4393 + $0x3c] sm:$0xe]
      %v5164 = vld [vmem:[%s4393 + $0x40] sm:$0xf]
      %v5165 = vld [vmem:[%s4393 + $0x44] sm:$0x1]
      %v5166 = vld [vmem:[%s4393 + $0x48] sm:$0xe]
      %v5167 = vld [vmem:[%s4393 + $0x4c] sm:$0xf]
      %v5168 = vld [vmem:[%s4393 + $0x50] sm:$0x1]
      %v5169 = vld [vmem:[%s4393 + $0x54] sm:$0xe]
      %v5170 = vld [vmem:[%s4393 + $0x58] sm:$0xf]
      %v5171 = vld [vmem:[%s4393 + $0x5c] sm:$0x1]
      %v5172 = vld [vmem:[%s4393 + $0x60] sm:$0xe]
      %v5173 = vld [vmem:[%s4393 + $0x64] sm:$0xf]
      %v5174 = vld [vmem:[%s4393 + $0x68] sm:$0x1]
      %v5175 = vld [vmem:[%s4393 + $0x6c] sm:$0xe]
      %v5176 = vld [vmem:[%s4393 + $0x70] sm:$0xf]
      %v5177 = vld [vmem:[%s4393 + $0x74] sm:$0x1]
      %v5178 = vld [vmem:[%s4393 + $0x78] sm:$0xe]
      %v5179 = vld [vmem:[%s4393 + $0x7c] sm:$0xf]
      %v5180 = vld [vmem:[%s4393 + $0x80] sm:$0x1]
      %v5181 = vld [vmem:[%s4393 + $0x84] sm:$0xe]
      %v5182 = vld [vmem:[%s4393 + $0x88] sm:$0xf]
      %v5183 = vld [vmem:[%s4393 + $0x8c] sm:$0x1]
      %v5184 = vld [vmem:[%s4393 + $0x90] sm:$0xe]
      %v5185 = vld [vmem:[%s4393 + $0x94] sm:$0xf]
      %v5186 = vld [vmem:[%s4393 + $0x98] sm:$0x1]
      %v5187 = vld [vmem:[%s4393 + $0x9c] sm:$0xe]
      %v5188 = vld [vmem:[%s4393 + $0xa0] sm:$0xf]
      %v5189 = vld [vmem:[%s4393 + $0xa4] sm:$0x1]
      %v5190 = vld [vmem:[%s4393 + $0xa8] sm:$0xe]
      %v5191 = vld [vmem:[%s4393 + $0xac] sm:$0xf]
      %v5192 = vld [vmem:[%s4393 + $0xb0] sm:$0x1]
      %v5193 = vld [vmem:[%s4393 + $0xb4] sm:$0xe]
      %v5194 = vld [vmem:[%s4393 + $0xb8] sm:$0xf]
      %v5195 = vld [vmem:[%s4393 + $0xbc] sm:$0x1]
      %v5244 = vrot.slane %v5148, 5
      %v5245 = vrot.slane %v5244, 4
      %v5246 = vrot.slane %v5149, 5
      %v5247 = vsel %vm4148, %v5245, %v5246
      %v5248 = vrot.slane %v5246, 4
      %v5249 = vrot.slane %v5150, 5
      %v5250 = vsel %vm4148, %v5248, %v5249
      %v5251 = vrot.slane %v5151, 5
      %v5252 = vrot.slane %v5251, 4
      %v5253 = vrot.slane %v5152, 5
      %v5254 = vsel %vm4148, %v5252, %v5253
      %v5255 = vrot.slane %v5253, 4
      %v5256 = vrot.slane %v5153, 5
      %v5257 = vsel %vm4148, %v5255, %v5256
      %v5258 = vrot.slane %v5154, 5
      %v5259 = vrot.slane %v5258, 4
      %v5260 = vrot.slane %v5155, 5
      %v5261 = vsel %vm4148, %v5259, %v5260
      %v5262 = vrot.slane %v5260, 4
      %v5263 = vrot.slane %v5156, 5
      %v5264 = vsel %vm4148, %v5262, %v5263
      %v5265 = vrot.slane %v5157, 5
      %v5266 = vrot.slane %v5265, 4
      %v5267 = vrot.slane %v5158, 5
      %v5268 = vsel %vm4148, %v5266, %v5267
      %v5269 = vrot.slane %v5267, 4
      %v5270 = vrot.slane %v5159, 5
      %v5271 = vsel %vm4148, %v5269, %v5270
      %v5272 = vrot.slane %v5160, 5
      %v5273 = vrot.slane %v5272, 4
      %v5274 = vrot.slane %v5161, 5
      %v5275 = vsel %vm4148, %v5273, %v5274
      %v5276 = vrot.slane %v5274, 4
      %v5277 = vrot.slane %v5162, 5
      %v5278 = vsel %vm4148, %v5276, %v5277
      %v5279 = vrot.slane %v5163, 5
      %v5280 = vrot.slane %v5279, 4
      %v5281 = vrot.slane %v5164, 5
      %v5282 = vsel %vm4148, %v5280, %v5281
      %v5283 = vrot.slane %v5281, 4
      %v5284 = vrot.slane %v5165, 5
      %v5285 = vsel %vm4148, %v5283, %v5284
      %v5286 = vrot.slane %v5166, 5
      %v5287 = vrot.slane %v5286, 4
      %v5288 = vrot.slane %v5167, 5
      %v5289 = vsel %vm4148, %v5287, %v5288
      %v5290 = vrot.slane %v5288, 4
      %v5291 = vrot.slane %v5168, 5
      %v5292 = vsel %vm4148, %v5290, %v5291
      %v5293 = vrot.slane %v5169, 5
      %v5294 = vrot.slane %v5293, 4
      %v5295 = vrot.slane %v5170, 5
      %v5296 = vsel %vm4148, %v5294, %v5295
      %v5297 = vrot.slane %v5295, 4
      %v5298 = vrot.slane %v5171, 5
      %v5299 = vsel %vm4148, %v5297, %v5298
      %v5300 = vrot.slane %v5172, 5
      %v5301 = vrot.slane %v5300, 4
      %v5302 = vrot.slane %v5173, 5
      %v5303 = vsel %vm4148, %v5301, %v5302
      %v5304 = vrot.slane %v5302, 4
      %v5305 = vrot.slane %v5174, 5
      %v5306 = vsel %vm4148, %v5304, %v5305
      %v5307 = vrot.slane %v5175, 5
      %v5308 = vrot.slane %v5307, 4
      %v5309 = vrot.slane %v5176, 5
      %v5310 = vsel %vm4148, %v5308, %v5309
      %v5311 = vrot.slane %v5309, 4
      %v5312 = vrot.slane %v5177, 5
      %v5313 = vsel %vm4148, %v5311, %v5312
      %v5314 = vrot.slane %v5178, 5
      %v5315 = vrot.slane %v5314, 4
      %v5316 = vrot.slane %v5179, 5
      %v5317 = vsel %vm4148, %v5315, %v5316
      %v5318 = vrot.slane %v5316, 4
      %v5319 = vrot.slane %v5180, 5
      %v5320 = vsel %vm4148, %v5318, %v5319
      %v5321 = vrot.slane %v5181, 5
      %v5322 = vrot.slane %v5321, 4
      %v5323 = vrot.slane %v5182, 5
      %v5324 = vsel %vm4148, %v5322, %v5323
      %v5325 = vrot.slane %v5323, 4
      %v5326 = vrot.slane %v5183, 5
      %v5327 = vsel %vm4148, %v5325, %v5326
      %v5328 = vrot.slane %v5184, 5
      %v5329 = vrot.slane %v5328, 4
      %v5330 = vrot.slane %v5185, 5
      %v5331 = vsel %vm4148, %v5329, %v5330
      %v5332 = vrot.slane %v5330, 4
      %v5333 = vrot.slane %v5186, 5
      %v5334 = vsel %vm4148, %v5332, %v5333
      %v5335 = vrot.slane %v5187, 5
      %v5336 = vrot.slane %v5335, 4
      %v5337 = vrot.slane %v5188, 5
      %v5338 = vsel %vm4148, %v5336, %v5337
      %v5339 = vrot.slane %v5337, 4
      %v5340 = vrot.slane %v5189, 5
      %v5341 = vsel %vm4148, %v5339, %v5340
      %v5342 = vrot.slane %v5190, 5
      %v5343 = vrot.slane %v5342, 4
      %v5344 = vrot.slane %v5191, 5
      %v5345 = vsel %vm4148, %v5343, %v5344
      %v5346 = vrot.slane %v5344, 4
      %v5347 = vrot.slane %v5192, 5
      %v5348 = vsel %vm4148, %v5346, %v5347
      %v5349 = vrot.slane %v5193, 5
      %v5350 = vrot.slane %v5349, 4
      %v5351 = vrot.slane %v5194, 5
      %v5352 = vsel %vm4148, %v5350, %v5351
      %v5353 = vrot.slane %v5351, 4
      %v5354 = vrot.slane %v5195, 5
      %v5355 = vsel %vm4148, %v5353, %v5354
      %5356 = vrot.lane.b32.xlu0 %v5247, 40
      %v5357 = vpop.permute.xlu0 %5356
      %5358 = vrot.lane.b32.xlu0 %v5250, 40
      %v5359 = vpop.permute.xlu0 %5358
      %5360 = vrot.lane.b32.xlu0 %v5254, 40
      %v5361 = vpop.permute.xlu0 %5360
      %5362 = vrot.lane.b32.xlu0 %v5257, 40
      %v5363 = vpop.permute.xlu0 %5362
      %5364 = vrot.lane.b32.xlu0 %v5261, 40
      %v5365 = vpop.permute.xlu0 %5364
      %5366 = vrot.lane.b32.xlu0 %v5264, 40
      %v5367 = vpop.permute.xlu0 %5366
      %5368 = vrot.lane.b32.xlu0 %v5268, 40
      %v5369 = vpop.permute.xlu0 %5368
      %5370 = vrot.lane.b32.xlu0 %v5271, 40
      %v5371 = vpop.permute.xlu0 %5370
      %5372 = vrot.lane.b32.xlu0 %v5275, 40
      %v5373 = vpop.permute.xlu0 %5372
      %5374 = vrot.lane.b32.xlu0 %v5278, 40
      %v5375 = vpop.permute.xlu0 %5374
      %5376 = vrot.lane.b32.xlu0 %v5282, 40
      %v5377 = vpop.permute.xlu0 %5376
      %5378 = vrot.lane.b32.xlu0 %v5285, 40
      %v5379 = vpop.permute.xlu0 %5378
      %5380 = vrot.lane.b32.xlu0 %v5289, 40
      %v5381 = vpop.permute.xlu0 %5380
      %5382 = vrot.lane.b32.xlu0 %v5292, 40
      %v5383 = vpop.permute.xlu0 %5382
      %5384 = vrot.lane.b32.xlu0 %v5296, 40
      %v5385 = vpop.permute.xlu0 %5384
      %5386 = vrot.lane.b32.xlu0 %v5299, 40
      %v5387 = vpop.permute.xlu0 %5386
      %5388 = vrot.lane.b32.xlu0 %v5303, 40
      %v5389 = vpop.permute.xlu0 %5388
      %5390 = vrot.lane.b32.xlu0 %v5306, 40
      %v5391 = vpop.permute.xlu0 %5390
      %5392 = vrot.lane.b32.xlu0 %v5310, 40
      %v5393 = vpop.permute.xlu0 %5392
      %5394 = vrot.lane.b32.xlu0 %v5313, 40
      %v5395 = vpop.permute.xlu0 %5394
      %5396 = vrot.lane.b32.xlu0 %v5317, 40
      %v5397 = vpop.permute.xlu0 %5396
      %5398 = vrot.lane.b32.xlu0 %v5320, 40
      %v5399 = vpop.permute.xlu0 %5398
      %5400 = vrot.lane.b32.xlu0 %v5324, 40
      %v5401 = vpop.permute.xlu0 %5400
      %5402 = vrot.lane.b32.xlu0 %v5327, 40
      %v5403 = vpop.permute.xlu0 %5402
      %5404 = vrot.lane.b32.xlu0 %v5331, 40
      %v5405 = vpop.permute.xlu0 %5404
      %5406 = vrot.lane.b32.xlu0 %v5334, 40
      %v5407 = vpop.permute.xlu0 %5406
      %5408 = vrot.lane.b32.xlu0 %v5338, 40
      %v5409 = vpop.permute.xlu0 %5408
      %5410 = vrot.lane.b32.xlu0 %v5341, 40
      %v5411 = vpop.permute.xlu0 %5410
      %5412 = vrot.lane.b32.xlu0 %v5345, 40
      %v5413 = vpop.permute.xlu0 %5412
      %5414 = vrot.lane.b32.xlu0 %v5348, 40
      %v5415 = vpop.permute.xlu0 %5414
      %5416 = vrot.lane.b32.xlu0 %v5352, 40
      %v5417 = vpop.permute.xlu0 %5416
      %5418 = vrot.lane.b32.xlu0 %v5355, 40
      %v5419 = vpop.permute.xlu0 %5418
      %vm5452 = vcmask 388416
      %5453 = vst.msk [vmem:[#allocation3] sm:$0xf] %vm5452, %v5357
      %5454 = vst.msk [vmem:[#allocation3 + $0x4] sm:$0xf] %vm5452, %v5359
      %5455 = vst.msk [vmem:[#allocation3 + $0x8] sm:$0xf] %vm5452, %v5361
      %5456 = vst.msk [vmem:[#allocation3 + $0xc] sm:$0xf] %vm5452, %v5363
      %5457 = vst.msk [vmem:[#allocation3 + $0x10] sm:$0xf] %vm5452, %v5365
      %5458 = vst.msk [vmem:[#allocation3 + $0x14] sm:$0xf] %vm5452, %v5367
      %5459 = vst.msk [vmem:[#allocation3 + $0x18] sm:$0xf] %vm5452, %v5369
      %5460 = vst.msk [vmem:[#allocation3 + $0x1c] sm:$0xf] %vm5452, %v5371
      %5461 = vst.msk [vmem:[#allocation3 + $0x20] sm:$0xf] %vm5452, %v5373
      %5462 = vst.msk [vmem:[#allocation3 + $0x24] sm:$0xf] %vm5452, %v5375
      %5463 = vst.msk [vmem:[#allocation3 + $0x28] sm:$0xf] %vm5452, %v5377
      %5464 = vst.msk [vmem:[#allocation3 + $0x2c] sm:$0xf] %vm5452, %v5379
      %5465 = vst.msk [vmem:[#allocation3 + $0x30] sm:$0xf] %vm5452, %v5381
      %5466 = vst.msk [vmem:[#allocation3 + $0x34] sm:$0xf] %vm5452, %v5383
      %5467 = vst.msk [vmem:[#allocation3 + $0x38] sm:$0xf] %vm5452, %v5385
      %5468 = vst.msk [vmem:[#allocation3 + $0x3c] sm:$0xf] %vm5452, %v5387
      %5469 = vst.msk [vmem:[#allocation3 + $0x40] sm:$0xf] %vm5452, %v5389
      %5470 = vst.msk [vmem:[#allocation3 + $0x44] sm:$0xf] %vm5452, %v5391
      %5471 = vst.msk [vmem:[#allocation3 + $0x48] sm:$0xf] %vm5452, %v5393
      %5472 = vst.msk [vmem:[#allocation3 + $0x4c] sm:$0xf] %vm5452, %v5395
      %5473 = vst.msk [vmem:[#allocation3 + $0x50] sm:$0xf] %vm5452, %v5397
      %5474 = vst.msk [vmem:[#allocation3 + $0x54] sm:$0xf] %vm5452, %v5399
      %5475 = vst.msk [vmem:[#allocation3 + $0x58] sm:$0xf] %vm5452, %v5401
      %5476 = vst.msk [vmem:[#allocation3 + $0x5c] sm:$0xf] %vm5452, %v5403
      %5477 = vst.msk [vmem:[#allocation3 + $0x60] sm:$0xf] %vm5452, %v5405
      %5478 = vst.msk [vmem:[#allocation3 + $0x64] sm:$0xf] %vm5452, %v5407
      %5479 = vst.msk [vmem:[#allocation3 + $0x68] sm:$0xf] %vm5452, %v5409
      %5480 = vst.msk [vmem:[#allocation3 + $0x6c] sm:$0xf] %vm5452, %v5411
      %5481 = vst.msk [vmem:[#allocation3 + $0x70] sm:$0xf] %vm5452, %v5413
      %5482 = vst.msk [vmem:[#allocation3 + $0x74] sm:$0xf] %vm5452, %v5415
      %5483 = vst.msk [vmem:[#allocation3 + $0x78] sm:$0xf] %vm5452, %v5417
      %5484 = vst.msk [vmem:[#allocation3 + $0x7c] sm:$0xf] %vm5452, %v5419
      %s5485 = sadd.s32 %s3417, 2
      %s5486 = smul.u32 %s5485, 3
      %s5487 = smul.addr %s5486, 4
      %s5488 = scalar_lea.vmem [#allocation2], %s5487
      %v5489 = vld [vmem:[%s5488] sm:$0xf]
      %v5490 = vld [vmem:[%s5488 + $0x4] sm:$0xf]
      %v5491 = vld [vmem:[%s5488 + $0xc] sm:$0xf]
      %v5492 = vld [vmem:[%s5488 + $0x10] sm:$0xf]
      %v5493 = vld [vmem:[%s5488 + $0x18] sm:$0xf]
      %v5494 = vld [vmem:[%s5488 + $0x1c] sm:$0xf]
      %v5495 = vld [vmem:[%s5488 + $0x24] sm:$0xf]
      %v5496 = vld [vmem:[%s5488 + $0x28] sm:$0xf]
      %v5497 = vld [vmem:[%s5488 + $0x30] sm:$0xf]
      %v5498 = vld [vmem:[%s5488 + $0x34] sm:$0xf]
      %v5499 = vld [vmem:[%s5488 + $0x3c] sm:$0xf]
      %v5500 = vld [vmem:[%s5488 + $0x40] sm:$0xf]
      %v5501 = vld [vmem:[%s5488 + $0x48] sm:$0xf]
      %v5502 = vld [vmem:[%s5488 + $0x4c] sm:$0xf]
      %v5503 = vld [vmem:[%s5488 + $0x54] sm:$0xf]
      %v5504 = vld [vmem:[%s5488 + $0x58] sm:$0xf]
      %v5505 = vld [vmem:[%s5488 + $0x60] sm:$0xf]
      %v5506 = vld [vmem:[%s5488 + $0x64] sm:$0xf]
      %v5507 = vld [vmem:[%s5488 + $0x6c] sm:$0xf]
      %v5508 = vld [vmem:[%s5488 + $0x70] sm:$0xf]
      %v5509 = vld [vmem:[%s5488 + $0x78] sm:$0xf]
      %v5510 = vld [vmem:[%s5488 + $0x7c] sm:$0xf]
      %v5511 = vld [vmem:[%s5488 + $0x84] sm:$0xf]
      %v5512 = vld [vmem:[%s5488 + $0x88] sm:$0xf]
      %v5513 = vld [vmem:[%s5488 + $0x90] sm:$0xf]
      %v5514 = vld [vmem:[%s5488 + $0x94] sm:$0xf]
      %v5515 = vld [vmem:[%s5488 + $0x9c] sm:$0xf]
      %v5516 = vld [vmem:[%s5488 + $0xa0] sm:$0xf]
      %v5517 = vld [vmem:[%s5488 + $0xa8] sm:$0xf]
      %v5518 = vld [vmem:[%s5488 + $0xac] sm:$0xf]
      %v5519 = vld [vmem:[%s5488 + $0xb4] sm:$0xf]
      %v5520 = vld [vmem:[%s5488 + $0xb8] sm:$0xf]
      %5553 = vrot.lane.b32.xlu0 %v5489, 48
      %v5554 = vpop.permute.xlu0 %5553
      %5555 = vrot.lane.b32.xlu0 %v5490, 48
      %v5556 = vpop.permute.xlu0 %5555
      %5557 = vrot.lane.b32.xlu0 %v5491, 48
      %v5558 = vpop.permute.xlu0 %5557
      %5559 = vrot.lane.b32.xlu0 %v5492, 48
      %v5560 = vpop.permute.xlu0 %5559
      %5561 = vrot.lane.b32.xlu0 %v5493, 48
      %v5562 = vpop.permute.xlu0 %5561
      %5563 = vrot.lane.b32.xlu0 %v5494, 48
      %v5564 = vpop.permute.xlu0 %5563
      %5565 = vrot.lane.b32.xlu0 %v5495, 48
      %v5566 = vpop.permute.xlu0 %5565
      %5567 = vrot.lane.b32.xlu0 %v5496, 48
      %v5568 = vpop.permute.xlu0 %5567
      %5569 = vrot.lane.b32.xlu0 %v5497, 48
      %v5570 = vpop.permute.xlu0 %5569
      %5571 = vrot.lane.b32.xlu0 %v5498, 48
      %v5572 = vpop.permute.xlu0 %5571
      %5573 = vrot.lane.b32.xlu0 %v5499, 48
      %v5574 = vpop.permute.xlu0 %5573
      %5575 = vrot.lane.b32.xlu0 %v5500, 48
      %v5576 = vpop.permute.xlu0 %5575
      %5577 = vrot.lane.b32.xlu0 %v5501, 48
      %v5578 = vpop.permute.xlu0 %5577
      %5579 = vrot.lane.b32.xlu0 %v5502, 48
      %v5580 = vpop.permute.xlu0 %5579
      %5581 = vrot.lane.b32.xlu0 %v5503, 48
      %v5582 = vpop.permute.xlu0 %5581
      %5583 = vrot.lane.b32.xlu0 %v5504, 48
      %v5584 = vpop.permute.xlu0 %5583
      %5585 = vrot.lane.b32.xlu0 %v5505, 48
      %v5586 = vpop.permute.xlu0 %5585
      %5587 = vrot.lane.b32.xlu0 %v5506, 48
      %v5588 = vpop.permute.xlu0 %5587
      %5589 = vrot.lane.b32.xlu0 %v5507, 48
      %v5590 = vpop.permute.xlu0 %5589
      %5591 = vrot.lane.b32.xlu0 %v5508, 48
      %v5592 = vpop.permute.xlu0 %5591
      %5593 = vrot.lane.b32.xlu0 %v5509, 48
      %v5594 = vpop.permute.xlu0 %5593
      %5595 = vrot.lane.b32.xlu0 %v5510, 48
      %v5596 = vpop.permute.xlu0 %5595
      %5597 = vrot.lane.b32.xlu0 %v5511, 48
      %v5598 = vpop.permute.xlu0 %5597
      %5599 = vrot.lane.b32.xlu0 %v5512, 48
      %v5600 = vpop.permute.xlu0 %5599
      %5601 = vrot.lane.b32.xlu0 %v5513, 48
      %v5602 = vpop.permute.xlu0 %5601
      %5603 = vrot.lane.b32.xlu0 %v5514, 48
      %v5604 = vpop.permute.xlu0 %5603
      %5605 = vrot.lane.b32.xlu0 %v5515, 48
      %v5606 = vpop.permute.xlu0 %5605
      %5607 = vrot.lane.b32.xlu0 %v5516, 48
      %v5608 = vpop.permute.xlu0 %5607
      %5609 = vrot.lane.b32.xlu0 %v5517, 48
      %v5610 = vpop.permute.xlu0 %5609
      %5611 = vrot.lane.b32.xlu0 %v5518, 48
      %v5612 = vpop.permute.xlu0 %5611
      %5613 = vrot.lane.b32.xlu0 %v5519, 48
      %v5614 = vpop.permute.xlu0 %5613
      %5615 = vrot.lane.b32.xlu0 %v5520, 48
      %v5616 = vpop.permute.xlu0 %5615
      %vm5649 = vcmask 454016
      %5650 = vst.msk [vmem:[#allocation3] sm:$0xf] %vm5649, %v5554
      %5651 = vst.msk [vmem:[#allocation3 + $0x4] sm:$0xf] %vm5649, %v5556
      %5652 = vst.msk [vmem:[#allocation3 + $0x8] sm:$0xf] %vm5649, %v5558
      %5653 = vst.msk [vmem:[#allocation3 + $0xc] sm:$0xf] %vm5649, %v5560
      %5654 = vst.msk [vmem:[#allocation3 + $0x10] sm:$0xf] %vm5649, %v5562
      %5655 = vst.msk [vmem:[#allocation3 + $0x14] sm:$0xf] %vm5649, %v5564
      %5656 = vst.msk [vmem:[#allocation3 + $0x18] sm:$0xf] %vm5649, %v5566
      %5657 = vst.msk [vmem:[#allocation3 + $0x1c] sm:$0xf] %vm5649, %v5568
      %5658 = vst.msk [vmem:[#allocation3 + $0x20] sm:$0xf] %vm5649, %v5570
      %5659 = vst.msk [vmem:[#allocation3 + $0x24] sm:$0xf] %vm5649, %v5572
      %5660 = vst.msk [vmem:[#allocation3 + $0x28] sm:$0xf] %vm5649, %v5574
      %5661 = vst.msk [vmem:[#allocation3 + $0x2c] sm:$0xf] %vm5649, %v5576
      %5662 = vst.msk [vmem:[#allocation3 + $0x30] sm:$0xf] %vm5649, %v5578
      %5663 = vst.msk [vmem:[#allocation3 + $0x34] sm:$0xf] %vm5649, %v5580
      %5664 = vst.msk [vmem:[#allocation3 + $0x38] sm:$0xf] %vm5649, %v5582
      %5665 = vst.msk [vmem:[#allocation3 + $0x3c] sm:$0xf] %vm5649, %v5584
      %5666 = vst.msk [vmem:[#allocation3 + $0x40] sm:$0xf] %vm5649, %v5586
      %5667 = vst.msk [vmem:[#allocation3 + $0x44] sm:$0xf] %vm5649, %v5588
      %5668 = vst.msk [vmem:[#allocation3 + $0x48] sm:$0xf] %vm5649, %v5590
      %5669 = vst.msk [vmem:[#allocation3 + $0x4c] sm:$0xf] %vm5649, %v5592
      %5670 = vst.msk [vmem:[#allocation3 + $0x50] sm:$0xf] %vm5649, %v5594
      %5671 = vst.msk [vmem:[#allocation3 + $0x54] sm:$0xf] %vm5649, %v5596
      %5672 = vst.msk [vmem:[#allocation3 + $0x58] sm:$0xf] %vm5649, %v5598
      %5673 = vst.msk [vmem:[#allocation3 + $0x5c] sm:$0xf] %vm5649, %v5600
      %5674 = vst.msk [vmem:[#allocation3 + $0x60] sm:$0xf] %vm5649, %v5602
      %5675 = vst.msk [vmem:[#allocation3 + $0x64] sm:$0xf] %vm5649, %v5604
      %5676 = vst.msk [vmem:[#allocation3 + $0x68] sm:$0xf] %vm5649, %v5606
      %5677 = vst.msk [vmem:[#allocation3 + $0x6c] sm:$0xf] %vm5649, %v5608
      %5678 = vst.msk [vmem:[#allocation3 + $0x70] sm:$0xf] %vm5649, %v5610
      %5679 = vst.msk [vmem:[#allocation3 + $0x74] sm:$0xf] %vm5649, %v5612
      %5680 = vst.msk [vmem:[#allocation3 + $0x78] sm:$0xf] %vm5649, %v5614
      %5681 = vst.msk [vmem:[#allocation3 + $0x7c] sm:$0xf] %vm5649, %v5616
      %v5682 = vld [vmem:[%s5488] sm:$0xf]
      %v5683 = vld [vmem:[%s5488 + $0x4] sm:$0xf]
      %v5684 = vld [vmem:[%s5488 + $0x8] sm:$0x1]
      %v5685 = vld [vmem:[%s5488 + $0xc] sm:$0xf]
      %v5686 = vld [vmem:[%s5488 + $0x10] sm:$0xf]
      %v5687 = vld [vmem:[%s5488 + $0x14] sm:$0x1]
      %v5688 = vld [vmem:[%s5488 + $0x18] sm:$0xf]
      %v5689 = vld [vmem:[%s5488 + $0x1c] sm:$0xf]
      %v5690 = vld [vmem:[%s5488 + $0x20] sm:$0x1]
      %v5691 = vld [vmem:[%s5488 + $0x24] sm:$0xf]
      %v5692 = vld [vmem:[%s5488 + $0x28] sm:$0xf]
      %v5693 = vld [vmem:[%s5488 + $0x2c] sm:$0x1]
      %v5694 = vld [vmem:[%s5488 + $0x30] sm:$0xf]
      %v5695 = vld [vmem:[%s5488 + $0x34] sm:$0xf]
      %v5696 = vld [vmem:[%s5488 + $0x38] sm:$0x1]
      %v5697 = vld [vmem:[%s5488 + $0x3c] sm:$0xf]
      %v5698 = vld [vmem:[%s5488 + $0x40] sm:$0xf]
      %v5699 = vld [vmem:[%s5488 + $0x44] sm:$0x1]
      %v5700 = vld [vmem:[%s5488 + $0x48] sm:$0xf]
      %v5701 = vld [vmem:[%s5488 + $0x4c] sm:$0xf]
      %v5702 = vld [vmem:[%s5488 + $0x50] sm:$0x1]
      %v5703 = vld [vmem:[%s5488 + $0x54] sm:$0xf]
      %v5704 = vld [vmem:[%s5488 + $0x58] sm:$0xf]
      %v5705 = vld [vmem:[%s5488 + $0x5c] sm:$0x1]
      %v5706 = vld [vmem:[%s5488 + $0x60] sm:$0xf]
      %v5707 = vld [vmem:[%s5488 + $0x64] sm:$0xf]
      %v5708 = vld [vmem:[%s5488 + $0x68] sm:$0x1]
      %v5709 = vld [vmem:[%s5488 + $0x6c] sm:$0xf]
      %v5710 = vld [vmem:[%s5488 + $0x70] sm:$0xf]
      %v5711 = vld [vmem:[%s5488 + $0x74] sm:$0x1]
      %v5712 = vld [vmem:[%s5488 + $0x78] sm:$0xf]
      %v5713 = vld [vmem:[%s5488 + $0x7c] sm:$0xf]
      %v5714 = vld [vmem:[%s5488 + $0x80] sm:$0x1]
      %v5715 = vld [vmem:[%s5488 + $0x84] sm:$0xf]
      %v5716 = vld [vmem:[%s5488 + $0x88] sm:$0xf]
      %v5717 = vld [vmem:[%s5488 + $0x8c] sm:$0x1]
      %v5718 = vld [vmem:[%s5488 + $0x90] sm:$0xf]
      %v5719 = vld [vmem:[%s5488 + $0x94] sm:$0xf]
      %v5720 = vld [vmem:[%s5488 + $0x98] sm:$0x1]
      %v5721 = vld [vmem:[%s5488 + $0x9c] sm:$0xf]
      %v5722 = vld [vmem:[%s5488 + $0xa0] sm:$0xf]
      %v5723 = vld [vmem:[%s5488 + $0xa4] sm:$0x1]
      %v5724 = vld [vmem:[%s5488 + $0xa8] sm:$0xf]
      %v5725 = vld [vmem:[%s5488 + $0xac] sm:$0xf]
      %v5726 = vld [vmem:[%s5488 + $0xb0] sm:$0x1]
      %v5727 = vld [vmem:[%s5488 + $0xb4] sm:$0xf]
      %v5728 = vld [vmem:[%s5488 + $0xb8] sm:$0xf]
      %v5729 = vld [vmem:[%s5488 + $0xbc] sm:$0x1]
      %v5731 = vshrl.u32 %v5682, 16
      %v5733 = vrot.slane %v5731, 4
      %v5734 = vshll.u32 %v5682, 16
      %v5736 = vrot.slane %v5734, 5
      %v5737 = vor.u32 %v5733, %v5736
      %v5738 = vrot.slane %v5737, 4
      %v5740 = vshll.u32 %v5683, 16
      %v5742 = vrot.slane %v5740, 5
      %v5743 = vsel %vm3536, %v5738, %v5742
      %v5744 = vshrl.u32 %v5683, 16
      %v5746 = vrot.slane %v5744, 4
      %v5747 = vor.u32 %v5746, %v5742
      %v5748 = vrot.slane %v5747, 4
      %v5750 = vshll.u32 %v5684, 16
      %v5752 = vrot.slane %v5750, 5
      %v5753 = vsel %vm3536, %v5748, %v5752
      %v5755 = vshrl.u32 %v5685, 16
      %v5757 = vrot.slane %v5755, 4
      %v5758 = vshll.u32 %v5685, 16
      %v5760 = vrot.slane %v5758, 5
      %v5761 = vor.u32 %v5757, %v5760
      %v5762 = vrot.slane %v5761, 4
      %v5764 = vshll.u32 %v5686, 16
      %v5766 = vrot.slane %v5764, 5
      %v5767 = vsel %vm3536, %v5762, %v5766
      %v5768 = vshrl.u32 %v5686, 16
      %v5770 = vrot.slane %v5768, 4
      %v5771 = vor.u32 %v5770, %v5766
      %v5772 = vrot.slane %v5771, 4
      %v5774 = vshll.u32 %v5687, 16
      %v5776 = vrot.slane %v5774, 5
      %v5777 = vsel %vm3536, %v5772, %v5776
      %v5779 = vshrl.u32 %v5688, 16
      %v5781 = vrot.slane %v5779, 4
      %v5782 = vshll.u32 %v5688, 16
      %v5784 = vrot.slane %v5782, 5
      %v5785 = vor.u32 %v5781, %v5784
      %v5786 = vrot.slane %v5785, 4
      %v5788 = vshll.u32 %v5689, 16
      %v5790 = vrot.slane %v5788, 5
      %v5791 = vsel %vm3536, %v5786, %v5790
      %v5792 = vshrl.u32 %v5689, 16
      %v5794 = vrot.slane %v5792, 4
      %v5795 = vor.u32 %v5794, %v5790
      %v5796 = vrot.slane %v5795, 4
      %v5798 = vshll.u32 %v5690, 16
      %v5800 = vrot.slane %v5798, 5
      %v5801 = vsel %vm3536, %v5796, %v5800
      %v5803 = vshrl.u32 %v5691, 16
      %v5805 = vrot.slane %v5803, 4
      %v5806 = vshll.u32 %v5691, 16
      %v5808 = vrot.slane %v5806, 5
      %v5809 = vor.u32 %v5805, %v5808
      %v5810 = vrot.slane %v5809, 4
      %v5812 = vshll.u32 %v5692, 16
      %v5814 = vrot.slane %v5812, 5
      %v5815 = vsel %vm3536, %v5810, %v5814
      %v5816 = vshrl.u32 %v5692, 16
      %v5818 = vrot.slane %v5816, 4
      %v5819 = vor.u32 %v5818, %v5814
      %v5820 = vrot.slane %v5819, 4
      %v5822 = vshll.u32 %v5693, 16
      %v5824 = vrot.slane %v5822, 5
      %v5825 = vsel %vm3536, %v5820, %v5824
      %v5827 = vshrl.u32 %v5694, 16
      %v5829 = vrot.slane %v5827, 4
      %v5830 = vshll.u32 %v5694, 16
      %v5832 = vrot.slane %v5830, 5
      %v5833 = vor.u32 %v5829, %v5832
      %v5834 = vrot.slane %v5833, 4
      %v5836 = vshll.u32 %v5695, 16
      %v5838 = vrot.slane %v5836, 5
      %v5839 = vsel %vm3536, %v5834, %v5838
      %v5840 = vshrl.u32 %v5695, 16
      %v5842 = vrot.slane %v5840, 4
      %v5843 = vor.u32 %v5842, %v5838
      %v5844 = vrot.slane %v5843, 4
      %v5846 = vshll.u32 %v5696, 16
      %v5848 = vrot.slane %v5846, 5
      %v5849 = vsel %vm3536, %v5844, %v5848
      %v5851 = vshrl.u32 %v5697, 16
      %v5853 = vrot.slane %v5851, 4
      %v5854 = vshll.u32 %v5697, 16
      %v5856 = vrot.slane %v5854, 5
      %v5857 = vor.u32 %v5853, %v5856
      %v5858 = vrot.slane %v5857, 4
      %v5860 = vshll.u32 %v5698, 16
      %v5862 = vrot.slane %v5860, 5
      %v5863 = vsel %vm3536, %v5858, %v5862
      %v5864 = vshrl.u32 %v5698, 16
      %v5866 = vrot.slane %v5864, 4
      %v5867 = vor.u32 %v5866, %v5862
      %v5868 = vrot.slane %v5867, 4
      %v5870 = vshll.u32 %v5699, 16
      %v5872 = vrot.slane %v5870, 5
      %v5873 = vsel %vm3536, %v5868, %v5872
      %v5875 = vshrl.u32 %v5700, 16
      %v5877 = vrot.slane %v5875, 4
      %v5878 = vshll.u32 %v5700, 16
      %v5880 = vrot.slane %v5878, 5
      %v5881 = vor.u32 %v5877, %v5880
      %v5882 = vrot.slane %v5881, 4
      %v5884 = vshll.u32 %v5701, 16
      %v5886 = vrot.slane %v5884, 5
      %v5887 = vsel %vm3536, %v5882, %v5886
      %v5888 = vshrl.u32 %v5701, 16
      %v5890 = vrot.slane %v5888, 4
      %v5891 = vor.u32 %v5890, %v5886
      %v5892 = vrot.slane %v5891, 4
      %v5894 = vshll.u32 %v5702, 16
      %v5896 = vrot.slane %v5894, 5
      %v5897 = vsel %vm3536, %v5892, %v5896
      %v5899 = vshrl.u32 %v5703, 16
      %v5901 = vrot.slane %v5899, 4
      %v5902 = vshll.u32 %v5703, 16
      %v5904 = vrot.slane %v5902, 5
      %v5905 = vor.u32 %v5901, %v5904
      %v5906 = vrot.slane %v5905, 4
      %v5908 = vshll.u32 %v5704, 16
      %v5910 = vrot.slane %v5908, 5
      %v5911 = vsel %vm3536, %v5906, %v5910
      %v5912 = vshrl.u32 %v5704, 16
      %v5914 = vrot.slane %v5912, 4
      %v5915 = vor.u32 %v5914, %v5910
      %v5916 = vrot.slane %v5915, 4
      %v5918 = vshll.u32 %v5705, 16
      %v5920 = vrot.slane %v5918, 5
      %v5921 = vsel %vm3536, %v5916, %v5920
      %v5923 = vshrl.u32 %v5706, 16
      %v5925 = vrot.slane %v5923, 4
      %v5926 = vshll.u32 %v5706, 16
      %v5928 = vrot.slane %v5926, 5
      %v5929 = vor.u32 %v5925, %v5928
      %v5930 = vrot.slane %v5929, 4
      %v5932 = vshll.u32 %v5707, 16
      %v5934 = vrot.slane %v5932, 5
      %v5935 = vsel %vm3536, %v5930, %v5934
      %v5936 = vshrl.u32 %v5707, 16
      %v5938 = vrot.slane %v5936, 4
      %v5939 = vor.u32 %v5938, %v5934
      %v5940 = vrot.slane %v5939, 4
      %v5942 = vshll.u32 %v5708, 16
      %v5944 = vrot.slane %v5942, 5
      %v5945 = vsel %vm3536, %v5940, %v5944
      %v5947 = vshrl.u32 %v5709, 16
      %v5949 = vrot.slane %v5947, 4
      %v5950 = vshll.u32 %v5709, 16
      %v5952 = vrot.slane %v5950, 5
      %v5953 = vor.u32 %v5949, %v5952
      %v5954 = vrot.slane %v5953, 4
      %v5956 = vshll.u32 %v5710, 16
      %v5958 = vrot.slane %v5956, 5
      %v5959 = vsel %vm3536, %v5954, %v5958
      %v5960 = vshrl.u32 %v5710, 16
      %v5962 = vrot.slane %v5960, 4
      %v5963 = vor.u32 %v5962, %v5958
      %v5964 = vrot.slane %v5963, 4
      %v5966 = vshll.u32 %v5711, 16
      %v5968 = vrot.slane %v5966, 5
      %v5969 = vsel %vm3536, %v5964, %v5968
      %v5971 = vshrl.u32 %v5712, 16
      %v5973 = vrot.slane %v5971, 4
      %v5974 = vshll.u32 %v5712, 16
      %v5976 = vrot.slane %v5974, 5
      %v5977 = vor.u32 %v5973, %v5976
      %v5978 = vrot.slane %v5977, 4
      %v5980 = vshll.u32 %v5713, 16
      %v5982 = vrot.slane %v5980, 5
      %v5983 = vsel %vm3536, %v5978, %v5982
      %v5984 = vshrl.u32 %v5713, 16
      %v5986 = vrot.slane %v5984, 4
      %v5987 = vor.u32 %v5986, %v5982
      %v5988 = vrot.slane %v5987, 4
      %v5990 = vshll.u32 %v5714, 16
      %v5992 = vrot.slane %v5990, 5
      %v5993 = vsel %vm3536, %v5988, %v5992
      %v5995 = vshrl.u32 %v5715, 16
      %v5997 = vrot.slane %v5995, 4
      %v5998 = vshll.u32 %v5715, 16
      %v6000 = vrot.slane %v5998, 5
      %v6001 = vor.u32 %v5997, %v6000
      %v6002 = vrot.slane %v6001, 4
      %v6004 = vshll.u32 %v5716, 16
      %v6006 = vrot.slane %v6004, 5
      %v6007 = vsel %vm3536, %v6002, %v6006
      %v6008 = vshrl.u32 %v5716, 16
      %v6010 = vrot.slane %v6008, 4
      %v6011 = vor.u32 %v6010, %v6006
      %v6012 = vrot.slane %v6011, 4
      %v6014 = vshll.u32 %v5717, 16
      %v6016 = vrot.slane %v6014, 5
      %v6017 = vsel %vm3536, %v6012, %v6016
      %v6019 = vshrl.u32 %v5718, 16
      %v6021 = vrot.slane %v6019, 4
      %v6022 = vshll.u32 %v5718, 16
      %v6024 = vrot.slane %v6022, 5
      %v6025 = vor.u32 %v6021, %v6024
      %v6026 = vrot.slane %v6025, 4
      %v6028 = vshll.u32 %v5719, 16
      %v6030 = vrot.slane %v6028, 5
      %v6031 = vsel %vm3536, %v6026, %v6030
      %v6032 = vshrl.u32 %v5719, 16
      %v6034 = vrot.slane %v6032, 4
      %v6035 = vor.u32 %v6034, %v6030
      %v6036 = vrot.slane %v6035, 4
      %v6038 = vshll.u32 %v5720, 16
      %v6040 = vrot.slane %v6038, 5
      %v6041 = vsel %vm3536, %v6036, %v6040
      %v6043 = vshrl.u32 %v5721, 16
      %v6045 = vrot.slane %v6043, 4
      %v6046 = vshll.u32 %v5721, 16
      %v6048 = vrot.slane %v6046, 5
      %v6049 = vor.u32 %v6045, %v6048
      %v6050 = vrot.slane %v6049, 4
      %v6052 = vshll.u32 %v5722, 16
      %v6054 = vrot.slane %v6052, 5
      %v6055 = vsel %vm3536, %v6050, %v6054
      %v6056 = vshrl.u32 %v5722, 16
      %v6058 = vrot.slane %v6056, 4
      %v6059 = vor.u32 %v6058, %v6054
      %v6060 = vrot.slane %v6059, 4
      %v6062 = vshll.u32 %v5723, 16
      %v6064 = vrot.slane %v6062, 5
      %v6065 = vsel %vm3536, %v6060, %v6064
      %v6067 = vshrl.u32 %v5724, 16
      %v6069 = vrot.slane %v6067, 4
      %v6070 = vshll.u32 %v5724, 16
      %v6072 = vrot.slane %v6070, 5
      %v6073 = vor.u32 %v6069, %v6072
      %v6074 = vrot.slane %v6073, 4
      %v6076 = vshll.u32 %v5725, 16
      %v6078 = vrot.slane %v6076, 5
      %v6079 = vsel %vm3536, %v6074, %v6078
      %v6080 = vshrl.u32 %v5725, 16
      %v6082 = vrot.slane %v6080, 4
      %v6083 = vor.u32 %v6082, %v6078
      %v6084 = vrot.slane %v6083, 4
      %v6086 = vshll.u32 %v5726, 16
      %v6088 = vrot.slane %v6086, 5
      %v6089 = vsel %vm3536, %v6084, %v6088
      %v6091 = vshrl.u32 %v5727, 16
      %v6093 = vrot.slane %v6091, 4
      %v6094 = vshll.u32 %v5727, 16
      %v6096 = vrot.slane %v6094, 5
      %v6097 = vor.u32 %v6093, %v6096
      %v6098 = vrot.slane %v6097, 4
      %v6100 = vshll.u32 %v5728, 16
      %v6102 = vrot.slane %v6100, 5
      %v6103 = vsel %vm3536, %v6098, %v6102
      %v6104 = vshrl.u32 %v5728, 16
      %v6106 = vrot.slane %v6104, 4
      %v6107 = vor.u32 %v6106, %v6102
      %v6108 = vrot.slane %v6107, 4
      %v6110 = vshll.u32 %v5729, 16
      %v6112 = vrot.slane %v6110, 5
      %v6113 = vsel %vm3536, %v6108, %v6112
      %6114 = vrot.lane.b32.xlu0 %v5743, 56
      %v6115 = vpop.permute.xlu0 %6114
      %6116 = vrot.lane.b32.xlu0 %v5753, 56
      %v6117 = vpop.permute.xlu0 %6116
      %6118 = vrot.lane.b32.xlu0 %v5767, 56
      %v6119 = vpop.permute.xlu0 %6118
      %6120 = vrot.lane.b32.xlu0 %v5777, 56
      %v6121 = vpop.permute.xlu0 %6120
      %6122 = vrot.lane.b32.xlu0 %v5791, 56
      %v6123 = vpop.permute.xlu0 %6122
      %6124 = vrot.lane.b32.xlu0 %v5801, 56
      %v6125 = vpop.permute.xlu0 %6124
      %6126 = vrot.lane.b32.xlu0 %v5815, 56
      %v6127 = vpop.permute.xlu0 %6126
      %6128 = vrot.lane.b32.xlu0 %v5825, 56
      %v6129 = vpop.permute.xlu0 %6128
      %6130 = vrot.lane.b32.xlu0 %v5839, 56
      %v6131 = vpop.permute.xlu0 %6130
      %6132 = vrot.lane.b32.xlu0 %v5849, 56
      %v6133 = vpop.permute.xlu0 %6132
      %6134 = vrot.lane.b32.xlu0 %v5863, 56
      %v6135 = vpop.permute.xlu0 %6134
      %6136 = vrot.lane.b32.xlu0 %v5873, 56
      %v6137 = vpop.permute.xlu0 %6136
      %6138 = vrot.lane.b32.xlu0 %v5887, 56
      %v6139 = vpop.permute.xlu0 %6138
      %6140 = vrot.lane.b32.xlu0 %v5897, 56
      %v6141 = vpop.permute.xlu0 %6140
      %6142 = vrot.lane.b32.xlu0 %v5911, 56
      %v6143 = vpop.permute.xlu0 %6142
      %6144 = vrot.lane.b32.xlu0 %v5921, 56
      %v6145 = vpop.permute.xlu0 %6144
      %6146 = vrot.lane.b32.xlu0 %v5935, 56
      %v6147 = vpop.permute.xlu0 %6146
      %6148 = vrot.lane.b32.xlu0 %v5945, 56
      %v6149 = vpop.permute.xlu0 %6148
      %6150 = vrot.lane.b32.xlu0 %v5959, 56
      %v6151 = vpop.permute.xlu0 %6150
      %6152 = vrot.lane.b32.xlu0 %v5969, 56
      %v6153 = vpop.permute.xlu0 %6152
      %6154 = vrot.lane.b32.xlu0 %v5983, 56
      %v6155 = vpop.permute.xlu0 %6154
      %6156 = vrot.lane.b32.xlu0 %v5993, 56
      %v6157 = vpop.permute.xlu0 %6156
      %6158 = vrot.lane.b32.xlu0 %v6007, 56
      %v6159 = vpop.permute.xlu0 %6158
      %6160 = vrot.lane.b32.xlu0 %v6017, 56
      %v6161 = vpop.permute.xlu0 %6160
      %6162 = vrot.lane.b32.xlu0 %v6031, 56
      %v6163 = vpop.permute.xlu0 %6162
      %6164 = vrot.lane.b32.xlu0 %v6041, 56
      %v6165 = vpop.permute.xlu0 %6164
      %6166 = vrot.lane.b32.xlu0 %v6055, 56
      %v6167 = vpop.permute.xlu0 %6166
      %6168 = vrot.lane.b32.xlu0 %v6065, 56
      %v6169 = vpop.permute.xlu0 %6168
      %6170 = vrot.lane.b32.xlu0 %v6079, 56
      %v6171 = vpop.permute.xlu0 %6170
      %6172 = vrot.lane.b32.xlu0 %v6089, 56
      %v6173 = vpop.permute.xlu0 %6172
      %6174 = vrot.lane.b32.xlu0 %v6103, 56
      %v6175 = vpop.permute.xlu0 %6174
      %6176 = vrot.lane.b32.xlu0 %v6113, 56
      %v6177 = vpop.permute.xlu0 %6176
      %vm6210 = vcmask 519616
      %6211 = vst.msk [vmem:[#allocation3] sm:$0xf] %vm6210, %v6115
      %6212 = vst.msk [vmem:[#allocation3 + $0x4] sm:$0xf] %vm6210, %v6117
      %6213 = vst.msk [vmem:[#allocation3 + $0x8] sm:$0xf] %vm6210, %v6119
      %6214 = vst.msk [vmem:[#allocation3 + $0xc] sm:$0xf] %vm6210, %v6121
      %6215 = vst.msk [vmem:[#allocation3 + $0x10] sm:$0xf] %vm6210, %v6123
      %6216 = vst.msk [vmem:[#allocation3 + $0x14] sm:$0xf] %vm6210, %v6125
      %6217 = vst.msk [vmem:[#allocation3 + $0x18] sm:$0xf] %vm6210, %v6127
      %6218 = vst.msk [vmem:[#allocation3 + $0x1c] sm:$0xf] %vm6210, %v6129
      %6219 = vst.msk [vmem:[#allocation3 + $0x20] sm:$0xf] %vm6210, %v6131
      %6220 = vst.msk [vmem:[#allocation3 + $0x24] sm:$0xf] %vm6210, %v6133
      %6221 = vst.msk [vmem:[#allocation3 + $0x28] sm:$0xf] %vm6210, %v6135
      %6222 = vst.msk [vmem:[#allocation3 + $0x2c] sm:$0xf] %vm6210, %v6137
      %6223 = vst.msk [vmem:[#allocation3 + $0x30] sm:$0xf] %vm6210, %v6139
      %6224 = vst.msk [vmem:[#allocation3 + $0x34] sm:$0xf] %vm6210, %v6141
      %6225 = vst.msk [vmem:[#allocation3 + $0x38] sm:$0xf] %vm6210, %v6143
      %6226 = vst.msk [vmem:[#allocation3 + $0x3c] sm:$0xf] %vm6210, %v6145
      %6227 = vst.msk [vmem:[#allocation3 + $0x40] sm:$0xf] %vm6210, %v6147
      %6228 = vst.msk [vmem:[#allocation3 + $0x44] sm:$0xf] %vm6210, %v6149
      %6229 = vst.msk [vmem:[#allocation3 + $0x48] sm:$0xf] %vm6210, %v6151
      %6230 = vst.msk [vmem:[#allocation3 + $0x4c] sm:$0xf] %vm6210, %v6153
      %6231 = vst.msk [vmem:[#allocation3 + $0x50] sm:$0xf] %vm6210, %v6155
      %6232 = vst.msk [vmem:[#allocation3 + $0x54] sm:$0xf] %vm6210, %v6157
      %6233 = vst.msk [vmem:[#allocation3 + $0x58] sm:$0xf] %vm6210, %v6159
      %6234 = vst.msk [vmem:[#allocation3 + $0x5c] sm:$0xf] %vm6210, %v6161
      %6235 = vst.msk [vmem:[#allocation3 + $0x60] sm:$0xf] %vm6210, %v6163
      %6236 = vst.msk [vmem:[#allocation3 + $0x64] sm:$0xf] %vm6210, %v6165
      %6237 = vst.msk [vmem:[#allocation3 + $0x68] sm:$0xf] %vm6210, %v6167
      %6238 = vst.msk [vmem:[#allocation3 + $0x6c] sm:$0xf] %vm6210, %v6169
      %6239 = vst.msk [vmem:[#allocation3 + $0x70] sm:$0xf] %vm6210, %v6171
      %6240 = vst.msk [vmem:[#allocation3 + $0x74] sm:$0xf] %vm6210, %v6173
      %6241 = vst.msk [vmem:[#allocation3 + $0x78] sm:$0xf] %vm6210, %v6175
      %6242 = vst.msk [vmem:[#allocation3 + $0x7c] sm:$0xf] %vm6210, %v6177
      %v6243 = vld [vmem:[%s5488] sm:$0xe]
      %v6244 = vld [vmem:[%s5488 + $0x4] sm:$0xf]
      %v6245 = vld [vmem:[%s5488 + $0x8] sm:$0x1]
      %v6246 = vld [vmem:[%s5488 + $0xc] sm:$0xe]
      %v6247 = vld [vmem:[%s5488 + $0x10] sm:$0xf]
      %v6248 = vld [vmem:[%s5488 + $0x14] sm:$0x1]
      %v6249 = vld [vmem:[%s5488 + $0x18] sm:$0xe]
      %v6250 = vld [vmem:[%s5488 + $0x1c] sm:$0xf]
      %v6251 = vld [vmem:[%s5488 + $0x20] sm:$0x1]
      %v6252 = vld [vmem:[%s5488 + $0x24] sm:$0xe]
      %v6253 = vld [vmem:[%s5488 + $0x28] sm:$0xf]
      %v6254 = vld [vmem:[%s5488 + $0x2c] sm:$0x1]
      %v6255 = vld [vmem:[%s5488 + $0x30] sm:$0xe]
      %v6256 = vld [vmem:[%s5488 + $0x34] sm:$0xf]
      %v6257 = vld [vmem:[%s5488 + $0x38] sm:$0x1]
      %v6258 = vld [vmem:[%s5488 + $0x3c] sm:$0xe]
      %v6259 = vld [vmem:[%s5488 + $0x40] sm:$0xf]
      %v6260 = vld [vmem:[%s5488 + $0x44] sm:$0x1]
      %v6261 = vld [vmem:[%s5488 + $0x48] sm:$0xe]
      %v6262 = vld [vmem:[%s5488 + $0x4c] sm:$0xf]
      %v6263 = vld [vmem:[%s5488 + $0x50] sm:$0x1]
      %v6264 = vld [vmem:[%s5488 + $0x54] sm:$0xe]
      %v6265 = vld [vmem:[%s5488 + $0x58] sm:$0xf]
      %v6266 = vld [vmem:[%s5488 + $0x5c] sm:$0x1]
      %v6267 = vld [vmem:[%s5488 + $0x60] sm:$0xe]
      %v6268 = vld [vmem:[%s5488 + $0x64] sm:$0xf]
      %v6269 = vld [vmem:[%s5488 + $0x68] sm:$0x1]
      %v6270 = vld [vmem:[%s5488 + $0x6c] sm:$0xe]
      %v6271 = vld [vmem:[%s5488 + $0x70] sm:$0xf]
      %v6272 = vld [vmem:[%s5488 + $0x74] sm:$0x1]
      %v6273 = vld [vmem:[%s5488 + $0x78] sm:$0xe]
      %v6274 = vld [vmem:[%s5488 + $0x7c] sm:$0xf]
      %v6275 = vld [vmem:[%s5488 + $0x80] sm:$0x1]
      %v6276 = vld [vmem:[%s5488 + $0x84] sm:$0xe]
      %v6277 = vld [vmem:[%s5488 + $0x88] sm:$0xf]
      %v6278 = vld [vmem:[%s5488 + $0x8c] sm:$0x1]
      %v6279 = vld [vmem:[%s5488 + $0x90] sm:$0xe]
      %v6280 = vld [vmem:[%s5488 + $0x94] sm:$0xf]
      %v6281 = vld [vmem:[%s5488 + $0x98] sm:$0x1]
      %v6282 = vld [vmem:[%s5488 + $0x9c] sm:$0xe]
      %v6283 = vld [vmem:[%s5488 + $0xa0] sm:$0xf]
      %v6284 = vld [vmem:[%s5488 + $0xa4] sm:$0x1]
      %v6285 = vld [vmem:[%s5488 + $0xa8] sm:$0xe]
      %v6286 = vld [vmem:[%s5488 + $0xac] sm:$0xf]
      %v6287 = vld [vmem:[%s5488 + $0xb0] sm:$0x1]
      %v6288 = vld [vmem:[%s5488 + $0xb4] sm:$0xe]
      %v6289 = vld [vmem:[%s5488 + $0xb8] sm:$0xf]
      %v6290 = vld [vmem:[%s5488 + $0xbc] sm:$0x1]
      %v6339 = vrot.slane %v6243, 5
      %v6340 = vrot.slane %v6339, 4
      %v6341 = vrot.slane %v6244, 5
      %v6342 = vsel %vm4148, %v6340, %v6341
      %v6343 = vrot.slane %v6341, 4
      %v6344 = vrot.slane %v6245, 5
      %v6345 = vsel %vm4148, %v6343, %v6344
      %v6346 = vrot.slane %v6246, 5
      %v6347 = vrot.slane %v6346, 4
      %v6348 = vrot.slane %v6247, 5
      %v6349 = vsel %vm4148, %v6347, %v6348
      %v6350 = vrot.slane %v6348, 4
      %v6351 = vrot.slane %v6248, 5
      %v6352 = vsel %vm4148, %v6350, %v6351
      %v6353 = vrot.slane %v6249, 5
      %v6354 = vrot.slane %v6353, 4
      %v6355 = vrot.slane %v6250, 5
      %v6356 = vsel %vm4148, %v6354, %v6355
      %v6357 = vrot.slane %v6355, 4
      %v6358 = vrot.slane %v6251, 5
      %v6359 = vsel %vm4148, %v6357, %v6358
      %v6360 = vrot.slane %v6252, 5
      %v6361 = vrot.slane %v6360, 4
      %v6362 = vrot.slane %v6253, 5
      %v6363 = vsel %vm4148, %v6361, %v6362
      %v6364 = vrot.slane %v6362, 4
      %v6365 = vrot.slane %v6254, 5
      %v6366 = vsel %vm4148, %v6364, %v6365
      %v6367 = vrot.slane %v6255, 5
      %v6368 = vrot.slane %v6367, 4
      %v6369 = vrot.slane %v6256, 5
      %v6370 = vsel %vm4148, %v6368, %v6369
      %v6371 = vrot.slane %v6369, 4
      %v6372 = vrot.slane %v6257, 5
      %v6373 = vsel %vm4148, %v6371, %v6372
      %v6374 = vrot.slane %v6258, 5
      %v6375 = vrot.slane %v6374, 4
      %v6376 = vrot.slane %v6259, 5
      %v6377 = vsel %vm4148, %v6375, %v6376
      %v6378 = vrot.slane %v6376, 4
      %v6379 = vrot.slane %v6260, 5
      %v6380 = vsel %vm4148, %v6378, %v6379
      %v6381 = vrot.slane %v6261, 5
      %v6382 = vrot.slane %v6381, 4
      %v6383 = vrot.slane %v6262, 5
      %v6384 = vsel %vm4148, %v6382, %v6383
      %v6385 = vrot.slane %v6383, 4
      %v6386 = vrot.slane %v6263, 5
      %v6387 = vsel %vm4148, %v6385, %v6386
      %v6388 = vrot.slane %v6264, 5
      %v6389 = vrot.slane %v6388, 4
      %v6390 = vrot.slane %v6265, 5
      %v6391 = vsel %vm4148, %v6389, %v6390
      %v6392 = vrot.slane %v6390, 4
      %v6393 = vrot.slane %v6266, 5
      %v6394 = vsel %vm4148, %v6392, %v6393
      %v6395 = vrot.slane %v6267, 5
      %v6396 = vrot.slane %v6395, 4
      %v6397 = vrot.slane %v6268, 5
      %v6398 = vsel %vm4148, %v6396, %v6397
      %v6399 = vrot.slane %v6397, 4
      %v6400 = vrot.slane %v6269, 5
      %v6401 = vsel %vm4148, %v6399, %v6400
      %v6402 = vrot.slane %v6270, 5
      %v6403 = vrot.slane %v6402, 4
      %v6404 = vrot.slane %v6271, 5
      %v6405 = vsel %vm4148, %v6403, %v6404
      %v6406 = vrot.slane %v6404, 4
      %v6407 = vrot.slane %v6272, 5
      %v6408 = vsel %vm4148, %v6406, %v6407
      %v6409 = vrot.slane %v6273, 5
      %v6410 = vrot.slane %v6409, 4
      %v6411 = vrot.slane %v6274, 5
      %v6412 = vsel %vm4148, %v6410, %v6411
      %v6413 = vrot.slane %v6411, 4
      %v6414 = vrot.slane %v6275, 5
      %v6415 = vsel %vm4148, %v6413, %v6414
      %v6416 = vrot.slane %v6276, 5
      %v6417 = vrot.slane %v6416, 4
      %v6418 = vrot.slane %v6277, 5
      %v6419 = vsel %vm4148, %v6417, %v6418
      %v6420 = vrot.slane %v6418, 4
      %v6421 = vrot.slane %v6278, 5
      %v6422 = vsel %vm4148, %v6420, %v6421
      %v6423 = vrot.slane %v6279, 5
      %v6424 = vrot.slane %v6423, 4
      %v6425 = vrot.slane %v6280, 5
      %v6426 = vsel %vm4148, %v6424, %v6425
      %v6427 = vrot.slane %v6425, 4
      %v6428 = vrot.slane %v6281, 5
      %v6429 = vsel %vm4148, %v6427, %v6428
      %v6430 = vrot.slane %v6282, 5
      %v6431 = vrot.slane %v6430, 4
      %v6432 = vrot.slane %v6283, 5
      %v6433 = vsel %vm4148, %v6431, %v6432
      %v6434 = vrot.slane %v6432, 4
      %v6435 = vrot.slane %v6284, 5
      %v6436 = vsel %vm4148, %v6434, %v6435
      %v6437 = vrot.slane %v6285, 5
      %v6438 = vrot.slane %v6437, 4
      %v6439 = vrot.slane %v6286, 5
      %v6440 = vsel %vm4148, %v6438, %v6439
      %v6441 = vrot.slane %v6439, 4
      %v6442 = vrot.slane %v6287, 5
      %v6443 = vsel %vm4148, %v6441, %v6442
      %v6444 = vrot.slane %v6288, 5
      %v6445 = vrot.slane %v6444, 4
      %v6446 = vrot.slane %v6289, 5
      %v6447 = vsel %vm4148, %v6445, %v6446
      %v6448 = vrot.slane %v6446, 4
      %v6449 = vrot.slane %v6290, 5
      %v6450 = vsel %vm4148, %v6448, %v6449
      %6451 = vrot.lane.b32.xlu0 %v6342, 64
      %v6452 = vpop.permute.xlu0 %6451
      %6453 = vrot.lane.b32.xlu0 %v6345, 64
      %v6454 = vpop.permute.xlu0 %6453
      %6455 = vrot.lane.b32.xlu0 %v6349, 64
      %v6456 = vpop.permute.xlu0 %6455
      %6457 = vrot.lane.b32.xlu0 %v6352, 64
      %v6458 = vpop.permute.xlu0 %6457
      %6459 = vrot.lane.b32.xlu0 %v6356, 64
      %v6460 = vpop.permute.xlu0 %6459
      %6461 = vrot.lane.b32.xlu0 %v6359, 64
      %v6462 = vpop.permute.xlu0 %6461
      %6463 = vrot.lane.b32.xlu0 %v6363, 64
      %v6464 = vpop.permute.xlu0 %6463
      %6465 = vrot.lane.b32.xlu0 %v6366, 64
      %v6466 = vpop.permute.xlu0 %6465
      %6467 = vrot.lane.b32.xlu0 %v6370, 64
      %v6468 = vpop.permute.xlu0 %6467
      %6469 = vrot.lane.b32.xlu0 %v6373, 64
      %v6470 = vpop.permute.xlu0 %6469
      %6471 = vrot.lane.b32.xlu0 %v6377, 64
      %v6472 = vpop.permute.xlu0 %6471
      %6473 = vrot.lane.b32.xlu0 %v6380, 64
      %v6474 = vpop.permute.xlu0 %6473
      %6475 = vrot.lane.b32.xlu0 %v6384, 64
      %v6476 = vpop.permute.xlu0 %6475
      %6477 = vrot.lane.b32.xlu0 %v6387, 64
      %v6478 = vpop.permute.xlu0 %6477
      %6479 = vrot.lane.b32.xlu0 %v6391, 64
      %v6480 = vpop.permute.xlu0 %6479
      %6481 = vrot.lane.b32.xlu0 %v6394, 64
      %v6482 = vpop.permute.xlu0 %6481
      %6483 = vrot.lane.b32.xlu0 %v6398, 64
      %v6484 = vpop.permute.xlu0 %6483
      %6485 = vrot.lane.b32.xlu0 %v6401, 64
      %v6486 = vpop.permute.xlu0 %6485
      %6487 = vrot.lane.b32.xlu0 %v6405, 64
      %v6488 = vpop.permute.xlu0 %6487
      %6489 = vrot.lane.b32.xlu0 %v6408, 64
      %v6490 = vpop.permute.xlu0 %6489
      %6491 = vrot.lane.b32.xlu0 %v6412, 64
      %v6492 = vpop.permute.xlu0 %6491
      %6493 = vrot.lane.b32.xlu0 %v6415, 64
      %v6494 = vpop.permute.xlu0 %6493
      %6495 = vrot.lane.b32.xlu0 %v6419, 64
      %v6496 = vpop.permute.xlu0 %6495
      %6497 = vrot.lane.b32.xlu0 %v6422, 64
      %v6498 = vpop.permute.xlu0 %6497
      %6499 = vrot.lane.b32.xlu0 %v6426, 64
      %v6500 = vpop.permute.xlu0 %6499
      %6501 = vrot.lane.b32.xlu0 %v6429, 64
      %v6502 = vpop.permute.xlu0 %6501
      %6503 = vrot.lane.b32.xlu0 %v6433, 64
      %v6504 = vpop.permute.xlu0 %6503
      %6505 = vrot.lane.b32.xlu0 %v6436, 64
      %v6506 = vpop.permute.xlu0 %6505
      %6507 = vrot.lane.b32.xlu0 %v6440, 64
      %v6508 = vpop.permute.xlu0 %6507
      %6509 = vrot.lane.b32.xlu0 %v6443, 64
      %v6510 = vpop.permute.xlu0 %6509
      %6511 = vrot.lane.b32.xlu0 %v6447, 64
      %v6512 = vpop.permute.xlu0 %6511
      %6513 = vrot.lane.b32.xlu0 %v6450, 64
      %v6514 = vpop.permute.xlu0 %6513
      %vm6547 = vcmask 585216
      %6548 = vst.msk [vmem:[#allocation3] sm:$0xf] %vm6547, %v6452
      %6549 = vst.msk [vmem:[#allocation3 + $0x4] sm:$0xf] %vm6547, %v6454
      %6550 = vst.msk [vmem:[#allocation3 + $0x8] sm:$0xf] %vm6547, %v6456
      %6551 = vst.msk [vmem:[#allocation3 + $0xc] sm:$0xf] %vm6547, %v6458
      %6552 = vst.msk [vmem:[#allocation3 + $0x10] sm:$0xf] %vm6547, %v6460
      %6553 = vst.msk [vmem:[#allocation3 + $0x14] sm:$0xf] %vm6547, %v6462
      %6554 = vst.msk [vmem:[#allocation3 + $0x18] sm:$0xf] %vm6547, %v6464
      %6555 = vst.msk [vmem:[#allocation3 + $0x1c] sm:$0xf] %vm6547, %v6466
      %6556 = vst.msk [vmem:[#allocation3 + $0x20] sm:$0xf] %vm6547, %v6468
      %6557 = vst.msk [vmem:[#allocation3 + $0x24] sm:$0xf] %vm6547, %v6470
      %6558 = vst.msk [vmem:[#allocation3 + $0x28] sm:$0xf] %vm6547, %v6472
      %6559 = vst.msk [vmem:[#allocation3 + $0x2c] sm:$0xf] %vm6547, %v6474
      %6560 = vst.msk [vmem:[#allocation3 + $0x30] sm:$0xf] %vm6547, %v6476
      %6561 = vst.msk [vmem:[#allocation3 + $0x34] sm:$0xf] %vm6547, %v6478
      %6562 = vst.msk [vmem:[#allocation3 + $0x38] sm:$0xf] %vm6547, %v6480
      %6563 = vst.msk [vmem:[#allocation3 + $0x3c] sm:$0xf] %vm6547, %v6482
      %6564 = vst.msk [vmem:[#allocation3 + $0x40] sm:$0xf] %vm6547, %v6484
      %6565 = vst.msk [vmem:[#allocation3 + $0x44] sm:$0xf] %vm6547, %v6486
      %6566 = vst.msk [vmem:[#allocation3 + $0x48] sm:$0xf] %vm6547, %v6488
      %6567 = vst.msk [vmem:[#allocation3 + $0x4c] sm:$0xf] %vm6547, %v6490
      %6568 = vst.msk [vmem:[#allocation3 + $0x50] sm:$0xf] %vm6547, %v6492
      %6569 = vst.msk [vmem:[#allocation3 + $0x54] sm:$0xf] %vm6547, %v6494
      %6570 = vst.msk [vmem:[#allocation3 + $0x58] sm:$0xf] %vm6547, %v6496
      %6571 = vst.msk [vmem:[#allocation3 + $0x5c] sm:$0xf] %vm6547, %v6498
      %6572 = vst.msk [vmem:[#allocation3 + $0x60] sm:$0xf] %vm6547, %v6500
      %6573 = vst.msk [vmem:[#allocation3 + $0x64] sm:$0xf] %vm6547, %v6502
      %6574 = vst.msk [vmem:[#allocation3 + $0x68] sm:$0xf] %vm6547, %v6504
      %6575 = vst.msk [vmem:[#allocation3 + $0x6c] sm:$0xf] %vm6547, %v6506
      %6576 = vst.msk [vmem:[#allocation3 + $0x70] sm:$0xf] %vm6547, %v6508
      %6577 = vst.msk [vmem:[#allocation3 + $0x74] sm:$0xf] %vm6547, %v6510
      %6578 = vst.msk [vmem:[#allocation3 + $0x78] sm:$0xf] %vm6547, %v6512
      %6579 = vst.msk [vmem:[#allocation3 + $0x7c] sm:$0xf] %vm6547, %v6514
      %v6580 = vld [vmem:[#allocation3] sm:$0xf]
      %v6581 = vld [vmem:[#allocation3 + $0x4] sm:$0xf]
      %v6582 = vld [vmem:[#allocation3 + $0x8] sm:$0xf]
      %v6583 = vld [vmem:[#allocation3 + $0xc] sm:$0xf]
      %v6584 = vld [vmem:[#allocation3 + $0x10] sm:$0xf]
      %v6585 = vld [vmem:[#allocation3 + $0x14] sm:$0xf]
      %v6586 = vld [vmem:[#allocation3 + $0x18] sm:$0xf]
      %v6587 = vld [vmem:[#allocation3 + $0x1c] sm:$0xf]
      %v6588 = vld [vmem:[#allocation3 + $0x20] sm:$0xf]
      %v6589 = vld [vmem:[#allocation3 + $0x24] sm:$0xf]
      %v6590 = vld [vmem:[#allocation3 + $0x28] sm:$0xf]
      %v6591 = vld [vmem:[#allocation3 + $0x2c] sm:$0xf]
      %v6592 = vld [vmem:[#allocation3 + $0x30] sm:$0xf]
      %v6593 = vld [vmem:[#allocation3 + $0x34] sm:$0xf]
      %v6594 = vld [vmem:[#allocation3 + $0x38] sm:$0xf]
      %v6595 = vld [vmem:[#allocation3 + $0x3c] sm:$0xf]
      %v6596 = vld [vmem:[#allocation3 + $0x40] sm:$0xf]
      %v6597 = vld [vmem:[#allocation3 + $0x44] sm:$0xf]
      %v6598 = vld [vmem:[#allocation3 + $0x48] sm:$0xf]
      %v6599 = vld [vmem:[#allocation3 + $0x4c] sm:$0xf]
      %v6600 = vld [vmem:[#allocation3 + $0x50] sm:$0xf]
      %v6601 = vld [vmem:[#allocation3 + $0x54] sm:$0xf]
      %v6602 = vld [vmem:[#allocation3 + $0x58] sm:$0xf]
      %v6603 = vld [vmem:[#allocation3 + $0x5c] sm:$0xf]
      %v6604 = vld [vmem:[#allocation3 + $0x60] sm:$0xf]
      %v6605 = vld [vmem:[#allocation3 + $0x64] sm:$0xf]
      %v6606 = vld [vmem:[#allocation3 + $0x68] sm:$0xf]
      %v6607 = vld [vmem:[#allocation3 + $0x6c] sm:$0xf]
      %v6608 = vld [vmem:[#allocation3 + $0x70] sm:$0xf]
      %v6609 = vld [vmem:[#allocation3 + $0x74] sm:$0xf]
      %v6610 = vld [vmem:[#allocation3 + $0x78] sm:$0xf]
      %v6611 = vld [vmem:[#allocation3 + $0x7c] sm:$0xf]
      %v6612 = vld [vmem:[%s4] sm:$0xf]
      %v6613 = vld [vmem:[%s4 + $0x4] sm:$0xf]
      %v6614 = vld [vmem:[%s4 + $0x8] sm:$0xf]
      %v6615 = vld [vmem:[%s4 + $0xc] sm:$0xf]
      %v6616 = vld [vmem:[%s4 + $0x10] sm:$0xf]
      %v6617 = vld [vmem:[%s4 + $0x14] sm:$0xf]
      %v6618 = vld [vmem:[%s4 + $0x18] sm:$0xf]
      %v6619 = vld [vmem:[%s4 + $0x1c] sm:$0xf]
      %v6620 = vld [vmem:[%s4 + $0x20] sm:$0xf]
      %v6653 = vunpack.c.l.b16 %v6580
      %v6654 = vunpack.c.l.b16 %v6581
      %v6655 = vunpack.c.l.b16 %v6582
      %v6656 = vunpack.c.l.b16 %v6583
      %v6657 = vunpack.c.l.b16 %v6584
      %v6658 = vunpack.c.l.b16 %v6585
      %v6659 = vunpack.c.l.b16 %v6586
      %v6660 = vunpack.c.l.b16 %v6587
      %v6661 = vunpack.c.l.b16 %v6588
      %v6662 = vunpack.c.l.b16 %v6589
      %v6663 = vunpack.c.l.b16 %v6590
      %v6664 = vunpack.c.l.b16 %v6591
      %v6665 = vunpack.c.l.b16 %v6592
      %v6666 = vunpack.c.l.b16 %v6593
      %v6667 = vunpack.c.l.b16 %v6594
      %v6668 = vunpack.c.l.b16 %v6595
      %v6669 = vunpack.c.l.b16 %v6596
      %v6670 = vunpack.c.l.b16 %v6597
      %v6671 = vunpack.c.l.b16 %v6598
      %v6672 = vunpack.c.l.b16 %v6599
      %v6673 = vunpack.c.l.b16 %v6600
      %v6674 = vunpack.c.l.b16 %v6601
      %v6675 = vunpack.c.l.b16 %v6602
      %v6676 = vunpack.c.l.b16 %v6603
      %v6677 = vunpack.c.l.b16 %v6604
      %v6678 = vunpack.c.l.b16 %v6605
      %v6679 = vunpack.c.l.b16 %v6606
      %v6680 = vunpack.c.l.b16 %v6607
      %v6681 = vunpack.c.l.b16 %v6608
      %v6682 = vunpack.c.l.b16 %v6609
      %v6683 = vunpack.c.l.b16 %v6610
      %v6684 = vunpack.c.l.b16 %v6611
      %v6685 = vpack.c.b16 %v6654, %v6653
      %v6686 = vpack.c.b16 %v6656, %v6655
      %v6687 = vpack.c.b16 %v6658, %v6657
      %v6688 = vpack.c.b16 %v6660, %v6659
      %v6689 = vpack.c.b16 %v6662, %v6661
      %v6690 = vpack.c.b16 %v6664, %v6663
      %v6691 = vpack.c.b16 %v6666, %v6665
      %v6692 = vpack.c.b16 %v6668, %v6667
      %v6693 = vpack.c.b16 %v6670, %v6669
      %v6694 = vpack.c.b16 %v6672, %v6671
      %v6695 = vpack.c.b16 %v6674, %v6673
      %v6696 = vpack.c.b16 %v6676, %v6675
      %v6697 = vpack.c.b16 %v6678, %v6677
      %v6698 = vpack.c.b16 %v6680, %v6679
      %v6699 = vpack.c.b16 %v6682, %v6681
      %v6700 = vpack.c.b16 %v6684, %v6683
      %v6710 = vunpack.c.l.b16 %v6612
      %v6711 = vunpack.c.l.b16 %v6613
      %v6712 = vunpack.c.l.b16 %v6614
      %v6713 = vunpack.c.l.b16 %v6615
      %v6714 = vunpack.c.l.b16 %v6616
      %v6715 = vunpack.c.l.b16 %v6617
      %v6716 = vunpack.c.l.b16 %v6618
      %v6717 = vunpack.c.l.b16 %v6619
      %v6718 = vunpack.c.l.b16 %v6620
      %v6719 = vpack.c.b16 %v6711, %v6710
      %v6720 = vpack.c.b16 %v6713, %v6712
      %v6721 = vpack.c.b16 %v6715, %v6714
      %v6722 = vpack.c.b16 %v6717, %v6716
      %v6723 = vpack.c.b16 %v6718, %v6718
      %vm6728 = vcmask 588800
      %v6730 = vsel %vm6728, %v6685, 0
      %v6733 = vsel %vm6728, %v6686, 0
      %v6736 = vsel %vm6728, %v6687, 0
      %v6739 = vsel %vm6728, %v6688, 0
      %v6742 = vsel %vm6728, %v6689, 0
      %v6745 = vsel %vm6728, %v6690, 0
      %v6748 = vsel %vm6728, %v6691, 0
      %v6751 = vsel %vm6728, %v6692, 0
      %v6754 = vsel %vm6728, %v6693, 0
      %v6757 = vsel %vm6728, %v6694, 0
      %v6760 = vsel %vm6728, %v6695, 0
      %v6763 = vsel %vm6728, %v6696, 0
      %v6766 = vsel %vm6728, %v6697, 0
      %v6769 = vsel %vm6728, %v6698, 0
      %v6772 = vsel %vm6728, %v6699, 0
      %v6775 = vsel %vm6728, %v6700, 0
      %vm6777 = vcmask 1043456
      %v6779 = vsel %vm6777, %v6723, 0
      %6781 = vmatprep.subr.bf16.mxu0 0
      %6782 = vmatpush1.bf16.msra.mxu0 0
      %6783 = vmatprep.subr.bf16.mxu0 0
      %6784 = vmatpush1.bf16.msra.mxu0 0
      %6785 = vmatprep.subr.bf16.mxu0 0
      %6786 = vmatpush1.bf16.msra.mxu0 0
      %6787 = vmatprep.subr.bf16.mxu0 0
      %6788 = vmatpush1.bf16.msra.mxu0 %v6779
      %6789 = vmatprep.subr.bf16.mxu0 0
      %6790 = vmatpush1.bf16.msra.mxu0 %v6722
      %6791 = vmatprep.subr.bf16.mxu0 0
      %6792 = vmatpush1.bf16.msra.mxu0 %v6721
      %6793 = vmatprep.subr.bf16.mxu0 0
      %6794 = vmatpush1.bf16.msra.mxu0 %v6720
      %6795 = vmatprep.subr.bf16.mxu0 0
      %6796 = vmatpush1.bf16.msra.mxu0 %v6719
      %6797 = vmatprep.subr.bf16.mxu0 0
      %6798 = vmatpush2.bf16.msra.mxu0 0
      %6799 = vmatprep.subr.bf16.mxu0 0
      %6800 = vmatpush2.bf16.msra.mxu0 0
      %6801 = vmatprep.subr.bf16.mxu0 0
      %6802 = vmatpush2.bf16.msra.mxu0 0
      %6803 = vmatprep.subr.bf16.mxu0 0
      %6804 = vmatpush2.bf16.msra.mxu0 0
      %6805 = vmatprep.subr.bf16.mxu0 0
      %6806 = vmatpush2.bf16.msra.mxu0 0
      %6807 = vmatprep.subr.bf16.mxu0 0
      %6808 = vmatpush2.bf16.msra.mxu0 0
      %6809 = vmatprep.subr.bf16.mxu0 0
      %6810 = vmatpush2.bf16.msra.mxu0 0
      %6811 = vmatprep.subr.bf16.mxu0 0
      %6812 = vmatpush2.bf16.msra.mxu0 0
      %6813 = vmatprep.mubr.bf16.mxu0 0
      %6814 = vmatmul.mubr.bf16.gmra.mxu0 %v6730
      %v6815 = vpop.f32.mrf.mxu0
      %v6816 = vadd.f32 0.0, %v6815
      %v6817 = vpop.f32.mrf.mxu0
      %v6818 = vpop.f32.mrf.mxu0
      %v6819 = vadd.f32 0.0, %v6818
      %v6820 = vpop.f32.mrf.mxu0
      %6821 = vmatprep.mubr.bf16.mxu0 0
      %6822 = vmatmul.mubr.bf16.gmra.mxu0 %v6733
      %v6823 = vpop.f32.mrf.mxu0
      %v6824 = vadd.f32 0.0, %v6823
      %v6825 = vpop.f32.mrf.mxu0
      %v6826 = vpop.f32.mrf.mxu0
      %v6827 = vadd.f32 0.0, %v6826
      %v6828 = vpop.f32.mrf.mxu0
      %6829 = vmatprep.mubr.bf16.mxu0 0
      %6830 = vmatmul.mubr.bf16.gmra.mxu0 %v6736
      %v6831 = vpop.f32.mrf.mxu0
      %v6832 = vadd.f32 0.0, %v6831
      %v6833 = vpop.f32.mrf.mxu0
      %v6834 = vpop.f32.mrf.mxu0
      %v6835 = vadd.f32 0.0, %v6834
      %v6836 = vpop.f32.mrf.mxu0
      %6837 = vmatprep.mubr.bf16.mxu0 0
      %6838 = vmatmul.mubr.bf16.gmra.mxu0 %v6739
      %v6839 = vpop.f32.mrf.mxu0
      %v6840 = vadd.f32 0.0, %v6839
      %v6841 = vpop.f32.mrf.mxu0
      %v6842 = vpop.f32.mrf.mxu0
      %v6843 = vadd.f32 0.0, %v6842
      %v6844 = vpop.f32.mrf.mxu0
      %6845 = vmatprep.mubr.bf16.mxu0 0
      %6846 = vmatmul.mubr.bf16.gmra.mxu0 %v6742
      %v6847 = vpop.f32.mrf.mxu0
      %v6848 = vadd.f32 0.0, %v6847
      %v6849 = vpop.f32.mrf.mxu0
      %v6850 = vpop.f32.mrf.mxu0
      %v6851 = vadd.f32 0.0, %v6850
      %v6852 = vpop.f32.mrf.mxu0
      %6853 = vmatprep.mubr.bf16.mxu0 0
      %6854 = vmatmul.mubr.bf16.gmra.mxu0 %v6745
      %v6855 = vpop.f32.mrf.mxu0
      %v6856 = vadd.f32 0.0, %v6855
      %v6857 = vpop.f32.mrf.mxu0
      %v6858 = vpop.f32.mrf.mxu0
      %v6859 = vadd.f32 0.0, %v6858
      %v6860 = vpop.f32.mrf.mxu0
      %6861 = vmatprep.mubr.bf16.mxu0 0
      %6862 = vmatmul.mubr.bf16.gmra.mxu0 %v6748
      %v6863 = vpop.f32.mrf.mxu0
      %v6864 = vadd.f32 0.0, %v6863
      %v6865 = vpop.f32.mrf.mxu0
      %v6866 = vpop.f32.mrf.mxu0
      %v6867 = vadd.f32 0.0, %v6866
      %v6868 = vpop.f32.mrf.mxu0
      %6869 = vmatprep.mubr.bf16.mxu0 0
      %6870 = vmatmul.mubr.bf16.gmra.mxu0 %v6751
      %v6871 = vpop.f32.mrf.mxu0
      %v6872 = vadd.f32 0.0, %v6871
      %v6873 = vpop.f32.mrf.mxu0
      %v6874 = vpop.f32.mrf.mxu0
      %v6875 = vadd.f32 0.0, %v6874
      %v6876 = vpop.f32.mrf.mxu0
      %6877 = vmatprep.mubr.bf16.mxu0 0
      %6878 = vmatmul.mubr.bf16.gmra.mxu0 %v6754
      %v6879 = vpop.f32.mrf.mxu0
      %v6880 = vadd.f32 0.0, %v6879
      %v6881 = vpop.f32.mrf.mxu0
      %v6882 = vpop.f32.mrf.mxu0
      %v6883 = vadd.f32 0.0, %v6882
      %v6884 = vpop.f32.mrf.mxu0
      %6885 = vmatprep.mubr.bf16.mxu0 0
      %6886 = vmatmul.mubr.bf16.gmra.mxu0 %v6757
      %v6887 = vpop.f32.mrf.mxu0
      %v6888 = vadd.f32 0.0, %v6887
      %v6889 = vpop.f32.mrf.mxu0
      %v6890 = vpop.f32.mrf.mxu0
      %v6891 = vadd.f32 0.0, %v6890
      %v6892 = vpop.f32.mrf.mxu0
      %6893 = vmatprep.mubr.bf16.mxu0 0
      %6894 = vmatmul.mubr.bf16.gmra.mxu0 %v6760
      %v6895 = vpop.f32.mrf.mxu0
      %v6896 = vadd.f32 0.0, %v6895
      %v6897 = vpop.f32.mrf.mxu0
      %v6898 = vpop.f32.mrf.mxu0
      %v6899 = vadd.f32 0.0, %v6898
      %v6900 = vpop.f32.mrf.mxu0
      %6901 = vmatprep.mubr.bf16.mxu0 0
      %6902 = vmatmul.mubr.bf16.gmra.mxu0 %v6763
      %v6903 = vpop.f32.mrf.mxu0
      %v6904 = vadd.f32 0.0, %v6903
      %v6905 = vpop.f32.mrf.mxu0
      %v6906 = vpop.f32.mrf.mxu0
      %v6907 = vadd.f32 0.0, %v6906
      %v6908 = vpop.f32.mrf.mxu0
      %6909 = vmatprep.mubr.bf16.mxu0 0
      %6910 = vmatmul.mubr.bf16.gmra.mxu0 %v6766
      %v6911 = vpop.f32.mrf.mxu0
      %v6912 = vadd.f32 0.0, %v6911
      %v6913 = vpop.f32.mrf.mxu0
      %v6914 = vpop.f32.mrf.mxu0
      %v6915 = vadd.f32 0.0, %v6914
      %v6916 = vpop.f32.mrf.mxu0
      %6917 = vmatprep.mubr.bf16.mxu0 0
      %6918 = vmatmul.mubr.bf16.gmra.mxu0 %v6769
      %v6919 = vpop.f32.mrf.mxu0
      %v6920 = vadd.f32 0.0, %v6919
      %v6921 = vpop.f32.mrf.mxu0
      %v6922 = vpop.f32.mrf.mxu0
      %v6923 = vadd.f32 0.0, %v6922
      %v6924 = vpop.f32.mrf.mxu0
      %6925 = vmatprep.mubr.bf16.mxu0 0
      %6926 = vmatmul.mubr.bf16.gmra.mxu0 %v6772
      %v6927 = vpop.f32.mrf.mxu0
      %v6928 = vadd.f32 0.0, %v6927
      %v6929 = vpop.f32.mrf.mxu0
      %v6930 = vpop.f32.mrf.mxu0
      %v6931 = vadd.f32 0.0, %v6930
      %v6932 = vpop.f32.mrf.mxu0
      %6933 = vmatprep.mubr.bf16.mxu0 0
      %6934 = vmatmul.mubr.bf16.gmra.mxu0 %v6775
      %v6935 = vpop.f32.mrf.mxu0
      %v6936 = vadd.f32 0.0, %v6935
      %v6937 = vpop.f32.mrf.mxu0
      %v6938 = vpop.f32.mrf.mxu0
      %v6939 = vadd.f32 0.0, %v6938
      %v6940 = vpop.f32.mrf.mxu0
      %6941 = vdwg.mxu0
      %vm6942 = vcmask 31744
      %6943 = vst.msk [vmem:[%s302] sm:$0xff] %vm6942, %v6816
      %6944 = vst.msk [vmem:[%s302 + $0x8] sm:$0xff] %vm6942, %v6819
      %6945 = vst.msk [vmem:[%s302 + $0x10] sm:$0xff] %vm6942, %v6824
      %6946 = vst.msk [vmem:[%s302 + $0x18] sm:$0xff] %vm6942, %v6827
      %6947 = vst.msk [vmem:[%s302 + $0x20] sm:$0xff] %vm6942, %v6832
      %6948 = vst.msk [vmem:[%s302 + $0x28] sm:$0xff] %vm6942, %v6835
      %6949 = vst.msk [vmem:[%s302 + $0x30] sm:$0xff] %vm6942, %v6840
      %6950 = vst.msk [vmem:[%s302 + $0x38] sm:$0xff] %vm6942, %v6843
      %6951 = vst.msk [vmem:[%s302 + $0x40] sm:$0xff] %vm6942, %v6848
      %6952 = vst.msk [vmem:[%s302 + $0x48] sm:$0xff] %vm6942, %v6851
      %6953 = vst.msk [vmem:[%s302 + $0x50] sm:$0xff] %vm6942, %v6856
      %6954 = vst.msk [vmem:[%s302 + $0x58] sm:$0xff] %vm6942, %v6859
      %6955 = vst.msk [vmem:[%s302 + $0x60] sm:$0xff] %vm6942, %v6864
      %6956 = vst.msk [vmem:[%s302 + $0x68] sm:$0xff] %vm6942, %v6867
      %6957 = vst.msk [vmem:[%s302 + $0x70] sm:$0xff] %vm6942, %v6872
      %6958 = vst.msk [vmem:[%s302 + $0x78] sm:$0xff] %vm6942, %v6875
      %6959 = vst.msk [vmem:[%s302 + $0x80] sm:$0xff] %vm6942, %v6880
      %6960 = vst.msk [vmem:[%s302 + $0x88] sm:$0xff] %vm6942, %v6883
      %6961 = vst.msk [vmem:[%s302 + $0x90] sm:$0xff] %vm6942, %v6888
      %6962 = vst.msk [vmem:[%s302 + $0x98] sm:$0xff] %vm6942, %v6891
      %6963 = vst.msk [vmem:[%s302 + $0xa0] sm:$0xff] %vm6942, %v6896
      %6964 = vst.msk [vmem:[%s302 + $0xa8] sm:$0xff] %vm6942, %v6899
      %6965 = vst.msk [vmem:[%s302 + $0xb0] sm:$0xff] %vm6942, %v6904
      %6966 = vst.msk [vmem:[%s302 + $0xb8] sm:$0xff] %vm6942, %v6907
      %6967 = vst.msk [vmem:[%s302 + $0xc0] sm:$0xff] %vm6942, %v6912
      %6968 = vst.msk [vmem:[%s302 + $0xc8] sm:$0xff] %vm6942, %v6915
      %6969 = vst.msk [vmem:[%s302 + $0xd0] sm:$0xff] %vm6942, %v6920
      %6970 = vst.msk [vmem:[%s302 + $0xd8] sm:$0xff] %vm6942, %v6923
      %6971 = vst.msk [vmem:[%s302 + $0xe0] sm:$0xff] %vm6942, %v6928
      %6972 = vst.msk [vmem:[%s302 + $0xe8] sm:$0xff] %vm6942, %v6931
      %6973 = vst.msk [vmem:[%s302 + $0xf0] sm:$0xff] %vm6942, %v6936
      %6974 = vst.msk [vmem:[%s302 + $0xf8] sm:$0xff] %vm6942, %v6939
      %v6975 = vsel %vm6942, %v6816, 0.0
      %v6976 = vsel %vm6942, %v6819, 0.0
      %v6977 = vadd.f32 %v6975, %v6976
      %v6978 = vsel %vm6942, %v6824, 0.0
      %v6979 = vadd.f32 %v6977, %v6978
      %v6980 = vsel %vm6942, %v6827, 0.0
      %v6981 = vadd.f32 %v6979, %v6980
      %v6982 = vsel %vm6942, %v6832, 0.0
      %v6983 = vadd.f32 %v6981, %v6982
      %v6984 = vsel %vm6942, %v6835, 0.0
      %v6985 = vadd.f32 %v6983, %v6984
      %v6986 = vsel %vm6942, %v6840, 0.0
      %v6987 = vadd.f32 %v6985, %v6986
      %v6988 = vsel %vm6942, %v6843, 0.0
      %v6989 = vadd.f32 %v6987, %v6988
      %v6990 = vsel %vm6942, %v6848, 0.0
      %v6991 = vadd.f32 %v6989, %v6990
      %v6992 = vsel %vm6942, %v6851, 0.0
      %v6993 = vadd.f32 %v6991, %v6992
      %v6994 = vsel %vm6942, %v6856, 0.0
      %v6995 = vadd.f32 %v6993, %v6994
      %v6996 = vsel %vm6942, %v6859, 0.0
      %v6997 = vadd.f32 %v6995, %v6996
      %v6998 = vsel %vm6942, %v6864, 0.0
      %v6999 = vadd.f32 %v6997, %v6998
      %v7000 = vsel %vm6942, %v6867, 0.0
      %v7001 = vadd.f32 %v6999, %v7000
      %v7002 = vsel %vm6942, %v6872, 0.0
      %v7003 = vadd.f32 %v7001, %v7002
      %v7004 = vsel %vm6942, %v6875, 0.0
      %v7005 = vadd.f32 %v7003, %v7004
      %v7006 = vsel %vm6942, %v6880, 0.0
      %v7007 = vadd.f32 %v7005, %v7006
      %v7008 = vsel %vm6942, %v6883, 0.0
      %v7009 = vadd.f32 %v7007, %v7008
      %v7010 = vsel %vm6942, %v6888, 0.0
      %v7011 = vadd.f32 %v7009, %v7010
      %v7012 = vsel %vm6942, %v6891, 0.0
      %v7013 = vadd.f32 %v7011, %v7012
      %v7014 = vsel %vm6942, %v6896, 0.0
      %v7015 = vadd.f32 %v7013, %v7014
      %v7016 = vsel %vm6942, %v6899, 0.0
      %v7017 = vadd.f32 %v7015, %v7016
      %v7018 = vsel %vm6942, %v6904, 0.0
      %v7019 = vadd.f32 %v7017, %v7018
      %v7020 = vsel %vm6942, %v6907, 0.0
      %v7021 = vadd.f32 %v7019, %v7020
      %v7022 = vsel %vm6942, %v6912, 0.0
      %v7023 = vadd.f32 %v7021, %v7022
      %v7024 = vsel %vm6942, %v6915, 0.0
      %v7025 = vadd.f32 %v7023, %v7024
      %v7026 = vsel %vm6942, %v6920, 0.0
      %v7027 = vadd.f32 %v7025, %v7026
      %v7028 = vsel %vm6942, %v6923, 0.0
      %v7029 = vadd.f32 %v7027, %v7028
      %v7030 = vsel %vm6942, %v6928, 0.0
      %v7031 = vadd.f32 %v7029, %v7030
      %v7032 = vsel %vm6942, %v6931, 0.0
      %v7033 = vadd.f32 %v7031, %v7032
      %v7034 = vsel %vm6942, %v6936, 0.0
      %v7035 = vadd.f32 %v7033, %v7034
      %v7036 = vsel %vm6942, %v6939, 0.0
      %v7037 = vadd.f32 %v7035, %v7036
      %v7038 = vrot.slane %v7037, 4
      %v7039 = vadd.f32 %v7037, %v7038
      %v7040 = vrot.slane %v7039, 2
      %v7041 = vadd.f32 %v7039, %v7040
      %v7042 = vrot.slane %v7041, 1
      %v7043 = vadd.f32 %v7041, %v7042
      %v7044 = vmul.f32 %v6816, %v6816
      %v7045 = vmul.f32 %v6819, %v6819
      %v7046 = vmul.f32 %v6824, %v6824
      %v7047 = vmul.f32 %v6827, %v6827
      %v7048 = vmul.f32 %v6832, %v6832
      %v7049 = vmul.f32 %v6835, %v6835
      %v7050 = vmul.f32 %v6840, %v6840
      %v7051 = vmul.f32 %v6843, %v6843
      %v7052 = vmul.f32 %v6848, %v6848
      %v7053 = vmul.f32 %v6851, %v6851
      %v7054 = vmul.f32 %v6856, %v6856
      %v7055 = vmul.f32 %v6859, %v6859
      %v7056 = vmul.f32 %v6864, %v6864
      %v7057 = vmul.f32 %v6867, %v6867
      %v7058 = vmul.f32 %v6872, %v6872
      %v7059 = vmul.f32 %v6875, %v6875
      %v7060 = vmul.f32 %v6880, %v6880
      %v7061 = vmul.f32 %v6883, %v6883
      %v7062 = vmul.f32 %v6888, %v6888
      %v7063 = vmul.f32 %v6891, %v6891
      %v7064 = vmul.f32 %v6896, %v6896
      %v7065 = vmul.f32 %v6899, %v6899
      %v7066 = vmul.f32 %v6904, %v6904
      %v7067 = vmul.f32 %v6907, %v6907
      %v7068 = vmul.f32 %v6912, %v6912
      %v7069 = vmul.f32 %v6915, %v6915
      %v7070 = vmul.f32 %v6920, %v6920
      %v7071 = vmul.f32 %v6923, %v6923
      %v7072 = vmul.f32 %v6928, %v6928
      %v7073 = vmul.f32 %v6931, %v6931
      %v7074 = vmul.f32 %v6936, %v6936
      %v7075 = vmul.f32 %v6939, %v6939
      %v7076 = vsel %vm6942, %v7044, 0.0
      %v7077 = vsel %vm6942, %v7045, 0.0
      %v7078 = vadd.f32 %v7076, %v7077
      %v7079 = vsel %vm6942, %v7046, 0.0
      %v7080 = vadd.f32 %v7078, %v7079
      %v7081 = vsel %vm6942, %v7047, 0.0
      %v7082 = vadd.f32 %v7080, %v7081
      %v7083 = vsel %vm6942, %v7048, 0.0
      %v7084 = vadd.f32 %v7082, %v7083
      %v7085 = vsel %vm6942, %v7049, 0.0
      %v7086 = vadd.f32 %v7084, %v7085
      %v7087 = vsel %vm6942, %v7050, 0.0
      %v7088 = vadd.f32 %v7086, %v7087
      %v7089 = vsel %vm6942, %v7051, 0.0
      %v7090 = vadd.f32 %v7088, %v7089
      %v7091 = vsel %vm6942, %v7052, 0.0
      %v7092 = vadd.f32 %v7090, %v7091
      %v7093 = vsel %vm6942, %v7053, 0.0
      %v7094 = vadd.f32 %v7092, %v7093
      %v7095 = vsel %vm6942, %v7054, 0.0
      %v7096 = vadd.f32 %v7094, %v7095
      %v7097 = vsel %vm6942, %v7055, 0.0
      %v7098 = vadd.f32 %v7096, %v7097
      %v7099 = vsel %vm6942, %v7056, 0.0
      %v7100 = vadd.f32 %v7098, %v7099
      %v7101 = vsel %vm6942, %v7057, 0.0
      %v7102 = vadd.f32 %v7100, %v7101
      %v7103 = vsel %vm6942, %v7058, 0.0
      %v7104 = vadd.f32 %v7102, %v7103
      %v7105 = vsel %vm6942, %v7059, 0.0
      %v7106 = vadd.f32 %v7104, %v7105
      %v7107 = vsel %vm6942, %v7060, 0.0
      %v7108 = vadd.f32 %v7106, %v7107
      %v7109 = vsel %vm6942, %v7061, 0.0
      %v7110 = vadd.f32 %v7108, %v7109
      %v7111 = vsel %vm6942, %v7062, 0.0
      %v7112 = vadd.f32 %v7110, %v7111
      %v7113 = vsel %vm6942, %v7063, 0.0
      %v7114 = vadd.f32 %v7112, %v7113
      %v7115 = vsel %vm6942, %v7064, 0.0
      %v7116 = vadd.f32 %v7114, %v7115
      %v7117 = vsel %vm6942, %v7065, 0.0
      %v7118 = vadd.f32 %v7116, %v7117
      %v7119 = vsel %vm6942, %v7066, 0.0
      %v7120 = vadd.f32 %v7118, %v7119
      %v7121 = vsel %vm6942, %v7067, 0.0
      %v7122 = vadd.f32 %v7120, %v7121
      %v7123 = vsel %vm6942, %v7068, 0.0
      %v7124 = vadd.f32 %v7122, %v7123
      %v7125 = vsel %vm6942, %v7069, 0.0
      %v7126 = vadd.f32 %v7124, %v7125
      %v7127 = vsel %vm6942, %v7070, 0.0
      %v7128 = vadd.f32 %v7126, %v7127
      %v7129 = vsel %vm6942, %v7071, 0.0
      %v7130 = vadd.f32 %v7128, %v7129
      %v7131 = vsel %vm6942, %v7072, 0.0
      %v7132 = vadd.f32 %v7130, %v7131
      %v7133 = vsel %vm6942, %v7073, 0.0
      %v7134 = vadd.f32 %v7132, %v7133
      %v7135 = vsel %vm6942, %v7074, 0.0
      %v7136 = vadd.f32 %v7134, %v7135
      %v7137 = vsel %vm6942, %v7075, 0.0
      %v7138 = vadd.f32 %v7136, %v7137
      %v7139 = vrot.slane %v7138, 4
      %v7140 = vadd.f32 %v7138, %v7139
      %v7141 = vrot.slane %v7140, 2
      %v7142 = vadd.f32 %v7140, %v7141
      %v7143 = vrot.slane %v7142, 1
      %v7144 = vadd.f32 %v7142, %v7143
      %v7145 = vld [vmem:[%s307] sm:$0x3]
      %vm7146 = vcmask 1040384
      %v7147 = vsel %vm7146, %v7043, %v7144
      %v7148 = vadd.f32 %v7145, %v7147
      %vm7149 = vcmask 25600
      %7150 = vst.msk [vmem:[%s307] sm:$0x3] %vm7149, %v7148
      %s7151 = smul.u32 16, %s23
      %p7152 = scmp.lt.s32.totalorder %s22, 1
      %s7153 = scalar_select %p7152, %s22, 1
      %p7154 = scmp.lt.s32.totalorder %s7151, 15
      %s7155 = scalar_select %p7154, %s7151, 15
      %s7156 = smul.addr %s7155, 2
      %s7157 = smul.addr %s7153, 32
      %s7158 = sadd.s32 %s7156, %s7157
      %s7159 = smul.addr %s7158, 8
      %s7160 = scalar_lea.vmem %s5, %s7159
      %p7161 = scmp.lt.s32.totalorder %s22, 1
      %s7162 = scalar_select %p7161, %s22, 1
      %s7163 = smul.addr %s7162, 2
      %s7164 = scalar_lea.vmem %s6, %s7163
      // Predicated region
      $region45: #{up_forward.3} parent=39 // pred_check
        %p7165 = pneg %p165
      $region46: #{up_forward.3} parent=39 // pred_check_branch
        %7167 = sbr.rel (%p7165) target = $region48
      $region47: #{up_forward.3} parent=39 // pred_region
        %s7168 = smul.u32 16, %s23
      $region48: #{up_forward.3} parent=39 // pred_fallthru
        _
      // Predicated region
      $region49: #{up_forward.3} parent=39 // pred_check
        %p7169 = pneg %p191
      $region50: #{up_forward.3} parent=39 // pred_check_branch
        %7171 = sbr.rel (%p7169) target = $region52
      $region51: #{up_forward.3} parent=39 // pred_region
        _
      $region52: #{up_forward.3} parent=39 // pred_fallthru
        _
    $region40: #{up_forward.3} parent=5 // pred_fallthru
      _
    %p7172 = scmp.le.s32.totalorder 2, %s13
    // Predicated region
    $region53: #{up_forward.3} parent=5 // pred_check
      %p7173 = pneg %p7172
    $region54: #{up_forward.3} parent=5 // pred_check_branch
      %7175 = sbr.rel (%p7173) target = $region56
    $region55: #{up_forward.3} parent=5 // pred_region
      %s7176 = ssub.s32 %s13, 2
      // Predicated region
      $region57: #{up_forward.3} parent=55 // pred_check
        %p7177 = pneg %p171
      $region58: #{up_forward.3} parent=55 // pred_check_branch
        %7179 = sbr.rel (%p7177) target = $region60
      $region59: #{up_forward.3} parent=55 // pred_region
        %s7180 = smul.u32 16, %s25
        %p7181 = scmp.lt.s32.totalorder %s24, 1
        %s7182 = scalar_select %p7181, %s24, 1
        %p7183 = scmp.lt.s32.totalorder %s7180, 15
        %s7184 = scalar_select %p7183, %s7180, 15
        %s7185 = smul.addr %s7184, 2
        %s7186 = smul.addr %s7182, 32
        %s7187 = sadd.s32 %s7185, %s7186
        %s7188 = smul.addr %s7187, 8
        %s7189 = scalar_lea.vmem %s5, %s7188
      $region60: #{up_forward.3} parent=55 // pred_fallthru
        _
      // Predicated region
      $region61: #{up_forward.3} parent=55 // pred_check
        %p7190 = pneg %p197
      $region62: #{up_forward.3} parent=55 // pred_check_branch
        %7192 = sbr.rel (%p7190) target = $region64
      $region63: #{up_forward.3} parent=55 // pred_region
        %p7193 = scmp.lt.s32.totalorder %s24, 1
        %s7194 = scalar_select %p7193, %s24, 1
        %s7195 = smul.addr %s7194, 2
        %s7196 = scalar_lea.vmem %s6, %s7195
      $region64: #{up_forward.3} parent=55 // pred_fallthru
        _
    $region56: #{up_forward.3} parent=5 // pred_fallthru
      _
  $region6: #{up_forward.3} parent=0 // loop_footer
    %s17 = sadd.s32 1, %s13
  $region7: #{up_forward.3} parent=0 // loop_footer_branch
    %12 = sbr.rel target = $region3
  $region8: #{up_forward.3} parent=0 // loop_exit
    _

</llo_original>
